<compile_context>
chip_gen: v6e
topology: v6e:2x2x1
jax: 0.10.0
libtpu: 0.0.40
codegen_flags: <defaults>
</compile_context>

<pallas_src>
import functools

import jax
import jax.numpy as jnp
from jax.experimental import pallas as pl
from jax.experimental.pallas import tpu as pltpu

LANE = 128     # last-dim tiling (lanes)
SUBLANE = 8    # second-to-last-dim tiling (sublanes, f32)

ENCODER_DIMS = [(28 * 28, 1000), (1000, 500), (500, 250), (250, 2)]
DECODER_DIMS = [(2, 250), (250, 500), (500, 1000), (1000, 28 * 28)]
LAYER_DIMS = ENCODER_DIMS + DECODER_DIMS
N_LAYERS = len(LAYER_DIMS)
MID_LAYER = len(ENCODER_DIMS) - 1  # encoder's final Linear (250 -> 2), no activation


def _round_up(x, m):
    return (x + m - 1) // m * m


def _padded_dims():
    """Per-layer padded (Kp, Np).

    Layer 0's contraction dim stays 784 (already 16-aligned for bf16 sublanes);
    every later Kp equals the previous layer's padded Np so activations chain in
    padded width with no per-layer pad/slice.  All Np are 128-multiples.
    """
    dims = []
    prev_np = LAYER_DIMS[0][0]          # 784, used as-is
    for (_, n) in LAYER_DIMS:
        kp = prev_np
        np_ = _round_up(n, LANE)
        dims.append((kp, np_))
        prev_np = np_
    return dims


PADDED_DIMS = _padded_dims()
TILE_M = 256                            # batch tile (multiple of 256 for v6e/v7x MXU)


# ----------------------------------------------------------------------------
# Fused kernel: 8 x (matmul + bias [+ LeakyReLU]) for one batch tile.
# refs = (x, w1, b1, ..., w8, b8, mid_out, out)
# Weights are bf16 and resident across grid steps; math accumulates in f32.
# ----------------------------------------------------------------------------
def _fused_autoencoder_kernel(*refs, n_layers, mid_layer):
    x_ref = refs[0]
    wb_refs = refs[1:1 + 2 * n_layers]
    mid_ref, out_ref = refs[1 + 2 * n_layers:]

    h = x_ref[...]                                   # (tile_m, 784) f32
    for i in range(n_layers):                        # static Python unroll
        w = wb_refs[2 * i][...]                      # (Kp, Np) bf16, VMEM-resident
        b = wb_refs[2 * i + 1][...]                  # (1, Np)  f32 -> broadcasts
        # Cast the (small) activation to bf16; weight is already bf16.
        h = jnp.dot(h.astype(jnp.bfloat16), w,
                    preferred_element_type=jnp.float32) + b
        if i == mid_layer:
            # encoder output: no activation, also fed straight into the decoder
            mid_ref[...] = h
        elif i < n_layers - 1:
            # LeakyReLU, PyTorch default negative_slope = 0.01 (kept in f32)
            h = jnp.where(h > 0, h, 0.01 * h)
    out_ref[...] = h


# ----------------------------------------------------------------------------
# Parameter construction (deterministic, PyTorch-nn.Linear-style uniform init)
# ----------------------------------------------------------------------------
def init_params(key):
    params = {"encoder": [], "decoder": []}
    for name, dims in (("encoder", ENCODER_DIMS), ("decoder", DECODER_DIMS)):
        for (fan_in, fan_out) in dims:
            key, kw, kb = jax.random.split(key, 3)
            bound = 1.0 / jnp.sqrt(jnp.float32(fan_in))
            w = jax.random.uniform(kw, (fan_in, fan_out), jnp.float32,
                                   minval=-bound, maxval=bound)
            b = jax.random.uniform(kb, (fan_out,), jnp.float32,
                                   minval=-bound, maxval=bound)
            params[name].append((w, b))
    return params


def pack_params(params):
    """Zero-pad weights/biases to the chained padded shapes ONCE; weights -> bf16."""
    flat = []
    raw = params["encoder"] + params["decoder"]
    for (w, b), (kp, np_) in zip(raw, PADDED_DIMS):
        k, n = w.shape
        w_p = (jnp.zeros((kp, np_), jnp.float32).at[:k, :n].set(w)
               .astype(jnp.bfloat16))                       # bf16 weights
        b_p = jnp.zeros((1, np_), jnp.float32).at[0, :n].set(b)   # f32 biases
        flat += [w_p, b_p]
    return tuple(flat)


# ----------------------------------------------------------------------------
# Forward pass (mirrors deep_auto_encoder.forward): returns (mid, out)
# ----------------------------------------------------------------------------
@jax.jit
def deep_auto_encoder_forward(packed_params, x):
    M, D_in = x.shape
    assert D_in == LAYER_DIMS[0][0]

    # Batch tiling: one sublane-aligned tile for tiny batches, TILE_M otherwise.
    if M <= TILE_M:
        tile_m = _round_up(M, SUBLANE)
        Mp = tile_m
    else:
        tile_m = TILE_M
        Mp = _round_up(M, tile_m)
    grid_m = Mp // tile_m

    mid_dim = LAYER_DIMS[MID_LAYER][1]
    out_dim = LAYER_DIMS[-1][1]
    mid_pad = PADDED_DIMS[MID_LAYER][1]
    out_pad = PADDED_DIMS[-1][1]

    # Only batch rows need padding (feature dim 784 stays unpadded).
    x_p = x if Mp == M else jnp.zeros((Mp, D_in), jnp.float32).at[:M].set(x)
    x_p = x_p.astype(jnp.float32)

    # Block specs: x / mid / out tiled over the batch grid; every weight/bias
    # uses a constant index_map so it is DMA'd once and stays VMEM-resident.
    in_specs = [pl.BlockSpec((tile_m, D_in), lambda i: (i, 0))]
    for (kp, np_) in PADDED_DIMS:
        in_specs.append(pl.BlockSpec((kp, np_), lambda i: (0, 0)))   # weight
        in_specs.append(pl.BlockSpec((1, np_), lambda i: (0, 0)))    # bias
    out_specs = (pl.BlockSpec((tile_m, mid_pad), lambda i: (i, 0)),
                 pl.BlockSpec((tile_m, out_pad), lambda i: (i, 0)))

    kernel = functools.partial(_fused_autoencoder_kernel,
                               n_layers=N_LAYERS, mid_layer=MID_LAYER)

    weight_elems = sum(kp * np_ for kp, np_ in PADDED_DIMS)
    bias_elems = sum(np_ for _, np_ in PADDED_DIMS)
    flops = 2 * Mp * weight_elems
    bytes_accessed = (2 * weight_elems                      # bf16 weights (once)
                      + 4 * bias_elems                      # f32 biases
                      + 4 * Mp * (D_in + mid_pad + out_pad))  # x + mid + out

    mid_p, out_p = pl.pallas_call(
        kernel,
        grid=(grid_m,),
        in_specs=in_specs,
        out_specs=out_specs,
        out_shape=(jax.ShapeDtypeStruct((Mp, mid_pad), jnp.float32),
                   jax.ShapeDtypeStruct((Mp, out_pad), jnp.float32)),
        compiler_params=pltpu.CompilerParams(
            # Shard batch tiles across v7x's two TensorCores only when the
            # kernel is compute-bound; tiny batches are weight-DMA-bound and
            # would just duplicate the weight fetch per core.
            dimension_semantics=(("parallel",) if M >= 512 else ("arbitrary",)),
            # bf16 weights (~6.2 MiB; ~12.3 MiB double-buffered) + pipelined
            # activation tiles: 48 MiB clears v5e/v6e scoped defaults and fits
            # under v7x's 64 MiB physical VMEM.
            vmem_limit_bytes=48 << 20,
        ),
        cost_estimate=pl.CostEstimate(flops=flops, transcendentals=0,
                                      bytes_accessed=bytes_accessed),
    )(x_p, *packed_params)

    return mid_p[:M, :mid_dim], out_p[:M, :out_dim]


# ----------------------------------------------------------------------------
# Pure-JAX reference with matching numerics (bf16 matmul operands, f32 accum)
# ----------------------------------------------------------------------------
def reference_forward(params, x):
    def lrelu(v):
        return jnp.where(v > 0, v, 0.01 * v)

    def bf16_matmul(h, w):
        return jnp.dot(h.astype(jnp.bfloat16), w.astype(jnp.bfloat16),
                       preferred_element_type=jnp.float32)

    h = x
    enc = params["encoder"]
    for i, (w, b) in enumerate(enc):
        h = bf16_matmul(h, w) + b
        if i < len(enc) - 1:
            h = lrelu(h)
    mid = h
    dec = params["decoder"]
    for i, (w, b) in enumerate(dec):
        h = bf16_matmul(h, w) + b
        if i < len(dec) - 1:
            h = lrelu(h)
    return mid, h


if __name__ == "__main__":
    key = jax.random.PRNGKey(0)
    key, kx = jax.random.split(key)

    params = init_params(key)
    packed = pack_params(params)   # pad + bf16-convert once, reuse every forward

    # --- small batch (single grid step) ---
    batch = 2
    x = jax.random.normal(kx, (batch, 28 * 28), jnp.float32)

    mid, out = deep_auto_encoder_forward(packed, x)
    mid = jax.block_until_ready(mid)
    out = jax.block_until_ready(out)

    assert mid.shape == (batch, 2), mid.shape
    assert out.shape == (batch, 28 * 28), out.shape

    mid_ref, out_ref = reference_forward(params, x)
    assert jnp.allclose(mid, mid_ref, atol=1e-2, rtol=1e-2), \
        float(jnp.max(jnp.abs(mid - mid_ref)))
    assert jnp.allclose(out, out_ref, atol=1e-2, rtol=1e-2), \
        float(jnp.max(jnp.abs(out - out_ref)))

    # --- larger batch: exercises the batch grid + "parallel" semantics path ---
    key, kx2 = jax.random.split(key)
    batch2 = 512
    x2 = jax.random.normal(kx2, (batch2, 28 * 28), jnp.float32)

    mid2, out2 = deep_auto_encoder_forward(packed, x2)
    mid2 = jax.block_until_ready(mid2)
    out2 = jax.block_until_ready(out2)

    mid2_ref, out2_ref = reference_forward(params, x2)
    assert mid2.shape == (batch2, 2) and out2.shape == (batch2, 28 * 28)
    assert jnp.allclose(mid2, mid2_ref, atol=1e-2, rtol=1e-2)
    assert jnp.allclose(out2, out2_ref, atol=1e-2, rtol=1e-2)

    print("KERNEL_OK")
</pallas_src>

<mosaic_0001>
module attributes {stable_mosaic.version = 11 : i64} {
  func.func @_fused_autoencoder_kernel(%arg0: i32, %arg1: memref<8x784xf32, #tpu.memory_space<vmem>>, %arg2: memref<784x1024xbf16, #tpu.memory_space<vmem>>, %arg3: memref<1x1024xf32, #tpu.memory_space<vmem>>, %arg4: memref<1024x512xbf16, #tpu.memory_space<vmem>>, %arg5: memref<1x512xf32, #tpu.memory_space<vmem>>, %arg6: memref<512x256xbf16, #tpu.memory_space<vmem>>, %arg7: memref<1x256xf32, #tpu.memory_space<vmem>>, %arg8: memref<256x128xbf16, #tpu.memory_space<vmem>>, %arg9: memref<1x128xf32, #tpu.memory_space<vmem>>, %arg10: memref<128x256xbf16, #tpu.memory_space<vmem>>, %arg11: memref<1x256xf32, #tpu.memory_space<vmem>>, %arg12: memref<256x512xbf16, #tpu.memory_space<vmem>>, %arg13: memref<1x512xf32, #tpu.memory_space<vmem>>, %arg14: memref<512x1024xbf16, #tpu.memory_space<vmem>>, %arg15: memref<1x1024xf32, #tpu.memory_space<vmem>>, %arg16: memref<1024x896xbf16, #tpu.memory_space<vmem>>, %arg17: memref<1x896xf32, #tpu.memory_space<vmem>>, %arg18: memref<8x128xf32, #tpu.memory_space<vmem>>, %arg19: memref<8x896xf32, #tpu.memory_space<vmem>>) attributes {dimension_semantics = [#tpu.dimension_semantics<arbitrary>], iteration_bounds = array<i64: 1>, scalar_prefetch = 0 : i64, scratch_operands = 0 : i64, tpu.core_type = #tpu.core_type<tc>, window_params = [{transform_indices = @transform_0, window_bounds = array<i64: 8, 784>}, {pipeline_mode = #tpu.pipeline_mode<synchronous>, transform_indices = @transform_1, window_bounds = array<i64: 784, 1024>}, {pipeline_mode = #tpu.pipeline_mode<synchronous>, transform_indices = @transform_2, window_bounds = array<i64: 1, 1024>}, {pipeline_mode = #tpu.pipeline_mode<synchronous>, transform_indices = @transform_3, window_bounds = array<i64: 1024, 512>}, {pipeline_mode = #tpu.pipeline_mode<synchronous>, transform_indices = @transform_4, window_bounds = array<i64: 1, 512>}, {pipeline_mode = #tpu.pipeline_mode<synchronous>, transform_indices = @transform_5, window_bounds = array<i64: 512, 256>}, {pipeline_mode = #tpu.pipeline_mode<synchronous>, transform_indices = @transform_6, window_bounds = array<i64: 1, 256>}, {pipeline_mode = #tpu.pipeline_mode<synchronous>, transform_indices = @transform_7, window_bounds = array<i64: 256, 128>}, {pipeline_mode = #tpu.pipeline_mode<synchronous>, transform_indices = @transform_8, window_bounds = array<i64: 1, 128>}, {pipeline_mode = #tpu.pipeline_mode<synchronous>, transform_indices = @transform_9, window_bounds = array<i64: 128, 256>}, {pipeline_mode = #tpu.pipeline_mode<synchronous>, transform_indices = @transform_10, window_bounds = array<i64: 1, 256>}, {pipeline_mode = #tpu.pipeline_mode<synchronous>, transform_indices = @transform_11, window_bounds = array<i64: 256, 512>}, {pipeline_mode = #tpu.pipeline_mode<synchronous>, transform_indices = @transform_12, window_bounds = array<i64: 1, 512>}, {pipeline_mode = #tpu.pipeline_mode<synchronous>, transform_indices = @transform_13, window_bounds = array<i64: 512, 1024>}, {pipeline_mode = #tpu.pipeline_mode<synchronous>, transform_indices = @transform_14, window_bounds = array<i64: 1, 1024>}, {pipeline_mode = #tpu.pipeline_mode<synchronous>, transform_indices = @transform_15, window_bounds = array<i64: 1024, 896>}, {pipeline_mode = #tpu.pipeline_mode<synchronous>, transform_indices = @transform_16, window_bounds = array<i64: 1, 896>}, {transform_indices = @transform_17, window_bounds = array<i64: 8, 128>}, {transform_indices = @transform_18, window_bounds = array<i64: 8, 896>}]} {
    %c0 = arith.constant 0 : index
    %c0_0 = arith.constant 0 : index
    %0 = vector.load %arg1[%c0, %c0_0] : memref<8x784xf32, #tpu.memory_space<vmem>>, vector<8x784xf32>
    %c0_1 = arith.constant 0 : index
    %c0_2 = arith.constant 0 : index
    %1 = vector.load %arg2[%c0_1, %c0_2] : memref<784x1024xbf16, #tpu.memory_space<vmem>>, vector<784x1024xbf16>
    %c0_3 = arith.constant 0 : index
    %c0_4 = arith.constant 0 : index
    %2 = vector.load %arg3[%c0_3, %c0_4] : memref<1x1024xf32, #tpu.memory_space<vmem>>, vector<1x1024xf32>
    %3 = arith.truncf %0 : vector<8x784xf32> to vector<8x784xbf16>
    %cst = arith.constant dense<0.000000e+00> : vector<8x1024xf32>
    %4 = tpu.matmul %3, %1, %cst {dimension_numbers = #tpu.dot_dimension_numbers<[1], [0], [0], [1], [0, 0, 1, 1], [], []>} : vector<8x784xbf16>, vector<784x1024xbf16>, vector<8x1024xf32> -> vector<8x1024xf32>
    %5 = vector.broadcast %2 : vector<1x1024xf32> to vector<8x1024xf32>
    %6 = arith.addf %4, %5 : vector<8x1024xf32>
    %cst_5 = arith.constant 0.000000e+00 : f32
    %7 = vector.broadcast %cst_5 : f32 to vector<8x1024xf32>
    %8 = arith.cmpf ogt, %6, %7 : vector<8x1024xf32>
    %cst_6 = arith.constant 0.00999999977 : f32
    %9 = vector.broadcast %cst_6 : f32 to vector<8x1024xf32>
    %10 = arith.mulf %9, %6 : vector<8x1024xf32>
    %11 = arith.select %8, %6, %10 : vector<8x1024xi1>, vector<8x1024xf32>
    %c0_7 = arith.constant 0 : index
    %c0_8 = arith.constant 0 : index
    %12 = vector.load %arg4[%c0_7, %c0_8] : memref<1024x512xbf16, #tpu.memory_space<vmem>>, vector<1024x512xbf16>
    %c0_9 = arith.constant 0 : index
    %c0_10 = arith.constant 0 : index
    %13 = vector.load %arg5[%c0_9, %c0_10] : memref<1x512xf32, #tpu.memory_space<vmem>>, vector<1x512xf32>
    %14 = arith.truncf %11 : vector<8x1024xf32> to vector<8x1024xbf16>
    %cst_11 = arith.constant dense<0.000000e+00> : vector<8x512xf32>
    %15 = tpu.matmul %14, %12, %cst_11 {dimension_numbers = #tpu.dot_dimension_numbers<[1], [0], [0], [1], [0, 0, 1, 1], [], []>} : vector<8x1024xbf16>, vector<1024x512xbf16>, vector<8x512xf32> -> vector<8x512xf32>
    %16 = vector.broadcast %13 : vector<1x512xf32> to vector<8x512xf32>
    %17 = arith.addf %15, %16 : vector<8x512xf32>
    %cst_12 = arith.constant 0.000000e+00 : f32
    %18 = vector.broadcast %cst_12 : f32 to vector<8x512xf32>
    %19 = arith.cmpf ogt, %17, %18 : vector<8x512xf32>
    %cst_13 = arith.constant 0.00999999977 : f32
    %20 = vector.broadcast %cst_13 : f32 to vector<8x512xf32>
    %21 = arith.mulf %20, %17 : vector<8x512xf32>
    %22 = arith.select %19, %17, %21 : vector<8x512xi1>, vector<8x512xf32>
    %c0_14 = arith.constant 0 : index
    %c0_15 = arith.constant 0 : index
    %23 = vector.load %arg6[%c0_14, %c0_15] : memref<512x256xbf16, #tpu.memory_space<vmem>>, vector<512x256xbf16>
    %c0_16 = arith.constant 0 : index
    %c0_17 = arith.constant 0 : index
    %24 = vector.load %arg7[%c0_16, %c0_17] : memref<1x256xf32, #tpu.memory_space<vmem>>, vector<1x256xf32>
    %25 = arith.truncf %22 : vector<8x512xf32> to vector<8x512xbf16>
    %cst_18 = arith.constant dense<0.000000e+00> : vector<8x256xf32>
    %26 = tpu.matmul %25, %23, %cst_18 {dimension_numbers = #tpu.dot_dimension_numbers<[1], [0], [0], [1], [0, 0, 1, 1], [], []>} : vector<8x512xbf16>, vector<512x256xbf16>, vector<8x256xf32> -> vector<8x256xf32>
    %27 = vector.broadcast %24 : vector<1x256xf32> to vector<8x256xf32>
    %28 = arith.addf %26, %27 : vector<8x256xf32>
    %cst_19 = arith.constant 0.000000e+00 : f32
    %29 = vector.broadcast %cst_19 : f32 to vector<8x256xf32>
    %30 = arith.cmpf ogt, %28, %29 : vector<8x256xf32>
    %cst_20 = arith.constant 0.00999999977 : f32
    %31 = vector.broadcast %cst_20 : f32 to vector<8x256xf32>
    %32 = arith.mulf %31, %28 : vector<8x256xf32>
    %33 = arith.select %30, %28, %32 : vector<8x256xi1>, vector<8x256xf32>
    %c0_21 = arith.constant 0 : index
    %c0_22 = arith.constant 0 : index
    %34 = vector.load %arg8[%c0_21, %c0_22] : memref<256x128xbf16, #tpu.memory_space<vmem>>, vector<256x128xbf16>
    %c0_23 = arith.constant 0 : index
    %c0_24 = arith.constant 0 : index
    %35 = vector.load %arg9[%c0_23, %c0_24] : memref<1x128xf32, #tpu.memory_space<vmem>>, vector<1x128xf32>
    %36 = arith.truncf %33 : vector<8x256xf32> to vector<8x256xbf16>
    %cst_25 = arith.constant dense<0.000000e+00> : vector<8x128xf32>
    %37 = tpu.matmul %36, %34, %cst_25 {dimension_numbers = #tpu.dot_dimension_numbers<[1], [0], [0], [1], [0, 0, 1, 1], [], []>} : vector<8x256xbf16>, vector<256x128xbf16>, vector<8x128xf32> -> vector<8x128xf32>
    %38 = vector.broadcast %35 : vector<1x128xf32> to vector<8x128xf32>
    %39 = arith.addf %37, %38 : vector<8x128xf32>
    %c0_26 = arith.constant 0 : index
    %c0_27 = arith.constant 0 : index
    %40 = vector.load %arg18[%c0_26, %c0_27] : memref<8x128xf32, #tpu.memory_space<vmem>>, vector<8x128xf32>
    tpu.vector_store %arg18[%c0_26, %c0_27], %39 {strides = array<i32>} : memref<8x128xf32, #tpu.memory_space<vmem>>, vector<8x128xf32>,
    %c0_28 = arith.constant 0 : index
    %c0_29 = arith.constant 0 : index
    %41 = vector.load %arg10[%c0_28, %c0_29] : memref<128x256xbf16, #tpu.memory_space<vmem>>, vector<128x256xbf16>
    %c0_30 = arith.constant 0 : index
    %c0_31 = arith.constant 0 : index
    %42 = vector.load %arg11[%c0_30, %c0_31] : memref<1x256xf32, #tpu.memory_space<vmem>>, vector<1x256xf32>
    %43 = arith.truncf %39 : vector<8x128xf32> to vector<8x128xbf16>
    %cst_32 = arith.constant dense<0.000000e+00> : vector<8x256xf32>
    %44 = tpu.matmul %43, %41, %cst_32 {dimension_numbers = #tpu.dot_dimension_numbers<[1], [0], [0], [1], [0, 0, 1, 1], [], []>} : vector<8x128xbf16>, vector<128x256xbf16>, vector<8x256xf32> -> vector<8x256xf32>
    %45 = vector.broadcast %42 : vector<1x256xf32> to vector<8x256xf32>
    %46 = arith.addf %44, %45 : vector<8x256xf32>
    %cst_33 = arith.constant 0.000000e+00 : f32
    %47 = vector.broadcast %cst_33 : f32 to vector<8x256xf32>
    %48 = arith.cmpf ogt, %46, %47 : vector<8x256xf32>
    %cst_34 = arith.constant 0.00999999977 : f32
    %49 = vector.broadcast %cst_34 : f32 to vector<8x256xf32>
    %50 = arith.mulf %49, %46 : vector<8x256xf32>
    %51 = arith.select %48, %46, %50 : vector<8x256xi1>, vector<8x256xf32>
    %c0_35 = arith.constant 0 : index
    %c0_36 = arith.constant 0 : index
    %52 = vector.load %arg12[%c0_35, %c0_36] : memref<256x512xbf16, #tpu.memory_space<vmem>>, vector<256x512xbf16>
    %c0_37 = arith.constant 0 : index
    %c0_38 = arith.constant 0 : index
    %53 = vector.load %arg13[%c0_37, %c0_38] : memref<1x512xf32, #tpu.memory_space<vmem>>, vector<1x512xf32>
    %54 = arith.truncf %51 : vector<8x256xf32> to vector<8x256xbf16>
    %cst_39 = arith.constant dense<0.000000e+00> : vector<8x512xf32>
    %55 = tpu.matmul %54, %52, %cst_39 {dimension_numbers = #tpu.dot_dimension_numbers<[1], [0], [0], [1], [0, 0, 1, 1], [], []>} : vector<8x256xbf16>, vector<256x512xbf16>, vector<8x512xf32> -> vector<8x512xf32>
    %56 = vector.broadcast %53 : vector<1x512xf32> to vector<8x512xf32>
    %57 = arith.addf %55, %56 : vector<8x512xf32>
    %cst_40 = arith.constant 0.000000e+00 : f32
    %58 = vector.broadcast %cst_40 : f32 to vector<8x512xf32>
    %59 = arith.cmpf ogt, %57, %58 : vector<8x512xf32>
    %cst_41 = arith.constant 0.00999999977 : f32
    %60 = vector.broadcast %cst_41 : f32 to vector<8x512xf32>
    %61 = arith.mulf %60, %57 : vector<8x512xf32>
    %62 = arith.select %59, %57, %61 : vector<8x512xi1>, vector<8x512xf32>
    %c0_42 = arith.constant 0 : index
    %c0_43 = arith.constant 0 : index
    %63 = vector.load %arg14[%c0_42, %c0_43] : memref<512x1024xbf16, #tpu.memory_space<vmem>>, vector<512x1024xbf16>
    %c0_44 = arith.constant 0 : index
    %c0_45 = arith.constant 0 : index
    %64 = vector.load %arg15[%c0_44, %c0_45] : memref<1x1024xf32, #tpu.memory_space<vmem>>, vector<1x1024xf32>
    %65 = arith.truncf %62 : vector<8x512xf32> to vector<8x512xbf16>
    %cst_46 = arith.constant dense<0.000000e+00> : vector<8x1024xf32>
    %66 = tpu.matmul %65, %63, %cst_46 {dimension_numbers = #tpu.dot_dimension_numbers<[1], [0], [0], [1], [0, 0, 1, 1], [], []>} : vector<8x512xbf16>, vector<512x1024xbf16>, vector<8x1024xf32> -> vector<8x1024xf32>
    %67 = vector.broadcast %64 : vector<1x1024xf32> to vector<8x1024xf32>
    %68 = arith.addf %66, %67 : vector<8x1024xf32>
    %cst_47 = arith.constant 0.000000e+00 : f32
    %69 = vector.broadcast %cst_47 : f32 to vector<8x1024xf32>
    %70 = arith.cmpf ogt, %68, %69 : vector<8x1024xf32>
    %cst_48 = arith.constant 0.00999999977 : f32
    %71 = vector.broadcast %cst_48 : f32 to vector<8x1024xf32>
    %72 = arith.mulf %71, %68 : vector<8x1024xf32>
    %73 = arith.select %70, %68, %72 : vector<8x1024xi1>, vector<8x1024xf32>
    %c0_49 = arith.constant 0 : index
    %c0_50 = arith.constant 0 : index
    %74 = vector.load %arg16[%c0_49, %c0_50] : memref<1024x896xbf16, #tpu.memory_space<vmem>>, vector<1024x896xbf16>
    %c0_51 = arith.constant 0 : index
    %c0_52 = arith.constant 0 : index
    %75 = vector.load %arg17[%c0_51, %c0_52] : memref<1x896xf32, #tpu.memory_space<vmem>>, vector<1x896xf32>
    %76 = arith.truncf %73 : vector<8x1024xf32> to vector<8x1024xbf16>
    %cst_53 = arith.constant dense<0.000000e+00> : vector<8x896xf32>
    %77 = tpu.matmul %76, %74, %cst_53 {dimension_numbers = #tpu.dot_dimension_numbers<[1], [0], [0], [1], [0, 0, 1, 1], [], []>} : vector<8x1024xbf16>, vector<1024x896xbf16>, vector<8x896xf32> -> vector<8x896xf32>
    %78 = vector.broadcast %75 : vector<1x896xf32> to vector<8x896xf32>
    %79 = arith.addf %77, %78 : vector<8x896xf32>
    %c0_54 = arith.constant 0 : index
    %c0_55 = arith.constant 0 : index
    %80 = vector.load %arg19[%c0_54, %c0_55] : memref<8x896xf32, #tpu.memory_space<vmem>>, vector<8x896xf32>
    tpu.vector_store %arg19[%c0_54, %c0_55], %79 {strides = array<i32>} : memref<8x896xf32, #tpu.memory_space<vmem>>, vector<8x896xf32>,
    return
  }
  func.func @transform_0(%arg0: i32) -> (i32, i32) {
    %c0_i32 = arith.constant 0 : i32
    %c0_i32_0 = arith.constant 0 : i32
    return %arg0, %c0_i32 : i32, i32
  }
  func.func @transform_1(%arg0: i32) -> (i32, i32) {
    %c0_i32 = arith.constant 0 : i32
    %c0_i32_0 = arith.constant 0 : i32
    %c0_i32_1 = arith.constant 0 : i32
    return %c0_i32, %c0_i32_0 : i32, i32
  }
  func.func @transform_2(%arg0: i32) -> (i32, i32) {
    %c0_i32 = arith.constant 0 : i32
    %c0_i32_0 = arith.constant 0 : i32
    %c0_i32_1 = arith.constant 0 : i32
    return %c0_i32, %c0_i32_0 : i32, i32
  }
  func.func @transform_3(%arg0: i32) -> (i32, i32) {
    %c0_i32 = arith.constant 0 : i32
    %c0_i32_0 = arith.constant 0 : i32
    %c0_i32_1 = arith.constant 0 : i32
    return %c0_i32, %c0_i32_0 : i32, i32
  }
  func.func @transform_4(%arg0: i32) -> (i32, i32) {
    %c0_i32 = arith.constant 0 : i32
    %c0_i32_0 = arith.constant 0 : i32
    %c0_i32_1 = arith.constant 0 : i32
    return %c0_i32, %c0_i32_0 : i32, i32
  }
  func.func @transform_5(%arg0: i32) -> (i32, i32) {
    %c0_i32 = arith.constant 0 : i32
    %c0_i32_0 = arith.constant 0 : i32
    %c0_i32_1 = arith.constant 0 : i32
    return %c0_i32, %c0_i32_0 : i32, i32
  }
  func.func @transform_6(%arg0: i32) -> (i32, i32) {
    %c0_i32 = arith.constant 0 : i32
    %c0_i32_0 = arith.constant 0 : i32
    %c0_i32_1 = arith.constant 0 : i32
    return %c0_i32, %c0_i32_0 : i32, i32
  }
  func.func @transform_7(%arg0: i32) -> (i32, i32) {
    %c0_i32 = arith.constant 0 : i32
    %c0_i32_0 = arith.constant 0 : i32
    %c0_i32_1 = arith.constant 0 : i32
    return %c0_i32, %c0_i32_0 : i32, i32
  }
  func.func @transform_8(%arg0: i32) -> (i32, i32) {
    %c0_i32 = arith.constant 0 : i32
    %c0_i32_0 = arith.constant 0 : i32
    %c0_i32_1 = arith.constant 0 : i32
    return %c0_i32, %c0_i32_0 : i32, i32
  }
  func.func @transform_9(%arg0: i32) -> (i32, i32) {
    %c0_i32 = arith.constant 0 : i32
    %c0_i32_0 = arith.constant 0 : i32
    %c0_i32_1 = arith.constant 0 : i32
    return %c0_i32, %c0_i32_0 : i32, i32
  }
  func.func @transform_10(%arg0: i32) -> (i32, i32) {
    %c0_i32 = arith.constant 0 : i32
    %c0_i32_0 = arith.constant 0 : i32
    %c0_i32_1 = arith.constant 0 : i32
    return %c0_i32, %c0_i32_0 : i32, i32
  }
  func.func @transform_11(%arg0: i32) -> (i32, i32) {
    %c0_i32 = arith.constant 0 : i32
    %c0_i32_0 = arith.constant 0 : i32
    %c0_i32_1 = arith.constant 0 : i32
    return %c0_i32, %c0_i32_0 : i32, i32
  }
  func.func @transform_12(%arg0: i32) -> (i32, i32) {
    %c0_i32 = arith.constant 0 : i32
    %c0_i32_0 = arith.constant 0 : i32
    %c0_i32_1 = arith.constant 0 : i32
    return %c0_i32, %c0_i32_0 : i32, i32
  }
  func.func @transform_13(%arg0: i32) -> (i32, i32) {
    %c0_i32 = arith.constant 0 : i32
    %c0_i32_0 = arith.constant 0 : i32
    %c0_i32_1 = arith.constant 0 : i32
    return %c0_i32, %c0_i32_0 : i32, i32
  }
  func.func @transform_14(%arg0: i32) -> (i32, i32) {
    %c0_i32 = arith.constant 0 : i32
    %c0_i32_0 = arith.constant 0 : i32
    %c0_i32_1 = arith.constant 0 : i32
    return %c0_i32, %c0_i32_0 : i32, i32
  }
  func.func @transform_15(%arg0: i32) -> (i32, i32) {
    %c0_i32 = arith.constant 0 : i32
    %c0_i32_0 = arith.constant 0 : i32
    %c0_i32_1 = arith.constant 0 : i32
    return %c0_i32, %c0_i32_0 : i32, i32
  }
  func.func @transform_16(%arg0: i32) -> (i32, i32) {
    %c0_i32 = arith.constant 0 : i32
    %c0_i32_0 = arith.constant 0 : i32
    %c0_i32_1 = arith.constant 0 : i32
    return %c0_i32, %c0_i32_0 : i32, i32
  }
  func.func @transform_17(%arg0: i32) -> (i32, i32) {
    %c0_i32 = arith.constant 0 : i32
    %c0_i32_0 = arith.constant 0 : i32
    return %arg0, %c0_i32 : i32, i32
  }
  func.func @transform_18(%arg0: i32) -> (i32, i32) {
    %c0_i32 = arith.constant 0 : i32
    %c0_i32_0 = arith.constant 0 : i32
    return %arg0, %c0_i32 : i32, i32
  }
}

</mosaic_0001>

<llo_original>
// kernel: deep_auto_encoder_forward.1
$region0: #{deep_auto_encoder_forward.1}
  #allocation0 [shape = 'u32[]', space=smem, size = 0x4, offset = 0x4, fixed_abs, tag = 'smem constant byte address 0x4 - core index']
  #allocation1 [shape = 'u32[144,128]{1,0:T(1,128)}', space=vmem, size = 0x12000, scoped, tag = 'internal scratch']
  %s0 = inlined_call_operand.vmem [shape: f32[8,784], index: 0, kind: input, shape index: {}]
  %s1 = inlined_call_operand.hbm [shape: bf16[784,1024], index: 1, kind: input, shape index: {}]
  %s2 = inlined_call_operand.hbm [shape: f32[1,1024], index: 2, kind: input, shape index: {}]
  %s3 = inlined_call_operand.hbm [shape: bf16[1024,512], index: 3, kind: input, shape index: {}]
  %s4 = inlined_call_operand.hbm [shape: f32[1,512], index: 4, kind: input, shape index: {}]
  %s5 = inlined_call_operand.hbm [shape: bf16[512,256], index: 5, kind: input, shape index: {}]
  %s6 = inlined_call_operand.hbm [shape: f32[1,256], index: 6, kind: input, shape index: {}]
  %s7 = inlined_call_operand.hbm [shape: bf16[256,128], index: 7, kind: input, shape index: {}]
  %s8 = inlined_call_operand.hbm [shape: f32[1,128], index: 8, kind: input, shape index: {}]
  %s9 = inlined_call_operand.hbm [shape: bf16[128,256], index: 9, kind: input, shape index: {}]
  %s10 = inlined_call_operand.hbm [shape: f32[1,256], index: 10, kind: input, shape index: {}]
  %s11 = inlined_call_operand.hbm [shape: bf16[256,512], index: 11, kind: input, shape index: {}]
  %s12 = inlined_call_operand.hbm [shape: f32[1,512], index: 12, kind: input, shape index: {}]
  %s13 = inlined_call_operand.hbm [shape: bf16[512,1024], index: 13, kind: input, shape index: {}]
  %s14 = inlined_call_operand.hbm [shape: f32[1,1024], index: 14, kind: input, shape index: {}]
  %s15 = inlined_call_operand.hbm [shape: bf16[1024,896], index: 15, kind: input, shape index: {}]
  %s16 = inlined_call_operand.hbm [shape: f32[1,896], index: 16, kind: input, shape index: {}]
  %s17 = inlined_call_operand.vmem [shape: f32[8,128], index: 17, kind: output, shape index: {0}]
  %s18 = inlined_call_operand.vmem [shape: f32[8,896], index: 18, kind: output, shape index: {1}]
  %19 = xla_tuple %s17, %s18
  %s20 = sld [smem:[#allocation0]]
  $region150: #{deep_auto_encoder_forward.1} parent=0
    _
  %s22 = ssub.s32 1, %s20
  %s23 = scalar_select 0, %s22, %s20
  $region1: #{deep_auto_encoder_forward.1} parent=0
    #allocation2 [shape = 'u8[1605632]{0}', space=vmem, size = 0x188000, scoped, tag = 'input window, operand 1, single buffered']
    #allocation3 [shape = 's32[1]{0}', space=sflag, size = 0x4, scoped, tag = 'scoped memory for deep_auto_encoder_forward.1']
    #allocation4 [shape = 'u8[4096]{0}', space=vmem, size = 0x1000, scoped, tag = 'input window, operand 2, single buffered']
    #allocation5 [shape = 's32[1]{0}', space=sflag, size = 0x4, scoped, tag = 'scoped memory for deep_auto_encoder_forward.1']
    #allocation6 [shape = 'u8[1048576]{0}', space=vmem, size = 0x100000, scoped, tag = 'input window, operand 3, single buffered']
    #allocation7 [shape = 'u8[2048]{0}', space=vmem, size = 0x800, scoped, tag = 'input window, operand 4, single buffered']
    #allocation8 [shape = 's32[1]{0}', space=sflag, size = 0x4, scoped, tag = 'scoped memory for deep_auto_encoder_forward.1']
    #allocation9 [shape = 'u8[262144]{0}', space=vmem, size = 0x40000, scoped, tag = 'input window, operand 5, single buffered']
    #allocation10 [shape = 'u8[1024]{0}', space=vmem, size = 0x400, scoped, tag = 'input window, operand 6, single buffered']
    #allocation11 [shape = 's32[1]{0}', space=sflag, size = 0x4, scoped, tag = 'scoped memory for deep_auto_encoder_forward.1']
    #allocation12 [shape = 'u8[65536]{0}', space=vmem, size = 0x10000, scoped, tag = 'input window, operand 7, single buffered']
    #allocation13 [shape = 'u8[512]{0}', space=vmem, size = 0x400, scoped, tag = 'input window, operand 8, single buffered']
    #allocation14 [shape = 's32[1]{0}', space=sflag, size = 0x4, scoped, tag = 'scoped memory for deep_auto_encoder_forward.1']
    #allocation15 [shape = 'u8[65536]{0}', space=vmem, size = 0x10000, scoped, tag = 'input window, operand 9, single buffered']
    #allocation16 [shape = 'u8[1024]{0}', space=vmem, size = 0x400, scoped, tag = 'input window, operand 10, single buffered']
    #allocation17 [shape = 's32[1]{0}', space=sflag, size = 0x4, scoped, tag = 'scoped memory for deep_auto_encoder_forward.1']
    #allocation18 [shape = 'u8[262144]{0}', space=vmem, size = 0x40000, scoped, tag = 'input window, operand 11, single buffered']
    #allocation19 [shape = 'u8[2048]{0}', space=vmem, size = 0x800, scoped, tag = 'input window, operand 12, single buffered']
    #allocation20 [shape = 's32[1]{0}', space=sflag, size = 0x4, scoped, tag = 'scoped memory for deep_auto_encoder_forward.1']
    #allocation21 [shape = 'u8[1048576]{0}', space=vmem, size = 0x100000, scoped, tag = 'input window, operand 13, single buffered']
    #allocation22 [shape = 'u8[4096]{0}', space=vmem, size = 0x1000, scoped, tag = 'input window, operand 14, single buffered']
    #allocation23 [shape = 's32[1]{0}', space=sflag, size = 0x4, scoped, tag = 'scoped memory for deep_auto_encoder_forward.1']
    #allocation24 [shape = 'u8[1835008]{0}', space=vmem, size = 0x1c0000, scoped, tag = 'input window, operand 15, single buffered']
    #allocation25 [shape = 'u8[3584]{0}', space=vmem, size = 0x1000, scoped, tag = 'input window, operand 16, single buffered']
    #allocation26 [shape = 's32[1]{0}', space=sflag, size = 0x4, scoped, tag = 'scoped memory for deep_auto_encoder_forward.1']
    %24 = vsyncpa [#allocation3], 0
    %25 = vsyncpa [#allocation5], 0
    %26 = vsyncpa [#allocation8], 0
    %27 = vsyncpa [#allocation11], 0
    %28 = vsyncpa [#allocation14], 0
    %29 = vsyncpa [#allocation17], 0
    %30 = vsyncpa [#allocation20], 0
    %31 = vsyncpa [#allocation23], 0
    %32 = vsyncpa [#allocation26], 0
    // Predicated region
    $region2: #{deep_auto_encoder_forward.1} parent=1 // pred_check
      _
    $region3: #{deep_auto_encoder_forward.1} parent=1 // pred_check_branch
      %34 = sbr.rel (0) target = $region5
    $region4: #{deep_auto_encoder_forward.1} parent=1 // pred_region
      _
    $region5: #{deep_auto_encoder_forward.1} parent=1 // pred_fallthru
      _
    // Predicated region
    $region6: #{deep_auto_encoder_forward.1} parent=1 // pred_check
      _
    $region7: #{deep_auto_encoder_forward.1} parent=1 // pred_check_branch
      %36 = sbr.rel (0) target = $region9
    $region8: #{deep_auto_encoder_forward.1} parent=1 // pred_region
      %s38 = ssub.s32 50176, 50176
      %39 = vsyncadd [#allocation3], %s38
      %s40 = sshll.u32 [#allocation2], 4
      %s41 = int_to_ptr.vmem [resolvable:$true] %s40
      %46 = dma.hbm_to_vmem [thread:$0]  %s1, 50176, %s41, [#allocation3], 512, 512, 32
    $region9: #{deep_auto_encoder_forward.1} parent=1 // pred_fallthru
      _
    // Predicated region
    $region10: #{deep_auto_encoder_forward.1} parent=1 // pred_check
      _
    $region11: #{deep_auto_encoder_forward.1} parent=1 // pred_check_branch
      %48 = sbr.rel (0) target = $region13
    $region12: #{deep_auto_encoder_forward.1} parent=1 // pred_region
      %s50 = ssub.s32 128, 128
      %51 = vsyncadd [#allocation5], %s50
      %s53 = sshll.u32 [#allocation4], 4
      %s54 = int_to_ptr.vmem [resolvable:$true] %s53
      %56 = dma.hbm_to_vmem [thread:$0]  %s2, 128, %s54, [#allocation5]
    $region13: #{deep_auto_encoder_forward.1} parent=1 // pred_fallthru
      _
    // Predicated region
    $region14: #{deep_auto_encoder_forward.1} parent=1 // pred_check
      _
    $region15: #{deep_auto_encoder_forward.1} parent=1 // pred_check_branch
      %58 = sbr.rel (0) target = $region17
    $region16: #{deep_auto_encoder_forward.1} parent=1 // pred_region
      %s60 = ssub.s32 32768, 32768
      %61 = vsyncadd [#allocation5], %s60
      %s62 = sshll.u32 [#allocation6], 4
      %s63 = int_to_ptr.vmem [resolvable:$true] %s62
      %68 = dma.hbm_to_vmem [thread:$0]  %s3, 32768, %s63, [#allocation5], 256, 256, 16
    $region17: #{deep_auto_encoder_forward.1} parent=1 // pred_fallthru
      _
    // Predicated region
    $region18: #{deep_auto_encoder_forward.1} parent=1 // pred_check
      _
    $region19: #{deep_auto_encoder_forward.1} parent=1 // pred_check_branch
      %70 = sbr.rel (0) target = $region21
    $region20: #{deep_auto_encoder_forward.1} parent=1 // pred_region
      %s72 = ssub.s32 64, 64
      %73 = vsyncadd [#allocation8], %s72
      %s75 = sshll.u32 [#allocation7], 4
      %s76 = int_to_ptr.vmem [resolvable:$true] %s75
      %78 = dma.hbm_to_vmem [thread:$0]  %s4, 64, %s76, [#allocation8]
    $region21: #{deep_auto_encoder_forward.1} parent=1 // pred_fallthru
      _
    // Predicated region
    $region22: #{deep_auto_encoder_forward.1} parent=1 // pred_check
      _
    $region23: #{deep_auto_encoder_forward.1} parent=1 // pred_check_branch
      %80 = sbr.rel (0) target = $region25
    $region24: #{deep_auto_encoder_forward.1} parent=1 // pred_region
      %s82 = ssub.s32 8192, 8192
      %83 = vsyncadd [#allocation8], %s82
      %s84 = sshll.u32 [#allocation9], 4
      %s85 = int_to_ptr.vmem [resolvable:$true] %s84
      %90 = dma.hbm_to_vmem [thread:$0]  %s5, 8192, %s85, [#allocation8], 128, 128, 8
    $region25: #{deep_auto_encoder_forward.1} parent=1 // pred_fallthru
      _
    // Predicated region
    $region26: #{deep_auto_encoder_forward.1} parent=1 // pred_check
      _
    $region27: #{deep_auto_encoder_forward.1} parent=1 // pred_check_branch
      %92 = sbr.rel (0) target = $region29
    $region28: #{deep_auto_encoder_forward.1} parent=1 // pred_region
      %s94 = ssub.s32 32, 32
      %95 = vsyncadd [#allocation11], %s94
      %s97 = sshll.u32 [#allocation10], 4
      %s98 = int_to_ptr.vmem [resolvable:$true] %s97
      %100 = dma.hbm_to_vmem [thread:$0]  %s6, 32, %s98, [#allocation11]
    $region29: #{deep_auto_encoder_forward.1} parent=1 // pred_fallthru
      _
    // Predicated region
    $region30: #{deep_auto_encoder_forward.1} parent=1 // pred_check
      _
    $region31: #{deep_auto_encoder_forward.1} parent=1 // pred_check_branch
      %102 = sbr.rel (0) target = $region33
    $region32: #{deep_auto_encoder_forward.1} parent=1 // pred_region
      %s104 = ssub.s32 2048, 2048
      %105 = vsyncadd [#allocation11], %s104
      %s106 = sshll.u32 [#allocation12], 4
      %s107 = int_to_ptr.vmem [resolvable:$true] %s106
      %112 = dma.hbm_to_vmem [thread:$0]  %s7, 2048, %s107, [#allocation11], 64, 64, 4
    $region33: #{deep_auto_encoder_forward.1} parent=1 // pred_fallthru
      _
    // Predicated region
    $region34: #{deep_auto_encoder_forward.1} parent=1 // pred_check
      _
    $region35: #{deep_auto_encoder_forward.1} parent=1 // pred_check_branch
      %114 = sbr.rel (0) target = $region37
    $region36: #{deep_auto_encoder_forward.1} parent=1 // pred_region
      %s116 = ssub.s32 16, 16
      %117 = vsyncadd [#allocation14], %s116
      %s119 = sshll.u32 [#allocation13], 4
      %s120 = int_to_ptr.vmem [resolvable:$true] %s119
      %122 = dma.hbm_to_vmem [thread:$0]  %s8, 16, %s120, [#allocation14]
    $region37: #{deep_auto_encoder_forward.1} parent=1 // pred_fallthru
      _
    // Predicated region
    $region38: #{deep_auto_encoder_forward.1} parent=1 // pred_check
      _
    $region39: #{deep_auto_encoder_forward.1} parent=1 // pred_check_branch
      %124 = sbr.rel (0) target = $region41
    $region40: #{deep_auto_encoder_forward.1} parent=1 // pred_region
      %s126 = ssub.s32 2048, 2048
      %127 = vsyncadd [#allocation14], %s126
      %s128 = sshll.u32 [#allocation15], 4
      %s129 = int_to_ptr.vmem [resolvable:$true] %s128
      %134 = dma.hbm_to_vmem [thread:$0]  %s9, 2048, %s129, [#allocation14], 128, 128, 8
    $region41: #{deep_auto_encoder_forward.1} parent=1 // pred_fallthru
      _
    // Predicated region
    $region42: #{deep_auto_encoder_forward.1} parent=1 // pred_check
      _
    $region43: #{deep_auto_encoder_forward.1} parent=1 // pred_check_branch
      %136 = sbr.rel (0) target = $region45
    $region44: #{deep_auto_encoder_forward.1} parent=1 // pred_region
      %s138 = ssub.s32 32, 32
      %139 = vsyncadd [#allocation17], %s138
      %s141 = sshll.u32 [#allocation16], 4
      %s142 = int_to_ptr.vmem [resolvable:$true] %s141
      %144 = dma.hbm_to_vmem [thread:$0]  %s10, 32, %s142, [#allocation17]
    $region45: #{deep_auto_encoder_forward.1} parent=1 // pred_fallthru
      _
    // Predicated region
    $region46: #{deep_auto_encoder_forward.1} parent=1 // pred_check
      _
    $region47: #{deep_auto_encoder_forward.1} parent=1 // pred_check_branch
      %146 = sbr.rel (0) target = $region49
    $region48: #{deep_auto_encoder_forward.1} parent=1 // pred_region
      %s148 = ssub.s32 8192, 8192
      %149 = vsyncadd [#allocation17], %s148
      %s150 = sshll.u32 [#allocation18], 4
      %s151 = int_to_ptr.vmem [resolvable:$true] %s150
      %156 = dma.hbm_to_vmem [thread:$0]  %s11, 8192, %s151, [#allocation17], 256, 256, 16
    $region49: #{deep_auto_encoder_forward.1} parent=1 // pred_fallthru
      _
    // Predicated region
    $region50: #{deep_auto_encoder_forward.1} parent=1 // pred_check
      _
    $region51: #{deep_auto_encoder_forward.1} parent=1 // pred_check_branch
      %158 = sbr.rel (0) target = $region53
    $region52: #{deep_auto_encoder_forward.1} parent=1 // pred_region
      %s160 = ssub.s32 64, 64
      %161 = vsyncadd [#allocation20], %s160
      %s163 = sshll.u32 [#allocation19], 4
      %s164 = int_to_ptr.vmem [resolvable:$true] %s163
      %166 = dma.hbm_to_vmem [thread:$0]  %s12, 64, %s164, [#allocation20]
    $region53: #{deep_auto_encoder_forward.1} parent=1 // pred_fallthru
      _
    // Predicated region
    $region54: #{deep_auto_encoder_forward.1} parent=1 // pred_check
      _
    $region55: #{deep_auto_encoder_forward.1} parent=1 // pred_check_branch
      %168 = sbr.rel (0) target = $region57
    $region56: #{deep_auto_encoder_forward.1} parent=1 // pred_region
      %s170 = ssub.s32 32768, 32768
      %171 = vsyncadd [#allocation20], %s170
      %s172 = sshll.u32 [#allocation21], 4
      %s173 = int_to_ptr.vmem [resolvable:$true] %s172
      %178 = dma.hbm_to_vmem [thread:$0]  %s13, 32768, %s173, [#allocation20], 512, 512, 32
    $region57: #{deep_auto_encoder_forward.1} parent=1 // pred_fallthru
      _
    // Predicated region
    $region58: #{deep_auto_encoder_forward.1} parent=1 // pred_check
      _
    $region59: #{deep_auto_encoder_forward.1} parent=1 // pred_check_branch
      %180 = sbr.rel (0) target = $region61
    $region60: #{deep_auto_encoder_forward.1} parent=1 // pred_region
      %s182 = ssub.s32 128, 128
      %183 = vsyncadd [#allocation23], %s182
      %s185 = sshll.u32 [#allocation22], 4
      %s186 = int_to_ptr.vmem [resolvable:$true] %s185
      %188 = dma.hbm_to_vmem [thread:$0]  %s14, 128, %s186, [#allocation23]
    $region61: #{deep_auto_encoder_forward.1} parent=1 // pred_fallthru
      _
    // Predicated region
    $region62: #{deep_auto_encoder_forward.1} parent=1 // pred_check
      _
    $region63: #{deep_auto_encoder_forward.1} parent=1 // pred_check_branch
      %190 = sbr.rel (0) target = $region65
    $region64: #{deep_auto_encoder_forward.1} parent=1 // pred_region
      %s192 = ssub.s32 57344, 57344
      %193 = vsyncadd [#allocation23], %s192
      %s194 = sshll.u32 [#allocation24], 4
      %s195 = int_to_ptr.vmem [resolvable:$true] %s194
      %200 = dma.hbm_to_vmem [thread:$0]  %s15, 57344, %s195, [#allocation23], 448, 448, 28
    $region65: #{deep_auto_encoder_forward.1} parent=1 // pred_fallthru
      _
    // Predicated region
    $region66: #{deep_auto_encoder_forward.1} parent=1 // pred_check
      _
    $region67: #{deep_auto_encoder_forward.1} parent=1 // pred_check_branch
      %202 = sbr.rel (0) target = $region69
    $region68: #{deep_auto_encoder_forward.1} parent=1 // pred_region
      %s204 = ssub.s32 112, 112
      %205 = vsyncadd [#allocation26], %s204
      %s207 = sshll.u32 [#allocation25], 4
      %s208 = int_to_ptr.vmem [resolvable:$true] %s207
      %210 = dma.hbm_to_vmem [thread:$0]  %s16, 112, %s208, [#allocation26]
    $region69: #{deep_auto_encoder_forward.1} parent=1 // pred_fallthru
      _
    // Predicated region
    $region70: #{deep_auto_encoder_forward.1} parent=1 // pred_check
      _
    $region71: #{deep_auto_encoder_forward.1} parent=1 // pred_check_branch
      %212 = sbr.rel (0) target = $region73
    $region72: #{deep_auto_encoder_forward.1} parent=1 // pred_region
      %213 = dma.done [#allocation3], 50176
    $region73: #{deep_auto_encoder_forward.1} parent=1 // pred_fallthru
      _
    // Predicated region
    $region74: #{deep_auto_encoder_forward.1} parent=1 // pred_check
      _
    $region75: #{deep_auto_encoder_forward.1} parent=1 // pred_check_branch
      %215 = sbr.rel (0) target = $region77
    $region76: #{deep_auto_encoder_forward.1} parent=1 // pred_region
      %216 = dma.done [#allocation5], 128
    $region77: #{deep_auto_encoder_forward.1} parent=1 // pred_fallthru
      _
    // Predicated region
    $region78: #{deep_auto_encoder_forward.1} parent=1 // pred_check
      _
    $region79: #{deep_auto_encoder_forward.1} parent=1 // pred_check_branch
      %218 = sbr.rel (0) target = $region81
    $region80: #{deep_auto_encoder_forward.1} parent=1 // pred_region
      %219 = dma.done [#allocation5], 32768
    $region81: #{deep_auto_encoder_forward.1} parent=1 // pred_fallthru
      _
    // Predicated region
    $region82: #{deep_auto_encoder_forward.1} parent=1 // pred_check
      _
    $region83: #{deep_auto_encoder_forward.1} parent=1 // pred_check_branch
      %221 = sbr.rel (0) target = $region85
    $region84: #{deep_auto_encoder_forward.1} parent=1 // pred_region
      %222 = dma.done [#allocation8], 64
    $region85: #{deep_auto_encoder_forward.1} parent=1 // pred_fallthru
      _
    // Predicated region
    $region86: #{deep_auto_encoder_forward.1} parent=1 // pred_check
      _
    $region87: #{deep_auto_encoder_forward.1} parent=1 // pred_check_branch
      %224 = sbr.rel (0) target = $region89
    $region88: #{deep_auto_encoder_forward.1} parent=1 // pred_region
      %225 = dma.done [#allocation8], 8192
    $region89: #{deep_auto_encoder_forward.1} parent=1 // pred_fallthru
      _
    // Predicated region
    $region90: #{deep_auto_encoder_forward.1} parent=1 // pred_check
      _
    $region91: #{deep_auto_encoder_forward.1} parent=1 // pred_check_branch
      %227 = sbr.rel (0) target = $region93
    $region92: #{deep_auto_encoder_forward.1} parent=1 // pred_region
      %228 = dma.done [#allocation11], 32
    $region93: #{deep_auto_encoder_forward.1} parent=1 // pred_fallthru
      _
    // Predicated region
    $region94: #{deep_auto_encoder_forward.1} parent=1 // pred_check
      _
    $region95: #{deep_auto_encoder_forward.1} parent=1 // pred_check_branch
      %230 = sbr.rel (0) target = $region97
    $region96: #{deep_auto_encoder_forward.1} parent=1 // pred_region
      %231 = dma.done [#allocation11], 2048
    $region97: #{deep_auto_encoder_forward.1} parent=1 // pred_fallthru
      _
    // Predicated region
    $region98: #{deep_auto_encoder_forward.1} parent=1 // pred_check
      _
    $region99: #{deep_auto_encoder_forward.1} parent=1 // pred_check_branch
      %233 = sbr.rel (0) target = $region101
    $region100: #{deep_auto_encoder_forward.1} parent=1 // pred_region
      %234 = dma.done [#allocation14], 16
    $region101: #{deep_auto_encoder_forward.1} parent=1 // pred_fallthru
      _
    // Predicated region
    $region102: #{deep_auto_encoder_forward.1} parent=1 // pred_check
      _
    $region103: #{deep_auto_encoder_forward.1} parent=1 // pred_check_branch
      %236 = sbr.rel (0) target = $region105
    $region104: #{deep_auto_encoder_forward.1} parent=1 // pred_region
      %237 = dma.done [#allocation14], 2048
    $region105: #{deep_auto_encoder_forward.1} parent=1 // pred_fallthru
      _
    // Predicated region
    $region106: #{deep_auto_encoder_forward.1} parent=1 // pred_check
      _
    $region107: #{deep_auto_encoder_forward.1} parent=1 // pred_check_branch
      %239 = sbr.rel (0) target = $region109
    $region108: #{deep_auto_encoder_forward.1} parent=1 // pred_region
      %240 = dma.done [#allocation17], 32
    $region109: #{deep_auto_encoder_forward.1} parent=1 // pred_fallthru
      _
    // Predicated region
    $region110: #{deep_auto_encoder_forward.1} parent=1 // pred_check
      _
    $region111: #{deep_auto_encoder_forward.1} parent=1 // pred_check_branch
      %242 = sbr.rel (0) target = $region113
    $region112: #{deep_auto_encoder_forward.1} parent=1 // pred_region
      %243 = dma.done [#allocation17], 8192
    $region113: #{deep_auto_encoder_forward.1} parent=1 // pred_fallthru
      _
    // Predicated region
    $region114: #{deep_auto_encoder_forward.1} parent=1 // pred_check
      _
    $region115: #{deep_auto_encoder_forward.1} parent=1 // pred_check_branch
      %245 = sbr.rel (0) target = $region117
    $region116: #{deep_auto_encoder_forward.1} parent=1 // pred_region
      %246 = dma.done [#allocation20], 64
    $region117: #{deep_auto_encoder_forward.1} parent=1 // pred_fallthru
      _
    // Predicated region
    $region118: #{deep_auto_encoder_forward.1} parent=1 // pred_check
      _
    $region119: #{deep_auto_encoder_forward.1} parent=1 // pred_check_branch
      %248 = sbr.rel (0) target = $region121
    $region120: #{deep_auto_encoder_forward.1} parent=1 // pred_region
      %249 = dma.done [#allocation20], 32768
    $region121: #{deep_auto_encoder_forward.1} parent=1 // pred_fallthru
      _
    // Predicated region
    $region122: #{deep_auto_encoder_forward.1} parent=1 // pred_check
      _
    $region123: #{deep_auto_encoder_forward.1} parent=1 // pred_check_branch
      %251 = sbr.rel (0) target = $region125
    $region124: #{deep_auto_encoder_forward.1} parent=1 // pred_region
      %252 = dma.done [#allocation23], 128
    $region125: #{deep_auto_encoder_forward.1} parent=1 // pred_fallthru
      _
    // Predicated region
    $region126: #{deep_auto_encoder_forward.1} parent=1 // pred_check
      _
    $region127: #{deep_auto_encoder_forward.1} parent=1 // pred_check_branch
      %254 = sbr.rel (0) target = $region129
    $region128: #{deep_auto_encoder_forward.1} parent=1 // pred_region
      %255 = dma.done [#allocation23], 57344
    $region129: #{deep_auto_encoder_forward.1} parent=1 // pred_fallthru
      _
    // Predicated region
    $region130: #{deep_auto_encoder_forward.1} parent=1 // pred_check
      _
    $region131: #{deep_auto_encoder_forward.1} parent=1 // pred_check_branch
      %257 = sbr.rel (0) target = $region133
    $region132: #{deep_auto_encoder_forward.1} parent=1 // pred_region
      %258 = dma.done [#allocation26], 112
    $region133: #{deep_auto_encoder_forward.1} parent=1 // pred_fallthru
      _
    %v260 = vld [vmem:[%s0] sm:$0xff]
    %v261 = vld [vmem:[%s0 + $0x8] sm:$0xff]
    %v262 = vld [vmem:[%s0 + $0x10] sm:$0xff]
    %v263 = vld [vmem:[%s0 + $0x18] sm:$0xff]
    %v264 = vld [vmem:[%s0 + $0x20] sm:$0xff]
    %v265 = vld [vmem:[%s0 + $0x28] sm:$0xff]
    %v266 = vld [vmem:[%s0 + $0x30] sm:$0xff]
    %v267 = vld [vmem:[#allocation2] sm:$0xff]
    %v268 = vld [vmem:[#allocation2 + $0x8] sm:$0xff]
    %v269 = vld [vmem:[#allocation2 + $0x10] sm:$0xff]
    %v270 = vld [vmem:[#allocation2 + $0x18] sm:$0xff]
    %v271 = vld [vmem:[#allocation2 + $0x20] sm:$0xff]
    %v272 = vld [vmem:[#allocation2 + $0x28] sm:$0xff]
    %v273 = vld [vmem:[#allocation2 + $0x30] sm:$0xff]
    %v274 = vld [vmem:[#allocation2 + $0x38] sm:$0xff]
    %v275 = vld [vmem:[#allocation2 + $0x40] sm:$0xff]
    %v276 = vld [vmem:[#allocation2 + $0x48] sm:$0xff]
    %v277 = vld [vmem:[#allocation2 + $0x50] sm:$0xff]
    %v278 = vld [vmem:[#allocation2 + $0x58] sm:$0xff]
    %v279 = vld [vmem:[#allocation2 + $0x60] sm:$0xff]
    %v280 = vld [vmem:[#allocation2 + $0x68] sm:$0xff]
    %v281 = vld [vmem:[#allocation2 + $0x70] sm:$0xff]
    %v282 = vld [vmem:[#allocation2 + $0x78] sm:$0xff]
    %v283 = vld [vmem:[#allocation2 + $0x80] sm:$0xff]
    %v284 = vld [vmem:[#allocation2 + $0x88] sm:$0xff]
    %v285 = vld [vmem:[#allocation2 + $0x90] sm:$0xff]
    %v286 = vld [vmem:[#allocation2 + $0x98] sm:$0xff]
    %v287 = vld [vmem:[#allocation2 + $0xa0] sm:$0xff]
    %v288 = vld [vmem:[#allocation2 + $0xa8] sm:$0xff]
    %v289 = vld [vmem:[#allocation2 + $0xb0] sm:$0xff]
    %v290 = vld [vmem:[#allocation2 + $0xb8] sm:$0xff]
    %v291 = vld [vmem:[#allocation2 + $0xc0] sm:$0xff]
    %v292 = vld [vmem:[#allocation2 + $0xc8] sm:$0xff]
    %v293 = vld [vmem:[#allocation2 + $0xd0] sm:$0xff]
    %v294 = vld [vmem:[#allocation2 + $0xd8] sm:$0xff]
    %v295 = vld [vmem:[#allocation2 + $0xe0] sm:$0xff]
    %v296 = vld [vmem:[#allocation2 + $0xe8] sm:$0xff]
    %v297 = vld [vmem:[#allocation2 + $0xf0] sm:$0xff]
    %v298 = vld [vmem:[#allocation2 + $0xf8] sm:$0xff]
    %v299 = vld [vmem:[#allocation2 + $0x100] sm:$0xff]
    %v300 = vld [vmem:[#allocation2 + $0x108] sm:$0xff]
    %v301 = vld [vmem:[#allocation2 + $0x110] sm:$0xff]
    %v302 = vld [vmem:[#allocation2 + $0x118] sm:$0xff]
    %v303 = vld [vmem:[#allocation2 + $0x120] sm:$0xff]
    %v304 = vld [vmem:[#allocation2 + $0x128] sm:$0xff]
    %v305 = vld [vmem:[#allocation2 + $0x130] sm:$0xff]
    %v306 = vld [vmem:[#allocation2 + $0x138] sm:$0xff]
    %v307 = vld [vmem:[#allocation2 + $0x140] sm:$0xff]
    %v308 = vld [vmem:[#allocation2 + $0x148] sm:$0xff]
    %v309 = vld [vmem:[#allocation2 + $0x150] sm:$0xff]
    %v310 = vld [vmem:[#allocation2 + $0x158] sm:$0xff]
    %v311 = vld [vmem:[#allocation2 + $0x160] sm:$0xff]
    %v312 = vld [vmem:[#allocation2 + $0x168] sm:$0xff]
    %v313 = vld [vmem:[#allocation2 + $0x170] sm:$0xff]
    %v314 = vld [vmem:[#allocation2 + $0x178] sm:$0xff]
    %v315 = vld [vmem:[#allocation2 + $0x180] sm:$0xff]
    %v316 = vld [vmem:[#allocation2 + $0x188] sm:$0xff]
    %v317 = vld [vmem:[#allocation2 + $0x190] sm:$0xff]
    %v318 = vld [vmem:[#allocation2 + $0x198] sm:$0xff]
    %v319 = vld [vmem:[#allocation2 + $0x1a0] sm:$0xff]
    %v320 = vld [vmem:[#allocation2 + $0x1a8] sm:$0xff]
    %v321 = vld [vmem:[#allocation2 + $0x1b0] sm:$0xff]
    %v322 = vld [vmem:[#allocation2 + $0x1b8] sm:$0xff]
    %v323 = vld [vmem:[#allocation2 + $0x1c0] sm:$0xff]
    %v324 = vld [vmem:[#allocation2 + $0x1c8] sm:$0xff]
    %v325 = vld [vmem:[#allocation2 + $0x1d0] sm:$0xff]
    %v326 = vld [vmem:[#allocation2 + $0x1d8] sm:$0xff]
    %v327 = vld [vmem:[#allocation2 + $0x1e0] sm:$0xff]
    %v328 = vld [vmem:[#allocation2 + $0x1e8] sm:$0xff]
    %v329 = vld [vmem:[#allocation2 + $0x1f0] sm:$0xff]
    %v330 = vld [vmem:[#allocation2 + $0x1f8] sm:$0xff]
    %v331 = vld [vmem:[#allocation2 + $0x200] sm:$0xff]
    %v332 = vld [vmem:[#allocation2 + $0x208] sm:$0xff]
    %v333 = vld [vmem:[#allocation2 + $0x210] sm:$0xff]
    %v334 = vld [vmem:[#allocation2 + $0x218] sm:$0xff]
    %v335 = vld [vmem:[#allocation2 + $0x220] sm:$0xff]
    %v336 = vld [vmem:[#allocation2 + $0x228] sm:$0xff]
    %v337 = vld [vmem:[#allocation2 + $0x230] sm:$0xff]
    %v338 = vld [vmem:[#allocation2 + $0x238] sm:$0xff]
    %v339 = vld [vmem:[#allocation2 + $0x240] sm:$0xff]
    %v340 = vld [vmem:[#allocation2 + $0x248] sm:$0xff]
    %v341 = vld [vmem:[#allocation2 + $0x250] sm:$0xff]
    %v342 = vld [vmem:[#allocation2 + $0x258] sm:$0xff]
    %v343 = vld [vmem:[#allocation2 + $0x260] sm:$0xff]
    %v344 = vld [vmem:[#allocation2 + $0x268] sm:$0xff]
    %v345 = vld [vmem:[#allocation2 + $0x270] sm:$0xff]
    %v346 = vld [vmem:[#allocation2 + $0x278] sm:$0xff]
    %v347 = vld [vmem:[#allocation2 + $0x280] sm:$0xff]
    %v348 = vld [vmem:[#allocation2 + $0x288] sm:$0xff]
    %v349 = vld [vmem:[#allocation2 + $0x290] sm:$0xff]
    %v350 = vld [vmem:[#allocation2 + $0x298] sm:$0xff]
    %v351 = vld [vmem:[#allocation2 + $0x2a0] sm:$0xff]
    %v352 = vld [vmem:[#allocation2 + $0x2a8] sm:$0xff]
    %v353 = vld [vmem:[#allocation2 + $0x2b0] sm:$0xff]
    %v354 = vld [vmem:[#allocation2 + $0x2b8] sm:$0xff]
    %v355 = vld [vmem:[#allocation2 + $0x2c0] sm:$0xff]
    %v356 = vld [vmem:[#allocation2 + $0x2c8] sm:$0xff]
    %v357 = vld [vmem:[#allocation2 + $0x2d0] sm:$0xff]
    %v358 = vld [vmem:[#allocation2 + $0x2d8] sm:$0xff]
    %v359 = vld [vmem:[#allocation2 + $0x2e0] sm:$0xff]
    %v360 = vld [vmem:[#allocation2 + $0x2e8] sm:$0xff]
    %v361 = vld [vmem:[#allocation2 + $0x2f0] sm:$0xff]
    %v362 = vld [vmem:[#allocation2 + $0x2f8] sm:$0xff]
    %v363 = vld [vmem:[#allocation2 + $0x300] sm:$0xff]
    %v364 = vld [vmem:[#allocation2 + $0x308] sm:$0xff]
    %v365 = vld [vmem:[#allocation2 + $0x310] sm:$0xff]
    %v366 = vld [vmem:[#allocation2 + $0x318] sm:$0xff]
    %v367 = vld [vmem:[#allocation2 + $0x320] sm:$0xff]
    %v368 = vld [vmem:[#allocation2 + $0x328] sm:$0xff]
    %v369 = vld [vmem:[#allocation2 + $0x330] sm:$0xff]
    %v370 = vld [vmem:[#allocation2 + $0x338] sm:$0xff]
    %v371 = vld [vmem:[#allocation2 + $0x340] sm:$0xff]
    %v372 = vld [vmem:[#allocation2 + $0x348] sm:$0xff]
    %v373 = vld [vmem:[#allocation2 + $0x350] sm:$0xff]
    %v374 = vld [vmem:[#allocation2 + $0x358] sm:$0xff]
    %v375 = vld [vmem:[#allocation2 + $0x360] sm:$0xff]
    %v376 = vld [vmem:[#allocation2 + $0x368] sm:$0xff]
    %v377 = vld [vmem:[#allocation2 + $0x370] sm:$0xff]
    %v378 = vld [vmem:[#allocation2 + $0x378] sm:$0xff]
    %v379 = vld [vmem:[#allocation2 + $0x380] sm:$0xff]
    %v380 = vld [vmem:[#allocation2 + $0x388] sm:$0xff]
    %v381 = vld [vmem:[#allocation2 + $0x390] sm:$0xff]
    %v382 = vld [vmem:[#allocation2 + $0x398] sm:$0xff]
    %v383 = vld [vmem:[#allocation2 + $0x3a0] sm:$0xff]
    %v384 = vld [vmem:[#allocation2 + $0x3a8] sm:$0xff]
    %v385 = vld [vmem:[#allocation2 + $0x3b0] sm:$0xff]
    %v386 = vld [vmem:[#allocation2 + $0x3b8] sm:$0xff]
    %v387 = vld [vmem:[#allocation2 + $0x3c0] sm:$0xff]
    %v388 = vld [vmem:[#allocation2 + $0x3c8] sm:$0xff]
    %v389 = vld [vmem:[#allocation2 + $0x3d0] sm:$0xff]
    %v390 = vld [vmem:[#allocation2 + $0x3d8] sm:$0xff]
    %v391 = vld [vmem:[#allocation2 + $0x3e0] sm:$0xff]
    %v392 = vld [vmem:[#allocation2 + $0x3e8] sm:$0xff]
    %v393 = vld [vmem:[#allocation2 + $0x3f0] sm:$0xff]
    %v394 = vld [vmem:[#allocation2 + $0x3f8] sm:$0xff]
    %v395 = vld [vmem:[#allocation2 + $0x400] sm:$0xff]
    %v396 = vld [vmem:[#allocation2 + $0x408] sm:$0xff]
    %v397 = vld [vmem:[#allocation2 + $0x410] sm:$0xff]
    %v398 = vld [vmem:[#allocation2 + $0x418] sm:$0xff]
    %v399 = vld [vmem:[#allocation2 + $0x420] sm:$0xff]
    %v400 = vld [vmem:[#allocation2 + $0x428] sm:$0xff]
    %v401 = vld [vmem:[#allocation2 + $0x430] sm:$0xff]
    %v402 = vld [vmem:[#allocation2 + $0x438] sm:$0xff]
    %v403 = vld [vmem:[#allocation2 + $0x440] sm:$0xff]
    %v404 = vld [vmem:[#allocation2 + $0x448] sm:$0xff]
    %v405 = vld [vmem:[#allocation2 + $0x450] sm:$0xff]
    %v406 = vld [vmem:[#allocation2 + $0x458] sm:$0xff]
    %v407 = vld [vmem:[#allocation2 + $0x460] sm:$0xff]
    %v408 = vld [vmem:[#allocation2 + $0x468] sm:$0xff]
    %v409 = vld [vmem:[#allocation2 + $0x470] sm:$0xff]
    %v410 = vld [vmem:[#allocation2 + $0x478] sm:$0xff]
    %v411 = vld [vmem:[#allocation2 + $0x480] sm:$0xff]
    %v412 = vld [vmem:[#allocation2 + $0x488] sm:$0xff]
    %v413 = vld [vmem:[#allocation2 + $0x490] sm:$0xff]
    %v414 = vld [vmem:[#allocation2 + $0x498] sm:$0xff]
    %v415 = vld [vmem:[#allocation2 + $0x4a0] sm:$0xff]
    %v416 = vld [vmem:[#allocation2 + $0x4a8] sm:$0xff]
    %v417 = vld [vmem:[#allocation2 + $0x4b0] sm:$0xff]
    %v418 = vld [vmem:[#allocation2 + $0x4b8] sm:$0xff]
    %v419 = vld [vmem:[#allocation2 + $0x4c0] sm:$0xff]
    %v420 = vld [vmem:[#allocation2 + $0x4c8] sm:$0xff]
    %v421 = vld [vmem:[#allocation2 + $0x4d0] sm:$0xff]
    %v422 = vld [vmem:[#allocation2 + $0x4d8] sm:$0xff]
    %v423 = vld [vmem:[#allocation2 + $0x4e0] sm:$0xff]
    %v424 = vld [vmem:[#allocation2 + $0x4e8] sm:$0xff]
    %v425 = vld [vmem:[#allocation2 + $0x4f0] sm:$0xff]
    %v426 = vld [vmem:[#allocation2 + $0x4f8] sm:$0xff]
    %v427 = vld [vmem:[#allocation2 + $0x500] sm:$0xff]
    %v428 = vld [vmem:[#allocation2 + $0x508] sm:$0xff]
    %v429 = vld [vmem:[#allocation2 + $0x510] sm:$0xff]
    %v430 = vld [vmem:[#allocation2 + $0x518] sm:$0xff]
    %v431 = vld [vmem:[#allocation2 + $0x520] sm:$0xff]
    %v432 = vld [vmem:[#allocation2 + $0x528] sm:$0xff]
    %v433 = vld [vmem:[#allocation2 + $0x530] sm:$0xff]
    %v434 = vld [vmem:[#allocation2 + $0x538] sm:$0xff]
    %v435 = vld [vmem:[#allocation2 + $0x540] sm:$0xff]
    %v436 = vld [vmem:[#allocation2 + $0x548] sm:$0xff]
    %v437 = vld [vmem:[#allocation2 + $0x550] sm:$0xff]
    %v438 = vld [vmem:[#allocation2 + $0x558] sm:$0xff]
    %v439 = vld [vmem:[#allocation2 + $0x560] sm:$0xff]
    %v440 = vld [vmem:[#allocation2 + $0x568] sm:$0xff]
    %v441 = vld [vmem:[#allocation2 + $0x570] sm:$0xff]
    %v442 = vld [vmem:[#allocation2 + $0x578] sm:$0xff]
    %v443 = vld [vmem:[#allocation2 + $0x580] sm:$0xff]
    %v444 = vld [vmem:[#allocation2 + $0x588] sm:$0xff]
    %v445 = vld [vmem:[#allocation2 + $0x590] sm:$0xff]
    %v446 = vld [vmem:[#allocation2 + $0x598] sm:$0xff]
    %v447 = vld [vmem:[#allocation2 + $0x5a0] sm:$0xff]
    %v448 = vld [vmem:[#allocation2 + $0x5a8] sm:$0xff]
    %v449 = vld [vmem:[#allocation2 + $0x5b0] sm:$0xff]
    %v450 = vld [vmem:[#allocation2 + $0x5b8] sm:$0xff]
    %v451 = vld [vmem:[#allocation2 + $0x5c0] sm:$0xff]
    %v452 = vld [vmem:[#allocation2 + $0x5c8] sm:$0xff]
    %v453 = vld [vmem:[#allocation2 + $0x5d0] sm:$0xff]
    %v454 = vld [vmem:[#allocation2 + $0x5d8] sm:$0xff]
    %v455 = vld [vmem:[#allocation2 + $0x5e0] sm:$0xff]
    %v456 = vld [vmem:[#allocation2 + $0x5e8] sm:$0xff]
    %v457 = vld [vmem:[#allocation2 + $0x5f0] sm:$0xff]
    %v458 = vld [vmem:[#allocation2 + $0x5f8] sm:$0xff]
    %v459 = vld [vmem:[#allocation2 + $0x600] sm:$0xff]
    %v460 = vld [vmem:[#allocation2 + $0x608] sm:$0xff]
    %v461 = vld [vmem:[#allocation2 + $0x610] sm:$0xff]
    %v462 = vld [vmem:[#allocation2 + $0x618] sm:$0xff]
    %v463 = vld [vmem:[#allocation2 + $0x620] sm:$0xff]
    %v464 = vld [vmem:[#allocation2 + $0x628] sm:$0xff]
    %v465 = vld [vmem:[#allocation2 + $0x630] sm:$0xff]
    %v466 = vld [vmem:[#allocation2 + $0x638] sm:$0xff]
    %v467 = vld [vmem:[#allocation2 + $0x640] sm:$0xff]
    %v468 = vld [vmem:[#allocation2 + $0x648] sm:$0xff]
    %v469 = vld [vmem:[#allocation2 + $0x650] sm:$0xff]
    %v470 = vld [vmem:[#allocation2 + $0x658] sm:$0xff]
    %v471 = vld [vmem:[#allocation2 + $0x660] sm:$0xff]
    %v472 = vld [vmem:[#allocation2 + $0x668] sm:$0xff]
    %v473 = vld [vmem:[#allocation2 + $0x670] sm:$0xff]
    %v474 = vld [vmem:[#allocation2 + $0x678] sm:$0xff]
    %v475 = vld [vmem:[#allocation2 + $0x680] sm:$0xff]
    %v476 = vld [vmem:[#allocation2 + $0x688] sm:$0xff]
    %v477 = vld [vmem:[#allocation2 + $0x690] sm:$0xff]
    %v478 = vld [vmem:[#allocation2 + $0x698] sm:$0xff]
    %v479 = vld [vmem:[#allocation2 + $0x6a0] sm:$0xff]
    %v480 = vld [vmem:[#allocation2 + $0x6a8] sm:$0xff]
    %v481 = vld [vmem:[#allocation2 + $0x6b0] sm:$0xff]
    %v482 = vld [vmem:[#allocation2 + $0x6b8] sm:$0xff]
    %v483 = vld [vmem:[#allocation2 + $0x6c0] sm:$0xff]
    %v484 = vld [vmem:[#allocation2 + $0x6c8] sm:$0xff]
    %v485 = vld [vmem:[#allocation2 + $0x6d0] sm:$0xff]
    %v486 = vld [vmem:[#allocation2 + $0x6d8] sm:$0xff]
    %v487 = vld [vmem:[#allocation2 + $0x6e0] sm:$0xff]
    %v488 = vld [vmem:[#allocation2 + $0x6e8] sm:$0xff]
    %v489 = vld [vmem:[#allocation2 + $0x6f0] sm:$0xff]
    %v490 = vld [vmem:[#allocation2 + $0x6f8] sm:$0xff]
    %v491 = vld [vmem:[#allocation2 + $0x700] sm:$0xff]
    %v492 = vld [vmem:[#allocation2 + $0x708] sm:$0xff]
    %v493 = vld [vmem:[#allocation2 + $0x710] sm:$0xff]
    %v494 = vld [vmem:[#allocation2 + $0x718] sm:$0xff]
    %v495 = vld [vmem:[#allocation2 + $0x720] sm:$0xff]
    %v496 = vld [vmem:[#allocation2 + $0x728] sm:$0xff]
    %v497 = vld [vmem:[#allocation2 + $0x730] sm:$0xff]
    %v498 = vld [vmem:[#allocation2 + $0x738] sm:$0xff]
    %v499 = vld [vmem:[#allocation2 + $0x740] sm:$0xff]
    %v500 = vld [vmem:[#allocation2 + $0x748] sm:$0xff]
    %v501 = vld [vmem:[#allocation2 + $0x750] sm:$0xff]
    %v502 = vld [vmem:[#allocation2 + $0x758] sm:$0xff]
    %v503 = vld [vmem:[#allocation2 + $0x760] sm:$0xff]
    %v504 = vld [vmem:[#allocation2 + $0x768] sm:$0xff]
    %v505 = vld [vmem:[#allocation2 + $0x770] sm:$0xff]
    %v506 = vld [vmem:[#allocation2 + $0x778] sm:$0xff]
    %v507 = vld [vmem:[#allocation2 + $0x780] sm:$0xff]
    %v508 = vld [vmem:[#allocation2 + $0x788] sm:$0xff]
    %v509 = vld [vmem:[#allocation2 + $0x790] sm:$0xff]
    %v510 = vld [vmem:[#allocation2 + $0x798] sm:$0xff]
    %v511 = vld [vmem:[#allocation2 + $0x7a0] sm:$0xff]
    %v512 = vld [vmem:[#allocation2 + $0x7a8] sm:$0xff]
    %v513 = vld [vmem:[#allocation2 + $0x7b0] sm:$0xff]
    %v514 = vld [vmem:[#allocation2 + $0x7b8] sm:$0xff]
    %v515 = vld [vmem:[#allocation2 + $0x7c0] sm:$0xff]
    %v516 = vld [vmem:[#allocation2 + $0x7c8] sm:$0xff]
    %v517 = vld [vmem:[#allocation2 + $0x7d0] sm:$0xff]
    %v518 = vld [vmem:[#allocation2 + $0x7d8] sm:$0xff]
    %v519 = vld [vmem:[#allocation2 + $0x7e0] sm:$0xff]
    %v520 = vld [vmem:[#allocation2 + $0x7e8] sm:$0xff]
    %v521 = vld [vmem:[#allocation2 + $0x7f0] sm:$0xff]
    %v522 = vld [vmem:[#allocation2 + $0x7f8] sm:$0xff]
    %v523 = vld [vmem:[#allocation2 + $0x800] sm:$0xff]
    %v524 = vld [vmem:[#allocation2 + $0x808] sm:$0xff]
    %v525 = vld [vmem:[#allocation2 + $0x810] sm:$0xff]
    %v526 = vld [vmem:[#allocation2 + $0x818] sm:$0xff]
    %v527 = vld [vmem:[#allocation2 + $0x820] sm:$0xff]
    %v528 = vld [vmem:[#allocation2 + $0x828] sm:$0xff]
    %v529 = vld [vmem:[#allocation2 + $0x830] sm:$0xff]
    %v530 = vld [vmem:[#allocation2 + $0x838] sm:$0xff]
    %v531 = vld [vmem:[#allocation2 + $0x840] sm:$0xff]
    %v532 = vld [vmem:[#allocation2 + $0x848] sm:$0xff]
    %v533 = vld [vmem:[#allocation2 + $0x850] sm:$0xff]
    %v534 = vld [vmem:[#allocation2 + $0x858] sm:$0xff]
    %v535 = vld [vmem:[#allocation2 + $0x860] sm:$0xff]
    %v536 = vld [vmem:[#allocation2 + $0x868] sm:$0xff]
    %v537 = vld [vmem:[#allocation2 + $0x870] sm:$0xff]
    %v538 = vld [vmem:[#allocation2 + $0x878] sm:$0xff]
    %v539 = vld [vmem:[#allocation2 + $0x880] sm:$0xff]
    %v540 = vld [vmem:[#allocation2 + $0x888] sm:$0xff]
    %v541 = vld [vmem:[#allocation2 + $0x890] sm:$0xff]
    %v542 = vld [vmem:[#allocation2 + $0x898] sm:$0xff]
    %v543 = vld [vmem:[#allocation2 + $0x8a0] sm:$0xff]
    %v544 = vld [vmem:[#allocation2 + $0x8a8] sm:$0xff]
    %v545 = vld [vmem:[#allocation2 + $0x8b0] sm:$0xff]
    %v546 = vld [vmem:[#allocation2 + $0x8b8] sm:$0xff]
    %v547 = vld [vmem:[#allocation2 + $0x8c0] sm:$0xff]
    %v548 = vld [vmem:[#allocation2 + $0x8c8] sm:$0xff]
    %v549 = vld [vmem:[#allocation2 + $0x8d0] sm:$0xff]
    %v550 = vld [vmem:[#allocation2 + $0x8d8] sm:$0xff]
    %v551 = vld [vmem:[#allocation2 + $0x8e0] sm:$0xff]
    %v552 = vld [vmem:[#allocation2 + $0x8e8] sm:$0xff]
    %v553 = vld [vmem:[#allocation2 + $0x8f0] sm:$0xff]
    %v554 = vld [vmem:[#allocation2 + $0x8f8] sm:$0xff]
    %v555 = vld [vmem:[#allocation2 + $0x900] sm:$0xff]
    %v556 = vld [vmem:[#allocation2 + $0x908] sm:$0xff]
    %v557 = vld [vmem:[#allocation2 + $0x910] sm:$0xff]
    %v558 = vld [vmem:[#allocation2 + $0x918] sm:$0xff]
    %v559 = vld [vmem:[#allocation2 + $0x920] sm:$0xff]
    %v560 = vld [vmem:[#allocation2 + $0x928] sm:$0xff]
    %v561 = vld [vmem:[#allocation2 + $0x930] sm:$0xff]
    %v562 = vld [vmem:[#allocation2 + $0x938] sm:$0xff]
    %v563 = vld [vmem:[#allocation2 + $0x940] sm:$0xff]
    %v564 = vld [vmem:[#allocation2 + $0x948] sm:$0xff]
    %v565 = vld [vmem:[#allocation2 + $0x950] sm:$0xff]
    %v566 = vld [vmem:[#allocation2 + $0x958] sm:$0xff]
    %v567 = vld [vmem:[#allocation2 + $0x960] sm:$0xff]
    %v568 = vld [vmem:[#allocation2 + $0x968] sm:$0xff]
    %v569 = vld [vmem:[#allocation2 + $0x970] sm:$0xff]
    %v570 = vld [vmem:[#allocation2 + $0x978] sm:$0xff]
    %v571 = vld [vmem:[#allocation2 + $0x980] sm:$0xff]
    %v572 = vld [vmem:[#allocation2 + $0x988] sm:$0xff]
    %v573 = vld [vmem:[#allocation2 + $0x990] sm:$0xff]
    %v574 = vld [vmem:[#allocation2 + $0x998] sm:$0xff]
    %v575 = vld [vmem:[#allocation2 + $0x9a0] sm:$0xff]
    %v576 = vld [vmem:[#allocation2 + $0x9a8] sm:$0xff]
    %v577 = vld [vmem:[#allocation2 + $0x9b0] sm:$0xff]
    %v578 = vld [vmem:[#allocation2 + $0x9b8] sm:$0xff]
    %v579 = vld [vmem:[#allocation2 + $0x9c0] sm:$0xff]
    %v580 = vld [vmem:[#allocation2 + $0x9c8] sm:$0xff]
    %v581 = vld [vmem:[#allocation2 + $0x9d0] sm:$0xff]
    %v582 = vld [vmem:[#allocation2 + $0x9d8] sm:$0xff]
    %v583 = vld [vmem:[#allocation2 + $0x9e0] sm:$0xff]
    %v584 = vld [vmem:[#allocation2 + $0x9e8] sm:$0xff]
    %v585 = vld [vmem:[#allocation2 + $0x9f0] sm:$0xff]
    %v586 = vld [vmem:[#allocation2 + $0x9f8] sm:$0xff]
    %v587 = vld [vmem:[#allocation2 + $0xa00] sm:$0xff]
    %v588 = vld [vmem:[#allocation2 + $0xa08] sm:$0xff]
    %v589 = vld [vmem:[#allocation2 + $0xa10] sm:$0xff]
    %v590 = vld [vmem:[#allocation2 + $0xa18] sm:$0xff]
    %v591 = vld [vmem:[#allocation2 + $0xa20] sm:$0xff]
    %v592 = vld [vmem:[#allocation2 + $0xa28] sm:$0xff]
    %v593 = vld [vmem:[#allocation2 + $0xa30] sm:$0xff]
    %v594 = vld [vmem:[#allocation2 + $0xa38] sm:$0xff]
    %v595 = vld [vmem:[#allocation2 + $0xa40] sm:$0xff]
    %v596 = vld [vmem:[#allocation2 + $0xa48] sm:$0xff]
    %v597 = vld [vmem:[#allocation2 + $0xa50] sm:$0xff]
    %v598 = vld [vmem:[#allocation2 + $0xa58] sm:$0xff]
    %v599 = vld [vmem:[#allocation2 + $0xa60] sm:$0xff]
    %v600 = vld [vmem:[#allocation2 + $0xa68] sm:$0xff]
    %v601 = vld [vmem:[#allocation2 + $0xa70] sm:$0xff]
    %v602 = vld [vmem:[#allocation2 + $0xa78] sm:$0xff]
    %v603 = vld [vmem:[#allocation2 + $0xa80] sm:$0xff]
    %v604 = vld [vmem:[#allocation2 + $0xa88] sm:$0xff]
    %v605 = vld [vmem:[#allocation2 + $0xa90] sm:$0xff]
    %v606 = vld [vmem:[#allocation2 + $0xa98] sm:$0xff]
    %v607 = vld [vmem:[#allocation2 + $0xaa0] sm:$0xff]
    %v608 = vld [vmem:[#allocation2 + $0xaa8] sm:$0xff]
    %v609 = vld [vmem:[#allocation2 + $0xab0] sm:$0xff]
    %v610 = vld [vmem:[#allocation2 + $0xab8] sm:$0xff]
    %v611 = vld [vmem:[#allocation2 + $0xac0] sm:$0xff]
    %v612 = vld [vmem:[#allocation2 + $0xac8] sm:$0xff]
    %v613 = vld [vmem:[#allocation2 + $0xad0] sm:$0xff]
    %v614 = vld [vmem:[#allocation2 + $0xad8] sm:$0xff]
    %v615 = vld [vmem:[#allocation2 + $0xae0] sm:$0xff]
    %v616 = vld [vmem:[#allocation2 + $0xae8] sm:$0xff]
    %v617 = vld [vmem:[#allocation2 + $0xaf0] sm:$0xff]
    %v618 = vld [vmem:[#allocation2 + $0xaf8] sm:$0xff]
    %v619 = vld [vmem:[#allocation2 + $0xb00] sm:$0xff]
    %v620 = vld [vmem:[#allocation2 + $0xb08] sm:$0xff]
    %v621 = vld [vmem:[#allocation2 + $0xb10] sm:$0xff]
    %v622 = vld [vmem:[#allocation2 + $0xb18] sm:$0xff]
    %v623 = vld [vmem:[#allocation2 + $0xb20] sm:$0xff]
    %v624 = vld [vmem:[#allocation2 + $0xb28] sm:$0xff]
    %v625 = vld [vmem:[#allocation2 + $0xb30] sm:$0xff]
    %v626 = vld [vmem:[#allocation2 + $0xb38] sm:$0xff]
    %v627 = vld [vmem:[#allocation2 + $0xb40] sm:$0xff]
    %v628 = vld [vmem:[#allocation2 + $0xb48] sm:$0xff]
    %v629 = vld [vmem:[#allocation2 + $0xb50] sm:$0xff]
    %v630 = vld [vmem:[#allocation2 + $0xb58] sm:$0xff]
    %v631 = vld [vmem:[#allocation2 + $0xb60] sm:$0xff]
    %v632 = vld [vmem:[#allocation2 + $0xb68] sm:$0xff]
    %v633 = vld [vmem:[#allocation2 + $0xb70] sm:$0xff]
    %v634 = vld [vmem:[#allocation2 + $0xb78] sm:$0xff]
    %v635 = vld [vmem:[#allocation2 + $0xb80] sm:$0xff]
    %v636 = vld [vmem:[#allocation2 + $0xb88] sm:$0xff]
    %v637 = vld [vmem:[#allocation2 + $0xb90] sm:$0xff]
    %v638 = vld [vmem:[#allocation2 + $0xb98] sm:$0xff]
    %v639 = vld [vmem:[#allocation2 + $0xba0] sm:$0xff]
    %v640 = vld [vmem:[#allocation2 + $0xba8] sm:$0xff]
    %v641 = vld [vmem:[#allocation2 + $0xbb0] sm:$0xff]
    %v642 = vld [vmem:[#allocation2 + $0xbb8] sm:$0xff]
    %v643 = vld [vmem:[#allocation2 + $0xbc0] sm:$0xff]
    %v644 = vld [vmem:[#allocation2 + $0xbc8] sm:$0xff]
    %v645 = vld [vmem:[#allocation2 + $0xbd0] sm:$0xff]
    %v646 = vld [vmem:[#allocation2 + $0xbd8] sm:$0xff]
    %v647 = vld [vmem:[#allocation2 + $0xbe0] sm:$0xff]
    %v648 = vld [vmem:[#allocation2 + $0xbe8] sm:$0xff]
    %v649 = vld [vmem:[#allocation2 + $0xbf0] sm:$0xff]
    %v650 = vld [vmem:[#allocation2 + $0xbf8] sm:$0xff]
    %v651 = vld [vmem:[#allocation2 + $0xc00] sm:$0xff]
    %v652 = vld [vmem:[#allocation2 + $0xc08] sm:$0xff]
    %v653 = vld [vmem:[#allocation2 + $0xc10] sm:$0xff]
    %v654 = vld [vmem:[#allocation2 + $0xc18] sm:$0xff]
    %v655 = vld [vmem:[#allocation2 + $0xc20] sm:$0xff]
    %v656 = vld [vmem:[#allocation2 + $0xc28] sm:$0xff]
    %v657 = vld [vmem:[#allocation2 + $0xc30] sm:$0xff]
    %v658 = vld [vmem:[#allocation2 + $0xc38] sm:$0xff]
    %v659 = vld [vmem:[#allocation4] sm:$0xff]
    %v660 = vpack.c.bf16 %v260, %v260
    %v661 = vpack.c.bf16 %v261, %v261
    %v662 = vpack.c.bf16 %v262, %v262
    %v663 = vpack.c.bf16 %v263, %v263
    %v664 = vpack.c.bf16 %v264, %v264
    %v665 = vpack.c.bf16 %v265, %v265
    %v666 = vpack.c.bf16 %v266, %v266
    %v668 = vlaneseq
    %v669 = vshrl.u32 %v668, 7
    %v670 = vsub.s32 0, %v669
    %v671 = vrot.slane %v659, %v670
    %v672 = vlaneseq
    %v673 = vshrl.u32 %v672, 7
    %v674 = vsub.s32 1, %v673
    %v675 = vrot.slane %v659, %v674
    %v676 = vlaneseq
    %v677 = vshrl.u32 %v676, 7
    %v678 = vsub.s32 2, %v677
    %v679 = vrot.slane %v659, %v678
    %v680 = vlaneseq
    %v681 = vshrl.u32 %v680, 7
    %v682 = vsub.s32 3, %v681
    %v683 = vrot.slane %v659, %v682
    %v684 = vlaneseq
    %v685 = vshrl.u32 %v684, 7
    %v686 = vsub.s32 4, %v685
    %v687 = vrot.slane %v659, %v686
    %v688 = vlaneseq
    %v689 = vshrl.u32 %v688, 7
    %v690 = vsub.s32 5, %v689
    %v691 = vrot.slane %v659, %v690
    %v692 = vlaneseq
    %v693 = vshrl.u32 %v692, 7
    %v694 = vsub.s32 6, %v693
    %v695 = vrot.slane %v659, %v694
    %v696 = vlaneseq
    %v697 = vshrl.u32 %v696, 7
    %v698 = vsub.s32 7, %v697
    %v699 = vrot.slane %v659, %v698
    %v1100 = vunpack.c.l.b16 %v267
    %v1101 = vunpack.c.h.b16 %v267
    %v1102 = vunpack.c.l.b16 %v268
    %v1103 = vunpack.c.h.b16 %v268
    %v1104 = vunpack.c.l.b16 %v269
    %v1105 = vunpack.c.h.b16 %v269
    %v1106 = vunpack.c.l.b16 %v270
    %v1107 = vunpack.c.h.b16 %v270
    %v1108 = vunpack.c.l.b16 %v271
    %v1109 = vunpack.c.h.b16 %v271
    %v1110 = vunpack.c.l.b16 %v272
    %v1111 = vunpack.c.h.b16 %v272
    %v1112 = vunpack.c.l.b16 %v273
    %v1113 = vunpack.c.h.b16 %v273
    %v1114 = vunpack.c.l.b16 %v274
    %v1115 = vunpack.c.h.b16 %v274
    %v1116 = vunpack.c.l.b16 %v275
    %v1117 = vunpack.c.h.b16 %v275
    %v1118 = vunpack.c.l.b16 %v276
    %v1119 = vunpack.c.h.b16 %v276
    %v1120 = vunpack.c.l.b16 %v277
    %v1121 = vunpack.c.h.b16 %v277
    %v1122 = vunpack.c.l.b16 %v278
    %v1123 = vunpack.c.h.b16 %v278
    %v1124 = vunpack.c.l.b16 %v279
    %v1125 = vunpack.c.h.b16 %v279
    %v1126 = vunpack.c.l.b16 %v280
    %v1127 = vunpack.c.h.b16 %v280
    %v1128 = vunpack.c.l.b16 %v281
    %v1129 = vunpack.c.h.b16 %v281
    %v1130 = vunpack.c.l.b16 %v282
    %v1131 = vunpack.c.h.b16 %v282
    %v1132 = vunpack.c.l.b16 %v283
    %v1133 = vunpack.c.h.b16 %v283
    %v1134 = vunpack.c.l.b16 %v284
    %v1135 = vunpack.c.h.b16 %v284
    %v1136 = vunpack.c.l.b16 %v285
    %v1137 = vunpack.c.h.b16 %v285
    %v1138 = vunpack.c.l.b16 %v286
    %v1139 = vunpack.c.h.b16 %v286
    %v1140 = vunpack.c.l.b16 %v287
    %v1141 = vunpack.c.h.b16 %v287
    %v1142 = vunpack.c.l.b16 %v288
    %v1143 = vunpack.c.h.b16 %v288
    %v1144 = vunpack.c.l.b16 %v289
    %v1145 = vunpack.c.h.b16 %v289
    %v1146 = vunpack.c.l.b16 %v290
    %v1147 = vunpack.c.h.b16 %v290
    %v1148 = vunpack.c.l.b16 %v291
    %v1149 = vunpack.c.h.b16 %v291
    %v1150 = vunpack.c.l.b16 %v292
    %v1151 = vunpack.c.h.b16 %v292
    %v1152 = vunpack.c.l.b16 %v293
    %v1153 = vunpack.c.h.b16 %v293
    %v1154 = vunpack.c.l.b16 %v294
    %v1155 = vunpack.c.h.b16 %v294
    %v1156 = vunpack.c.l.b16 %v295
    %v1157 = vunpack.c.h.b16 %v295
    %v1158 = vunpack.c.l.b16 %v296
    %v1159 = vunpack.c.h.b16 %v296
    %v1160 = vunpack.c.l.b16 %v297
    %v1161 = vunpack.c.h.b16 %v297
    %v1162 = vunpack.c.l.b16 %v298
    %v1163 = vunpack.c.h.b16 %v298
    %v1164 = vunpack.c.l.b16 %v299
    %v1165 = vunpack.c.h.b16 %v299
    %v1166 = vunpack.c.l.b16 %v300
    %v1167 = vunpack.c.h.b16 %v300
    %v1168 = vunpack.c.l.b16 %v301
    %v1169 = vunpack.c.h.b16 %v301
    %v1170 = vunpack.c.l.b16 %v302
    %v1171 = vunpack.c.h.b16 %v302
    %v1172 = vunpack.c.l.b16 %v303
    %v1173 = vunpack.c.h.b16 %v303
    %v1174 = vunpack.c.l.b16 %v304
    %v1175 = vunpack.c.h.b16 %v304
    %v1176 = vunpack.c.l.b16 %v305
    %v1177 = vunpack.c.h.b16 %v305
    %v1178 = vunpack.c.l.b16 %v306
    %v1179 = vunpack.c.h.b16 %v306
    %v1180 = vunpack.c.l.b16 %v307
    %v1181 = vunpack.c.h.b16 %v307
    %v1182 = vunpack.c.l.b16 %v308
    %v1183 = vunpack.c.h.b16 %v308
    %v1184 = vunpack.c.l.b16 %v309
    %v1185 = vunpack.c.h.b16 %v309
    %v1186 = vunpack.c.l.b16 %v310
    %v1187 = vunpack.c.h.b16 %v310
    %v1188 = vunpack.c.l.b16 %v311
    %v1189 = vunpack.c.h.b16 %v311
    %v1190 = vunpack.c.l.b16 %v312
    %v1191 = vunpack.c.h.b16 %v312
    %v1192 = vunpack.c.l.b16 %v313
    %v1193 = vunpack.c.h.b16 %v313
    %v1194 = vunpack.c.l.b16 %v314
    %v1195 = vunpack.c.h.b16 %v314
    %v1196 = vunpack.c.l.b16 %v315
    %v1197 = vunpack.c.h.b16 %v315
    %v1198 = vunpack.c.l.b16 %v316
    %v1199 = vunpack.c.h.b16 %v316
    %v1200 = vunpack.c.l.b16 %v317
    %v1201 = vunpack.c.h.b16 %v317
    %v1202 = vunpack.c.l.b16 %v318
    %v1203 = vunpack.c.h.b16 %v318
    %v1204 = vunpack.c.l.b16 %v319
    %v1205 = vunpack.c.h.b16 %v319
    %v1206 = vunpack.c.l.b16 %v320
    %v1207 = vunpack.c.h.b16 %v320
    %v1208 = vunpack.c.l.b16 %v321
    %v1209 = vunpack.c.h.b16 %v321
    %v1210 = vunpack.c.l.b16 %v322
    %v1211 = vunpack.c.h.b16 %v322
    %v1212 = vunpack.c.l.b16 %v323
    %v1213 = vunpack.c.h.b16 %v323
    %v1214 = vunpack.c.l.b16 %v324
    %v1215 = vunpack.c.h.b16 %v324
    %v1216 = vunpack.c.l.b16 %v325
    %v1217 = vunpack.c.h.b16 %v325
    %v1218 = vunpack.c.l.b16 %v326
    %v1219 = vunpack.c.h.b16 %v326
    %v1220 = vunpack.c.l.b16 %v327
    %v1221 = vunpack.c.h.b16 %v327
    %v1222 = vunpack.c.l.b16 %v328
    %v1223 = vunpack.c.h.b16 %v328
    %v1224 = vunpack.c.l.b16 %v329
    %v1225 = vunpack.c.h.b16 %v329
    %v1226 = vunpack.c.l.b16 %v330
    %v1227 = vunpack.c.h.b16 %v330
    %v1228 = vunpack.c.l.b16 %v331
    %v1229 = vunpack.c.h.b16 %v331
    %v1230 = vunpack.c.l.b16 %v332
    %v1231 = vunpack.c.h.b16 %v332
    %v1232 = vunpack.c.l.b16 %v333
    %v1233 = vunpack.c.h.b16 %v333
    %v1234 = vunpack.c.l.b16 %v334
    %v1235 = vunpack.c.h.b16 %v334
    %v1236 = vunpack.c.l.b16 %v335
    %v1237 = vunpack.c.h.b16 %v335
    %v1238 = vunpack.c.l.b16 %v336
    %v1239 = vunpack.c.h.b16 %v336
    %v1240 = vunpack.c.l.b16 %v337
    %v1241 = vunpack.c.h.b16 %v337
    %v1242 = vunpack.c.l.b16 %v338
    %v1243 = vunpack.c.h.b16 %v338
    %v1244 = vunpack.c.l.b16 %v339
    %v1245 = vunpack.c.h.b16 %v339
    %v1246 = vunpack.c.l.b16 %v340
    %v1247 = vunpack.c.h.b16 %v340
    %v1248 = vunpack.c.l.b16 %v341
    %v1249 = vunpack.c.h.b16 %v341
    %v1250 = vunpack.c.l.b16 %v342
    %v1251 = vunpack.c.h.b16 %v342
    %v1252 = vunpack.c.l.b16 %v343
    %v1253 = vunpack.c.h.b16 %v343
    %v1254 = vunpack.c.l.b16 %v344
    %v1255 = vunpack.c.h.b16 %v344
    %v1256 = vunpack.c.l.b16 %v345
    %v1257 = vunpack.c.h.b16 %v345
    %v1258 = vunpack.c.l.b16 %v346
    %v1259 = vunpack.c.h.b16 %v346
    %v1260 = vunpack.c.l.b16 %v347
    %v1261 = vunpack.c.h.b16 %v347
    %v1262 = vunpack.c.l.b16 %v348
    %v1263 = vunpack.c.h.b16 %v348
    %v1264 = vunpack.c.l.b16 %v349
    %v1265 = vunpack.c.h.b16 %v349
    %v1266 = vunpack.c.l.b16 %v350
    %v1267 = vunpack.c.h.b16 %v350
    %v1268 = vunpack.c.l.b16 %v351
    %v1269 = vunpack.c.h.b16 %v351
    %v1270 = vunpack.c.l.b16 %v352
    %v1271 = vunpack.c.h.b16 %v352
    %v1272 = vunpack.c.l.b16 %v353
    %v1273 = vunpack.c.h.b16 %v353
    %v1274 = vunpack.c.l.b16 %v354
    %v1275 = vunpack.c.h.b16 %v354
    %v1276 = vunpack.c.l.b16 %v355
    %v1277 = vunpack.c.h.b16 %v355
    %v1278 = vunpack.c.l.b16 %v356
    %v1279 = vunpack.c.h.b16 %v356
    %v1280 = vunpack.c.l.b16 %v357
    %v1281 = vunpack.c.h.b16 %v357
    %v1282 = vunpack.c.l.b16 %v358
    %v1283 = vunpack.c.h.b16 %v358
    %v1284 = vunpack.c.l.b16 %v359
    %v1285 = vunpack.c.h.b16 %v359
    %v1286 = vunpack.c.l.b16 %v360
    %v1287 = vunpack.c.h.b16 %v360
    %v1288 = vunpack.c.l.b16 %v361
    %v1289 = vunpack.c.h.b16 %v361
    %v1290 = vunpack.c.l.b16 %v362
    %v1291 = vunpack.c.h.b16 %v362
    %v1292 = vunpack.c.l.b16 %v363
    %v1293 = vunpack.c.h.b16 %v363
    %v1294 = vunpack.c.l.b16 %v364
    %v1295 = vunpack.c.h.b16 %v364
    %v1296 = vunpack.c.l.b16 %v365
    %v1297 = vunpack.c.h.b16 %v365
    %v1298 = vunpack.c.l.b16 %v366
    %v1299 = vunpack.c.h.b16 %v366
    %v1300 = vunpack.c.l.b16 %v367
    %v1301 = vunpack.c.h.b16 %v367
    %v1302 = vunpack.c.l.b16 %v368
    %v1303 = vunpack.c.h.b16 %v368
    %v1304 = vunpack.c.l.b16 %v369
    %v1305 = vunpack.c.h.b16 %v369
    %v1306 = vunpack.c.l.b16 %v370
    %v1307 = vunpack.c.h.b16 %v370
    %v1308 = vunpack.c.l.b16 %v371
    %v1309 = vunpack.c.h.b16 %v371
    %v1310 = vunpack.c.l.b16 %v372
    %v1311 = vunpack.c.h.b16 %v372
    %v1312 = vunpack.c.l.b16 %v373
    %v1313 = vunpack.c.h.b16 %v373
    %v1314 = vunpack.c.l.b16 %v374
    %v1315 = vunpack.c.h.b16 %v374
    %v1316 = vunpack.c.l.b16 %v375
    %v1317 = vunpack.c.h.b16 %v375
    %v1318 = vunpack.c.l.b16 %v376
    %v1319 = vunpack.c.h.b16 %v376
    %v1320 = vunpack.c.l.b16 %v377
    %v1321 = vunpack.c.h.b16 %v377
    %v1322 = vunpack.c.l.b16 %v378
    %v1323 = vunpack.c.h.b16 %v378
    %v1324 = vunpack.c.l.b16 %v379
    %v1325 = vunpack.c.h.b16 %v379
    %v1326 = vunpack.c.l.b16 %v380
    %v1327 = vunpack.c.h.b16 %v380
    %v1328 = vunpack.c.l.b16 %v381
    %v1329 = vunpack.c.h.b16 %v381
    %v1330 = vunpack.c.l.b16 %v382
    %v1331 = vunpack.c.h.b16 %v382
    %v1332 = vunpack.c.l.b16 %v383
    %v1333 = vunpack.c.h.b16 %v383
    %v1334 = vunpack.c.l.b16 %v384
    %v1335 = vunpack.c.h.b16 %v384
    %v1336 = vunpack.c.l.b16 %v385
    %v1337 = vunpack.c.h.b16 %v385
    %v1338 = vunpack.c.l.b16 %v386
    %v1339 = vunpack.c.h.b16 %v386
    %v1340 = vunpack.c.l.b16 %v387
    %v1341 = vunpack.c.h.b16 %v387
    %v1342 = vunpack.c.l.b16 %v388
    %v1343 = vunpack.c.h.b16 %v388
    %v1344 = vunpack.c.l.b16 %v389
    %v1345 = vunpack.c.h.b16 %v389
    %v1346 = vunpack.c.l.b16 %v390
    %v1347 = vunpack.c.h.b16 %v390
    %v1348 = vunpack.c.l.b16 %v391
    %v1349 = vunpack.c.h.b16 %v391
    %v1350 = vunpack.c.l.b16 %v392
    %v1351 = vunpack.c.h.b16 %v392
    %v1352 = vunpack.c.l.b16 %v393
    %v1353 = vunpack.c.h.b16 %v393
    %v1354 = vunpack.c.l.b16 %v394
    %v1355 = vunpack.c.h.b16 %v394
    %v1356 = vunpack.c.l.b16 %v395
    %v1357 = vunpack.c.h.b16 %v395
    %v1358 = vunpack.c.l.b16 %v396
    %v1359 = vunpack.c.h.b16 %v396
    %v1360 = vunpack.c.l.b16 %v397
    %v1361 = vunpack.c.h.b16 %v397
    %v1362 = vunpack.c.l.b16 %v398
    %v1363 = vunpack.c.h.b16 %v398
    %v1364 = vunpack.c.l.b16 %v399
    %v1365 = vunpack.c.h.b16 %v399
    %v1366 = vunpack.c.l.b16 %v400
    %v1367 = vunpack.c.h.b16 %v400
    %v1368 = vunpack.c.l.b16 %v401
    %v1369 = vunpack.c.h.b16 %v401
    %v1370 = vunpack.c.l.b16 %v402
    %v1371 = vunpack.c.h.b16 %v402
    %v1372 = vunpack.c.l.b16 %v403
    %v1373 = vunpack.c.h.b16 %v403
    %v1374 = vunpack.c.l.b16 %v404
    %v1375 = vunpack.c.h.b16 %v404
    %v1376 = vunpack.c.l.b16 %v405
    %v1377 = vunpack.c.h.b16 %v405
    %v1378 = vunpack.c.l.b16 %v406
    %v1379 = vunpack.c.h.b16 %v406
    %v1380 = vunpack.c.l.b16 %v407
    %v1381 = vunpack.c.h.b16 %v407
    %v1382 = vunpack.c.l.b16 %v408
    %v1383 = vunpack.c.h.b16 %v408
    %v1384 = vunpack.c.l.b16 %v409
    %v1385 = vunpack.c.h.b16 %v409
    %v1386 = vunpack.c.l.b16 %v410
    %v1387 = vunpack.c.h.b16 %v410
    %v1388 = vunpack.c.l.b16 %v411
    %v1389 = vunpack.c.h.b16 %v411
    %v1390 = vunpack.c.l.b16 %v412
    %v1391 = vunpack.c.h.b16 %v412
    %v1392 = vunpack.c.l.b16 %v413
    %v1393 = vunpack.c.h.b16 %v413
    %v1394 = vunpack.c.l.b16 %v414
    %v1395 = vunpack.c.h.b16 %v414
    %v1396 = vunpack.c.l.b16 %v415
    %v1397 = vunpack.c.h.b16 %v415
    %v1398 = vunpack.c.l.b16 %v416
    %v1399 = vunpack.c.h.b16 %v416
    %v1400 = vunpack.c.l.b16 %v417
    %v1401 = vunpack.c.h.b16 %v417
    %v1402 = vunpack.c.l.b16 %v418
    %v1403 = vunpack.c.h.b16 %v418
    %v1404 = vunpack.c.l.b16 %v419
    %v1405 = vunpack.c.h.b16 %v419
    %v1406 = vunpack.c.l.b16 %v420
    %v1407 = vunpack.c.h.b16 %v420
    %v1408 = vunpack.c.l.b16 %v421
    %v1409 = vunpack.c.h.b16 %v421
    %v1410 = vunpack.c.l.b16 %v422
    %v1411 = vunpack.c.h.b16 %v422
    %v1412 = vunpack.c.l.b16 %v423
    %v1413 = vunpack.c.h.b16 %v423
    %v1414 = vunpack.c.l.b16 %v424
    %v1415 = vunpack.c.h.b16 %v424
    %v1416 = vunpack.c.l.b16 %v425
    %v1417 = vunpack.c.h.b16 %v425
    %v1418 = vunpack.c.l.b16 %v426
    %v1419 = vunpack.c.h.b16 %v426
    %v1420 = vunpack.c.l.b16 %v427
    %v1421 = vunpack.c.h.b16 %v427
    %v1422 = vunpack.c.l.b16 %v428
    %v1423 = vunpack.c.h.b16 %v428
    %v1424 = vunpack.c.l.b16 %v429
    %v1425 = vunpack.c.h.b16 %v429
    %v1426 = vunpack.c.l.b16 %v430
    %v1427 = vunpack.c.h.b16 %v430
    %v1428 = vunpack.c.l.b16 %v431
    %v1429 = vunpack.c.h.b16 %v431
    %v1430 = vunpack.c.l.b16 %v432
    %v1431 = vunpack.c.h.b16 %v432
    %v1432 = vunpack.c.l.b16 %v433
    %v1433 = vunpack.c.h.b16 %v433
    %v1434 = vunpack.c.l.b16 %v434
    %v1435 = vunpack.c.h.b16 %v434
    %v1436 = vunpack.c.l.b16 %v435
    %v1437 = vunpack.c.h.b16 %v435
    %v1438 = vunpack.c.l.b16 %v436
    %v1439 = vunpack.c.h.b16 %v436
    %v1440 = vunpack.c.l.b16 %v437
    %v1441 = vunpack.c.h.b16 %v437
    %v1442 = vunpack.c.l.b16 %v438
    %v1443 = vunpack.c.h.b16 %v438
    %v1444 = vunpack.c.l.b16 %v439
    %v1445 = vunpack.c.h.b16 %v439
    %v1446 = vunpack.c.l.b16 %v440
    %v1447 = vunpack.c.h.b16 %v440
    %v1448 = vunpack.c.l.b16 %v441
    %v1449 = vunpack.c.h.b16 %v441
    %v1450 = vunpack.c.l.b16 %v442
    %v1451 = vunpack.c.h.b16 %v442
    %v1452 = vunpack.c.l.b16 %v443
    %v1453 = vunpack.c.h.b16 %v443
    %v1454 = vunpack.c.l.b16 %v444
    %v1455 = vunpack.c.h.b16 %v444
    %v1456 = vunpack.c.l.b16 %v445
    %v1457 = vunpack.c.h.b16 %v445
    %v1458 = vunpack.c.l.b16 %v446
    %v1459 = vunpack.c.h.b16 %v446
    %v1460 = vunpack.c.l.b16 %v447
    %v1461 = vunpack.c.h.b16 %v447
    %v1462 = vunpack.c.l.b16 %v448
    %v1463 = vunpack.c.h.b16 %v448
    %v1464 = vunpack.c.l.b16 %v449
    %v1465 = vunpack.c.h.b16 %v449
    %v1466 = vunpack.c.l.b16 %v450
    %v1467 = vunpack.c.h.b16 %v450
    %v1468 = vunpack.c.l.b16 %v451
    %v1469 = vunpack.c.h.b16 %v451
    %v1470 = vunpack.c.l.b16 %v452
    %v1471 = vunpack.c.h.b16 %v452
    %v1472 = vunpack.c.l.b16 %v453
    %v1473 = vunpack.c.h.b16 %v453
    %v1474 = vunpack.c.l.b16 %v454
    %v1475 = vunpack.c.h.b16 %v454
    %v1476 = vunpack.c.l.b16 %v455
    %v1477 = vunpack.c.h.b16 %v455
    %v1478 = vunpack.c.l.b16 %v456
    %v1479 = vunpack.c.h.b16 %v456
    %v1480 = vunpack.c.l.b16 %v457
    %v1481 = vunpack.c.h.b16 %v457
    %v1482 = vunpack.c.l.b16 %v458
    %v1483 = vunpack.c.h.b16 %v458
    %v1484 = vunpack.c.l.b16 %v459
    %v1485 = vunpack.c.h.b16 %v459
    %v1486 = vunpack.c.l.b16 %v460
    %v1487 = vunpack.c.h.b16 %v460
    %v1488 = vunpack.c.l.b16 %v461
    %v1489 = vunpack.c.h.b16 %v461
    %v1490 = vunpack.c.l.b16 %v462
    %v1491 = vunpack.c.h.b16 %v462
    %v1492 = vunpack.c.l.b16 %v463
    %v1493 = vunpack.c.h.b16 %v463
    %v1494 = vunpack.c.l.b16 %v464
    %v1495 = vunpack.c.h.b16 %v464
    %v1496 = vunpack.c.l.b16 %v465
    %v1497 = vunpack.c.h.b16 %v465
    %v1498 = vunpack.c.l.b16 %v466
    %v1499 = vunpack.c.h.b16 %v466
    %v1500 = vunpack.c.l.b16 %v467
    %v1501 = vunpack.c.h.b16 %v467
    %v1502 = vunpack.c.l.b16 %v468
    %v1503 = vunpack.c.h.b16 %v468
    %v1504 = vunpack.c.l.b16 %v469
    %v1505 = vunpack.c.h.b16 %v469
    %v1506 = vunpack.c.l.b16 %v470
    %v1507 = vunpack.c.h.b16 %v470
    %v1508 = vunpack.c.l.b16 %v471
    %v1509 = vunpack.c.h.b16 %v471
    %v1510 = vunpack.c.l.b16 %v472
    %v1511 = vunpack.c.h.b16 %v472
    %v1512 = vunpack.c.l.b16 %v473
    %v1513 = vunpack.c.h.b16 %v473
    %v1514 = vunpack.c.l.b16 %v474
    %v1515 = vunpack.c.h.b16 %v474
    %v1516 = vunpack.c.l.b16 %v475
    %v1517 = vunpack.c.h.b16 %v475
    %v1518 = vunpack.c.l.b16 %v476
    %v1519 = vunpack.c.h.b16 %v476
    %v1520 = vunpack.c.l.b16 %v477
    %v1521 = vunpack.c.h.b16 %v477
    %v1522 = vunpack.c.l.b16 %v478
    %v1523 = vunpack.c.h.b16 %v478
    %v1524 = vunpack.c.l.b16 %v479
    %v1525 = vunpack.c.h.b16 %v479
    %v1526 = vunpack.c.l.b16 %v480
    %v1527 = vunpack.c.h.b16 %v480
    %v1528 = vunpack.c.l.b16 %v481
    %v1529 = vunpack.c.h.b16 %v481
    %v1530 = vunpack.c.l.b16 %v482
    %v1531 = vunpack.c.h.b16 %v482
    %v1532 = vunpack.c.l.b16 %v483
    %v1533 = vunpack.c.h.b16 %v483
    %v1534 = vunpack.c.l.b16 %v484
    %v1535 = vunpack.c.h.b16 %v484
    %v1536 = vunpack.c.l.b16 %v485
    %v1537 = vunpack.c.h.b16 %v485
    %v1538 = vunpack.c.l.b16 %v486
    %v1539 = vunpack.c.h.b16 %v486
    %v1540 = vunpack.c.l.b16 %v487
    %v1541 = vunpack.c.h.b16 %v487
    %v1542 = vunpack.c.l.b16 %v488
    %v1543 = vunpack.c.h.b16 %v488
    %v1544 = vunpack.c.l.b16 %v489
    %v1545 = vunpack.c.h.b16 %v489
    %v1546 = vunpack.c.l.b16 %v490
    %v1547 = vunpack.c.h.b16 %v490
    %v1548 = vunpack.c.l.b16 %v491
    %v1549 = vunpack.c.h.b16 %v491
    %v1550 = vunpack.c.l.b16 %v492
    %v1551 = vunpack.c.h.b16 %v492
    %v1552 = vunpack.c.l.b16 %v493
    %v1553 = vunpack.c.h.b16 %v493
    %v1554 = vunpack.c.l.b16 %v494
    %v1555 = vunpack.c.h.b16 %v494
    %v1556 = vunpack.c.l.b16 %v495
    %v1557 = vunpack.c.h.b16 %v495
    %v1558 = vunpack.c.l.b16 %v496
    %v1559 = vunpack.c.h.b16 %v496
    %v1560 = vunpack.c.l.b16 %v497
    %v1561 = vunpack.c.h.b16 %v497
    %v1562 = vunpack.c.l.b16 %v498
    %v1563 = vunpack.c.h.b16 %v498
    %v1564 = vunpack.c.l.b16 %v499
    %v1565 = vunpack.c.h.b16 %v499
    %v1566 = vunpack.c.l.b16 %v500
    %v1567 = vunpack.c.h.b16 %v500
    %v1568 = vunpack.c.l.b16 %v501
    %v1569 = vunpack.c.h.b16 %v501
    %v1570 = vunpack.c.l.b16 %v502
    %v1571 = vunpack.c.h.b16 %v502
    %v1572 = vunpack.c.l.b16 %v503
    %v1573 = vunpack.c.h.b16 %v503
    %v1574 = vunpack.c.l.b16 %v504
    %v1575 = vunpack.c.h.b16 %v504
    %v1576 = vunpack.c.l.b16 %v505
    %v1577 = vunpack.c.h.b16 %v505
    %v1578 = vunpack.c.l.b16 %v506
    %v1579 = vunpack.c.h.b16 %v506
    %v1580 = vunpack.c.l.b16 %v507
    %v1581 = vunpack.c.h.b16 %v507
    %v1582 = vunpack.c.l.b16 %v508
    %v1583 = vunpack.c.h.b16 %v508
    %v1584 = vunpack.c.l.b16 %v509
    %v1585 = vunpack.c.h.b16 %v509
    %v1586 = vunpack.c.l.b16 %v510
    %v1587 = vunpack.c.h.b16 %v510
    %v1588 = vunpack.c.l.b16 %v511
    %v1589 = vunpack.c.h.b16 %v511
    %v1590 = vunpack.c.l.b16 %v512
    %v1591 = vunpack.c.h.b16 %v512
    %v1592 = vunpack.c.l.b16 %v513
    %v1593 = vunpack.c.h.b16 %v513
    %v1594 = vunpack.c.l.b16 %v514
    %v1595 = vunpack.c.h.b16 %v514
    %v1596 = vunpack.c.l.b16 %v515
    %v1597 = vunpack.c.h.b16 %v515
    %v1598 = vunpack.c.l.b16 %v516
    %v1599 = vunpack.c.h.b16 %v516
    %v1600 = vunpack.c.l.b16 %v517
    %v1601 = vunpack.c.h.b16 %v517
    %v1602 = vunpack.c.l.b16 %v518
    %v1603 = vunpack.c.h.b16 %v518
    %v1604 = vunpack.c.l.b16 %v519
    %v1605 = vunpack.c.h.b16 %v519
    %v1606 = vunpack.c.l.b16 %v520
    %v1607 = vunpack.c.h.b16 %v520
    %v1608 = vunpack.c.l.b16 %v521
    %v1609 = vunpack.c.h.b16 %v521
    %v1610 = vunpack.c.l.b16 %v522
    %v1611 = vunpack.c.h.b16 %v522
    %v1612 = vunpack.c.l.b16 %v523
    %v1613 = vunpack.c.h.b16 %v523
    %v1614 = vunpack.c.l.b16 %v524
    %v1615 = vunpack.c.h.b16 %v524
    %v1616 = vunpack.c.l.b16 %v525
    %v1617 = vunpack.c.h.b16 %v525
    %v1618 = vunpack.c.l.b16 %v526
    %v1619 = vunpack.c.h.b16 %v526
    %v1620 = vunpack.c.l.b16 %v527
    %v1621 = vunpack.c.h.b16 %v527
    %v1622 = vunpack.c.l.b16 %v528
    %v1623 = vunpack.c.h.b16 %v528
    %v1624 = vunpack.c.l.b16 %v529
    %v1625 = vunpack.c.h.b16 %v529
    %v1626 = vunpack.c.l.b16 %v530
    %v1627 = vunpack.c.h.b16 %v530
    %v1628 = vunpack.c.l.b16 %v531
    %v1629 = vunpack.c.h.b16 %v531
    %v1630 = vunpack.c.l.b16 %v532
    %v1631 = vunpack.c.h.b16 %v532
    %v1632 = vunpack.c.l.b16 %v533
    %v1633 = vunpack.c.h.b16 %v533
    %v1634 = vunpack.c.l.b16 %v534
    %v1635 = vunpack.c.h.b16 %v534
    %v1636 = vunpack.c.l.b16 %v535
    %v1637 = vunpack.c.h.b16 %v535
    %v1638 = vunpack.c.l.b16 %v536
    %v1639 = vunpack.c.h.b16 %v536
    %v1640 = vunpack.c.l.b16 %v537
    %v1641 = vunpack.c.h.b16 %v537
    %v1642 = vunpack.c.l.b16 %v538
    %v1643 = vunpack.c.h.b16 %v538
    %v1644 = vunpack.c.l.b16 %v539
    %v1645 = vunpack.c.h.b16 %v539
    %v1646 = vunpack.c.l.b16 %v540
    %v1647 = vunpack.c.h.b16 %v540
    %v1648 = vunpack.c.l.b16 %v541
    %v1649 = vunpack.c.h.b16 %v541
    %v1650 = vunpack.c.l.b16 %v542
    %v1651 = vunpack.c.h.b16 %v542
    %v1652 = vunpack.c.l.b16 %v543
    %v1653 = vunpack.c.h.b16 %v543
    %v1654 = vunpack.c.l.b16 %v544
    %v1655 = vunpack.c.h.b16 %v544
    %v1656 = vunpack.c.l.b16 %v545
    %v1657 = vunpack.c.h.b16 %v545
    %v1658 = vunpack.c.l.b16 %v546
    %v1659 = vunpack.c.h.b16 %v546
    %v1660 = vunpack.c.l.b16 %v547
    %v1661 = vunpack.c.h.b16 %v547
    %v1662 = vunpack.c.l.b16 %v548
    %v1663 = vunpack.c.h.b16 %v548
    %v1664 = vunpack.c.l.b16 %v549
    %v1665 = vunpack.c.h.b16 %v549
    %v1666 = vunpack.c.l.b16 %v550
    %v1667 = vunpack.c.h.b16 %v550
    %v1668 = vunpack.c.l.b16 %v551
    %v1669 = vunpack.c.h.b16 %v551
    %v1670 = vunpack.c.l.b16 %v552
    %v1671 = vunpack.c.h.b16 %v552
    %v1672 = vunpack.c.l.b16 %v553
    %v1673 = vunpack.c.h.b16 %v553
    %v1674 = vunpack.c.l.b16 %v554
    %v1675 = vunpack.c.h.b16 %v554
    %v1676 = vunpack.c.l.b16 %v555
    %v1677 = vunpack.c.h.b16 %v555
    %v1678 = vunpack.c.l.b16 %v556
    %v1679 = vunpack.c.h.b16 %v556
    %v1680 = vunpack.c.l.b16 %v557
    %v1681 = vunpack.c.h.b16 %v557
    %v1682 = vunpack.c.l.b16 %v558
    %v1683 = vunpack.c.h.b16 %v558
    %v1684 = vunpack.c.l.b16 %v559
    %v1685 = vunpack.c.h.b16 %v559
    %v1686 = vunpack.c.l.b16 %v560
    %v1687 = vunpack.c.h.b16 %v560
    %v1688 = vunpack.c.l.b16 %v561
    %v1689 = vunpack.c.h.b16 %v561
    %v1690 = vunpack.c.l.b16 %v562
    %v1691 = vunpack.c.h.b16 %v562
    %v1692 = vunpack.c.l.b16 %v563
    %v1693 = vunpack.c.h.b16 %v563
    %v1694 = vunpack.c.l.b16 %v564
    %v1695 = vunpack.c.h.b16 %v564
    %v1696 = vunpack.c.l.b16 %v565
    %v1697 = vunpack.c.h.b16 %v565
    %v1698 = vunpack.c.l.b16 %v566
    %v1699 = vunpack.c.h.b16 %v566
    %v1700 = vunpack.c.l.b16 %v567
    %v1701 = vunpack.c.h.b16 %v567
    %v1702 = vunpack.c.l.b16 %v568
    %v1703 = vunpack.c.h.b16 %v568
    %v1704 = vunpack.c.l.b16 %v569
    %v1705 = vunpack.c.h.b16 %v569
    %v1706 = vunpack.c.l.b16 %v570
    %v1707 = vunpack.c.h.b16 %v570
    %v1708 = vunpack.c.l.b16 %v571
    %v1709 = vunpack.c.h.b16 %v571
    %v1710 = vunpack.c.l.b16 %v572
    %v1711 = vunpack.c.h.b16 %v572
    %v1712 = vunpack.c.l.b16 %v573
    %v1713 = vunpack.c.h.b16 %v573
    %v1714 = vunpack.c.l.b16 %v574
    %v1715 = vunpack.c.h.b16 %v574
    %v1716 = vunpack.c.l.b16 %v575
    %v1717 = vunpack.c.h.b16 %v575
    %v1718 = vunpack.c.l.b16 %v576
    %v1719 = vunpack.c.h.b16 %v576
    %v1720 = vunpack.c.l.b16 %v577
    %v1721 = vunpack.c.h.b16 %v577
    %v1722 = vunpack.c.l.b16 %v578
    %v1723 = vunpack.c.h.b16 %v578
    %v1724 = vunpack.c.l.b16 %v579
    %v1725 = vunpack.c.h.b16 %v579
    %v1726 = vunpack.c.l.b16 %v580
    %v1727 = vunpack.c.h.b16 %v580
    %v1728 = vunpack.c.l.b16 %v581
    %v1729 = vunpack.c.h.b16 %v581
    %v1730 = vunpack.c.l.b16 %v582
    %v1731 = vunpack.c.h.b16 %v582
    %v1732 = vunpack.c.l.b16 %v583
    %v1733 = vunpack.c.h.b16 %v583
    %v1734 = vunpack.c.l.b16 %v584
    %v1735 = vunpack.c.h.b16 %v584
    %v1736 = vunpack.c.l.b16 %v585
    %v1737 = vunpack.c.h.b16 %v585
    %v1738 = vunpack.c.l.b16 %v586
    %v1739 = vunpack.c.h.b16 %v586
    %v1740 = vunpack.c.l.b16 %v587
    %v1741 = vunpack.c.h.b16 %v587
    %v1742 = vunpack.c.l.b16 %v588
    %v1743 = vunpack.c.h.b16 %v588
    %v1744 = vunpack.c.l.b16 %v589
    %v1745 = vunpack.c.h.b16 %v589
    %v1746 = vunpack.c.l.b16 %v590
    %v1747 = vunpack.c.h.b16 %v590
    %v1748 = vunpack.c.l.b16 %v591
    %v1749 = vunpack.c.h.b16 %v591
    %v1750 = vunpack.c.l.b16 %v592
    %v1751 = vunpack.c.h.b16 %v592
    %v1752 = vunpack.c.l.b16 %v593
    %v1753 = vunpack.c.h.b16 %v593
    %v1754 = vunpack.c.l.b16 %v594
    %v1755 = vunpack.c.h.b16 %v594
    %v1756 = vunpack.c.l.b16 %v595
    %v1757 = vunpack.c.h.b16 %v595
    %v1758 = vunpack.c.l.b16 %v596
    %v1759 = vunpack.c.h.b16 %v596
    %v1760 = vunpack.c.l.b16 %v597
    %v1761 = vunpack.c.h.b16 %v597
    %v1762 = vunpack.c.l.b16 %v598
    %v1763 = vunpack.c.h.b16 %v598
    %v1764 = vunpack.c.l.b16 %v599
    %v1765 = vunpack.c.h.b16 %v599
    %v1766 = vunpack.c.l.b16 %v600
    %v1767 = vunpack.c.h.b16 %v600
    %v1768 = vunpack.c.l.b16 %v601
    %v1769 = vunpack.c.h.b16 %v601
    %v1770 = vunpack.c.l.b16 %v602
    %v1771 = vunpack.c.h.b16 %v602
    %v1772 = vunpack.c.l.b16 %v603
    %v1773 = vunpack.c.h.b16 %v603
    %v1774 = vunpack.c.l.b16 %v604
    %v1775 = vunpack.c.h.b16 %v604
    %v1776 = vunpack.c.l.b16 %v605
    %v1777 = vunpack.c.h.b16 %v605
    %v1778 = vunpack.c.l.b16 %v606
    %v1779 = vunpack.c.h.b16 %v606
    %v1780 = vunpack.c.l.b16 %v607
    %v1781 = vunpack.c.h.b16 %v607
    %v1782 = vunpack.c.l.b16 %v608
    %v1783 = vunpack.c.h.b16 %v608
    %v1784 = vunpack.c.l.b16 %v609
    %v1785 = vunpack.c.h.b16 %v609
    %v1786 = vunpack.c.l.b16 %v610
    %v1787 = vunpack.c.h.b16 %v610
    %v1788 = vunpack.c.l.b16 %v611
    %v1789 = vunpack.c.h.b16 %v611
    %v1790 = vunpack.c.l.b16 %v612
    %v1791 = vunpack.c.h.b16 %v612
    %v1792 = vunpack.c.l.b16 %v613
    %v1793 = vunpack.c.h.b16 %v613
    %v1794 = vunpack.c.l.b16 %v614
    %v1795 = vunpack.c.h.b16 %v614
    %v1796 = vunpack.c.l.b16 %v615
    %v1797 = vunpack.c.h.b16 %v615
    %v1798 = vunpack.c.l.b16 %v616
    %v1799 = vunpack.c.h.b16 %v616
    %v1800 = vunpack.c.l.b16 %v617
    %v1801 = vunpack.c.h.b16 %v617
    %v1802 = vunpack.c.l.b16 %v618
    %v1803 = vunpack.c.h.b16 %v618
    %v1804 = vunpack.c.l.b16 %v619
    %v1805 = vunpack.c.h.b16 %v619
    %v1806 = vunpack.c.l.b16 %v620
    %v1807 = vunpack.c.h.b16 %v620
    %v1808 = vunpack.c.l.b16 %v621
    %v1809 = vunpack.c.h.b16 %v621
    %v1810 = vunpack.c.l.b16 %v622
    %v1811 = vunpack.c.h.b16 %v622
    %v1812 = vunpack.c.l.b16 %v623
    %v1813 = vunpack.c.h.b16 %v623
    %v1814 = vunpack.c.l.b16 %v624
    %v1815 = vunpack.c.h.b16 %v624
    %v1816 = vunpack.c.l.b16 %v625
    %v1817 = vunpack.c.h.b16 %v625
    %v1818 = vunpack.c.l.b16 %v626
    %v1819 = vunpack.c.h.b16 %v626
    %v1820 = vunpack.c.l.b16 %v627
    %v1821 = vunpack.c.h.b16 %v627
    %v1822 = vunpack.c.l.b16 %v628
    %v1823 = vunpack.c.h.b16 %v628
    %v1824 = vunpack.c.l.b16 %v629
    %v1825 = vunpack.c.h.b16 %v629
    %v1826 = vunpack.c.l.b16 %v630
    %v1827 = vunpack.c.h.b16 %v630
    %v1828 = vunpack.c.l.b16 %v631
    %v1829 = vunpack.c.h.b16 %v631
    %v1830 = vunpack.c.l.b16 %v632
    %v1831 = vunpack.c.h.b16 %v632
    %v1832 = vunpack.c.l.b16 %v633
    %v1833 = vunpack.c.h.b16 %v633
    %v1834 = vunpack.c.l.b16 %v634
    %v1835 = vunpack.c.h.b16 %v634
    %v1836 = vunpack.c.l.b16 %v635
    %v1837 = vunpack.c.h.b16 %v635
    %v1838 = vunpack.c.l.b16 %v636
    %v1839 = vunpack.c.h.b16 %v636
    %v1840 = vunpack.c.l.b16 %v637
    %v1841 = vunpack.c.h.b16 %v637
    %v1842 = vunpack.c.l.b16 %v638
    %v1843 = vunpack.c.h.b16 %v638
    %v1844 = vunpack.c.l.b16 %v639
    %v1845 = vunpack.c.h.b16 %v639
    %v1846 = vunpack.c.l.b16 %v640
    %v1847 = vunpack.c.h.b16 %v640
    %v1848 = vunpack.c.l.b16 %v641
    %v1849 = vunpack.c.h.b16 %v641
    %v1850 = vunpack.c.l.b16 %v642
    %v1851 = vunpack.c.h.b16 %v642
    %v1852 = vunpack.c.l.b16 %v643
    %v1853 = vunpack.c.h.b16 %v643
    %v1854 = vunpack.c.l.b16 %v644
    %v1855 = vunpack.c.h.b16 %v644
    %v1856 = vunpack.c.l.b16 %v645
    %v1857 = vunpack.c.h.b16 %v645
    %v1858 = vunpack.c.l.b16 %v646
    %v1859 = vunpack.c.h.b16 %v646
    %v1860 = vunpack.c.l.b16 %v647
    %v1861 = vunpack.c.h.b16 %v647
    %v1862 = vunpack.c.l.b16 %v648
    %v1863 = vunpack.c.h.b16 %v648
    %v1864 = vunpack.c.l.b16 %v649
    %v1865 = vunpack.c.h.b16 %v649
    %v1866 = vunpack.c.l.b16 %v650
    %v1867 = vunpack.c.h.b16 %v650
    %v1868 = vunpack.c.l.b16 %v651
    %v1869 = vunpack.c.h.b16 %v651
    %v1870 = vunpack.c.l.b16 %v652
    %v1871 = vunpack.c.h.b16 %v652
    %v1872 = vunpack.c.l.b16 %v653
    %v1873 = vunpack.c.h.b16 %v653
    %v1874 = vunpack.c.l.b16 %v654
    %v1875 = vunpack.c.h.b16 %v654
    %v1876 = vunpack.c.l.b16 %v655
    %v1877 = vunpack.c.h.b16 %v655
    %v1878 = vunpack.c.l.b16 %v656
    %v1879 = vunpack.c.h.b16 %v656
    %v1880 = vunpack.c.l.b16 %v657
    %v1881 = vunpack.c.h.b16 %v657
    %v1882 = vunpack.c.l.b16 %v658
    %v1883 = vunpack.c.h.b16 %v658
    %v1884 = vpack.c.b16 %v1108, %v1100
    %v1885 = vpack.c.b16 %v1109, %v1101
    %v1886 = vpack.c.b16 %v1110, %v1102
    %v1887 = vpack.c.b16 %v1111, %v1103
    %v1888 = vpack.c.b16 %v1112, %v1104
    %v1889 = vpack.c.b16 %v1113, %v1105
    %v1890 = vpack.c.b16 %v1114, %v1106
    %v1891 = vpack.c.b16 %v1115, %v1107
    %v1892 = vpack.c.b16 %v1124, %v1116
    %v1893 = vpack.c.b16 %v1125, %v1117
    %v1894 = vpack.c.b16 %v1126, %v1118
    %v1895 = vpack.c.b16 %v1127, %v1119
    %v1896 = vpack.c.b16 %v1128, %v1120
    %v1897 = vpack.c.b16 %v1129, %v1121
    %v1898 = vpack.c.b16 %v1130, %v1122
    %v1899 = vpack.c.b16 %v1131, %v1123
    %v1900 = vpack.c.b16 %v1140, %v1132
    %v1901 = vpack.c.b16 %v1141, %v1133
    %v1902 = vpack.c.b16 %v1142, %v1134
    %v1903 = vpack.c.b16 %v1143, %v1135
    %v1904 = vpack.c.b16 %v1144, %v1136
    %v1905 = vpack.c.b16 %v1145, %v1137
    %v1906 = vpack.c.b16 %v1146, %v1138
    %v1907 = vpack.c.b16 %v1147, %v1139
    %v1908 = vpack.c.b16 %v1156, %v1148
    %v1909 = vpack.c.b16 %v1157, %v1149
    %v1910 = vpack.c.b16 %v1158, %v1150
    %v1911 = vpack.c.b16 %v1159, %v1151
    %v1912 = vpack.c.b16 %v1160, %v1152
    %v1913 = vpack.c.b16 %v1161, %v1153
    %v1914 = vpack.c.b16 %v1162, %v1154
    %v1915 = vpack.c.b16 %v1163, %v1155
    %v1916 = vpack.c.b16 %v1172, %v1164
    %v1917 = vpack.c.b16 %v1173, %v1165
    %v1918 = vpack.c.b16 %v1174, %v1166
    %v1919 = vpack.c.b16 %v1175, %v1167
    %v1920 = vpack.c.b16 %v1176, %v1168
    %v1921 = vpack.c.b16 %v1177, %v1169
    %v1922 = vpack.c.b16 %v1178, %v1170
    %v1923 = vpack.c.b16 %v1179, %v1171
    %v1924 = vpack.c.b16 %v1188, %v1180
    %v1925 = vpack.c.b16 %v1189, %v1181
    %v1926 = vpack.c.b16 %v1190, %v1182
    %v1927 = vpack.c.b16 %v1191, %v1183
    %v1928 = vpack.c.b16 %v1192, %v1184
    %v1929 = vpack.c.b16 %v1193, %v1185
    %v1930 = vpack.c.b16 %v1194, %v1186
    %v1931 = vpack.c.b16 %v1195, %v1187
    %v1932 = vpack.c.b16 %v1204, %v1196
    %v1933 = vpack.c.b16 %v1205, %v1197
    %v1934 = vpack.c.b16 %v1206, %v1198
    %v1935 = vpack.c.b16 %v1207, %v1199
    %v1936 = vpack.c.b16 %v1208, %v1200
    %v1937 = vpack.c.b16 %v1209, %v1201
    %v1938 = vpack.c.b16 %v1210, %v1202
    %v1939 = vpack.c.b16 %v1211, %v1203
    %v1940 = vpack.c.b16 %v1220, %v1212
    %v1941 = vpack.c.b16 %v1221, %v1213
    %v1942 = vpack.c.b16 %v1222, %v1214
    %v1943 = vpack.c.b16 %v1223, %v1215
    %v1944 = vpack.c.b16 %v1224, %v1216
    %v1945 = vpack.c.b16 %v1225, %v1217
    %v1946 = vpack.c.b16 %v1226, %v1218
    %v1947 = vpack.c.b16 %v1227, %v1219
    %v1948 = vpack.c.b16 %v1236, %v1228
    %v1949 = vpack.c.b16 %v1237, %v1229
    %v1950 = vpack.c.b16 %v1238, %v1230
    %v1951 = vpack.c.b16 %v1239, %v1231
    %v1952 = vpack.c.b16 %v1240, %v1232
    %v1953 = vpack.c.b16 %v1241, %v1233
    %v1954 = vpack.c.b16 %v1242, %v1234
    %v1955 = vpack.c.b16 %v1243, %v1235
    %v1956 = vpack.c.b16 %v1252, %v1244
    %v1957 = vpack.c.b16 %v1253, %v1245
    %v1958 = vpack.c.b16 %v1254, %v1246
    %v1959 = vpack.c.b16 %v1255, %v1247
    %v1960 = vpack.c.b16 %v1256, %v1248
    %v1961 = vpack.c.b16 %v1257, %v1249
    %v1962 = vpack.c.b16 %v1258, %v1250
    %v1963 = vpack.c.b16 %v1259, %v1251
    %v1964 = vpack.c.b16 %v1268, %v1260
    %v1965 = vpack.c.b16 %v1269, %v1261
    %v1966 = vpack.c.b16 %v1270, %v1262
    %v1967 = vpack.c.b16 %v1271, %v1263
    %v1968 = vpack.c.b16 %v1272, %v1264
    %v1969 = vpack.c.b16 %v1273, %v1265
    %v1970 = vpack.c.b16 %v1274, %v1266
    %v1971 = vpack.c.b16 %v1275, %v1267
    %v1972 = vpack.c.b16 %v1284, %v1276
    %v1973 = vpack.c.b16 %v1285, %v1277
    %v1974 = vpack.c.b16 %v1286, %v1278
    %v1975 = vpack.c.b16 %v1287, %v1279
    %v1976 = vpack.c.b16 %v1288, %v1280
    %v1977 = vpack.c.b16 %v1289, %v1281
    %v1978 = vpack.c.b16 %v1290, %v1282
    %v1979 = vpack.c.b16 %v1291, %v1283
    %v1980 = vpack.c.b16 %v1300, %v1292
    %v1981 = vpack.c.b16 %v1301, %v1293
    %v1982 = vpack.c.b16 %v1302, %v1294
    %v1983 = vpack.c.b16 %v1303, %v1295
    %v1984 = vpack.c.b16 %v1304, %v1296
    %v1985 = vpack.c.b16 %v1305, %v1297
    %v1986 = vpack.c.b16 %v1306, %v1298
    %v1987 = vpack.c.b16 %v1307, %v1299
    %v1988 = vpack.c.b16 %v1316, %v1308
    %v1989 = vpack.c.b16 %v1317, %v1309
    %v1990 = vpack.c.b16 %v1318, %v1310
    %v1991 = vpack.c.b16 %v1319, %v1311
    %v1992 = vpack.c.b16 %v1320, %v1312
    %v1993 = vpack.c.b16 %v1321, %v1313
    %v1994 = vpack.c.b16 %v1322, %v1314
    %v1995 = vpack.c.b16 %v1323, %v1315
    %v1996 = vpack.c.b16 %v1332, %v1324
    %v1997 = vpack.c.b16 %v1333, %v1325
    %v1998 = vpack.c.b16 %v1334, %v1326
    %v1999 = vpack.c.b16 %v1335, %v1327
    %v2000 = vpack.c.b16 %v1336, %v1328
    %v2001 = vpack.c.b16 %v1337, %v1329
    %v2002 = vpack.c.b16 %v1338, %v1330
    %v2003 = vpack.c.b16 %v1339, %v1331
    %v2004 = vpack.c.b16 %v1348, %v1340
    %v2005 = vpack.c.b16 %v1349, %v1341
    %v2006 = vpack.c.b16 %v1350, %v1342
    %v2007 = vpack.c.b16 %v1351, %v1343
    %v2008 = vpack.c.b16 %v1352, %v1344
    %v2009 = vpack.c.b16 %v1353, %v1345
    %v2010 = vpack.c.b16 %v1354, %v1346
    %v2011 = vpack.c.b16 %v1355, %v1347
    %v2012 = vpack.c.b16 %v1364, %v1356
    %v2013 = vpack.c.b16 %v1365, %v1357
    %v2014 = vpack.c.b16 %v1366, %v1358
    %v2015 = vpack.c.b16 %v1367, %v1359
    %v2016 = vpack.c.b16 %v1368, %v1360
    %v2017 = vpack.c.b16 %v1369, %v1361
    %v2018 = vpack.c.b16 %v1370, %v1362
    %v2019 = vpack.c.b16 %v1371, %v1363
    %v2020 = vpack.c.b16 %v1380, %v1372
    %v2021 = vpack.c.b16 %v1381, %v1373
    %v2022 = vpack.c.b16 %v1382, %v1374
    %v2023 = vpack.c.b16 %v1383, %v1375
    %v2024 = vpack.c.b16 %v1384, %v1376
    %v2025 = vpack.c.b16 %v1385, %v1377
    %v2026 = vpack.c.b16 %v1386, %v1378
    %v2027 = vpack.c.b16 %v1387, %v1379
    %v2028 = vpack.c.b16 %v1396, %v1388
    %v2029 = vpack.c.b16 %v1397, %v1389
    %v2030 = vpack.c.b16 %v1398, %v1390
    %v2031 = vpack.c.b16 %v1399, %v1391
    %v2032 = vpack.c.b16 %v1400, %v1392
    %v2033 = vpack.c.b16 %v1401, %v1393
    %v2034 = vpack.c.b16 %v1402, %v1394
    %v2035 = vpack.c.b16 %v1403, %v1395
    %v2036 = vpack.c.b16 %v1412, %v1404
    %v2037 = vpack.c.b16 %v1413, %v1405
    %v2038 = vpack.c.b16 %v1414, %v1406
    %v2039 = vpack.c.b16 %v1415, %v1407
    %v2040 = vpack.c.b16 %v1416, %v1408
    %v2041 = vpack.c.b16 %v1417, %v1409
    %v2042 = vpack.c.b16 %v1418, %v1410
    %v2043 = vpack.c.b16 %v1419, %v1411
    %v2044 = vpack.c.b16 %v1428, %v1420
    %v2045 = vpack.c.b16 %v1429, %v1421
    %v2046 = vpack.c.b16 %v1430, %v1422
    %v2047 = vpack.c.b16 %v1431, %v1423
    %v2048 = vpack.c.b16 %v1432, %v1424
    %v2049 = vpack.c.b16 %v1433, %v1425
    %v2050 = vpack.c.b16 %v1434, %v1426
    %v2051 = vpack.c.b16 %v1435, %v1427
    %v2052 = vpack.c.b16 %v1444, %v1436
    %v2053 = vpack.c.b16 %v1445, %v1437
    %v2054 = vpack.c.b16 %v1446, %v1438
    %v2055 = vpack.c.b16 %v1447, %v1439
    %v2056 = vpack.c.b16 %v1448, %v1440
    %v2057 = vpack.c.b16 %v1449, %v1441
    %v2058 = vpack.c.b16 %v1450, %v1442
    %v2059 = vpack.c.b16 %v1451, %v1443
    %v2060 = vpack.c.b16 %v1460, %v1452
    %v2061 = vpack.c.b16 %v1461, %v1453
    %v2062 = vpack.c.b16 %v1462, %v1454
    %v2063 = vpack.c.b16 %v1463, %v1455
    %v2064 = vpack.c.b16 %v1464, %v1456
    %v2065 = vpack.c.b16 %v1465, %v1457
    %v2066 = vpack.c.b16 %v1466, %v1458
    %v2067 = vpack.c.b16 %v1467, %v1459
    %v2068 = vpack.c.b16 %v1476, %v1468
    %v2069 = vpack.c.b16 %v1477, %v1469
    %v2070 = vpack.c.b16 %v1478, %v1470
    %v2071 = vpack.c.b16 %v1479, %v1471
    %v2072 = vpack.c.b16 %v1480, %v1472
    %v2073 = vpack.c.b16 %v1481, %v1473
    %v2074 = vpack.c.b16 %v1482, %v1474
    %v2075 = vpack.c.b16 %v1483, %v1475
    %v2076 = vpack.c.b16 %v1492, %v1484
    %v2077 = vpack.c.b16 %v1493, %v1485
    %v2078 = vpack.c.b16 %v1494, %v1486
    %v2079 = vpack.c.b16 %v1495, %v1487
    %v2080 = vpack.c.b16 %v1496, %v1488
    %v2081 = vpack.c.b16 %v1497, %v1489
    %v2082 = vpack.c.b16 %v1498, %v1490
    %v2083 = vpack.c.b16 %v1499, %v1491
    %v2084 = vpack.c.b16 %v1508, %v1500
    %v2085 = vpack.c.b16 %v1509, %v1501
    %v2086 = vpack.c.b16 %v1510, %v1502
    %v2087 = vpack.c.b16 %v1511, %v1503
    %v2088 = vpack.c.b16 %v1512, %v1504
    %v2089 = vpack.c.b16 %v1513, %v1505
    %v2090 = vpack.c.b16 %v1514, %v1506
    %v2091 = vpack.c.b16 %v1515, %v1507
    %v2092 = vpack.c.b16 %v1524, %v1516
    %v2093 = vpack.c.b16 %v1525, %v1517
    %v2094 = vpack.c.b16 %v1526, %v1518
    %v2095 = vpack.c.b16 %v1527, %v1519
    %v2096 = vpack.c.b16 %v1528, %v1520
    %v2097 = vpack.c.b16 %v1529, %v1521
    %v2098 = vpack.c.b16 %v1530, %v1522
    %v2099 = vpack.c.b16 %v1531, %v1523
    %v2100 = vpack.c.b16 %v1540, %v1532
    %v2101 = vpack.c.b16 %v1541, %v1533
    %v2102 = vpack.c.b16 %v1542, %v1534
    %v2103 = vpack.c.b16 %v1543, %v1535
    %v2104 = vpack.c.b16 %v1544, %v1536
    %v2105 = vpack.c.b16 %v1545, %v1537
    %v2106 = vpack.c.b16 %v1546, %v1538
    %v2107 = vpack.c.b16 %v1547, %v1539
    %v2108 = vpack.c.b16 %v1556, %v1548
    %v2109 = vpack.c.b16 %v1557, %v1549
    %v2110 = vpack.c.b16 %v1558, %v1550
    %v2111 = vpack.c.b16 %v1559, %v1551
    %v2112 = vpack.c.b16 %v1560, %v1552
    %v2113 = vpack.c.b16 %v1561, %v1553
    %v2114 = vpack.c.b16 %v1562, %v1554
    %v2115 = vpack.c.b16 %v1563, %v1555
    %v2116 = vpack.c.b16 %v1572, %v1564
    %v2117 = vpack.c.b16 %v1573, %v1565
    %v2118 = vpack.c.b16 %v1574, %v1566
    %v2119 = vpack.c.b16 %v1575, %v1567
    %v2120 = vpack.c.b16 %v1576, %v1568
    %v2121 = vpack.c.b16 %v1577, %v1569
    %v2122 = vpack.c.b16 %v1578, %v1570
    %v2123 = vpack.c.b16 %v1579, %v1571
    %v2124 = vpack.c.b16 %v1588, %v1580
    %v2125 = vpack.c.b16 %v1589, %v1581
    %v2126 = vpack.c.b16 %v1590, %v1582
    %v2127 = vpack.c.b16 %v1591, %v1583
    %v2128 = vpack.c.b16 %v1592, %v1584
    %v2129 = vpack.c.b16 %v1593, %v1585
    %v2130 = vpack.c.b16 %v1594, %v1586
    %v2131 = vpack.c.b16 %v1595, %v1587
    %v2132 = vpack.c.b16 %v1604, %v1596
    %v2133 = vpack.c.b16 %v1605, %v1597
    %v2134 = vpack.c.b16 %v1606, %v1598
    %v2135 = vpack.c.b16 %v1607, %v1599
    %v2136 = vpack.c.b16 %v1608, %v1600
    %v2137 = vpack.c.b16 %v1609, %v1601
    %v2138 = vpack.c.b16 %v1610, %v1602
    %v2139 = vpack.c.b16 %v1611, %v1603
    %v2140 = vpack.c.b16 %v1620, %v1612
    %v2141 = vpack.c.b16 %v1621, %v1613
    %v2142 = vpack.c.b16 %v1622, %v1614
    %v2143 = vpack.c.b16 %v1623, %v1615
    %v2144 = vpack.c.b16 %v1624, %v1616
    %v2145 = vpack.c.b16 %v1625, %v1617
    %v2146 = vpack.c.b16 %v1626, %v1618
    %v2147 = vpack.c.b16 %v1627, %v1619
    %v2148 = vpack.c.b16 %v1636, %v1628
    %v2149 = vpack.c.b16 %v1637, %v1629
    %v2150 = vpack.c.b16 %v1638, %v1630
    %v2151 = vpack.c.b16 %v1639, %v1631
    %v2152 = vpack.c.b16 %v1640, %v1632
    %v2153 = vpack.c.b16 %v1641, %v1633
    %v2154 = vpack.c.b16 %v1642, %v1634
    %v2155 = vpack.c.b16 %v1643, %v1635
    %v2156 = vpack.c.b16 %v1652, %v1644
    %v2157 = vpack.c.b16 %v1653, %v1645
    %v2158 = vpack.c.b16 %v1654, %v1646
    %v2159 = vpack.c.b16 %v1655, %v1647
    %v2160 = vpack.c.b16 %v1656, %v1648
    %v2161 = vpack.c.b16 %v1657, %v1649
    %v2162 = vpack.c.b16 %v1658, %v1650
    %v2163 = vpack.c.b16 %v1659, %v1651
    %v2164 = vpack.c.b16 %v1668, %v1660
    %v2165 = vpack.c.b16 %v1669, %v1661
    %v2166 = vpack.c.b16 %v1670, %v1662
    %v2167 = vpack.c.b16 %v1671, %v1663
    %v2168 = vpack.c.b16 %v1672, %v1664
    %v2169 = vpack.c.b16 %v1673, %v1665
    %v2170 = vpack.c.b16 %v1674, %v1666
    %v2171 = vpack.c.b16 %v1675, %v1667
    %v2172 = vpack.c.b16 %v1684, %v1676
    %v2173 = vpack.c.b16 %v1685, %v1677
    %v2174 = vpack.c.b16 %v1686, %v1678
    %v2175 = vpack.c.b16 %v1687, %v1679
    %v2176 = vpack.c.b16 %v1688, %v1680
    %v2177 = vpack.c.b16 %v1689, %v1681
    %v2178 = vpack.c.b16 %v1690, %v1682
    %v2179 = vpack.c.b16 %v1691, %v1683
    %v2180 = vpack.c.b16 %v1700, %v1692
    %v2181 = vpack.c.b16 %v1701, %v1693
    %v2182 = vpack.c.b16 %v1702, %v1694
    %v2183 = vpack.c.b16 %v1703, %v1695
    %v2184 = vpack.c.b16 %v1704, %v1696
    %v2185 = vpack.c.b16 %v1705, %v1697
    %v2186 = vpack.c.b16 %v1706, %v1698
    %v2187 = vpack.c.b16 %v1707, %v1699
    %v2188 = vpack.c.b16 %v1716, %v1708
    %v2189 = vpack.c.b16 %v1717, %v1709
    %v2190 = vpack.c.b16 %v1718, %v1710
    %v2191 = vpack.c.b16 %v1719, %v1711
    %v2192 = vpack.c.b16 %v1720, %v1712
    %v2193 = vpack.c.b16 %v1721, %v1713
    %v2194 = vpack.c.b16 %v1722, %v1714
    %v2195 = vpack.c.b16 %v1723, %v1715
    %v2196 = vpack.c.b16 %v1732, %v1724
    %v2197 = vpack.c.b16 %v1733, %v1725
    %v2198 = vpack.c.b16 %v1734, %v1726
    %v2199 = vpack.c.b16 %v1735, %v1727
    %v2200 = vpack.c.b16 %v1736, %v1728
    %v2201 = vpack.c.b16 %v1737, %v1729
    %v2202 = vpack.c.b16 %v1738, %v1730
    %v2203 = vpack.c.b16 %v1739, %v1731
    %v2204 = vpack.c.b16 %v1748, %v1740
    %v2205 = vpack.c.b16 %v1749, %v1741
    %v2206 = vpack.c.b16 %v1750, %v1742
    %v2207 = vpack.c.b16 %v1751, %v1743
    %v2208 = vpack.c.b16 %v1752, %v1744
    %v2209 = vpack.c.b16 %v1753, %v1745
    %v2210 = vpack.c.b16 %v1754, %v1746
    %v2211 = vpack.c.b16 %v1755, %v1747
    %v2212 = vpack.c.b16 %v1764, %v1756
    %v2213 = vpack.c.b16 %v1765, %v1757
    %v2214 = vpack.c.b16 %v1766, %v1758
    %v2215 = vpack.c.b16 %v1767, %v1759
    %v2216 = vpack.c.b16 %v1768, %v1760
    %v2217 = vpack.c.b16 %v1769, %v1761
    %v2218 = vpack.c.b16 %v1770, %v1762
    %v2219 = vpack.c.b16 %v1771, %v1763
    %v2220 = vpack.c.b16 %v1780, %v1772
    %v2221 = vpack.c.b16 %v1781, %v1773
    %v2222 = vpack.c.b16 %v1782, %v1774
    %v2223 = vpack.c.b16 %v1783, %v1775
    %v2224 = vpack.c.b16 %v1784, %v1776
    %v2225 = vpack.c.b16 %v1785, %v1777
    %v2226 = vpack.c.b16 %v1786, %v1778
    %v2227 = vpack.c.b16 %v1787, %v1779
    %v2228 = vpack.c.b16 %v1796, %v1788
    %v2229 = vpack.c.b16 %v1797, %v1789
    %v2230 = vpack.c.b16 %v1798, %v1790
    %v2231 = vpack.c.b16 %v1799, %v1791
    %v2232 = vpack.c.b16 %v1800, %v1792
    %v2233 = vpack.c.b16 %v1801, %v1793
    %v2234 = vpack.c.b16 %v1802, %v1794
    %v2235 = vpack.c.b16 %v1803, %v1795
    %v2236 = vpack.c.b16 %v1812, %v1804
    %v2237 = vpack.c.b16 %v1813, %v1805
    %v2238 = vpack.c.b16 %v1814, %v1806
    %v2239 = vpack.c.b16 %v1815, %v1807
    %v2240 = vpack.c.b16 %v1816, %v1808
    %v2241 = vpack.c.b16 %v1817, %v1809
    %v2242 = vpack.c.b16 %v1818, %v1810
    %v2243 = vpack.c.b16 %v1819, %v1811
    %v2244 = vpack.c.b16 %v1828, %v1820
    %v2245 = vpack.c.b16 %v1829, %v1821
    %v2246 = vpack.c.b16 %v1830, %v1822
    %v2247 = vpack.c.b16 %v1831, %v1823
    %v2248 = vpack.c.b16 %v1832, %v1824
    %v2249 = vpack.c.b16 %v1833, %v1825
    %v2250 = vpack.c.b16 %v1834, %v1826
    %v2251 = vpack.c.b16 %v1835, %v1827
    %v2252 = vpack.c.b16 %v1844, %v1836
    %v2253 = vpack.c.b16 %v1845, %v1837
    %v2254 = vpack.c.b16 %v1846, %v1838
    %v2255 = vpack.c.b16 %v1847, %v1839
    %v2256 = vpack.c.b16 %v1848, %v1840
    %v2257 = vpack.c.b16 %v1849, %v1841
    %v2258 = vpack.c.b16 %v1850, %v1842
    %v2259 = vpack.c.b16 %v1851, %v1843
    %v2260 = vpack.c.b16 %v1860, %v1852
    %v2261 = vpack.c.b16 %v1861, %v1853
    %v2262 = vpack.c.b16 %v1862, %v1854
    %v2263 = vpack.c.b16 %v1863, %v1855
    %v2264 = vpack.c.b16 %v1864, %v1856
    %v2265 = vpack.c.b16 %v1865, %v1857
    %v2266 = vpack.c.b16 %v1866, %v1858
    %v2267 = vpack.c.b16 %v1867, %v1859
    %v2268 = vpack.c.b16 %v1876, %v1868
    %v2269 = vpack.c.b16 %v1877, %v1869
    %v2270 = vpack.c.b16 %v1878, %v1870
    %v2271 = vpack.c.b16 %v1879, %v1871
    %v2272 = vpack.c.b16 %v1880, %v1872
    %v2273 = vpack.c.b16 %v1881, %v1873
    %v2274 = vpack.c.b16 %v1882, %v1874
    %v2275 = vpack.c.b16 %v1883, %v1875
    %vm2668 = vcmask 130048
    %v2670 = vsel %vm2668, %v666, 0
    %2672 = vmatprep.subr.bf16.mxu0 %v1941
    %2673 = vmatpush1.bf16.msra.mxu0 %v1940
    %2674 = vmatprep.subr.bf16.mxu0 %v1933
    %2675 = vmatpush1.bf16.msra.mxu0 %v1932
    %2676 = vmatprep.subr.bf16.mxu0 %v1925
    %2677 = vmatpush1.bf16.msra.mxu0 %v1924
    %2678 = vmatprep.subr.bf16.mxu0 %v1917
    %2679 = vmatpush1.bf16.msra.mxu0 %v1916
    %2680 = vmatprep.subr.bf16.mxu0 %v1909
    %2681 = vmatpush1.bf16.msra.mxu0 %v1908
    %2682 = vmatprep.subr.bf16.mxu0 %v1901
    %2683 = vmatpush1.bf16.msra.mxu0 %v1900
    %2684 = vmatprep.subr.bf16.mxu0 %v1893
    %2685 = vmatpush1.bf16.msra.mxu0 %v1892
    %2686 = vmatprep.subr.bf16.mxu0 %v1885
    %2687 = vmatpush1.bf16.msra.mxu0 %v1884
    %2688 = vmatprep.subr.bf16.mxu0 %v2005
    %2689 = vmatpush2.bf16.msra.mxu0 %v2004
    %2690 = vmatprep.subr.bf16.mxu0 %v1997
    %2691 = vmatpush2.bf16.msra.mxu0 %v1996
    %2692 = vmatprep.subr.bf16.mxu0 %v1989
    %2693 = vmatpush2.bf16.msra.mxu0 %v1988
    %2694 = vmatprep.subr.bf16.mxu0 %v1981
    %2695 = vmatpush2.bf16.msra.mxu0 %v1980
    %2696 = vmatprep.subr.bf16.mxu0 %v1973
    %2697 = vmatpush2.bf16.msra.mxu0 %v1972
    %2698 = vmatprep.subr.bf16.mxu0 %v1965
    %2699 = vmatpush2.bf16.msra.mxu0 %v1964
    %2700 = vmatprep.subr.bf16.mxu0 %v1957
    %2701 = vmatpush2.bf16.msra.mxu0 %v1956
    %2702 = vmatprep.subr.bf16.mxu0 %v1949
    %2703 = vmatpush2.bf16.msra.mxu0 %v1948
    %2704 = vmatprep.mubr.bf16.mxu0 %v661
    %2705 = vmatmul.mubr.bf16.gmra.mxu0 %v660
    %v2706 = vpop.f32.mrf.mxu0
    %v2707 = vadd.f32 %v671, %v2706
    %v2708 = vpop.f32.mrf.mxu0
    %v2709 = vadd.f32 %v675, %v2708
    %v2710 = vpop.f32.mrf.mxu0
    %v2711 = vpop.f32.mrf.mxu0
    %2712 = vdwg.mxu0
    %2713 = vmatprep.subr.bf16.mxu0 %v2069
    %2714 = vmatpush1.bf16.msra.mxu0 %v2068
    %2715 = vmatprep.subr.bf16.mxu0 %v2061
    %2716 = vmatpush1.bf16.msra.mxu0 %v2060
    %2717 = vmatprep.subr.bf16.mxu0 %v2053
    %2718 = vmatpush1.bf16.msra.mxu0 %v2052
    %2719 = vmatprep.subr.bf16.mxu0 %v2045
    %2720 = vmatpush1.bf16.msra.mxu0 %v2044
    %2721 = vmatprep.subr.bf16.mxu0 %v2037
    %2722 = vmatpush1.bf16.msra.mxu0 %v2036
    %2723 = vmatprep.subr.bf16.mxu0 %v2029
    %2724 = vmatpush1.bf16.msra.mxu0 %v2028
    %2725 = vmatprep.subr.bf16.mxu0 %v2021
    %2726 = vmatpush1.bf16.msra.mxu0 %v2020
    %2727 = vmatprep.subr.bf16.mxu0 %v2013
    %2728 = vmatpush1.bf16.msra.mxu0 %v2012
    %2729 = vmatprep.subr.bf16.mxu0 %v2133
    %2730 = vmatpush2.bf16.msra.mxu0 %v2132
    %2731 = vmatprep.subr.bf16.mxu0 %v2125
    %2732 = vmatpush2.bf16.msra.mxu0 %v2124
    %2733 = vmatprep.subr.bf16.mxu0 %v2117
    %2734 = vmatpush2.bf16.msra.mxu0 %v2116
    %2735 = vmatprep.subr.bf16.mxu0 %v2109
    %2736 = vmatpush2.bf16.msra.mxu0 %v2108
    %2737 = vmatprep.subr.bf16.mxu0 %v2101
    %2738 = vmatpush2.bf16.msra.mxu0 %v2100
    %2739 = vmatprep.subr.bf16.mxu0 %v2093
    %2740 = vmatpush2.bf16.msra.mxu0 %v2092
    %2741 = vmatprep.subr.bf16.mxu0 %v2085
    %2742 = vmatpush2.bf16.msra.mxu0 %v2084
    %2743 = vmatprep.subr.bf16.mxu0 %v2077
    %2744 = vmatpush2.bf16.msra.mxu0 %v2076
    %2745 = vmatprep.mubr.bf16.mxu0 %v663
    %2746 = vmatmul.mubr.bf16.gmra.mxu0 %v662
    %v2747 = vpop.f32.mrf.mxu0
    %v2748 = vadd.f32 %v2707, %v2747
    %v2749 = vpop.f32.mrf.mxu0
    %v2750 = vadd.f32 %v2709, %v2749
    %v2751 = vpop.f32.mrf.mxu0
    %v2752 = vpop.f32.mrf.mxu0
    %2753 = vdwg.mxu0
    %2754 = vmatprep.subr.bf16.mxu0 %v2197
    %2755 = vmatpush1.bf16.msra.mxu0 %v2196
    %2756 = vmatprep.subr.bf16.mxu0 %v2189
    %2757 = vmatpush1.bf16.msra.mxu0 %v2188
    %2758 = vmatprep.subr.bf16.mxu0 %v2181
    %2759 = vmatpush1.bf16.msra.mxu0 %v2180
    %2760 = vmatprep.subr.bf16.mxu0 %v2173
    %2761 = vmatpush1.bf16.msra.mxu0 %v2172
    %2762 = vmatprep.subr.bf16.mxu0 %v2165
    %2763 = vmatpush1.bf16.msra.mxu0 %v2164
    %2764 = vmatprep.subr.bf16.mxu0 %v2157
    %2765 = vmatpush1.bf16.msra.mxu0 %v2156
    %2766 = vmatprep.subr.bf16.mxu0 %v2149
    %2767 = vmatpush1.bf16.msra.mxu0 %v2148
    %2768 = vmatprep.subr.bf16.mxu0 %v2141
    %2769 = vmatpush1.bf16.msra.mxu0 %v2140
    %2770 = vmatprep.subr.bf16.mxu0 %v2261
    %2771 = vmatpush2.bf16.msra.mxu0 %v2260
    %2772 = vmatprep.subr.bf16.mxu0 %v2253
    %2773 = vmatpush2.bf16.msra.mxu0 %v2252
    %2774 = vmatprep.subr.bf16.mxu0 %v2245
    %2775 = vmatpush2.bf16.msra.mxu0 %v2244
    %2776 = vmatprep.subr.bf16.mxu0 %v2237
    %2777 = vmatpush2.bf16.msra.mxu0 %v2236
    %2778 = vmatprep.subr.bf16.mxu0 %v2229
    %2779 = vmatpush2.bf16.msra.mxu0 %v2228
    %2780 = vmatprep.subr.bf16.mxu0 %v2221
    %2781 = vmatpush2.bf16.msra.mxu0 %v2220
    %2782 = vmatprep.subr.bf16.mxu0 %v2213
    %2783 = vmatpush2.bf16.msra.mxu0 %v2212
    %2784 = vmatprep.subr.bf16.mxu0 %v2205
    %2785 = vmatpush2.bf16.msra.mxu0 %v2204
    %2786 = vmatprep.mubr.bf16.mxu0 %v665
    %2787 = vmatmul.mubr.bf16.gmra.mxu0 %v664
    %v2788 = vpop.f32.mrf.mxu0
    %v2789 = vadd.f32 %v2748, %v2788
    %v2790 = vpop.f32.mrf.mxu0
    %v2791 = vadd.f32 %v2750, %v2790
    %v2792 = vpop.f32.mrf.mxu0
    %v2793 = vpop.f32.mrf.mxu0
    %2794 = vdwg.mxu0
    %2795 = vmatprep.subr.bf16.mxu0 0
    %2796 = vmatpush1.bf16.msra.mxu0 0
    %2797 = vmatprep.subr.bf16.mxu0 0
    %2798 = vmatpush1.bf16.msra.mxu0 0
    %2799 = vmatprep.subr.bf16.mxu0 0
    %2800 = vmatpush1.bf16.msra.mxu0 0
    %2801 = vmatprep.subr.bf16.mxu0 0
    %2802 = vmatpush1.bf16.msra.mxu0 0
    %2803 = vmatprep.subr.bf16.mxu0 0
    %2804 = vmatpush1.bf16.msra.mxu0 0
    %2805 = vmatprep.subr.bf16.mxu0 0
    %2806 = vmatpush1.bf16.msra.mxu0 0
    %2807 = vmatprep.subr.bf16.mxu0 0
    %2808 = vmatpush1.bf16.msra.mxu0 0
    %2809 = vmatprep.subr.bf16.mxu0 %v2269
    %2810 = vmatpush1.bf16.msra.mxu0 %v2268
    %2811 = vmatprep.subr.bf16.mxu0 0
    %2812 = vmatpush2.bf16.msra.mxu0 0
    %2813 = vmatprep.subr.bf16.mxu0 0
    %2814 = vmatpush2.bf16.msra.mxu0 0
    %2815 = vmatprep.subr.bf16.mxu0 0
    %2816 = vmatpush2.bf16.msra.mxu0 0
    %2817 = vmatprep.subr.bf16.mxu0 0
    %2818 = vmatpush2.bf16.msra.mxu0 0
    %2819 = vmatprep.subr.bf16.mxu0 0
    %2820 = vmatpush2.bf16.msra.mxu0 0
    %2821 = vmatprep.subr.bf16.mxu0 0
    %2822 = vmatpush2.bf16.msra.mxu0 0
    %2823 = vmatprep.subr.bf16.mxu0 0
    %2824 = vmatpush2.bf16.msra.mxu0 0
    %2825 = vmatprep.subr.bf16.mxu0 0
    %2826 = vmatpush2.bf16.msra.mxu0 0
    %2827 = vmatprep.mubr.bf16.mxu0 0
    %2828 = vmatmul.mubr.bf16.gmra.mxu0 %v2670
    %v2829 = vpop.f32.mrf.mxu0
    %v2830 = vadd.f32 %v2789, %v2829
    %v2831 = vpop.f32.mrf.mxu0
    %v2832 = vadd.f32 %v2791, %v2831
    %v2833 = vpop.f32.mrf.mxu0
    %v2834 = vpop.f32.mrf.mxu0
    %2835 = vdwg.mxu0
    %2836 = vmatprep.subr.bf16.mxu0 %v1943
    %2837 = vmatpush1.bf16.msra.mxu0 %v1942
    %2838 = vmatprep.subr.bf16.mxu0 %v1935
    %2839 = vmatpush1.bf16.msra.mxu0 %v1934
    %2840 = vmatprep.subr.bf16.mxu0 %v1927
    %2841 = vmatpush1.bf16.msra.mxu0 %v1926
    %2842 = vmatprep.subr.bf16.mxu0 %v1919
    %2843 = vmatpush1.bf16.msra.mxu0 %v1918
    %2844 = vmatprep.subr.bf16.mxu0 %v1911
    %2845 = vmatpush1.bf16.msra.mxu0 %v1910
    %2846 = vmatprep.subr.bf16.mxu0 %v1903
    %2847 = vmatpush1.bf16.msra.mxu0 %v1902
    %2848 = vmatprep.subr.bf16.mxu0 %v1895
    %2849 = vmatpush1.bf16.msra.mxu0 %v1894
    %2850 = vmatprep.subr.bf16.mxu0 %v1887
    %2851 = vmatpush1.bf16.msra.mxu0 %v1886
    %2852 = vmatprep.subr.bf16.mxu0 %v2007
    %2853 = vmatpush2.bf16.msra.mxu0 %v2006
    %2854 = vmatprep.subr.bf16.mxu0 %v1999
    %2855 = vmatpush2.bf16.msra.mxu0 %v1998
    %2856 = vmatprep.subr.bf16.mxu0 %v1991
    %2857 = vmatpush2.bf16.msra.mxu0 %v1990
    %2858 = vmatprep.subr.bf16.mxu0 %v1983
    %2859 = vmatpush2.bf16.msra.mxu0 %v1982
    %2860 = vmatprep.subr.bf16.mxu0 %v1975
    %2861 = vmatpush2.bf16.msra.mxu0 %v1974
    %2862 = vmatprep.subr.bf16.mxu0 %v1967
    %2863 = vmatpush2.bf16.msra.mxu0 %v1966
    %2864 = vmatprep.subr.bf16.mxu0 %v1959
    %2865 = vmatpush2.bf16.msra.mxu0 %v1958
    %2866 = vmatprep.subr.bf16.mxu0 %v1951
    %2867 = vmatpush2.bf16.msra.mxu0 %v1950
    %2868 = vmatprep.mubr.bf16.mxu0 %v661
    %2869 = vmatmul.mubr.bf16.gmra.mxu0 %v660
    %v2870 = vpop.f32.mrf.mxu0
    %v2871 = vadd.f32 %v679, %v2870
    %v2872 = vpop.f32.mrf.mxu0
    %v2873 = vadd.f32 %v683, %v2872
    %v2874 = vpop.f32.mrf.mxu0
    %v2875 = vpop.f32.mrf.mxu0
    %2876 = vdwg.mxu0
    %2877 = vmatprep.subr.bf16.mxu0 %v2071
    %2878 = vmatpush1.bf16.msra.mxu0 %v2070
    %2879 = vmatprep.subr.bf16.mxu0 %v2063
    %2880 = vmatpush1.bf16.msra.mxu0 %v2062
    %2881 = vmatprep.subr.bf16.mxu0 %v2055
    %2882 = vmatpush1.bf16.msra.mxu0 %v2054
    %2883 = vmatprep.subr.bf16.mxu0 %v2047
    %2884 = vmatpush1.bf16.msra.mxu0 %v2046
    %2885 = vmatprep.subr.bf16.mxu0 %v2039
    %2886 = vmatpush1.bf16.msra.mxu0 %v2038
    %2887 = vmatprep.subr.bf16.mxu0 %v2031
    %2888 = vmatpush1.bf16.msra.mxu0 %v2030
    %2889 = vmatprep.subr.bf16.mxu0 %v2023
    %2890 = vmatpush1.bf16.msra.mxu0 %v2022
    %2891 = vmatprep.subr.bf16.mxu0 %v2015
    %2892 = vmatpush1.bf16.msra.mxu0 %v2014
    %2893 = vmatprep.subr.bf16.mxu0 %v2135
    %2894 = vmatpush2.bf16.msra.mxu0 %v2134
    %2895 = vmatprep.subr.bf16.mxu0 %v2127
    %2896 = vmatpush2.bf16.msra.mxu0 %v2126
    %2897 = vmatprep.subr.bf16.mxu0 %v2119
    %2898 = vmatpush2.bf16.msra.mxu0 %v2118
    %2899 = vmatprep.subr.bf16.mxu0 %v2111
    %2900 = vmatpush2.bf16.msra.mxu0 %v2110
    %2901 = vmatprep.subr.bf16.mxu0 %v2103
    %2902 = vmatpush2.bf16.msra.mxu0 %v2102
    %2903 = vmatprep.subr.bf16.mxu0 %v2095
    %2904 = vmatpush2.bf16.msra.mxu0 %v2094
    %2905 = vmatprep.subr.bf16.mxu0 %v2087
    %2906 = vmatpush2.bf16.msra.mxu0 %v2086
    %2907 = vmatprep.subr.bf16.mxu0 %v2079
    %2908 = vmatpush2.bf16.msra.mxu0 %v2078
    %2909 = vmatprep.mubr.bf16.mxu0 %v663
    %2910 = vmatmul.mubr.bf16.gmra.mxu0 %v662
    %v2911 = vpop.f32.mrf.mxu0
    %v2912 = vadd.f32 %v2871, %v2911
    %v2913 = vpop.f32.mrf.mxu0
    %v2914 = vadd.f32 %v2873, %v2913
    %v2915 = vpop.f32.mrf.mxu0
    %v2916 = vpop.f32.mrf.mxu0
    %2917 = vdwg.mxu0
    %2918 = vmatprep.subr.bf16.mxu0 %v2199
    %2919 = vmatpush1.bf16.msra.mxu0 %v2198
    %2920 = vmatprep.subr.bf16.mxu0 %v2191
    %2921 = vmatpush1.bf16.msra.mxu0 %v2190
    %2922 = vmatprep.subr.bf16.mxu0 %v2183
    %2923 = vmatpush1.bf16.msra.mxu0 %v2182
    %2924 = vmatprep.subr.bf16.mxu0 %v2175
    %2925 = vmatpush1.bf16.msra.mxu0 %v2174
    %2926 = vmatprep.subr.bf16.mxu0 %v2167
    %2927 = vmatpush1.bf16.msra.mxu0 %v2166
    %2928 = vmatprep.subr.bf16.mxu0 %v2159
    %2929 = vmatpush1.bf16.msra.mxu0 %v2158
    %2930 = vmatprep.subr.bf16.mxu0 %v2151
    %2931 = vmatpush1.bf16.msra.mxu0 %v2150
    %2932 = vmatprep.subr.bf16.mxu0 %v2143
    %2933 = vmatpush1.bf16.msra.mxu0 %v2142
    %2934 = vmatprep.subr.bf16.mxu0 %v2263
    %2935 = vmatpush2.bf16.msra.mxu0 %v2262
    %2936 = vmatprep.subr.bf16.mxu0 %v2255
    %2937 = vmatpush2.bf16.msra.mxu0 %v2254
    %2938 = vmatprep.subr.bf16.mxu0 %v2247
    %2939 = vmatpush2.bf16.msra.mxu0 %v2246
    %2940 = vmatprep.subr.bf16.mxu0 %v2239
    %2941 = vmatpush2.bf16.msra.mxu0 %v2238
    %2942 = vmatprep.subr.bf16.mxu0 %v2231
    %2943 = vmatpush2.bf16.msra.mxu0 %v2230
    %2944 = vmatprep.subr.bf16.mxu0 %v2223
    %2945 = vmatpush2.bf16.msra.mxu0 %v2222
    %2946 = vmatprep.subr.bf16.mxu0 %v2215
    %2947 = vmatpush2.bf16.msra.mxu0 %v2214
    %2948 = vmatprep.subr.bf16.mxu0 %v2207
    %2949 = vmatpush2.bf16.msra.mxu0 %v2206
    %2950 = vmatprep.mubr.bf16.mxu0 %v665
    %2951 = vmatmul.mubr.bf16.gmra.mxu0 %v664
    %v2952 = vpop.f32.mrf.mxu0
    %v2953 = vadd.f32 %v2912, %v2952
    %v2954 = vpop.f32.mrf.mxu0
    %v2955 = vadd.f32 %v2914, %v2954
    %v2956 = vpop.f32.mrf.mxu0
    %v2957 = vpop.f32.mrf.mxu0
    %2958 = vdwg.mxu0
    %2959 = vmatprep.subr.bf16.mxu0 0
    %2960 = vmatpush1.bf16.msra.mxu0 0
    %2961 = vmatprep.subr.bf16.mxu0 0
    %2962 = vmatpush1.bf16.msra.mxu0 0
    %2963 = vmatprep.subr.bf16.mxu0 0
    %2964 = vmatpush1.bf16.msra.mxu0 0
    %2965 = vmatprep.subr.bf16.mxu0 0
    %2966 = vmatpush1.bf16.msra.mxu0 0
    %2967 = vmatprep.subr.bf16.mxu0 0
    %2968 = vmatpush1.bf16.msra.mxu0 0
    %2969 = vmatprep.subr.bf16.mxu0 0
    %2970 = vmatpush1.bf16.msra.mxu0 0
    %2971 = vmatprep.subr.bf16.mxu0 0
    %2972 = vmatpush1.bf16.msra.mxu0 0
    %2973 = vmatprep.subr.bf16.mxu0 %v2271
    %2974 = vmatpush1.bf16.msra.mxu0 %v2270
    %2975 = vmatprep.subr.bf16.mxu0 0
    %2976 = vmatpush2.bf16.msra.mxu0 0
    %2977 = vmatprep.subr.bf16.mxu0 0
    %2978 = vmatpush2.bf16.msra.mxu0 0
    %2979 = vmatprep.subr.bf16.mxu0 0
    %2980 = vmatpush2.bf16.msra.mxu0 0
    %2981 = vmatprep.subr.bf16.mxu0 0
    %2982 = vmatpush2.bf16.msra.mxu0 0
    %2983 = vmatprep.subr.bf16.mxu0 0
    %2984 = vmatpush2.bf16.msra.mxu0 0
    %2985 = vmatprep.subr.bf16.mxu0 0
    %2986 = vmatpush2.bf16.msra.mxu0 0
    %2987 = vmatprep.subr.bf16.mxu0 0
    %2988 = vmatpush2.bf16.msra.mxu0 0
    %2989 = vmatprep.subr.bf16.mxu0 0
    %2990 = vmatpush2.bf16.msra.mxu0 0
    %2991 = vmatprep.mubr.bf16.mxu0 0
    %2992 = vmatmul.mubr.bf16.gmra.mxu0 %v2670
    %v2993 = vpop.f32.mrf.mxu0
    %v2994 = vadd.f32 %v2953, %v2993
    %v2995 = vpop.f32.mrf.mxu0
    %v2996 = vadd.f32 %v2955, %v2995
    %v2997 = vpop.f32.mrf.mxu0
    %v2998 = vpop.f32.mrf.mxu0
    %2999 = vdwg.mxu0
    %3000 = vmatprep.subr.bf16.mxu0 %v1945
    %3001 = vmatpush1.bf16.msra.mxu0 %v1944
    %3002 = vmatprep.subr.bf16.mxu0 %v1937
    %3003 = vmatpush1.bf16.msra.mxu0 %v1936
    %3004 = vmatprep.subr.bf16.mxu0 %v1929
    %3005 = vmatpush1.bf16.msra.mxu0 %v1928
    %3006 = vmatprep.subr.bf16.mxu0 %v1921
    %3007 = vmatpush1.bf16.msra.mxu0 %v1920
    %3008 = vmatprep.subr.bf16.mxu0 %v1913
    %3009 = vmatpush1.bf16.msra.mxu0 %v1912
    %3010 = vmatprep.subr.bf16.mxu0 %v1905
    %3011 = vmatpush1.bf16.msra.mxu0 %v1904
    %3012 = vmatprep.subr.bf16.mxu0 %v1897
    %3013 = vmatpush1.bf16.msra.mxu0 %v1896
    %3014 = vmatprep.subr.bf16.mxu0 %v1889
    %3015 = vmatpush1.bf16.msra.mxu0 %v1888
    %3016 = vmatprep.subr.bf16.mxu0 %v2009
    %3017 = vmatpush2.bf16.msra.mxu0 %v2008
    %3018 = vmatprep.subr.bf16.mxu0 %v2001
    %3019 = vmatpush2.bf16.msra.mxu0 %v2000
    %3020 = vmatprep.subr.bf16.mxu0 %v1993
    %3021 = vmatpush2.bf16.msra.mxu0 %v1992
    %3022 = vmatprep.subr.bf16.mxu0 %v1985
    %3023 = vmatpush2.bf16.msra.mxu0 %v1984
    %3024 = vmatprep.subr.bf16.mxu0 %v1977
    %3025 = vmatpush2.bf16.msra.mxu0 %v1976
    %3026 = vmatprep.subr.bf16.mxu0 %v1969
    %3027 = vmatpush2.bf16.msra.mxu0 %v1968
    %3028 = vmatprep.subr.bf16.mxu0 %v1961
    %3029 = vmatpush2.bf16.msra.mxu0 %v1960
    %3030 = vmatprep.subr.bf16.mxu0 %v1953
    %3031 = vmatpush2.bf16.msra.mxu0 %v1952
    %3032 = vmatprep.mubr.bf16.mxu0 %v661
    %3033 = vmatmul.mubr.bf16.gmra.mxu0 %v660
    %v3034 = vpop.f32.mrf.mxu0
    %v3035 = vadd.f32 %v687, %v3034
    %v3036 = vpop.f32.mrf.mxu0
    %v3037 = vadd.f32 %v691, %v3036
    %v3038 = vpop.f32.mrf.mxu0
    %v3039 = vpop.f32.mrf.mxu0
    %3040 = vdwg.mxu0
    %3041 = vmatprep.subr.bf16.mxu0 %v2073
    %3042 = vmatpush1.bf16.msra.mxu0 %v2072
    %3043 = vmatprep.subr.bf16.mxu0 %v2065
    %3044 = vmatpush1.bf16.msra.mxu0 %v2064
    %3045 = vmatprep.subr.bf16.mxu0 %v2057
    %3046 = vmatpush1.bf16.msra.mxu0 %v2056
    %3047 = vmatprep.subr.bf16.mxu0 %v2049
    %3048 = vmatpush1.bf16.msra.mxu0 %v2048
    %3049 = vmatprep.subr.bf16.mxu0 %v2041
    %3050 = vmatpush1.bf16.msra.mxu0 %v2040
    %3051 = vmatprep.subr.bf16.mxu0 %v2033
    %3052 = vmatpush1.bf16.msra.mxu0 %v2032
    %3053 = vmatprep.subr.bf16.mxu0 %v2025
    %3054 = vmatpush1.bf16.msra.mxu0 %v2024
    %3055 = vmatprep.subr.bf16.mxu0 %v2017
    %3056 = vmatpush1.bf16.msra.mxu0 %v2016
    %3057 = vmatprep.subr.bf16.mxu0 %v2137
    %3058 = vmatpush2.bf16.msra.mxu0 %v2136
    %3059 = vmatprep.subr.bf16.mxu0 %v2129
    %3060 = vmatpush2.bf16.msra.mxu0 %v2128
    %3061 = vmatprep.subr.bf16.mxu0 %v2121
    %3062 = vmatpush2.bf16.msra.mxu0 %v2120
    %3063 = vmatprep.subr.bf16.mxu0 %v2113
    %3064 = vmatpush2.bf16.msra.mxu0 %v2112
    %3065 = vmatprep.subr.bf16.mxu0 %v2105
    %3066 = vmatpush2.bf16.msra.mxu0 %v2104
    %3067 = vmatprep.subr.bf16.mxu0 %v2097
    %3068 = vmatpush2.bf16.msra.mxu0 %v2096
    %3069 = vmatprep.subr.bf16.mxu0 %v2089
    %3070 = vmatpush2.bf16.msra.mxu0 %v2088
    %3071 = vmatprep.subr.bf16.mxu0 %v2081
    %3072 = vmatpush2.bf16.msra.mxu0 %v2080
    %3073 = vmatprep.mubr.bf16.mxu0 %v663
    %3074 = vmatmul.mubr.bf16.gmra.mxu0 %v662
    %v3075 = vpop.f32.mrf.mxu0
    %v3076 = vadd.f32 %v3035, %v3075
    %v3077 = vpop.f32.mrf.mxu0
    %v3078 = vadd.f32 %v3037, %v3077
    %v3079 = vpop.f32.mrf.mxu0
    %v3080 = vpop.f32.mrf.mxu0
    %3081 = vdwg.mxu0
    %3082 = vmatprep.subr.bf16.mxu0 %v2201
    %3083 = vmatpush1.bf16.msra.mxu0 %v2200
    %3084 = vmatprep.subr.bf16.mxu0 %v2193
    %3085 = vmatpush1.bf16.msra.mxu0 %v2192
    %3086 = vmatprep.subr.bf16.mxu0 %v2185
    %3087 = vmatpush1.bf16.msra.mxu0 %v2184
    %3088 = vmatprep.subr.bf16.mxu0 %v2177
    %3089 = vmatpush1.bf16.msra.mxu0 %v2176
    %3090 = vmatprep.subr.bf16.mxu0 %v2169
    %3091 = vmatpush1.bf16.msra.mxu0 %v2168
    %3092 = vmatprep.subr.bf16.mxu0 %v2161
    %3093 = vmatpush1.bf16.msra.mxu0 %v2160
    %3094 = vmatprep.subr.bf16.mxu0 %v2153
    %3095 = vmatpush1.bf16.msra.mxu0 %v2152
    %3096 = vmatprep.subr.bf16.mxu0 %v2145
    %3097 = vmatpush1.bf16.msra.mxu0 %v2144
    %3098 = vmatprep.subr.bf16.mxu0 %v2265
    %3099 = vmatpush2.bf16.msra.mxu0 %v2264
    %3100 = vmatprep.subr.bf16.mxu0 %v2257
    %3101 = vmatpush2.bf16.msra.mxu0 %v2256
    %3102 = vmatprep.subr.bf16.mxu0 %v2249
    %3103 = vmatpush2.bf16.msra.mxu0 %v2248
    %3104 = vmatprep.subr.bf16.mxu0 %v2241
    %3105 = vmatpush2.bf16.msra.mxu0 %v2240
    %3106 = vmatprep.subr.bf16.mxu0 %v2233
    %3107 = vmatpush2.bf16.msra.mxu0 %v2232
    %3108 = vmatprep.subr.bf16.mxu0 %v2225
    %3109 = vmatpush2.bf16.msra.mxu0 %v2224
    %3110 = vmatprep.subr.bf16.mxu0 %v2217
    %3111 = vmatpush2.bf16.msra.mxu0 %v2216
    %3112 = vmatprep.subr.bf16.mxu0 %v2209
    %3113 = vmatpush2.bf16.msra.mxu0 %v2208
    %3114 = vmatprep.mubr.bf16.mxu0 %v665
    %3115 = vmatmul.mubr.bf16.gmra.mxu0 %v664
    %v3116 = vpop.f32.mrf.mxu0
    %v3117 = vadd.f32 %v3076, %v3116
    %v3118 = vpop.f32.mrf.mxu0
    %v3119 = vadd.f32 %v3078, %v3118
    %v3120 = vpop.f32.mrf.mxu0
    %v3121 = vpop.f32.mrf.mxu0
    %3122 = vdwg.mxu0
    %3123 = vmatprep.subr.bf16.mxu0 0
    %3124 = vmatpush1.bf16.msra.mxu0 0
    %3125 = vmatprep.subr.bf16.mxu0 0
    %3126 = vmatpush1.bf16.msra.mxu0 0
    %3127 = vmatprep.subr.bf16.mxu0 0
    %3128 = vmatpush1.bf16.msra.mxu0 0
    %3129 = vmatprep.subr.bf16.mxu0 0
    %3130 = vmatpush1.bf16.msra.mxu0 0
    %3131 = vmatprep.subr.bf16.mxu0 0
    %3132 = vmatpush1.bf16.msra.mxu0 0
    %3133 = vmatprep.subr.bf16.mxu0 0
    %3134 = vmatpush1.bf16.msra.mxu0 0
    %3135 = vmatprep.subr.bf16.mxu0 0
    %3136 = vmatpush1.bf16.msra.mxu0 0
    %3137 = vmatprep.subr.bf16.mxu0 %v2273
    %3138 = vmatpush1.bf16.msra.mxu0 %v2272
    %3139 = vmatprep.subr.bf16.mxu0 0
    %3140 = vmatpush2.bf16.msra.mxu0 0
    %3141 = vmatprep.subr.bf16.mxu0 0
    %3142 = vmatpush2.bf16.msra.mxu0 0
    %3143 = vmatprep.subr.bf16.mxu0 0
    %3144 = vmatpush2.bf16.msra.mxu0 0
    %3145 = vmatprep.subr.bf16.mxu0 0
    %3146 = vmatpush2.bf16.msra.mxu0 0
    %3147 = vmatprep.subr.bf16.mxu0 0
    %3148 = vmatpush2.bf16.msra.mxu0 0
    %3149 = vmatprep.subr.bf16.mxu0 0
    %3150 = vmatpush2.bf16.msra.mxu0 0
    %3151 = vmatprep.subr.bf16.mxu0 0
    %3152 = vmatpush2.bf16.msra.mxu0 0
    %3153 = vmatprep.subr.bf16.mxu0 0
    %3154 = vmatpush2.bf16.msra.mxu0 0
    %3155 = vmatprep.mubr.bf16.mxu0 0
    %3156 = vmatmul.mubr.bf16.gmra.mxu0 %v2670
    %v3157 = vpop.f32.mrf.mxu0
    %v3158 = vadd.f32 %v3117, %v3157
    %v3159 = vpop.f32.mrf.mxu0
    %v3160 = vadd.f32 %v3119, %v3159
    %v3161 = vpop.f32.mrf.mxu0
    %v3162 = vpop.f32.mrf.mxu0
    %3163 = vdwg.mxu0
    %3164 = vmatprep.subr.bf16.mxu0 %v1947
    %3165 = vmatpush1.bf16.msra.mxu0 %v1946
    %3166 = vmatprep.subr.bf16.mxu0 %v1939
    %3167 = vmatpush1.bf16.msra.mxu0 %v1938
    %3168 = vmatprep.subr.bf16.mxu0 %v1931
    %3169 = vmatpush1.bf16.msra.mxu0 %v1930
    %3170 = vmatprep.subr.bf16.mxu0 %v1923
    %3171 = vmatpush1.bf16.msra.mxu0 %v1922
    %3172 = vmatprep.subr.bf16.mxu0 %v1915
    %3173 = vmatpush1.bf16.msra.mxu0 %v1914
    %3174 = vmatprep.subr.bf16.mxu0 %v1907
    %3175 = vmatpush1.bf16.msra.mxu0 %v1906
    %3176 = vmatprep.subr.bf16.mxu0 %v1899
    %3177 = vmatpush1.bf16.msra.mxu0 %v1898
    %3178 = vmatprep.subr.bf16.mxu0 %v1891
    %3179 = vmatpush1.bf16.msra.mxu0 %v1890
    %3180 = vmatprep.subr.bf16.mxu0 %v2011
    %3181 = vmatpush2.bf16.msra.mxu0 %v2010
    %3182 = vmatprep.subr.bf16.mxu0 %v2003
    %3183 = vmatpush2.bf16.msra.mxu0 %v2002
    %3184 = vmatprep.subr.bf16.mxu0 %v1995
    %3185 = vmatpush2.bf16.msra.mxu0 %v1994
    %3186 = vmatprep.subr.bf16.mxu0 %v1987
    %3187 = vmatpush2.bf16.msra.mxu0 %v1986
    %3188 = vmatprep.subr.bf16.mxu0 %v1979
    %3189 = vmatpush2.bf16.msra.mxu0 %v1978
    %3190 = vmatprep.subr.bf16.mxu0 %v1971
    %3191 = vmatpush2.bf16.msra.mxu0 %v1970
    %3192 = vmatprep.subr.bf16.mxu0 %v1963
    %3193 = vmatpush2.bf16.msra.mxu0 %v1962
    %3194 = vmatprep.subr.bf16.mxu0 %v1955
    %3195 = vmatpush2.bf16.msra.mxu0 %v1954
    %3196 = vmatprep.mubr.bf16.mxu0 %v661
    %3197 = vmatmul.mubr.bf16.gmra.mxu0 %v660
    %v3198 = vpop.f32.mrf.mxu0
    %v3199 = vadd.f32 %v695, %v3198
    %v3200 = vpop.f32.mrf.mxu0
    %v3201 = vadd.f32 %v699, %v3200
    %v3202 = vpop.f32.mrf.mxu0
    %v3203 = vpop.f32.mrf.mxu0
    %3204 = vdwg.mxu0
    %3205 = vmatprep.subr.bf16.mxu0 %v2075
    %3206 = vmatpush1.bf16.msra.mxu0 %v2074
    %3207 = vmatprep.subr.bf16.mxu0 %v2067
    %3208 = vmatpush1.bf16.msra.mxu0 %v2066
    %3209 = vmatprep.subr.bf16.mxu0 %v2059
    %3210 = vmatpush1.bf16.msra.mxu0 %v2058
    %3211 = vmatprep.subr.bf16.mxu0 %v2051
    %3212 = vmatpush1.bf16.msra.mxu0 %v2050
    %3213 = vmatprep.subr.bf16.mxu0 %v2043
    %3214 = vmatpush1.bf16.msra.mxu0 %v2042
    %3215 = vmatprep.subr.bf16.mxu0 %v2035
    %3216 = vmatpush1.bf16.msra.mxu0 %v2034
    %3217 = vmatprep.subr.bf16.mxu0 %v2027
    %3218 = vmatpush1.bf16.msra.mxu0 %v2026
    %3219 = vmatprep.subr.bf16.mxu0 %v2019
    %3220 = vmatpush1.bf16.msra.mxu0 %v2018
    %3221 = vmatprep.subr.bf16.mxu0 %v2139
    %3222 = vmatpush2.bf16.msra.mxu0 %v2138
    %3223 = vmatprep.subr.bf16.mxu0 %v2131
    %3224 = vmatpush2.bf16.msra.mxu0 %v2130
    %3225 = vmatprep.subr.bf16.mxu0 %v2123
    %3226 = vmatpush2.bf16.msra.mxu0 %v2122
    %3227 = vmatprep.subr.bf16.mxu0 %v2115
    %3228 = vmatpush2.bf16.msra.mxu0 %v2114
    %3229 = vmatprep.subr.bf16.mxu0 %v2107
    %3230 = vmatpush2.bf16.msra.mxu0 %v2106
    %3231 = vmatprep.subr.bf16.mxu0 %v2099
    %3232 = vmatpush2.bf16.msra.mxu0 %v2098
    %3233 = vmatprep.subr.bf16.mxu0 %v2091
    %3234 = vmatpush2.bf16.msra.mxu0 %v2090
    %3235 = vmatprep.subr.bf16.mxu0 %v2083
    %3236 = vmatpush2.bf16.msra.mxu0 %v2082
    %3237 = vmatprep.mubr.bf16.mxu0 %v663
    %3238 = vmatmul.mubr.bf16.gmra.mxu0 %v662
    %v3239 = vpop.f32.mrf.mxu0
    %v3240 = vadd.f32 %v3199, %v3239
    %v3241 = vpop.f32.mrf.mxu0
    %v3242 = vadd.f32 %v3201, %v3241
    %v3243 = vpop.f32.mrf.mxu0
    %v3244 = vpop.f32.mrf.mxu0
    %3245 = vdwg.mxu0
    %3246 = vmatprep.subr.bf16.mxu0 %v2203
    %3247 = vmatpush1.bf16.msra.mxu0 %v2202
    %3248 = vmatprep.subr.bf16.mxu0 %v2195
    %3249 = vmatpush1.bf16.msra.mxu0 %v2194
    %3250 = vmatprep.subr.bf16.mxu0 %v2187
    %3251 = vmatpush1.bf16.msra.mxu0 %v2186
    %3252 = vmatprep.subr.bf16.mxu0 %v2179
    %3253 = vmatpush1.bf16.msra.mxu0 %v2178
    %3254 = vmatprep.subr.bf16.mxu0 %v2171
    %3255 = vmatpush1.bf16.msra.mxu0 %v2170
    %3256 = vmatprep.subr.bf16.mxu0 %v2163
    %3257 = vmatpush1.bf16.msra.mxu0 %v2162
    %3258 = vmatprep.subr.bf16.mxu0 %v2155
    %3259 = vmatpush1.bf16.msra.mxu0 %v2154
    %3260 = vmatprep.subr.bf16.mxu0 %v2147
    %3261 = vmatpush1.bf16.msra.mxu0 %v2146
    %3262 = vmatprep.subr.bf16.mxu0 %v2267
    %3263 = vmatpush2.bf16.msra.mxu0 %v2266
    %3264 = vmatprep.subr.bf16.mxu0 %v2259
    %3265 = vmatpush2.bf16.msra.mxu0 %v2258
    %3266 = vmatprep.subr.bf16.mxu0 %v2251
    %3267 = vmatpush2.bf16.msra.mxu0 %v2250
    %3268 = vmatprep.subr.bf16.mxu0 %v2243
    %3269 = vmatpush2.bf16.msra.mxu0 %v2242
    %3270 = vmatprep.subr.bf16.mxu0 %v2235
    %3271 = vmatpush2.bf16.msra.mxu0 %v2234
    %3272 = vmatprep.subr.bf16.mxu0 %v2227
    %3273 = vmatpush2.bf16.msra.mxu0 %v2226
    %3274 = vmatprep.subr.bf16.mxu0 %v2219
    %3275 = vmatpush2.bf16.msra.mxu0 %v2218
    %3276 = vmatprep.subr.bf16.mxu0 %v2211
    %3277 = vmatpush2.bf16.msra.mxu0 %v2210
    %3278 = vmatprep.mubr.bf16.mxu0 %v665
    %3279 = vmatmul.mubr.bf16.gmra.mxu0 %v664
    %v3280 = vpop.f32.mrf.mxu0
    %v3281 = vadd.f32 %v3240, %v3280
    %v3282 = vpop.f32.mrf.mxu0
    %v3283 = vadd.f32 %v3242, %v3282
    %v3284 = vpop.f32.mrf.mxu0
    %v3285 = vpop.f32.mrf.mxu0
    %3286 = vdwg.mxu0
    %3287 = vmatprep.subr.bf16.mxu0 0
    %3288 = vmatpush1.bf16.msra.mxu0 0
    %3289 = vmatprep.subr.bf16.mxu0 0
    %3290 = vmatpush1.bf16.msra.mxu0 0
    %3291 = vmatprep.subr.bf16.mxu0 0
    %3292 = vmatpush1.bf16.msra.mxu0 0
    %3293 = vmatprep.subr.bf16.mxu0 0
    %3294 = vmatpush1.bf16.msra.mxu0 0
    %3295 = vmatprep.subr.bf16.mxu0 0
    %3296 = vmatpush1.bf16.msra.mxu0 0
    %3297 = vmatprep.subr.bf16.mxu0 0
    %3298 = vmatpush1.bf16.msra.mxu0 0
    %3299 = vmatprep.subr.bf16.mxu0 0
    %3300 = vmatpush1.bf16.msra.mxu0 0
    %3301 = vmatprep.subr.bf16.mxu0 %v2275
    %3302 = vmatpush1.bf16.msra.mxu0 %v2274
    %3303 = vmatprep.subr.bf16.mxu0 0
    %3304 = vmatpush2.bf16.msra.mxu0 0
    %3305 = vmatprep.subr.bf16.mxu0 0
    %3306 = vmatpush2.bf16.msra.mxu0 0
    %3307 = vmatprep.subr.bf16.mxu0 0
    %3308 = vmatpush2.bf16.msra.mxu0 0
    %3309 = vmatprep.subr.bf16.mxu0 0
    %3310 = vmatpush2.bf16.msra.mxu0 0
    %3311 = vmatprep.subr.bf16.mxu0 0
    %3312 = vmatpush2.bf16.msra.mxu0 0
    %3313 = vmatprep.subr.bf16.mxu0 0
    %3314 = vmatpush2.bf16.msra.mxu0 0
    %3315 = vmatprep.subr.bf16.mxu0 0
    %3316 = vmatpush2.bf16.msra.mxu0 0
    %3317 = vmatprep.subr.bf16.mxu0 0
    %3318 = vmatpush2.bf16.msra.mxu0 0
    %3319 = vmatprep.mubr.bf16.mxu0 0
    %3320 = vmatmul.mubr.bf16.gmra.mxu0 %v2670
    %v3321 = vpop.f32.mrf.mxu0
    %v3322 = vadd.f32 %v3281, %v3321
    %v3323 = vpop.f32.mrf.mxu0
    %v3324 = vadd.f32 %v3283, %v3323
    %v3325 = vpop.f32.mrf.mxu0
    %v3326 = vpop.f32.mrf.mxu0
    %3327 = vdwg.mxu0
    %vm3328 = vcmp.gt.f32.partialorder %v2830, 0.0
    %vm3329 = vcmp.gt.f32.partialorder %v2832, 0.0
    %vm3330 = vcmp.gt.f32.partialorder %v2994, 0.0
    %vm3331 = vcmp.gt.f32.partialorder %v2996, 0.0
    %vm3332 = vcmp.gt.f32.partialorder %v3158, 0.0
    %vm3333 = vcmp.gt.f32.partialorder %v3160, 0.0
    %vm3334 = vcmp.gt.f32.partialorder %v3322, 0.0
    %vm3335 = vcmp.gt.f32.partialorder %v3324, 0.0
    %v3336 = vmul.f32 %v2830, 0.01
    %v3337 = vmul.f32 %v2832, 0.01
    %v3338 = vmul.f32 %v2994, 0.01
    %v3339 = vmul.f32 %v2996, 0.01
    %v3340 = vmul.f32 %v3158, 0.01
    %v3341 = vmul.f32 %v3160, 0.01
    %v3342 = vmul.f32 %v3322, 0.01
    %v3343 = vmul.f32 %v3324, 0.01
    %v3344 = vsel %vm3328, %v2830, %v3336
    %v3345 = vsel %vm3329, %v2832, %v3337
    %v3346 = vsel %vm3330, %v2994, %v3338
    %v3347 = vsel %vm3331, %v2996, %v3339
    %v3348 = vsel %vm3332, %v3158, %v3340
    %v3349 = vsel %vm3333, %v3160, %v3341
    %v3350 = vsel %vm3334, %v3322, %v3342
    %v3351 = vsel %vm3335, %v3324, %v3343
    %v3352 = vld [vmem:[#allocation6] sm:$0xff]
    %v3353 = vld [vmem:[#allocation6 + $0x8] sm:$0xff]
    %v3354 = vld [vmem:[#allocation6 + $0x10] sm:$0xff]
    %v3355 = vld [vmem:[#allocation6 + $0x18] sm:$0xff]
    %v3356 = vld [vmem:[#allocation6 + $0x20] sm:$0xff]
    %v3357 = vld [vmem:[#allocation6 + $0x28] sm:$0xff]
    %v3358 = vld [vmem:[#allocation6 + $0x30] sm:$0xff]
    %v3359 = vld [vmem:[#allocation6 + $0x38] sm:$0xff]
    %v3360 = vld [vmem:[#allocation6 + $0x40] sm:$0xff]
    %v3361 = vld [vmem:[#allocation6 + $0x48] sm:$0xff]
    %v3362 = vld [vmem:[#allocation6 + $0x50] sm:$0xff]
    %v3363 = vld [vmem:[#allocation6 + $0x58] sm:$0xff]
    %v3364 = vld [vmem:[#allocation6 + $0x60] sm:$0xff]
    %v3365 = vld [vmem:[#allocation6 + $0x68] sm:$0xff]
    %v3366 = vld [vmem:[#allocation6 + $0x70] sm:$0xff]
    %v3367 = vld [vmem:[#allocation6 + $0x78] sm:$0xff]
    %v3368 = vld [vmem:[#allocation6 + $0x80] sm:$0xff]
    %v3369 = vld [vmem:[#allocation6 + $0x88] sm:$0xff]
    %v3370 = vld [vmem:[#allocation6 + $0x90] sm:$0xff]
    %v3371 = vld [vmem:[#allocation6 + $0x98] sm:$0xff]
    %v3372 = vld [vmem:[#allocation6 + $0xa0] sm:$0xff]
    %v3373 = vld [vmem:[#allocation6 + $0xa8] sm:$0xff]
    %v3374 = vld [vmem:[#allocation6 + $0xb0] sm:$0xff]
    %v3375 = vld [vmem:[#allocation6 + $0xb8] sm:$0xff]
    %v3376 = vld [vmem:[#allocation6 + $0xc0] sm:$0xff]
    %v3377 = vld [vmem:[#allocation6 + $0xc8] sm:$0xff]
    %v3378 = vld [vmem:[#allocation6 + $0xd0] sm:$0xff]
    %v3379 = vld [vmem:[#allocation6 + $0xd8] sm:$0xff]
    %v3380 = vld [vmem:[#allocation6 + $0xe0] sm:$0xff]
    %v3381 = vld [vmem:[#allocation6 + $0xe8] sm:$0xff]
    %v3382 = vld [vmem:[#allocation6 + $0xf0] sm:$0xff]
    %v3383 = vld [vmem:[#allocation6 + $0xf8] sm:$0xff]
    %v3384 = vld [vmem:[#allocation6 + $0x100] sm:$0xff]
    %v3385 = vld [vmem:[#allocation6 + $0x108] sm:$0xff]
    %v3386 = vld [vmem:[#allocation6 + $0x110] sm:$0xff]
    %v3387 = vld [vmem:[#allocation6 + $0x118] sm:$0xff]
    %v3388 = vld [vmem:[#allocation6 + $0x120] sm:$0xff]
    %v3389 = vld [vmem:[#allocation6 + $0x128] sm:$0xff]
    %v3390 = vld [vmem:[#allocation6 + $0x130] sm:$0xff]
    %v3391 = vld [vmem:[#allocation6 + $0x138] sm:$0xff]
    %v3392 = vld [vmem:[#allocation6 + $0x140] sm:$0xff]
    %v3393 = vld [vmem:[#allocation6 + $0x148] sm:$0xff]
    %v3394 = vld [vmem:[#allocation6 + $0x150] sm:$0xff]
    %v3395 = vld [vmem:[#allocation6 + $0x158] sm:$0xff]
    %v3396 = vld [vmem:[#allocation6 + $0x160] sm:$0xff]
    %v3397 = vld [vmem:[#allocation6 + $0x168] sm:$0xff]
    %v3398 = vld [vmem:[#allocation6 + $0x170] sm:$0xff]
    %v3399 = vld [vmem:[#allocation6 + $0x178] sm:$0xff]
    %v3400 = vld [vmem:[#allocation6 + $0x180] sm:$0xff]
    %v3401 = vld [vmem:[#allocation6 + $0x188] sm:$0xff]
    %v3402 = vld [vmem:[#allocation6 + $0x190] sm:$0xff]
    %v3403 = vld [vmem:[#allocation6 + $0x198] sm:$0xff]
    %v3404 = vld [vmem:[#allocation6 + $0x1a0] sm:$0xff]
    %v3405 = vld [vmem:[#allocation6 + $0x1a8] sm:$0xff]
    %v3406 = vld [vmem:[#allocation6 + $0x1b0] sm:$0xff]
    %v3407 = vld [vmem:[#allocation6 + $0x1b8] sm:$0xff]
    %v3408 = vld [vmem:[#allocation6 + $0x1c0] sm:$0xff]
    %v3409 = vld [vmem:[#allocation6 + $0x1c8] sm:$0xff]
    %v3410 = vld [vmem:[#allocation6 + $0x1d0] sm:$0xff]
    %v3411 = vld [vmem:[#allocation6 + $0x1d8] sm:$0xff]
    %v3412 = vld [vmem:[#allocation6 + $0x1e0] sm:$0xff]
    %v3413 = vld [vmem:[#allocation6 + $0x1e8] sm:$0xff]
    %v3414 = vld [vmem:[#allocation6 + $0x1f0] sm:$0xff]
    %v3415 = vld [vmem:[#allocation6 + $0x1f8] sm:$0xff]
    %v3416 = vld [vmem:[#allocation6 + $0x200] sm:$0xff]
    %v3417 = vld [vmem:[#allocation6 + $0x208] sm:$0xff]
    %v3418 = vld [vmem:[#allocation6 + $0x210] sm:$0xff]
    %v3419 = vld [vmem:[#allocation6 + $0x218] sm:$0xff]
    %v3420 = vld [vmem:[#allocation6 + $0x220] sm:$0xff]
    %v3421 = vld [vmem:[#allocation6 + $0x228] sm:$0xff]
    %v3422 = vld [vmem:[#allocation6 + $0x230] sm:$0xff]
    %v3423 = vld [vmem:[#allocation6 + $0x238] sm:$0xff]
    %v3424 = vld [vmem:[#allocation6 + $0x240] sm:$0xff]
    %v3425 = vld [vmem:[#allocation6 + $0x248] sm:$0xff]
    %v3426 = vld [vmem:[#allocation6 + $0x250] sm:$0xff]
    %v3427 = vld [vmem:[#allocation6 + $0x258] sm:$0xff]
    %v3428 = vld [vmem:[#allocation6 + $0x260] sm:$0xff]
    %v3429 = vld [vmem:[#allocation6 + $0x268] sm:$0xff]
    %v3430 = vld [vmem:[#allocation6 + $0x270] sm:$0xff]
    %v3431 = vld [vmem:[#allocation6 + $0x278] sm:$0xff]
    %v3432 = vld [vmem:[#allocation6 + $0x280] sm:$0xff]
    %v3433 = vld [vmem:[#allocation6 + $0x288] sm:$0xff]
    %v3434 = vld [vmem:[#allocation6 + $0x290] sm:$0xff]
    %v3435 = vld [vmem:[#allocation6 + $0x298] sm:$0xff]
    %v3436 = vld [vmem:[#allocation6 + $0x2a0] sm:$0xff]
    %v3437 = vld [vmem:[#allocation6 + $0x2a8] sm:$0xff]
    %v3438 = vld [vmem:[#allocation6 + $0x2b0] sm:$0xff]
    %v3439 = vld [vmem:[#allocation6 + $0x2b8] sm:$0xff]
    %v3440 = vld [vmem:[#allocation6 + $0x2c0] sm:$0xff]
    %v3441 = vld [vmem:[#allocation6 + $0x2c8] sm:$0xff]
    %v3442 = vld [vmem:[#allocation6 + $0x2d0] sm:$0xff]
    %v3443 = vld [vmem:[#allocation6 + $0x2d8] sm:$0xff]
    %v3444 = vld [vmem:[#allocation6 + $0x2e0] sm:$0xff]
    %v3445 = vld [vmem:[#allocation6 + $0x2e8] sm:$0xff]
    %v3446 = vld [vmem:[#allocation6 + $0x2f0] sm:$0xff]
    %v3447 = vld [vmem:[#allocation6 + $0x2f8] sm:$0xff]
    %v3448 = vld [vmem:[#allocation6 + $0x300] sm:$0xff]
    %v3449 = vld [vmem:[#allocation6 + $0x308] sm:$0xff]
    %v3450 = vld [vmem:[#allocation6 + $0x310] sm:$0xff]
    %v3451 = vld [vmem:[#allocation6 + $0x318] sm:$0xff]
    %v3452 = vld [vmem:[#allocation6 + $0x320] sm:$0xff]
    %v3453 = vld [vmem:[#allocation6 + $0x328] sm:$0xff]
    %v3454 = vld [vmem:[#allocation6 + $0x330] sm:$0xff]
    %v3455 = vld [vmem:[#allocation6 + $0x338] sm:$0xff]
    %v3456 = vld [vmem:[#allocation6 + $0x340] sm:$0xff]
    %v3457 = vld [vmem:[#allocation6 + $0x348] sm:$0xff]
    %v3458 = vld [vmem:[#allocation6 + $0x350] sm:$0xff]
    %v3459 = vld [vmem:[#allocation6 + $0x358] sm:$0xff]
    %v3460 = vld [vmem:[#allocation6 + $0x360] sm:$0xff]
    %v3461 = vld [vmem:[#allocation6 + $0x368] sm:$0xff]
    %v3462 = vld [vmem:[#allocation6 + $0x370] sm:$0xff]
    %v3463 = vld [vmem:[#allocation6 + $0x378] sm:$0xff]
    %v3464 = vld [vmem:[#allocation6 + $0x380] sm:$0xff]
    %v3465 = vld [vmem:[#allocation6 + $0x388] sm:$0xff]
    %v3466 = vld [vmem:[#allocation6 + $0x390] sm:$0xff]
    %v3467 = vld [vmem:[#allocation6 + $0x398] sm:$0xff]
    %v3468 = vld [vmem:[#allocation6 + $0x3a0] sm:$0xff]
    %v3469 = vld [vmem:[#allocation6 + $0x3a8] sm:$0xff]
    %v3470 = vld [vmem:[#allocation6 + $0x3b0] sm:$0xff]
    %v3471 = vld [vmem:[#allocation6 + $0x3b8] sm:$0xff]
    %v3472 = vld [vmem:[#allocation6 + $0x3c0] sm:$0xff]
    %v3473 = vld [vmem:[#allocation6 + $0x3c8] sm:$0xff]
    %v3474 = vld [vmem:[#allocation6 + $0x3d0] sm:$0xff]
    %v3475 = vld [vmem:[#allocation6 + $0x3d8] sm:$0xff]
    %v3476 = vld [vmem:[#allocation6 + $0x3e0] sm:$0xff]
    %v3477 = vld [vmem:[#allocation6 + $0x3e8] sm:$0xff]
    %v3478 = vld [vmem:[#allocation6 + $0x3f0] sm:$0xff]
    %v3479 = vld [vmem:[#allocation6 + $0x3f8] sm:$0xff]
    %v3480 = vld [vmem:[#allocation6 + $0x400] sm:$0xff]
    %v3481 = vld [vmem:[#allocation6 + $0x408] sm:$0xff]
    %v3482 = vld [vmem:[#allocation6 + $0x410] sm:$0xff]
    %v3483 = vld [vmem:[#allocation6 + $0x418] sm:$0xff]
    %v3484 = vld [vmem:[#allocation6 + $0x420] sm:$0xff]
    %v3485 = vld [vmem:[#allocation6 + $0x428] sm:$0xff]
    %v3486 = vld [vmem:[#allocation6 + $0x430] sm:$0xff]
    %v3487 = vld [vmem:[#allocation6 + $0x438] sm:$0xff]
    %v3488 = vld [vmem:[#allocation6 + $0x440] sm:$0xff]
    %v3489 = vld [vmem:[#allocation6 + $0x448] sm:$0xff]
    %v3490 = vld [vmem:[#allocation6 + $0x450] sm:$0xff]
    %v3491 = vld [vmem:[#allocation6 + $0x458] sm:$0xff]
    %v3492 = vld [vmem:[#allocation6 + $0x460] sm:$0xff]
    %v3493 = vld [vmem:[#allocation6 + $0x468] sm:$0xff]
    %v3494 = vld [vmem:[#allocation6 + $0x470] sm:$0xff]
    %v3495 = vld [vmem:[#allocation6 + $0x478] sm:$0xff]
    %v3496 = vld [vmem:[#allocation6 + $0x480] sm:$0xff]
    %v3497 = vld [vmem:[#allocation6 + $0x488] sm:$0xff]
    %v3498 = vld [vmem:[#allocation6 + $0x490] sm:$0xff]
    %v3499 = vld [vmem:[#allocation6 + $0x498] sm:$0xff]
    %v3500 = vld [vmem:[#allocation6 + $0x4a0] sm:$0xff]
    %v3501 = vld [vmem:[#allocation6 + $0x4a8] sm:$0xff]
    %v3502 = vld [vmem:[#allocation6 + $0x4b0] sm:$0xff]
    %v3503 = vld [vmem:[#allocation6 + $0x4b8] sm:$0xff]
    %v3504 = vld [vmem:[#allocation6 + $0x4c0] sm:$0xff]
    %v3505 = vld [vmem:[#allocation6 + $0x4c8] sm:$0xff]
    %v3506 = vld [vmem:[#allocation6 + $0x4d0] sm:$0xff]
    %v3507 = vld [vmem:[#allocation6 + $0x4d8] sm:$0xff]
    %v3508 = vld [vmem:[#allocation6 + $0x4e0] sm:$0xff]
    %v3509 = vld [vmem:[#allocation6 + $0x4e8] sm:$0xff]
    %v3510 = vld [vmem:[#allocation6 + $0x4f0] sm:$0xff]
    %v3511 = vld [vmem:[#allocation6 + $0x4f8] sm:$0xff]
    %v3512 = vld [vmem:[#allocation6 + $0x500] sm:$0xff]
    %v3513 = vld [vmem:[#allocation6 + $0x508] sm:$0xff]
    %v3514 = vld [vmem:[#allocation6 + $0x510] sm:$0xff]
    %v3515 = vld [vmem:[#allocation6 + $0x518] sm:$0xff]
    %v3516 = vld [vmem:[#allocation6 + $0x520] sm:$0xff]
    %v3517 = vld [vmem:[#allocation6 + $0x528] sm:$0xff]
    %v3518 = vld [vmem:[#allocation6 + $0x530] sm:$0xff]
    %v3519 = vld [vmem:[#allocation6 + $0x538] sm:$0xff]
    %v3520 = vld [vmem:[#allocation6 + $0x540] sm:$0xff]
    %v3521 = vld [vmem:[#allocation6 + $0x548] sm:$0xff]
    %v3522 = vld [vmem:[#allocation6 + $0x550] sm:$0xff]
    %v3523 = vld [vmem:[#allocation6 + $0x558] sm:$0xff]
    %v3524 = vld [vmem:[#allocation6 + $0x560] sm:$0xff]
    %v3525 = vld [vmem:[#allocation6 + $0x568] sm:$0xff]
    %v3526 = vld [vmem:[#allocation6 + $0x570] sm:$0xff]
    %v3527 = vld [vmem:[#allocation6 + $0x578] sm:$0xff]
    %v3528 = vld [vmem:[#allocation6 + $0x580] sm:$0xff]
    %v3529 = vld [vmem:[#allocation6 + $0x588] sm:$0xff]
    %v3530 = vld [vmem:[#allocation6 + $0x590] sm:$0xff]
    %v3531 = vld [vmem:[#allocation6 + $0x598] sm:$0xff]
    %v3532 = vld [vmem:[#allocation6 + $0x5a0] sm:$0xff]
    %v3533 = vld [vmem:[#allocation6 + $0x5a8] sm:$0xff]
    %v3534 = vld [vmem:[#allocation6 + $0x5b0] sm:$0xff]
    %v3535 = vld [vmem:[#allocation6 + $0x5b8] sm:$0xff]
    %v3536 = vld [vmem:[#allocation6 + $0x5c0] sm:$0xff]
    %v3537 = vld [vmem:[#allocation6 + $0x5c8] sm:$0xff]
    %v3538 = vld [vmem:[#allocation6 + $0x5d0] sm:$0xff]
    %v3539 = vld [vmem:[#allocation6 + $0x5d8] sm:$0xff]
    %v3540 = vld [vmem:[#allocation6 + $0x5e0] sm:$0xff]
    %v3541 = vld [vmem:[#allocation6 + $0x5e8] sm:$0xff]
    %v3542 = vld [vmem:[#allocation6 + $0x5f0] sm:$0xff]
    %v3543 = vld [vmem:[#allocation6 + $0x5f8] sm:$0xff]
    %v3544 = vld [vmem:[#allocation6 + $0x600] sm:$0xff]
    %v3545 = vld [vmem:[#allocation6 + $0x608] sm:$0xff]
    %v3546 = vld [vmem:[#allocation6 + $0x610] sm:$0xff]
    %v3547 = vld [vmem:[#allocation6 + $0x618] sm:$0xff]
    %v3548 = vld [vmem:[#allocation6 + $0x620] sm:$0xff]
    %v3549 = vld [vmem:[#allocation6 + $0x628] sm:$0xff]
    %v3550 = vld [vmem:[#allocation6 + $0x630] sm:$0xff]
    %v3551 = vld [vmem:[#allocation6 + $0x638] sm:$0xff]
    %v3552 = vld [vmem:[#allocation6 + $0x640] sm:$0xff]
    %v3553 = vld [vmem:[#allocation6 + $0x648] sm:$0xff]
    %v3554 = vld [vmem:[#allocation6 + $0x650] sm:$0xff]
    %v3555 = vld [vmem:[#allocation6 + $0x658] sm:$0xff]
    %v3556 = vld [vmem:[#allocation6 + $0x660] sm:$0xff]
    %v3557 = vld [vmem:[#allocation6 + $0x668] sm:$0xff]
    %v3558 = vld [vmem:[#allocation6 + $0x670] sm:$0xff]
    %v3559 = vld [vmem:[#allocation6 + $0x678] sm:$0xff]
    %v3560 = vld [vmem:[#allocation6 + $0x680] sm:$0xff]
    %v3561 = vld [vmem:[#allocation6 + $0x688] sm:$0xff]
    %v3562 = vld [vmem:[#allocation6 + $0x690] sm:$0xff]
    %v3563 = vld [vmem:[#allocation6 + $0x698] sm:$0xff]
    %v3564 = vld [vmem:[#allocation6 + $0x6a0] sm:$0xff]
    %v3565 = vld [vmem:[#allocation6 + $0x6a8] sm:$0xff]
    %v3566 = vld [vmem:[#allocation6 + $0x6b0] sm:$0xff]
    %v3567 = vld [vmem:[#allocation6 + $0x6b8] sm:$0xff]
    %v3568 = vld [vmem:[#allocation6 + $0x6c0] sm:$0xff]
    %v3569 = vld [vmem:[#allocation6 + $0x6c8] sm:$0xff]
    %v3570 = vld [vmem:[#allocation6 + $0x6d0] sm:$0xff]
    %v3571 = vld [vmem:[#allocation6 + $0x6d8] sm:$0xff]
    %v3572 = vld [vmem:[#allocation6 + $0x6e0] sm:$0xff]
    %v3573 = vld [vmem:[#allocation6 + $0x6e8] sm:$0xff]
    %v3574 = vld [vmem:[#allocation6 + $0x6f0] sm:$0xff]
    %v3575 = vld [vmem:[#allocation6 + $0x6f8] sm:$0xff]
    %v3576 = vld [vmem:[#allocation6 + $0x700] sm:$0xff]
    %v3577 = vld [vmem:[#allocation6 + $0x708] sm:$0xff]
    %v3578 = vld [vmem:[#allocation6 + $0x710] sm:$0xff]
    %v3579 = vld [vmem:[#allocation6 + $0x718] sm:$0xff]
    %v3580 = vld [vmem:[#allocation6 + $0x720] sm:$0xff]
    %v3581 = vld [vmem:[#allocation6 + $0x728] sm:$0xff]
    %v3582 = vld [vmem:[#allocation6 + $0x730] sm:$0xff]
    %v3583 = vld [vmem:[#allocation6 + $0x738] sm:$0xff]
    %v3584 = vld [vmem:[#allocation6 + $0x740] sm:$0xff]
    %v3585 = vld [vmem:[#allocation6 + $0x748] sm:$0xff]
    %v3586 = vld [vmem:[#allocation6 + $0x750] sm:$0xff]
    %v3587 = vld [vmem:[#allocation6 + $0x758] sm:$0xff]
    %v3588 = vld [vmem:[#allocation6 + $0x760] sm:$0xff]
    %v3589 = vld [vmem:[#allocation6 + $0x768] sm:$0xff]
    %v3590 = vld [vmem:[#allocation6 + $0x770] sm:$0xff]
    %v3591 = vld [vmem:[#allocation6 + $0x778] sm:$0xff]
    %v3592 = vld [vmem:[#allocation6 + $0x780] sm:$0xff]
    %v3593 = vld [vmem:[#allocation6 + $0x788] sm:$0xff]
    %v3594 = vld [vmem:[#allocation6 + $0x790] sm:$0xff]
    %v3595 = vld [vmem:[#allocation6 + $0x798] sm:$0xff]
    %v3596 = vld [vmem:[#allocation6 + $0x7a0] sm:$0xff]
    %v3597 = vld [vmem:[#allocation6 + $0x7a8] sm:$0xff]
    %v3598 = vld [vmem:[#allocation6 + $0x7b0] sm:$0xff]
    %v3599 = vld [vmem:[#allocation6 + $0x7b8] sm:$0xff]
    %v3600 = vld [vmem:[#allocation6 + $0x7c0] sm:$0xff]
    %v3601 = vld [vmem:[#allocation6 + $0x7c8] sm:$0xff]
    %v3602 = vld [vmem:[#allocation6 + $0x7d0] sm:$0xff]
    %v3603 = vld [vmem:[#allocation6 + $0x7d8] sm:$0xff]
    %v3604 = vld [vmem:[#allocation6 + $0x7e0] sm:$0xff]
    %v3605 = vld [vmem:[#allocation6 + $0x7e8] sm:$0xff]
    %v3606 = vld [vmem:[#allocation6 + $0x7f0] sm:$0xff]
    %v3607 = vld [vmem:[#allocation6 + $0x7f8] sm:$0xff]
    %v3608 = vld [vmem:[#allocation7] sm:$0xf]
    %v3609 = vpack.c.bf16 %v3344, %v3344
    %v3610 = vpack.c.bf16 %v3345, %v3345
    %v3611 = vpack.c.bf16 %v3346, %v3346
    %v3612 = vpack.c.bf16 %v3347, %v3347
    %v3613 = vpack.c.bf16 %v3348, %v3348
    %v3614 = vpack.c.bf16 %v3349, %v3349
    %v3615 = vpack.c.bf16 %v3350, %v3350
    %v3616 = vpack.c.bf16 %v3351, %v3351
    %v3618 = vlaneseq
    %v3619 = vshrl.u32 %v3618, 7
    %v3620 = vsub.s32 0, %v3619
    %v3621 = vrot.slane %v3608, %v3620
    %v3622 = vlaneseq
    %v3623 = vshrl.u32 %v3622, 7
    %v3624 = vsub.s32 1, %v3623
    %v3625 = vrot.slane %v3608, %v3624
    %v3626 = vlaneseq
    %v3627 = vshrl.u32 %v3626, 7
    %v3628 = vsub.s32 2, %v3627
    %v3629 = vrot.slane %v3608, %v3628
    %v3630 = vlaneseq
    %v3631 = vshrl.u32 %v3630, 7
    %v3632 = vsub.s32 3, %v3631
    %v3633 = vrot.slane %v3608, %v3632
    %v3894 = vunpack.c.l.b16 %v3352
    %v3895 = vunpack.c.h.b16 %v3352
    %v3896 = vunpack.c.l.b16 %v3353
    %v3897 = vunpack.c.h.b16 %v3353
    %v3898 = vunpack.c.l.b16 %v3354
    %v3899 = vunpack.c.h.b16 %v3354
    %v3900 = vunpack.c.l.b16 %v3355
    %v3901 = vunpack.c.h.b16 %v3355
    %v3902 = vunpack.c.l.b16 %v3356
    %v3903 = vunpack.c.h.b16 %v3356
    %v3904 = vunpack.c.l.b16 %v3357
    %v3905 = vunpack.c.h.b16 %v3357
    %v3906 = vunpack.c.l.b16 %v3358
    %v3907 = vunpack.c.h.b16 %v3358
    %v3908 = vunpack.c.l.b16 %v3359
    %v3909 = vunpack.c.h.b16 %v3359
    %v3910 = vunpack.c.l.b16 %v3360
    %v3911 = vunpack.c.h.b16 %v3360
    %v3912 = vunpack.c.l.b16 %v3361
    %v3913 = vunpack.c.h.b16 %v3361
    %v3914 = vunpack.c.l.b16 %v3362
    %v3915 = vunpack.c.h.b16 %v3362
    %v3916 = vunpack.c.l.b16 %v3363
    %v3917 = vunpack.c.h.b16 %v3363
    %v3918 = vunpack.c.l.b16 %v3364
    %v3919 = vunpack.c.h.b16 %v3364
    %v3920 = vunpack.c.l.b16 %v3365
    %v3921 = vunpack.c.h.b16 %v3365
    %v3922 = vunpack.c.l.b16 %v3366
    %v3923 = vunpack.c.h.b16 %v3366
    %v3924 = vunpack.c.l.b16 %v3367
    %v3925 = vunpack.c.h.b16 %v3367
    %v3926 = vunpack.c.l.b16 %v3368
    %v3927 = vunpack.c.h.b16 %v3368
    %v3928 = vunpack.c.l.b16 %v3369
    %v3929 = vunpack.c.h.b16 %v3369
    %v3930 = vunpack.c.l.b16 %v3370
    %v3931 = vunpack.c.h.b16 %v3370
    %v3932 = vunpack.c.l.b16 %v3371
    %v3933 = vunpack.c.h.b16 %v3371
    %v3934 = vunpack.c.l.b16 %v3372
    %v3935 = vunpack.c.h.b16 %v3372
    %v3936 = vunpack.c.l.b16 %v3373
    %v3937 = vunpack.c.h.b16 %v3373
    %v3938 = vunpack.c.l.b16 %v3374
    %v3939 = vunpack.c.h.b16 %v3374
    %v3940 = vunpack.c.l.b16 %v3375
    %v3941 = vunpack.c.h.b16 %v3375
    %v3942 = vunpack.c.l.b16 %v3376
    %v3943 = vunpack.c.h.b16 %v3376
    %v3944 = vunpack.c.l.b16 %v3377
    %v3945 = vunpack.c.h.b16 %v3377
    %v3946 = vunpack.c.l.b16 %v3378
    %v3947 = vunpack.c.h.b16 %v3378
    %v3948 = vunpack.c.l.b16 %v3379
    %v3949 = vunpack.c.h.b16 %v3379
    %v3950 = vunpack.c.l.b16 %v3380
    %v3951 = vunpack.c.h.b16 %v3380
    %v3952 = vunpack.c.l.b16 %v3381
    %v3953 = vunpack.c.h.b16 %v3381
    %v3954 = vunpack.c.l.b16 %v3382
    %v3955 = vunpack.c.h.b16 %v3382
    %v3956 = vunpack.c.l.b16 %v3383
    %v3957 = vunpack.c.h.b16 %v3383
    %v3958 = vunpack.c.l.b16 %v3384
    %v3959 = vunpack.c.h.b16 %v3384
    %v3960 = vunpack.c.l.b16 %v3385
    %v3961 = vunpack.c.h.b16 %v3385
    %v3962 = vunpack.c.l.b16 %v3386
    %v3963 = vunpack.c.h.b16 %v3386
    %v3964 = vunpack.c.l.b16 %v3387
    %v3965 = vunpack.c.h.b16 %v3387
    %v3966 = vunpack.c.l.b16 %v3388
    %v3967 = vunpack.c.h.b16 %v3388
    %v3968 = vunpack.c.l.b16 %v3389
    %v3969 = vunpack.c.h.b16 %v3389
    %v3970 = vunpack.c.l.b16 %v3390
    %v3971 = vunpack.c.h.b16 %v3390
    %v3972 = vunpack.c.l.b16 %v3391
    %v3973 = vunpack.c.h.b16 %v3391
    %v3974 = vunpack.c.l.b16 %v3392
    %v3975 = vunpack.c.h.b16 %v3392
    %v3976 = vunpack.c.l.b16 %v3393
    %v3977 = vunpack.c.h.b16 %v3393
    %v3978 = vunpack.c.l.b16 %v3394
    %v3979 = vunpack.c.h.b16 %v3394
    %v3980 = vunpack.c.l.b16 %v3395
    %v3981 = vunpack.c.h.b16 %v3395
    %v3982 = vunpack.c.l.b16 %v3396
    %v3983 = vunpack.c.h.b16 %v3396
    %v3984 = vunpack.c.l.b16 %v3397
    %v3985 = vunpack.c.h.b16 %v3397
    %v3986 = vunpack.c.l.b16 %v3398
    %v3987 = vunpack.c.h.b16 %v3398
    %v3988 = vunpack.c.l.b16 %v3399
    %v3989 = vunpack.c.h.b16 %v3399
    %v3990 = vunpack.c.l.b16 %v3400
    %v3991 = vunpack.c.h.b16 %v3400
    %v3992 = vunpack.c.l.b16 %v3401
    %v3993 = vunpack.c.h.b16 %v3401
    %v3994 = vunpack.c.l.b16 %v3402
    %v3995 = vunpack.c.h.b16 %v3402
    %v3996 = vunpack.c.l.b16 %v3403
    %v3997 = vunpack.c.h.b16 %v3403
    %v3998 = vunpack.c.l.b16 %v3404
    %v3999 = vunpack.c.h.b16 %v3404
    %v4000 = vunpack.c.l.b16 %v3405
    %v4001 = vunpack.c.h.b16 %v3405
    %v4002 = vunpack.c.l.b16 %v3406
    %v4003 = vunpack.c.h.b16 %v3406
    %v4004 = vunpack.c.l.b16 %v3407
    %v4005 = vunpack.c.h.b16 %v3407
    %v4006 = vunpack.c.l.b16 %v3408
    %v4007 = vunpack.c.h.b16 %v3408
    %v4008 = vunpack.c.l.b16 %v3409
    %v4009 = vunpack.c.h.b16 %v3409
    %v4010 = vunpack.c.l.b16 %v3410
    %v4011 = vunpack.c.h.b16 %v3410
    %v4012 = vunpack.c.l.b16 %v3411
    %v4013 = vunpack.c.h.b16 %v3411
    %v4014 = vunpack.c.l.b16 %v3412
    %v4015 = vunpack.c.h.b16 %v3412
    %v4016 = vunpack.c.l.b16 %v3413
    %v4017 = vunpack.c.h.b16 %v3413
    %v4018 = vunpack.c.l.b16 %v3414
    %v4019 = vunpack.c.h.b16 %v3414
    %v4020 = vunpack.c.l.b16 %v3415
    %v4021 = vunpack.c.h.b16 %v3415
    %v4022 = vunpack.c.l.b16 %v3416
    %v4023 = vunpack.c.h.b16 %v3416
    %v4024 = vunpack.c.l.b16 %v3417
    %v4025 = vunpack.c.h.b16 %v3417
    %v4026 = vunpack.c.l.b16 %v3418
    %v4027 = vunpack.c.h.b16 %v3418
    %v4028 = vunpack.c.l.b16 %v3419
    %v4029 = vunpack.c.h.b16 %v3419
    %v4030 = vunpack.c.l.b16 %v3420
    %v4031 = vunpack.c.h.b16 %v3420
    %v4032 = vunpack.c.l.b16 %v3421
    %v4033 = vunpack.c.h.b16 %v3421
    %v4034 = vunpack.c.l.b16 %v3422
    %v4035 = vunpack.c.h.b16 %v3422
    %v4036 = vunpack.c.l.b16 %v3423
    %v4037 = vunpack.c.h.b16 %v3423
    %v4038 = vunpack.c.l.b16 %v3424
    %v4039 = vunpack.c.h.b16 %v3424
    %v4040 = vunpack.c.l.b16 %v3425
    %v4041 = vunpack.c.h.b16 %v3425
    %v4042 = vunpack.c.l.b16 %v3426
    %v4043 = vunpack.c.h.b16 %v3426
    %v4044 = vunpack.c.l.b16 %v3427
    %v4045 = vunpack.c.h.b16 %v3427
    %v4046 = vunpack.c.l.b16 %v3428
    %v4047 = vunpack.c.h.b16 %v3428
    %v4048 = vunpack.c.l.b16 %v3429
    %v4049 = vunpack.c.h.b16 %v3429
    %v4050 = vunpack.c.l.b16 %v3430
    %v4051 = vunpack.c.h.b16 %v3430
    %v4052 = vunpack.c.l.b16 %v3431
    %v4053 = vunpack.c.h.b16 %v3431
    %v4054 = vunpack.c.l.b16 %v3432
    %v4055 = vunpack.c.h.b16 %v3432
    %v4056 = vunpack.c.l.b16 %v3433
    %v4057 = vunpack.c.h.b16 %v3433
    %v4058 = vunpack.c.l.b16 %v3434
    %v4059 = vunpack.c.h.b16 %v3434
    %v4060 = vunpack.c.l.b16 %v3435
    %v4061 = vunpack.c.h.b16 %v3435
    %v4062 = vunpack.c.l.b16 %v3436
    %v4063 = vunpack.c.h.b16 %v3436
    %v4064 = vunpack.c.l.b16 %v3437
    %v4065 = vunpack.c.h.b16 %v3437
    %v4066 = vunpack.c.l.b16 %v3438
    %v4067 = vunpack.c.h.b16 %v3438
    %v4068 = vunpack.c.l.b16 %v3439
    %v4069 = vunpack.c.h.b16 %v3439
    %v4070 = vunpack.c.l.b16 %v3440
    %v4071 = vunpack.c.h.b16 %v3440
    %v4072 = vunpack.c.l.b16 %v3441
    %v4073 = vunpack.c.h.b16 %v3441
    %v4074 = vunpack.c.l.b16 %v3442
    %v4075 = vunpack.c.h.b16 %v3442
    %v4076 = vunpack.c.l.b16 %v3443
    %v4077 = vunpack.c.h.b16 %v3443
    %v4078 = vunpack.c.l.b16 %v3444
    %v4079 = vunpack.c.h.b16 %v3444
    %v4080 = vunpack.c.l.b16 %v3445
    %v4081 = vunpack.c.h.b16 %v3445
    %v4082 = vunpack.c.l.b16 %v3446
    %v4083 = vunpack.c.h.b16 %v3446
    %v4084 = vunpack.c.l.b16 %v3447
    %v4085 = vunpack.c.h.b16 %v3447
    %v4086 = vunpack.c.l.b16 %v3448
    %v4087 = vunpack.c.h.b16 %v3448
    %v4088 = vunpack.c.l.b16 %v3449
    %v4089 = vunpack.c.h.b16 %v3449
    %v4090 = vunpack.c.l.b16 %v3450
    %v4091 = vunpack.c.h.b16 %v3450
    %v4092 = vunpack.c.l.b16 %v3451
    %v4093 = vunpack.c.h.b16 %v3451
    %v4094 = vunpack.c.l.b16 %v3452
    %v4095 = vunpack.c.h.b16 %v3452
    %v4096 = vunpack.c.l.b16 %v3453
    %v4097 = vunpack.c.h.b16 %v3453
    %v4098 = vunpack.c.l.b16 %v3454
    %v4099 = vunpack.c.h.b16 %v3454
    %v4100 = vunpack.c.l.b16 %v3455
    %v4101 = vunpack.c.h.b16 %v3455
    %v4102 = vunpack.c.l.b16 %v3456
    %v4103 = vunpack.c.h.b16 %v3456
    %v4104 = vunpack.c.l.b16 %v3457
    %v4105 = vunpack.c.h.b16 %v3457
    %v4106 = vunpack.c.l.b16 %v3458
    %v4107 = vunpack.c.h.b16 %v3458
    %v4108 = vunpack.c.l.b16 %v3459
    %v4109 = vunpack.c.h.b16 %v3459
    %v4110 = vunpack.c.l.b16 %v3460
    %v4111 = vunpack.c.h.b16 %v3460
    %v4112 = vunpack.c.l.b16 %v3461
    %v4113 = vunpack.c.h.b16 %v3461
    %v4114 = vunpack.c.l.b16 %v3462
    %v4115 = vunpack.c.h.b16 %v3462
    %v4116 = vunpack.c.l.b16 %v3463
    %v4117 = vunpack.c.h.b16 %v3463
    %v4118 = vunpack.c.l.b16 %v3464
    %v4119 = vunpack.c.h.b16 %v3464
    %v4120 = vunpack.c.l.b16 %v3465
    %v4121 = vunpack.c.h.b16 %v3465
    %v4122 = vunpack.c.l.b16 %v3466
    %v4123 = vunpack.c.h.b16 %v3466
    %v4124 = vunpack.c.l.b16 %v3467
    %v4125 = vunpack.c.h.b16 %v3467
    %v4126 = vunpack.c.l.b16 %v3468
    %v4127 = vunpack.c.h.b16 %v3468
    %v4128 = vunpack.c.l.b16 %v3469
    %v4129 = vunpack.c.h.b16 %v3469
    %v4130 = vunpack.c.l.b16 %v3470
    %v4131 = vunpack.c.h.b16 %v3470
    %v4132 = vunpack.c.l.b16 %v3471
    %v4133 = vunpack.c.h.b16 %v3471
    %v4134 = vunpack.c.l.b16 %v3472
    %v4135 = vunpack.c.h.b16 %v3472
    %v4136 = vunpack.c.l.b16 %v3473
    %v4137 = vunpack.c.h.b16 %v3473
    %v4138 = vunpack.c.l.b16 %v3474
    %v4139 = vunpack.c.h.b16 %v3474
    %v4140 = vunpack.c.l.b16 %v3475
    %v4141 = vunpack.c.h.b16 %v3475
    %v4142 = vunpack.c.l.b16 %v3476
    %v4143 = vunpack.c.h.b16 %v3476
    %v4144 = vunpack.c.l.b16 %v3477
    %v4145 = vunpack.c.h.b16 %v3477
    %v4146 = vunpack.c.l.b16 %v3478
    %v4147 = vunpack.c.h.b16 %v3478
    %v4148 = vunpack.c.l.b16 %v3479
    %v4149 = vunpack.c.h.b16 %v3479
    %v4150 = vunpack.c.l.b16 %v3480
    %v4151 = vunpack.c.h.b16 %v3480
    %v4152 = vunpack.c.l.b16 %v3481
    %v4153 = vunpack.c.h.b16 %v3481
    %v4154 = vunpack.c.l.b16 %v3482
    %v4155 = vunpack.c.h.b16 %v3482
    %v4156 = vunpack.c.l.b16 %v3483
    %v4157 = vunpack.c.h.b16 %v3483
    %v4158 = vunpack.c.l.b16 %v3484
    %v4159 = vunpack.c.h.b16 %v3484
    %v4160 = vunpack.c.l.b16 %v3485
    %v4161 = vunpack.c.h.b16 %v3485
    %v4162 = vunpack.c.l.b16 %v3486
    %v4163 = vunpack.c.h.b16 %v3486
    %v4164 = vunpack.c.l.b16 %v3487
    %v4165 = vunpack.c.h.b16 %v3487
    %v4166 = vunpack.c.l.b16 %v3488
    %v4167 = vunpack.c.h.b16 %v3488
    %v4168 = vunpack.c.l.b16 %v3489
    %v4169 = vunpack.c.h.b16 %v3489
    %v4170 = vunpack.c.l.b16 %v3490
    %v4171 = vunpack.c.h.b16 %v3490
    %v4172 = vunpack.c.l.b16 %v3491
    %v4173 = vunpack.c.h.b16 %v3491
    %v4174 = vunpack.c.l.b16 %v3492
    %v4175 = vunpack.c.h.b16 %v3492
    %v4176 = vunpack.c.l.b16 %v3493
    %v4177 = vunpack.c.h.b16 %v3493
    %v4178 = vunpack.c.l.b16 %v3494
    %v4179 = vunpack.c.h.b16 %v3494
    %v4180 = vunpack.c.l.b16 %v3495
    %v4181 = vunpack.c.h.b16 %v3495
    %v4182 = vunpack.c.l.b16 %v3496
    %v4183 = vunpack.c.h.b16 %v3496
    %v4184 = vunpack.c.l.b16 %v3497
    %v4185 = vunpack.c.h.b16 %v3497
    %v4186 = vunpack.c.l.b16 %v3498
    %v4187 = vunpack.c.h.b16 %v3498
    %v4188 = vunpack.c.l.b16 %v3499
    %v4189 = vunpack.c.h.b16 %v3499
    %v4190 = vunpack.c.l.b16 %v3500
    %v4191 = vunpack.c.h.b16 %v3500
    %v4192 = vunpack.c.l.b16 %v3501
    %v4193 = vunpack.c.h.b16 %v3501
    %v4194 = vunpack.c.l.b16 %v3502
    %v4195 = vunpack.c.h.b16 %v3502
    %v4196 = vunpack.c.l.b16 %v3503
    %v4197 = vunpack.c.h.b16 %v3503
    %v4198 = vunpack.c.l.b16 %v3504
    %v4199 = vunpack.c.h.b16 %v3504
    %v4200 = vunpack.c.l.b16 %v3505
    %v4201 = vunpack.c.h.b16 %v3505
    %v4202 = vunpack.c.l.b16 %v3506
    %v4203 = vunpack.c.h.b16 %v3506
    %v4204 = vunpack.c.l.b16 %v3507
    %v4205 = vunpack.c.h.b16 %v3507
    %v4206 = vunpack.c.l.b16 %v3508
    %v4207 = vunpack.c.h.b16 %v3508
    %v4208 = vunpack.c.l.b16 %v3509
    %v4209 = vunpack.c.h.b16 %v3509
    %v4210 = vunpack.c.l.b16 %v3510
    %v4211 = vunpack.c.h.b16 %v3510
    %v4212 = vunpack.c.l.b16 %v3511
    %v4213 = vunpack.c.h.b16 %v3511
    %v4214 = vunpack.c.l.b16 %v3512
    %v4215 = vunpack.c.h.b16 %v3512
    %v4216 = vunpack.c.l.b16 %v3513
    %v4217 = vunpack.c.h.b16 %v3513
    %v4218 = vunpack.c.l.b16 %v3514
    %v4219 = vunpack.c.h.b16 %v3514
    %v4220 = vunpack.c.l.b16 %v3515
    %v4221 = vunpack.c.h.b16 %v3515
    %v4222 = vunpack.c.l.b16 %v3516
    %v4223 = vunpack.c.h.b16 %v3516
    %v4224 = vunpack.c.l.b16 %v3517
    %v4225 = vunpack.c.h.b16 %v3517
    %v4226 = vunpack.c.l.b16 %v3518
    %v4227 = vunpack.c.h.b16 %v3518
    %v4228 = vunpack.c.l.b16 %v3519
    %v4229 = vunpack.c.h.b16 %v3519
    %v4230 = vunpack.c.l.b16 %v3520
    %v4231 = vunpack.c.h.b16 %v3520
    %v4232 = vunpack.c.l.b16 %v3521
    %v4233 = vunpack.c.h.b16 %v3521
    %v4234 = vunpack.c.l.b16 %v3522
    %v4235 = vunpack.c.h.b16 %v3522
    %v4236 = vunpack.c.l.b16 %v3523
    %v4237 = vunpack.c.h.b16 %v3523
    %v4238 = vunpack.c.l.b16 %v3524
    %v4239 = vunpack.c.h.b16 %v3524
    %v4240 = vunpack.c.l.b16 %v3525
    %v4241 = vunpack.c.h.b16 %v3525
    %v4242 = vunpack.c.l.b16 %v3526
    %v4243 = vunpack.c.h.b16 %v3526
    %v4244 = vunpack.c.l.b16 %v3527
    %v4245 = vunpack.c.h.b16 %v3527
    %v4246 = vunpack.c.l.b16 %v3528
    %v4247 = vunpack.c.h.b16 %v3528
    %v4248 = vunpack.c.l.b16 %v3529
    %v4249 = vunpack.c.h.b16 %v3529
    %v4250 = vunpack.c.l.b16 %v3530
    %v4251 = vunpack.c.h.b16 %v3530
    %v4252 = vunpack.c.l.b16 %v3531
    %v4253 = vunpack.c.h.b16 %v3531
    %v4254 = vunpack.c.l.b16 %v3532
    %v4255 = vunpack.c.h.b16 %v3532
    %v4256 = vunpack.c.l.b16 %v3533
    %v4257 = vunpack.c.h.b16 %v3533
    %v4258 = vunpack.c.l.b16 %v3534
    %v4259 = vunpack.c.h.b16 %v3534
    %v4260 = vunpack.c.l.b16 %v3535
    %v4261 = vunpack.c.h.b16 %v3535
    %v4262 = vunpack.c.l.b16 %v3536
    %v4263 = vunpack.c.h.b16 %v3536
    %v4264 = vunpack.c.l.b16 %v3537
    %v4265 = vunpack.c.h.b16 %v3537
    %v4266 = vunpack.c.l.b16 %v3538
    %v4267 = vunpack.c.h.b16 %v3538
    %v4268 = vunpack.c.l.b16 %v3539
    %v4269 = vunpack.c.h.b16 %v3539
    %v4270 = vunpack.c.l.b16 %v3540
    %v4271 = vunpack.c.h.b16 %v3540
    %v4272 = vunpack.c.l.b16 %v3541
    %v4273 = vunpack.c.h.b16 %v3541
    %v4274 = vunpack.c.l.b16 %v3542
    %v4275 = vunpack.c.h.b16 %v3542
    %v4276 = vunpack.c.l.b16 %v3543
    %v4277 = vunpack.c.h.b16 %v3543
    %v4278 = vunpack.c.l.b16 %v3544
    %v4279 = vunpack.c.h.b16 %v3544
    %v4280 = vunpack.c.l.b16 %v3545
    %v4281 = vunpack.c.h.b16 %v3545
    %v4282 = vunpack.c.l.b16 %v3546
    %v4283 = vunpack.c.h.b16 %v3546
    %v4284 = vunpack.c.l.b16 %v3547
    %v4285 = vunpack.c.h.b16 %v3547
    %v4286 = vunpack.c.l.b16 %v3548
    %v4287 = vunpack.c.h.b16 %v3548
    %v4288 = vunpack.c.l.b16 %v3549
    %v4289 = vunpack.c.h.b16 %v3549
    %v4290 = vunpack.c.l.b16 %v3550
    %v4291 = vunpack.c.h.b16 %v3550
    %v4292 = vunpack.c.l.b16 %v3551
    %v4293 = vunpack.c.h.b16 %v3551
    %v4294 = vunpack.c.l.b16 %v3552
    %v4295 = vunpack.c.h.b16 %v3552
    %v4296 = vunpack.c.l.b16 %v3553
    %v4297 = vunpack.c.h.b16 %v3553
    %v4298 = vunpack.c.l.b16 %v3554
    %v4299 = vunpack.c.h.b16 %v3554
    %v4300 = vunpack.c.l.b16 %v3555
    %v4301 = vunpack.c.h.b16 %v3555
    %v4302 = vunpack.c.l.b16 %v3556
    %v4303 = vunpack.c.h.b16 %v3556
    %v4304 = vunpack.c.l.b16 %v3557
    %v4305 = vunpack.c.h.b16 %v3557
    %v4306 = vunpack.c.l.b16 %v3558
    %v4307 = vunpack.c.h.b16 %v3558
    %v4308 = vunpack.c.l.b16 %v3559
    %v4309 = vunpack.c.h.b16 %v3559
    %v4310 = vunpack.c.l.b16 %v3560
    %v4311 = vunpack.c.h.b16 %v3560
    %v4312 = vunpack.c.l.b16 %v3561
    %v4313 = vunpack.c.h.b16 %v3561
    %v4314 = vunpack.c.l.b16 %v3562
    %v4315 = vunpack.c.h.b16 %v3562
    %v4316 = vunpack.c.l.b16 %v3563
    %v4317 = vunpack.c.h.b16 %v3563
    %v4318 = vunpack.c.l.b16 %v3564
    %v4319 = vunpack.c.h.b16 %v3564
    %v4320 = vunpack.c.l.b16 %v3565
    %v4321 = vunpack.c.h.b16 %v3565
    %v4322 = vunpack.c.l.b16 %v3566
    %v4323 = vunpack.c.h.b16 %v3566
    %v4324 = vunpack.c.l.b16 %v3567
    %v4325 = vunpack.c.h.b16 %v3567
    %v4326 = vunpack.c.l.b16 %v3568
    %v4327 = vunpack.c.h.b16 %v3568
    %v4328 = vunpack.c.l.b16 %v3569
    %v4329 = vunpack.c.h.b16 %v3569
    %v4330 = vunpack.c.l.b16 %v3570
    %v4331 = vunpack.c.h.b16 %v3570
    %v4332 = vunpack.c.l.b16 %v3571
    %v4333 = vunpack.c.h.b16 %v3571
    %v4334 = vunpack.c.l.b16 %v3572
    %v4335 = vunpack.c.h.b16 %v3572
    %v4336 = vunpack.c.l.b16 %v3573
    %v4337 = vunpack.c.h.b16 %v3573
    %v4338 = vunpack.c.l.b16 %v3574
    %v4339 = vunpack.c.h.b16 %v3574
    %v4340 = vunpack.c.l.b16 %v3575
    %v4341 = vunpack.c.h.b16 %v3575
    %v4342 = vunpack.c.l.b16 %v3576
    %v4343 = vunpack.c.h.b16 %v3576
    %v4344 = vunpack.c.l.b16 %v3577
    %v4345 = vunpack.c.h.b16 %v3577
    %v4346 = vunpack.c.l.b16 %v3578
    %v4347 = vunpack.c.h.b16 %v3578
    %v4348 = vunpack.c.l.b16 %v3579
    %v4349 = vunpack.c.h.b16 %v3579
    %v4350 = vunpack.c.l.b16 %v3580
    %v4351 = vunpack.c.h.b16 %v3580
    %v4352 = vunpack.c.l.b16 %v3581
    %v4353 = vunpack.c.h.b16 %v3581
    %v4354 = vunpack.c.l.b16 %v3582
    %v4355 = vunpack.c.h.b16 %v3582
    %v4356 = vunpack.c.l.b16 %v3583
    %v4357 = vunpack.c.h.b16 %v3583
    %v4358 = vunpack.c.l.b16 %v3584
    %v4359 = vunpack.c.h.b16 %v3584
    %v4360 = vunpack.c.l.b16 %v3585
    %v4361 = vunpack.c.h.b16 %v3585
    %v4362 = vunpack.c.l.b16 %v3586
    %v4363 = vunpack.c.h.b16 %v3586
    %v4364 = vunpack.c.l.b16 %v3587
    %v4365 = vunpack.c.h.b16 %v3587
    %v4366 = vunpack.c.l.b16 %v3588
    %v4367 = vunpack.c.h.b16 %v3588
    %v4368 = vunpack.c.l.b16 %v3589
    %v4369 = vunpack.c.h.b16 %v3589
    %v4370 = vunpack.c.l.b16 %v3590
    %v4371 = vunpack.c.h.b16 %v3590
    %v4372 = vunpack.c.l.b16 %v3591
    %v4373 = vunpack.c.h.b16 %v3591
    %v4374 = vunpack.c.l.b16 %v3592
    %v4375 = vunpack.c.h.b16 %v3592
    %v4376 = vunpack.c.l.b16 %v3593
    %v4377 = vunpack.c.h.b16 %v3593
    %v4378 = vunpack.c.l.b16 %v3594
    %v4379 = vunpack.c.h.b16 %v3594
    %v4380 = vunpack.c.l.b16 %v3595
    %v4381 = vunpack.c.h.b16 %v3595
    %v4382 = vunpack.c.l.b16 %v3596
    %v4383 = vunpack.c.h.b16 %v3596
    %v4384 = vunpack.c.l.b16 %v3597
    %v4385 = vunpack.c.h.b16 %v3597
    %v4386 = vunpack.c.l.b16 %v3598
    %v4387 = vunpack.c.h.b16 %v3598
    %v4388 = vunpack.c.l.b16 %v3599
    %v4389 = vunpack.c.h.b16 %v3599
    %v4390 = vunpack.c.l.b16 %v3600
    %v4391 = vunpack.c.h.b16 %v3600
    %v4392 = vunpack.c.l.b16 %v3601
    %v4393 = vunpack.c.h.b16 %v3601
    %v4394 = vunpack.c.l.b16 %v3602
    %v4395 = vunpack.c.h.b16 %v3602
    %v4396 = vunpack.c.l.b16 %v3603
    %v4397 = vunpack.c.h.b16 %v3603
    %v4398 = vunpack.c.l.b16 %v3604
    %v4399 = vunpack.c.h.b16 %v3604
    %v4400 = vunpack.c.l.b16 %v3605
    %v4401 = vunpack.c.h.b16 %v3605
    %v4402 = vunpack.c.l.b16 %v3606
    %v4403 = vunpack.c.h.b16 %v3606
    %v4404 = vunpack.c.l.b16 %v3607
    %v4405 = vunpack.c.h.b16 %v3607
    %v4406 = vpack.c.b16 %v3898, %v3894
    %v4407 = vpack.c.b16 %v3899, %v3895
    %v4408 = vpack.c.b16 %v3900, %v3896
    %v4409 = vpack.c.b16 %v3901, %v3897
    %v4410 = vpack.c.b16 %v3906, %v3902
    %v4411 = vpack.c.b16 %v3907, %v3903
    %v4412 = vpack.c.b16 %v3908, %v3904
    %v4413 = vpack.c.b16 %v3909, %v3905
    %v4414 = vpack.c.b16 %v3914, %v3910
    %v4415 = vpack.c.b16 %v3915, %v3911
    %v4416 = vpack.c.b16 %v3916, %v3912
    %v4417 = vpack.c.b16 %v3917, %v3913
    %v4418 = vpack.c.b16 %v3922, %v3918
    %v4419 = vpack.c.b16 %v3923, %v3919
    %v4420 = vpack.c.b16 %v3924, %v3920
    %v4421 = vpack.c.b16 %v3925, %v3921
    %v4422 = vpack.c.b16 %v3930, %v3926
    %v4423 = vpack.c.b16 %v3931, %v3927
    %v4424 = vpack.c.b16 %v3932, %v3928
    %v4425 = vpack.c.b16 %v3933, %v3929
    %v4426 = vpack.c.b16 %v3938, %v3934
    %v4427 = vpack.c.b16 %v3939, %v3935
    %v4428 = vpack.c.b16 %v3940, %v3936
    %v4429 = vpack.c.b16 %v3941, %v3937
    %v4430 = vpack.c.b16 %v3946, %v3942
    %v4431 = vpack.c.b16 %v3947, %v3943
    %v4432 = vpack.c.b16 %v3948, %v3944
    %v4433 = vpack.c.b16 %v3949, %v3945
    %v4434 = vpack.c.b16 %v3954, %v3950
    %v4435 = vpack.c.b16 %v3955, %v3951
    %v4436 = vpack.c.b16 %v3956, %v3952
    %v4437 = vpack.c.b16 %v3957, %v3953
    %v4438 = vpack.c.b16 %v3962, %v3958
    %v4439 = vpack.c.b16 %v3963, %v3959
    %v4440 = vpack.c.b16 %v3964, %v3960
    %v4441 = vpack.c.b16 %v3965, %v3961
    %v4442 = vpack.c.b16 %v3970, %v3966
    %v4443 = vpack.c.b16 %v3971, %v3967
    %v4444 = vpack.c.b16 %v3972, %v3968
    %v4445 = vpack.c.b16 %v3973, %v3969
    %v4446 = vpack.c.b16 %v3978, %v3974
    %v4447 = vpack.c.b16 %v3979, %v3975
    %v4448 = vpack.c.b16 %v3980, %v3976
    %v4449 = vpack.c.b16 %v3981, %v3977
    %v4450 = vpack.c.b16 %v3986, %v3982
    %v4451 = vpack.c.b16 %v3987, %v3983
    %v4452 = vpack.c.b16 %v3988, %v3984
    %v4453 = vpack.c.b16 %v3989, %v3985
    %v4454 = vpack.c.b16 %v3994, %v3990
    %v4455 = vpack.c.b16 %v3995, %v3991
    %v4456 = vpack.c.b16 %v3996, %v3992
    %v4457 = vpack.c.b16 %v3997, %v3993
    %v4458 = vpack.c.b16 %v4002, %v3998
    %v4459 = vpack.c.b16 %v4003, %v3999
    %v4460 = vpack.c.b16 %v4004, %v4000
    %v4461 = vpack.c.b16 %v4005, %v4001
    %v4462 = vpack.c.b16 %v4010, %v4006
    %v4463 = vpack.c.b16 %v4011, %v4007
    %v4464 = vpack.c.b16 %v4012, %v4008
    %v4465 = vpack.c.b16 %v4013, %v4009
    %v4466 = vpack.c.b16 %v4018, %v4014
    %v4467 = vpack.c.b16 %v4019, %v4015
    %v4468 = vpack.c.b16 %v4020, %v4016
    %v4469 = vpack.c.b16 %v4021, %v4017
    %v4470 = vpack.c.b16 %v4026, %v4022
    %v4471 = vpack.c.b16 %v4027, %v4023
    %v4472 = vpack.c.b16 %v4028, %v4024
    %v4473 = vpack.c.b16 %v4029, %v4025
    %v4474 = vpack.c.b16 %v4034, %v4030
    %v4475 = vpack.c.b16 %v4035, %v4031
    %v4476 = vpack.c.b16 %v4036, %v4032
    %v4477 = vpack.c.b16 %v4037, %v4033
    %v4478 = vpack.c.b16 %v4042, %v4038
    %v4479 = vpack.c.b16 %v4043, %v4039
    %v4480 = vpack.c.b16 %v4044, %v4040
    %v4481 = vpack.c.b16 %v4045, %v4041
    %v4482 = vpack.c.b16 %v4050, %v4046
    %v4483 = vpack.c.b16 %v4051, %v4047
    %v4484 = vpack.c.b16 %v4052, %v4048
    %v4485 = vpack.c.b16 %v4053, %v4049
    %v4486 = vpack.c.b16 %v4058, %v4054
    %v4487 = vpack.c.b16 %v4059, %v4055
    %v4488 = vpack.c.b16 %v4060, %v4056
    %v4489 = vpack.c.b16 %v4061, %v4057
    %v4490 = vpack.c.b16 %v4066, %v4062
    %v4491 = vpack.c.b16 %v4067, %v4063
    %v4492 = vpack.c.b16 %v4068, %v4064
    %v4493 = vpack.c.b16 %v4069, %v4065
    %v4494 = vpack.c.b16 %v4074, %v4070
    %v4495 = vpack.c.b16 %v4075, %v4071
    %v4496 = vpack.c.b16 %v4076, %v4072
    %v4497 = vpack.c.b16 %v4077, %v4073
    %v4498 = vpack.c.b16 %v4082, %v4078
    %v4499 = vpack.c.b16 %v4083, %v4079
    %v4500 = vpack.c.b16 %v4084, %v4080
    %v4501 = vpack.c.b16 %v4085, %v4081
    %v4502 = vpack.c.b16 %v4090, %v4086
    %v4503 = vpack.c.b16 %v4091, %v4087
    %v4504 = vpack.c.b16 %v4092, %v4088
    %v4505 = vpack.c.b16 %v4093, %v4089
    %v4506 = vpack.c.b16 %v4098, %v4094
    %v4507 = vpack.c.b16 %v4099, %v4095
    %v4508 = vpack.c.b16 %v4100, %v4096
    %v4509 = vpack.c.b16 %v4101, %v4097
    %v4510 = vpack.c.b16 %v4106, %v4102
    %v4511 = vpack.c.b16 %v4107, %v4103
    %v4512 = vpack.c.b16 %v4108, %v4104
    %v4513 = vpack.c.b16 %v4109, %v4105
    %v4514 = vpack.c.b16 %v4114, %v4110
    %v4515 = vpack.c.b16 %v4115, %v4111
    %v4516 = vpack.c.b16 %v4116, %v4112
    %v4517 = vpack.c.b16 %v4117, %v4113
    %v4518 = vpack.c.b16 %v4122, %v4118
    %v4519 = vpack.c.b16 %v4123, %v4119
    %v4520 = vpack.c.b16 %v4124, %v4120
    %v4521 = vpack.c.b16 %v4125, %v4121
    %v4522 = vpack.c.b16 %v4130, %v4126
    %v4523 = vpack.c.b16 %v4131, %v4127
    %v4524 = vpack.c.b16 %v4132, %v4128
    %v4525 = vpack.c.b16 %v4133, %v4129
    %v4526 = vpack.c.b16 %v4138, %v4134
    %v4527 = vpack.c.b16 %v4139, %v4135
    %v4528 = vpack.c.b16 %v4140, %v4136
    %v4529 = vpack.c.b16 %v4141, %v4137
    %v4530 = vpack.c.b16 %v4146, %v4142
    %v4531 = vpack.c.b16 %v4147, %v4143
    %v4532 = vpack.c.b16 %v4148, %v4144
    %v4533 = vpack.c.b16 %v4149, %v4145
    %v4534 = vpack.c.b16 %v4154, %v4150
    %v4535 = vpack.c.b16 %v4155, %v4151
    %v4536 = vpack.c.b16 %v4156, %v4152
    %v4537 = vpack.c.b16 %v4157, %v4153
    %v4538 = vpack.c.b16 %v4162, %v4158
    %v4539 = vpack.c.b16 %v4163, %v4159
    %v4540 = vpack.c.b16 %v4164, %v4160
    %v4541 = vpack.c.b16 %v4165, %v4161
    %v4542 = vpack.c.b16 %v4170, %v4166
    %v4543 = vpack.c.b16 %v4171, %v4167
    %v4544 = vpack.c.b16 %v4172, %v4168
    %v4545 = vpack.c.b16 %v4173, %v4169
    %v4546 = vpack.c.b16 %v4178, %v4174
    %v4547 = vpack.c.b16 %v4179, %v4175
    %v4548 = vpack.c.b16 %v4180, %v4176
    %v4549 = vpack.c.b16 %v4181, %v4177
    %v4550 = vpack.c.b16 %v4186, %v4182
    %v4551 = vpack.c.b16 %v4187, %v4183
    %v4552 = vpack.c.b16 %v4188, %v4184
    %v4553 = vpack.c.b16 %v4189, %v4185
    %v4554 = vpack.c.b16 %v4194, %v4190
    %v4555 = vpack.c.b16 %v4195, %v4191
    %v4556 = vpack.c.b16 %v4196, %v4192
    %v4557 = vpack.c.b16 %v4197, %v4193
    %v4558 = vpack.c.b16 %v4202, %v4198
    %v4559 = vpack.c.b16 %v4203, %v4199
    %v4560 = vpack.c.b16 %v4204, %v4200
    %v4561 = vpack.c.b16 %v4205, %v4201
    %v4562 = vpack.c.b16 %v4210, %v4206
    %v4563 = vpack.c.b16 %v4211, %v4207
    %v4564 = vpack.c.b16 %v4212, %v4208
    %v4565 = vpack.c.b16 %v4213, %v4209
    %v4566 = vpack.c.b16 %v4218, %v4214
    %v4567 = vpack.c.b16 %v4219, %v4215
    %v4568 = vpack.c.b16 %v4220, %v4216
    %v4569 = vpack.c.b16 %v4221, %v4217
    %v4570 = vpack.c.b16 %v4226, %v4222
    %v4571 = vpack.c.b16 %v4227, %v4223
    %v4572 = vpack.c.b16 %v4228, %v4224
    %v4573 = vpack.c.b16 %v4229, %v4225
    %v4574 = vpack.c.b16 %v4234, %v4230
    %v4575 = vpack.c.b16 %v4235, %v4231
    %v4576 = vpack.c.b16 %v4236, %v4232
    %v4577 = vpack.c.b16 %v4237, %v4233
    %v4578 = vpack.c.b16 %v4242, %v4238
    %v4579 = vpack.c.b16 %v4243, %v4239
    %v4580 = vpack.c.b16 %v4244, %v4240
    %v4581 = vpack.c.b16 %v4245, %v4241
    %v4582 = vpack.c.b16 %v4250, %v4246
    %v4583 = vpack.c.b16 %v4251, %v4247
    %v4584 = vpack.c.b16 %v4252, %v4248
    %v4585 = vpack.c.b16 %v4253, %v4249
    %v4586 = vpack.c.b16 %v4258, %v4254
    %v4587 = vpack.c.b16 %v4259, %v4255
    %v4588 = vpack.c.b16 %v4260, %v4256
    %v4589 = vpack.c.b16 %v4261, %v4257
    %v4590 = vpack.c.b16 %v4266, %v4262
    %v4591 = vpack.c.b16 %v4267, %v4263
    %v4592 = vpack.c.b16 %v4268, %v4264
    %v4593 = vpack.c.b16 %v4269, %v4265
    %v4594 = vpack.c.b16 %v4274, %v4270
    %v4595 = vpack.c.b16 %v4275, %v4271
    %v4596 = vpack.c.b16 %v4276, %v4272
    %v4597 = vpack.c.b16 %v4277, %v4273
    %v4598 = vpack.c.b16 %v4282, %v4278
    %v4599 = vpack.c.b16 %v4283, %v4279
    %v4600 = vpack.c.b16 %v4284, %v4280
    %v4601 = vpack.c.b16 %v4285, %v4281
    %v4602 = vpack.c.b16 %v4290, %v4286
    %v4603 = vpack.c.b16 %v4291, %v4287
    %v4604 = vpack.c.b16 %v4292, %v4288
    %v4605 = vpack.c.b16 %v4293, %v4289
    %v4606 = vpack.c.b16 %v4298, %v4294
    %v4607 = vpack.c.b16 %v4299, %v4295
    %v4608 = vpack.c.b16 %v4300, %v4296
    %v4609 = vpack.c.b16 %v4301, %v4297
    %v4610 = vpack.c.b16 %v4306, %v4302
    %v4611 = vpack.c.b16 %v4307, %v4303
    %v4612 = vpack.c.b16 %v4308, %v4304
    %v4613 = vpack.c.b16 %v4309, %v4305
    %v4614 = vpack.c.b16 %v4314, %v4310
    %v4615 = vpack.c.b16 %v4315, %v4311
    %v4616 = vpack.c.b16 %v4316, %v4312
    %v4617 = vpack.c.b16 %v4317, %v4313
    %v4618 = vpack.c.b16 %v4322, %v4318
    %v4619 = vpack.c.b16 %v4323, %v4319
    %v4620 = vpack.c.b16 %v4324, %v4320
    %v4621 = vpack.c.b16 %v4325, %v4321
    %v4622 = vpack.c.b16 %v4330, %v4326
    %v4623 = vpack.c.b16 %v4331, %v4327
    %v4624 = vpack.c.b16 %v4332, %v4328
    %v4625 = vpack.c.b16 %v4333, %v4329
    %v4626 = vpack.c.b16 %v4338, %v4334
    %v4627 = vpack.c.b16 %v4339, %v4335
    %v4628 = vpack.c.b16 %v4340, %v4336
    %v4629 = vpack.c.b16 %v4341, %v4337
    %v4630 = vpack.c.b16 %v4346, %v4342
    %v4631 = vpack.c.b16 %v4347, %v4343
    %v4632 = vpack.c.b16 %v4348, %v4344
    %v4633 = vpack.c.b16 %v4349, %v4345
    %v4634 = vpack.c.b16 %v4354, %v4350
    %v4635 = vpack.c.b16 %v4355, %v4351
    %v4636 = vpack.c.b16 %v4356, %v4352
    %v4637 = vpack.c.b16 %v4357, %v4353
    %v4638 = vpack.c.b16 %v4362, %v4358
    %v4639 = vpack.c.b16 %v4363, %v4359
    %v4640 = vpack.c.b16 %v4364, %v4360
    %v4641 = vpack.c.b16 %v4365, %v4361
    %v4642 = vpack.c.b16 %v4370, %v4366
    %v4643 = vpack.c.b16 %v4371, %v4367
    %v4644 = vpack.c.b16 %v4372, %v4368
    %v4645 = vpack.c.b16 %v4373, %v4369
    %v4646 = vpack.c.b16 %v4378, %v4374
    %v4647 = vpack.c.b16 %v4379, %v4375
    %v4648 = vpack.c.b16 %v4380, %v4376
    %v4649 = vpack.c.b16 %v4381, %v4377
    %v4650 = vpack.c.b16 %v4386, %v4382
    %v4651 = vpack.c.b16 %v4387, %v4383
    %v4652 = vpack.c.b16 %v4388, %v4384
    %v4653 = vpack.c.b16 %v4389, %v4385
    %v4654 = vpack.c.b16 %v4394, %v4390
    %v4655 = vpack.c.b16 %v4395, %v4391
    %v4656 = vpack.c.b16 %v4396, %v4392
    %v4657 = vpack.c.b16 %v4397, %v4393
    %v4658 = vpack.c.b16 %v4402, %v4398
    %v4659 = vpack.c.b16 %v4403, %v4399
    %v4660 = vpack.c.b16 %v4404, %v4400
    %v4661 = vpack.c.b16 %v4405, %v4401
    %4918 = vmatprep.subr.bf16.mxu0 %v4435
    %4919 = vmatpush1.bf16.msra.mxu0 %v4434
    %4920 = vmatprep.subr.bf16.mxu0 %v4431
    %4921 = vmatpush1.bf16.msra.mxu0 %v4430
    %4922 = vmatprep.subr.bf16.mxu0 %v4427
    %4923 = vmatpush1.bf16.msra.mxu0 %v4426
    %4924 = vmatprep.subr.bf16.mxu0 %v4423
    %4925 = vmatpush1.bf16.msra.mxu0 %v4422
    %4926 = vmatprep.subr.bf16.mxu0 %v4419
    %4927 = vmatpush1.bf16.msra.mxu0 %v4418
    %4928 = vmatprep.subr.bf16.mxu0 %v4415
    %4929 = vmatpush1.bf16.msra.mxu0 %v4414
    %4930 = vmatprep.subr.bf16.mxu0 %v4411
    %4931 = vmatpush1.bf16.msra.mxu0 %v4410
    %4932 = vmatprep.subr.bf16.mxu0 %v4407
    %4933 = vmatpush1.bf16.msra.mxu0 %v4406
    %4934 = vmatprep.subr.bf16.mxu0 %v4467
    %4935 = vmatpush2.bf16.msra.mxu0 %v4466
    %4936 = vmatprep.subr.bf16.mxu0 %v4463
    %4937 = vmatpush2.bf16.msra.mxu0 %v4462
    %4938 = vmatprep.subr.bf16.mxu0 %v4459
    %4939 = vmatpush2.bf16.msra.mxu0 %v4458
    %4940 = vmatprep.subr.bf16.mxu0 %v4455
    %4941 = vmatpush2.bf16.msra.mxu0 %v4454
    %4942 = vmatprep.subr.bf16.mxu0 %v4451
    %4943 = vmatpush2.bf16.msra.mxu0 %v4450
    %4944 = vmatprep.subr.bf16.mxu0 %v4447
    %4945 = vmatpush2.bf16.msra.mxu0 %v4446
    %4946 = vmatprep.subr.bf16.mxu0 %v4443
    %4947 = vmatpush2.bf16.msra.mxu0 %v4442
    %4948 = vmatprep.subr.bf16.mxu0 %v4439
    %4949 = vmatpush2.bf16.msra.mxu0 %v4438
    %4950 = vmatprep.mubr.bf16.mxu0 %v3610
    %4951 = vmatmul.mubr.bf16.gmra.mxu0 %v3609
    %v4952 = vpop.f32.mrf.mxu0
    %v4953 = vadd.f32 %v3621, %v4952
    %v4954 = vpop.f32.mrf.mxu0
    %v4955 = vadd.f32 %v3625, %v4954
    %v4956 = vpop.f32.mrf.mxu0
    %v4957 = vpop.f32.mrf.mxu0
    %4958 = vdwg.mxu0
    %4959 = vmatprep.subr.bf16.mxu0 %v4499
    %4960 = vmatpush1.bf16.msra.mxu0 %v4498
    %4961 = vmatprep.subr.bf16.mxu0 %v4495
    %4962 = vmatpush1.bf16.msra.mxu0 %v4494
    %4963 = vmatprep.subr.bf16.mxu0 %v4491
    %4964 = vmatpush1.bf16.msra.mxu0 %v4490
    %4965 = vmatprep.subr.bf16.mxu0 %v4487
    %4966 = vmatpush1.bf16.msra.mxu0 %v4486
    %4967 = vmatprep.subr.bf16.mxu0 %v4483
    %4968 = vmatpush1.bf16.msra.mxu0 %v4482
    %4969 = vmatprep.subr.bf16.mxu0 %v4479
    %4970 = vmatpush1.bf16.msra.mxu0 %v4478
    %4971 = vmatprep.subr.bf16.mxu0 %v4475
    %4972 = vmatpush1.bf16.msra.mxu0 %v4474
    %4973 = vmatprep.subr.bf16.mxu0 %v4471
    %4974 = vmatpush1.bf16.msra.mxu0 %v4470
    %4975 = vmatprep.subr.bf16.mxu0 %v4531
    %4976 = vmatpush2.bf16.msra.mxu0 %v4530
    %4977 = vmatprep.subr.bf16.mxu0 %v4527
    %4978 = vmatpush2.bf16.msra.mxu0 %v4526
    %4979 = vmatprep.subr.bf16.mxu0 %v4523
    %4980 = vmatpush2.bf16.msra.mxu0 %v4522
    %4981 = vmatprep.subr.bf16.mxu0 %v4519
    %4982 = vmatpush2.bf16.msra.mxu0 %v4518
    %4983 = vmatprep.subr.bf16.mxu0 %v4515
    %4984 = vmatpush2.bf16.msra.mxu0 %v4514
    %4985 = vmatprep.subr.bf16.mxu0 %v4511
    %4986 = vmatpush2.bf16.msra.mxu0 %v4510
    %4987 = vmatprep.subr.bf16.mxu0 %v4507
    %4988 = vmatpush2.bf16.msra.mxu0 %v4506
    %4989 = vmatprep.subr.bf16.mxu0 %v4503
    %4990 = vmatpush2.bf16.msra.mxu0 %v4502
    %4991 = vmatprep.mubr.bf16.mxu0 %v3612
    %4992 = vmatmul.mubr.bf16.gmra.mxu0 %v3611
    %v4993 = vpop.f32.mrf.mxu0
    %v4994 = vadd.f32 %v4953, %v4993
    %v4995 = vpop.f32.mrf.mxu0
    %v4996 = vadd.f32 %v4955, %v4995
    %v4997 = vpop.f32.mrf.mxu0
    %v4998 = vpop.f32.mrf.mxu0
    %4999 = vdwg.mxu0
    %5000 = vmatprep.subr.bf16.mxu0 %v4563
    %5001 = vmatpush1.bf16.msra.mxu0 %v4562
    %5002 = vmatprep.subr.bf16.mxu0 %v4559
    %5003 = vmatpush1.bf16.msra.mxu0 %v4558
    %5004 = vmatprep.subr.bf16.mxu0 %v4555
    %5005 = vmatpush1.bf16.msra.mxu0 %v4554
    %5006 = vmatprep.subr.bf16.mxu0 %v4551
    %5007 = vmatpush1.bf16.msra.mxu0 %v4550
    %5008 = vmatprep.subr.bf16.mxu0 %v4547
    %5009 = vmatpush1.bf16.msra.mxu0 %v4546
    %5010 = vmatprep.subr.bf16.mxu0 %v4543
    %5011 = vmatpush1.bf16.msra.mxu0 %v4542
    %5012 = vmatprep.subr.bf16.mxu0 %v4539
    %5013 = vmatpush1.bf16.msra.mxu0 %v4538
    %5014 = vmatprep.subr.bf16.mxu0 %v4535
    %5015 = vmatpush1.bf16.msra.mxu0 %v4534
    %5016 = vmatprep.subr.bf16.mxu0 %v4595
    %5017 = vmatpush2.bf16.msra.mxu0 %v4594
    %5018 = vmatprep.subr.bf16.mxu0 %v4591
    %5019 = vmatpush2.bf16.msra.mxu0 %v4590
    %5020 = vmatprep.subr.bf16.mxu0 %v4587
    %5021 = vmatpush2.bf16.msra.mxu0 %v4586
    %5022 = vmatprep.subr.bf16.mxu0 %v4583
    %5023 = vmatpush2.bf16.msra.mxu0 %v4582
    %5024 = vmatprep.subr.bf16.mxu0 %v4579
    %5025 = vmatpush2.bf16.msra.mxu0 %v4578
    %5026 = vmatprep.subr.bf16.mxu0 %v4575
    %5027 = vmatpush2.bf16.msra.mxu0 %v4574
    %5028 = vmatprep.subr.bf16.mxu0 %v4571
    %5029 = vmatpush2.bf16.msra.mxu0 %v4570
    %5030 = vmatprep.subr.bf16.mxu0 %v4567
    %5031 = vmatpush2.bf16.msra.mxu0 %v4566
    %5032 = vmatprep.mubr.bf16.mxu0 %v3614
    %5033 = vmatmul.mubr.bf16.gmra.mxu0 %v3613
    %v5034 = vpop.f32.mrf.mxu0
    %v5035 = vadd.f32 %v4994, %v5034
    %v5036 = vpop.f32.mrf.mxu0
    %v5037 = vadd.f32 %v4996, %v5036
    %v5038 = vpop.f32.mrf.mxu0
    %v5039 = vpop.f32.mrf.mxu0
    %5040 = vdwg.mxu0
    %5041 = vmatprep.subr.bf16.mxu0 %v4627
    %5042 = vmatpush1.bf16.msra.mxu0 %v4626
    %5043 = vmatprep.subr.bf16.mxu0 %v4623
    %5044 = vmatpush1.bf16.msra.mxu0 %v4622
    %5045 = vmatprep.subr.bf16.mxu0 %v4619
    %5046 = vmatpush1.bf16.msra.mxu0 %v4618
    %5047 = vmatprep.subr.bf16.mxu0 %v4615
    %5048 = vmatpush1.bf16.msra.mxu0 %v4614
    %5049 = vmatprep.subr.bf16.mxu0 %v4611
    %5050 = vmatpush1.bf16.msra.mxu0 %v4610
    %5051 = vmatprep.subr.bf16.mxu0 %v4607
    %5052 = vmatpush1.bf16.msra.mxu0 %v4606
    %5053 = vmatprep.subr.bf16.mxu0 %v4603
    %5054 = vmatpush1.bf16.msra.mxu0 %v4602
    %5055 = vmatprep.subr.bf16.mxu0 %v4599
    %5056 = vmatpush1.bf16.msra.mxu0 %v4598
    %5057 = vmatprep.subr.bf16.mxu0 %v4659
    %5058 = vmatpush2.bf16.msra.mxu0 %v4658
    %5059 = vmatprep.subr.bf16.mxu0 %v4655
    %5060 = vmatpush2.bf16.msra.mxu0 %v4654
    %5061 = vmatprep.subr.bf16.mxu0 %v4651
    %5062 = vmatpush2.bf16.msra.mxu0 %v4650
    %5063 = vmatprep.subr.bf16.mxu0 %v4647
    %5064 = vmatpush2.bf16.msra.mxu0 %v4646
    %5065 = vmatprep.subr.bf16.mxu0 %v4643
    %5066 = vmatpush2.bf16.msra.mxu0 %v4642
    %5067 = vmatprep.subr.bf16.mxu0 %v4639
    %5068 = vmatpush2.bf16.msra.mxu0 %v4638
    %5069 = vmatprep.subr.bf16.mxu0 %v4635
    %5070 = vmatpush2.bf16.msra.mxu0 %v4634
    %5071 = vmatprep.subr.bf16.mxu0 %v4631
    %5072 = vmatpush2.bf16.msra.mxu0 %v4630
    %5073 = vmatprep.mubr.bf16.mxu0 %v3616
    %5074 = vmatmul.mubr.bf16.gmra.mxu0 %v3615
    %v5075 = vpop.f32.mrf.mxu0
    %v5076 = vadd.f32 %v5035, %v5075
    %v5077 = vpop.f32.mrf.mxu0
    %v5078 = vadd.f32 %v5037, %v5077
    %v5079 = vpop.f32.mrf.mxu0
    %v5080 = vpop.f32.mrf.mxu0
    %5081 = vdwg.mxu0
    %5082 = vmatprep.subr.bf16.mxu0 %v4437
    %5083 = vmatpush1.bf16.msra.mxu0 %v4436
    %5084 = vmatprep.subr.bf16.mxu0 %v4433
    %5085 = vmatpush1.bf16.msra.mxu0 %v4432
    %5086 = vmatprep.subr.bf16.mxu0 %v4429
    %5087 = vmatpush1.bf16.msra.mxu0 %v4428
    %5088 = vmatprep.subr.bf16.mxu0 %v4425
    %5089 = vmatpush1.bf16.msra.mxu0 %v4424
    %5090 = vmatprep.subr.bf16.mxu0 %v4421
    %5091 = vmatpush1.bf16.msra.mxu0 %v4420
    %5092 = vmatprep.subr.bf16.mxu0 %v4417
    %5093 = vmatpush1.bf16.msra.mxu0 %v4416
    %5094 = vmatprep.subr.bf16.mxu0 %v4413
    %5095 = vmatpush1.bf16.msra.mxu0 %v4412
    %5096 = vmatprep.subr.bf16.mxu0 %v4409
    %5097 = vmatpush1.bf16.msra.mxu0 %v4408
    %5098 = vmatprep.subr.bf16.mxu0 %v4469
    %5099 = vmatpush2.bf16.msra.mxu0 %v4468
    %5100 = vmatprep.subr.bf16.mxu0 %v4465
    %5101 = vmatpush2.bf16.msra.mxu0 %v4464
    %5102 = vmatprep.subr.bf16.mxu0 %v4461
    %5103 = vmatpush2.bf16.msra.mxu0 %v4460
    %5104 = vmatprep.subr.bf16.mxu0 %v4457
    %5105 = vmatpush2.bf16.msra.mxu0 %v4456
    %5106 = vmatprep.subr.bf16.mxu0 %v4453
    %5107 = vmatpush2.bf16.msra.mxu0 %v4452
    %5108 = vmatprep.subr.bf16.mxu0 %v4449
    %5109 = vmatpush2.bf16.msra.mxu0 %v4448
    %5110 = vmatprep.subr.bf16.mxu0 %v4445
    %5111 = vmatpush2.bf16.msra.mxu0 %v4444
    %5112 = vmatprep.subr.bf16.mxu0 %v4441
    %5113 = vmatpush2.bf16.msra.mxu0 %v4440
    %5114 = vmatprep.mubr.bf16.mxu0 %v3610
    %5115 = vmatmul.mubr.bf16.gmra.mxu0 %v3609
    %v5116 = vpop.f32.mrf.mxu0
    %v5117 = vadd.f32 %v3629, %v5116
    %v5118 = vpop.f32.mrf.mxu0
    %v5119 = vadd.f32 %v3633, %v5118
    %v5120 = vpop.f32.mrf.mxu0
    %v5121 = vpop.f32.mrf.mxu0
    %5122 = vdwg.mxu0
    %5123 = vmatprep.subr.bf16.mxu0 %v4501
    %5124 = vmatpush1.bf16.msra.mxu0 %v4500
    %5125 = vmatprep.subr.bf16.mxu0 %v4497
    %5126 = vmatpush1.bf16.msra.mxu0 %v4496
    %5127 = vmatprep.subr.bf16.mxu0 %v4493
    %5128 = vmatpush1.bf16.msra.mxu0 %v4492
    %5129 = vmatprep.subr.bf16.mxu0 %v4489
    %5130 = vmatpush1.bf16.msra.mxu0 %v4488
    %5131 = vmatprep.subr.bf16.mxu0 %v4485
    %5132 = vmatpush1.bf16.msra.mxu0 %v4484
    %5133 = vmatprep.subr.bf16.mxu0 %v4481
    %5134 = vmatpush1.bf16.msra.mxu0 %v4480
    %5135 = vmatprep.subr.bf16.mxu0 %v4477
    %5136 = vmatpush1.bf16.msra.mxu0 %v4476
    %5137 = vmatprep.subr.bf16.mxu0 %v4473
    %5138 = vmatpush1.bf16.msra.mxu0 %v4472
    %5139 = vmatprep.subr.bf16.mxu0 %v4533
    %5140 = vmatpush2.bf16.msra.mxu0 %v4532
    %5141 = vmatprep.subr.bf16.mxu0 %v4529
    %5142 = vmatpush2.bf16.msra.mxu0 %v4528
    %5143 = vmatprep.subr.bf16.mxu0 %v4525
    %5144 = vmatpush2.bf16.msra.mxu0 %v4524
    %5145 = vmatprep.subr.bf16.mxu0 %v4521
    %5146 = vmatpush2.bf16.msra.mxu0 %v4520
    %5147 = vmatprep.subr.bf16.mxu0 %v4517
    %5148 = vmatpush2.bf16.msra.mxu0 %v4516
    %5149 = vmatprep.subr.bf16.mxu0 %v4513
    %5150 = vmatpush2.bf16.msra.mxu0 %v4512
    %5151 = vmatprep.subr.bf16.mxu0 %v4509
    %5152 = vmatpush2.bf16.msra.mxu0 %v4508
    %5153 = vmatprep.subr.bf16.mxu0 %v4505
    %5154 = vmatpush2.bf16.msra.mxu0 %v4504
    %5155 = vmatprep.mubr.bf16.mxu0 %v3612
    %5156 = vmatmul.mubr.bf16.gmra.mxu0 %v3611
    %v5157 = vpop.f32.mrf.mxu0
    %v5158 = vadd.f32 %v5117, %v5157
    %v5159 = vpop.f32.mrf.mxu0
    %v5160 = vadd.f32 %v5119, %v5159
    %v5161 = vpop.f32.mrf.mxu0
    %v5162 = vpop.f32.mrf.mxu0
    %5163 = vdwg.mxu0
    %5164 = vmatprep.subr.bf16.mxu0 %v4565
    %5165 = vmatpush1.bf16.msra.mxu0 %v4564
    %5166 = vmatprep.subr.bf16.mxu0 %v4561
    %5167 = vmatpush1.bf16.msra.mxu0 %v4560
    %5168 = vmatprep.subr.bf16.mxu0 %v4557
    %5169 = vmatpush1.bf16.msra.mxu0 %v4556
    %5170 = vmatprep.subr.bf16.mxu0 %v4553
    %5171 = vmatpush1.bf16.msra.mxu0 %v4552
    %5172 = vmatprep.subr.bf16.mxu0 %v4549
    %5173 = vmatpush1.bf16.msra.mxu0 %v4548
    %5174 = vmatprep.subr.bf16.mxu0 %v4545
    %5175 = vmatpush1.bf16.msra.mxu0 %v4544
    %5176 = vmatprep.subr.bf16.mxu0 %v4541
    %5177 = vmatpush1.bf16.msra.mxu0 %v4540
    %5178 = vmatprep.subr.bf16.mxu0 %v4537
    %5179 = vmatpush1.bf16.msra.mxu0 %v4536
    %5180 = vmatprep.subr.bf16.mxu0 %v4597
    %5181 = vmatpush2.bf16.msra.mxu0 %v4596
    %5182 = vmatprep.subr.bf16.mxu0 %v4593
    %5183 = vmatpush2.bf16.msra.mxu0 %v4592
    %5184 = vmatprep.subr.bf16.mxu0 %v4589
    %5185 = vmatpush2.bf16.msra.mxu0 %v4588
    %5186 = vmatprep.subr.bf16.mxu0 %v4585
    %5187 = vmatpush2.bf16.msra.mxu0 %v4584
    %5188 = vmatprep.subr.bf16.mxu0 %v4581
    %5189 = vmatpush2.bf16.msra.mxu0 %v4580
    %5190 = vmatprep.subr.bf16.mxu0 %v4577
    %5191 = vmatpush2.bf16.msra.mxu0 %v4576
    %5192 = vmatprep.subr.bf16.mxu0 %v4573
    %5193 = vmatpush2.bf16.msra.mxu0 %v4572
    %5194 = vmatprep.subr.bf16.mxu0 %v4569
    %5195 = vmatpush2.bf16.msra.mxu0 %v4568
    %5196 = vmatprep.mubr.bf16.mxu0 %v3614
    %5197 = vmatmul.mubr.bf16.gmra.mxu0 %v3613
    %v5198 = vpop.f32.mrf.mxu0
    %v5199 = vadd.f32 %v5158, %v5198
    %v5200 = vpop.f32.mrf.mxu0
    %v5201 = vadd.f32 %v5160, %v5200
    %v5202 = vpop.f32.mrf.mxu0
    %v5203 = vpop.f32.mrf.mxu0
    %5204 = vdwg.mxu0
    %5205 = vmatprep.subr.bf16.mxu0 %v4629
    %5206 = vmatpush1.bf16.msra.mxu0 %v4628
    %5207 = vmatprep.subr.bf16.mxu0 %v4625
    %5208 = vmatpush1.bf16.msra.mxu0 %v4624
    %5209 = vmatprep.subr.bf16.mxu0 %v4621
    %5210 = vmatpush1.bf16.msra.mxu0 %v4620
    %5211 = vmatprep.subr.bf16.mxu0 %v4617
    %5212 = vmatpush1.bf16.msra.mxu0 %v4616
    %5213 = vmatprep.subr.bf16.mxu0 %v4613
    %5214 = vmatpush1.bf16.msra.mxu0 %v4612
    %5215 = vmatprep.subr.bf16.mxu0 %v4609
    %5216 = vmatpush1.bf16.msra.mxu0 %v4608
    %5217 = vmatprep.subr.bf16.mxu0 %v4605
    %5218 = vmatpush1.bf16.msra.mxu0 %v4604
    %5219 = vmatprep.subr.bf16.mxu0 %v4601
    %5220 = vmatpush1.bf16.msra.mxu0 %v4600
    %5221 = vmatprep.subr.bf16.mxu0 %v4661
    %5222 = vmatpush2.bf16.msra.mxu0 %v4660
    %5223 = vmatprep.subr.bf16.mxu0 %v4657
    %5224 = vmatpush2.bf16.msra.mxu0 %v4656
    %5225 = vmatprep.subr.bf16.mxu0 %v4653
    %5226 = vmatpush2.bf16.msra.mxu0 %v4652
    %5227 = vmatprep.subr.bf16.mxu0 %v4649
    %5228 = vmatpush2.bf16.msra.mxu0 %v4648
    %5229 = vmatprep.subr.bf16.mxu0 %v4645
    %5230 = vmatpush2.bf16.msra.mxu0 %v4644
    %5231 = vmatprep.subr.bf16.mxu0 %v4641
    %5232 = vmatpush2.bf16.msra.mxu0 %v4640
    %5233 = vmatprep.subr.bf16.mxu0 %v4637
    %5234 = vmatpush2.bf16.msra.mxu0 %v4636
    %5235 = vmatprep.subr.bf16.mxu0 %v4633
    %5236 = vmatpush2.bf16.msra.mxu0 %v4632
    %5237 = vmatprep.mubr.bf16.mxu0 %v3616
    %5238 = vmatmul.mubr.bf16.gmra.mxu0 %v3615
    %v5239 = vpop.f32.mrf.mxu0
    %v5240 = vadd.f32 %v5199, %v5239
    %v5241 = vpop.f32.mrf.mxu0
    %v5242 = vadd.f32 %v5201, %v5241
    %v5243 = vpop.f32.mrf.mxu0
    %v5244 = vpop.f32.mrf.mxu0
    %5245 = vdwg.mxu0
    %vm5246 = vcmp.gt.f32.partialorder %v5076, 0.0
    %vm5247 = vcmp.gt.f32.partialorder %v5078, 0.0
    %vm5248 = vcmp.gt.f32.partialorder %v5240, 0.0
    %vm5249 = vcmp.gt.f32.partialorder %v5242, 0.0
    %v5250 = vmul.f32 %v5076, 0.01
    %v5251 = vmul.f32 %v5078, 0.01
    %v5252 = vmul.f32 %v5240, 0.01
    %v5253 = vmul.f32 %v5242, 0.01
    %v5254 = vsel %vm5246, %v5076, %v5250
    %v5255 = vsel %vm5247, %v5078, %v5251
    %v5256 = vsel %vm5248, %v5240, %v5252
    %v5257 = vsel %vm5249, %v5242, %v5253
    %v5258 = vld [vmem:[#allocation9] sm:$0xff]
    %v5259 = vld [vmem:[#allocation9 + $0x8] sm:$0xff]
    %v5260 = vld [vmem:[#allocation9 + $0x10] sm:$0xff]
    %v5261 = vld [vmem:[#allocation9 + $0x18] sm:$0xff]
    %v5262 = vld [vmem:[#allocation9 + $0x20] sm:$0xff]
    %v5263 = vld [vmem:[#allocation9 + $0x28] sm:$0xff]
    %v5264 = vld [vmem:[#allocation9 + $0x30] sm:$0xff]
    %v5265 = vld [vmem:[#allocation9 + $0x38] sm:$0xff]
    %v5266 = vld [vmem:[#allocation9 + $0x40] sm:$0xff]
    %v5267 = vld [vmem:[#allocation9 + $0x48] sm:$0xff]
    %v5268 = vld [vmem:[#allocation9 + $0x50] sm:$0xff]
    %v5269 = vld [vmem:[#allocation9 + $0x58] sm:$0xff]
    %v5270 = vld [vmem:[#allocation9 + $0x60] sm:$0xff]
    %v5271 = vld [vmem:[#allocation9 + $0x68] sm:$0xff]
    %v5272 = vld [vmem:[#allocation9 + $0x70] sm:$0xff]
    %v5273 = vld [vmem:[#allocation9 + $0x78] sm:$0xff]
    %v5274 = vld [vmem:[#allocation9 + $0x80] sm:$0xff]
    %v5275 = vld [vmem:[#allocation9 + $0x88] sm:$0xff]
    %v5276 = vld [vmem:[#allocation9 + $0x90] sm:$0xff]
    %v5277 = vld [vmem:[#allocation9 + $0x98] sm:$0xff]
    %v5278 = vld [vmem:[#allocation9 + $0xa0] sm:$0xff]
    %v5279 = vld [vmem:[#allocation9 + $0xa8] sm:$0xff]
    %v5280 = vld [vmem:[#allocation9 + $0xb0] sm:$0xff]
    %v5281 = vld [vmem:[#allocation9 + $0xb8] sm:$0xff]
    %v5282 = vld [vmem:[#allocation9 + $0xc0] sm:$0xff]
    %v5283 = vld [vmem:[#allocation9 + $0xc8] sm:$0xff]
    %v5284 = vld [vmem:[#allocation9 + $0xd0] sm:$0xff]
    %v5285 = vld [vmem:[#allocation9 + $0xd8] sm:$0xff]
    %v5286 = vld [vmem:[#allocation9 + $0xe0] sm:$0xff]
    %v5287 = vld [vmem:[#allocation9 + $0xe8] sm:$0xff]
    %v5288 = vld [vmem:[#allocation9 + $0xf0] sm:$0xff]
    %v5289 = vld [vmem:[#allocation9 + $0xf8] sm:$0xff]
    %v5290 = vld [vmem:[#allocation9 + $0x100] sm:$0xff]
    %v5291 = vld [vmem:[#allocation9 + $0x108] sm:$0xff]
    %v5292 = vld [vmem:[#allocation9 + $0x110] sm:$0xff]
    %v5293 = vld [vmem:[#allocation9 + $0x118] sm:$0xff]
    %v5294 = vld [vmem:[#allocation9 + $0x120] sm:$0xff]
    %v5295 = vld [vmem:[#allocation9 + $0x128] sm:$0xff]
    %v5296 = vld [vmem:[#allocation9 + $0x130] sm:$0xff]
    %v5297 = vld [vmem:[#allocation9 + $0x138] sm:$0xff]
    %v5298 = vld [vmem:[#allocation9 + $0x140] sm:$0xff]
    %v5299 = vld [vmem:[#allocation9 + $0x148] sm:$0xff]
    %v5300 = vld [vmem:[#allocation9 + $0x150] sm:$0xff]
    %v5301 = vld [vmem:[#allocation9 + $0x158] sm:$0xff]
    %v5302 = vld [vmem:[#allocation9 + $0x160] sm:$0xff]
    %v5303 = vld [vmem:[#allocation9 + $0x168] sm:$0xff]
    %v5304 = vld [vmem:[#allocation9 + $0x170] sm:$0xff]
    %v5305 = vld [vmem:[#allocation9 + $0x178] sm:$0xff]
    %v5306 = vld [vmem:[#allocation9 + $0x180] sm:$0xff]
    %v5307 = vld [vmem:[#allocation9 + $0x188] sm:$0xff]
    %v5308 = vld [vmem:[#allocation9 + $0x190] sm:$0xff]
    %v5309 = vld [vmem:[#allocation9 + $0x198] sm:$0xff]
    %v5310 = vld [vmem:[#allocation9 + $0x1a0] sm:$0xff]
    %v5311 = vld [vmem:[#allocation9 + $0x1a8] sm:$0xff]
    %v5312 = vld [vmem:[#allocation9 + $0x1b0] sm:$0xff]
    %v5313 = vld [vmem:[#allocation9 + $0x1b8] sm:$0xff]
    %v5314 = vld [vmem:[#allocation9 + $0x1c0] sm:$0xff]
    %v5315 = vld [vmem:[#allocation9 + $0x1c8] sm:$0xff]
    %v5316 = vld [vmem:[#allocation9 + $0x1d0] sm:$0xff]
    %v5317 = vld [vmem:[#allocation9 + $0x1d8] sm:$0xff]
    %v5318 = vld [vmem:[#allocation9 + $0x1e0] sm:$0xff]
    %v5319 = vld [vmem:[#allocation9 + $0x1e8] sm:$0xff]
    %v5320 = vld [vmem:[#allocation9 + $0x1f0] sm:$0xff]
    %v5321 = vld [vmem:[#allocation9 + $0x1f8] sm:$0xff]
    %v5322 = vld [vmem:[#allocation10] sm:$0x3]
    %v5323 = vpack.c.bf16 %v5254, %v5254
    %v5324 = vpack.c.bf16 %v5255, %v5255
    %v5325 = vpack.c.bf16 %v5256, %v5256
    %v5326 = vpack.c.bf16 %v5257, %v5257
    %v5328 = vlaneseq
    %v5329 = vshrl.u32 %v5328, 7
    %v5330 = vsub.s32 0, %v5329
    %v5331 = vrot.slane %v5322, %v5330
    %v5332 = vlaneseq
    %v5333 = vshrl.u32 %v5332, 7
    %v5334 = vsub.s32 1, %v5333
    %v5335 = vrot.slane %v5322, %v5334
    %v5402 = vunpack.c.l.b16 %v5258
    %v5403 = vunpack.c.h.b16 %v5258
    %v5404 = vunpack.c.l.b16 %v5259
    %v5405 = vunpack.c.h.b16 %v5259
    %v5406 = vunpack.c.l.b16 %v5260
    %v5407 = vunpack.c.h.b16 %v5260
    %v5408 = vunpack.c.l.b16 %v5261
    %v5409 = vunpack.c.h.b16 %v5261
    %v5410 = vunpack.c.l.b16 %v5262
    %v5411 = vunpack.c.h.b16 %v5262
    %v5412 = vunpack.c.l.b16 %v5263
    %v5413 = vunpack.c.h.b16 %v5263
    %v5414 = vunpack.c.l.b16 %v5264
    %v5415 = vunpack.c.h.b16 %v5264
    %v5416 = vunpack.c.l.b16 %v5265
    %v5417 = vunpack.c.h.b16 %v5265
    %v5418 = vunpack.c.l.b16 %v5266
    %v5419 = vunpack.c.h.b16 %v5266
    %v5420 = vunpack.c.l.b16 %v5267
    %v5421 = vunpack.c.h.b16 %v5267
    %v5422 = vunpack.c.l.b16 %v5268
    %v5423 = vunpack.c.h.b16 %v5268
    %v5424 = vunpack.c.l.b16 %v5269
    %v5425 = vunpack.c.h.b16 %v5269
    %v5426 = vunpack.c.l.b16 %v5270
    %v5427 = vunpack.c.h.b16 %v5270
    %v5428 = vunpack.c.l.b16 %v5271
    %v5429 = vunpack.c.h.b16 %v5271
    %v5430 = vunpack.c.l.b16 %v5272
    %v5431 = vunpack.c.h.b16 %v5272
    %v5432 = vunpack.c.l.b16 %v5273
    %v5433 = vunpack.c.h.b16 %v5273
    %v5434 = vunpack.c.l.b16 %v5274
    %v5435 = vunpack.c.h.b16 %v5274
    %v5436 = vunpack.c.l.b16 %v5275
    %v5437 = vunpack.c.h.b16 %v5275
    %v5438 = vunpack.c.l.b16 %v5276
    %v5439 = vunpack.c.h.b16 %v5276
    %v5440 = vunpack.c.l.b16 %v5277
    %v5441 = vunpack.c.h.b16 %v5277
    %v5442 = vunpack.c.l.b16 %v5278
    %v5443 = vunpack.c.h.b16 %v5278
    %v5444 = vunpack.c.l.b16 %v5279
    %v5445 = vunpack.c.h.b16 %v5279
    %v5446 = vunpack.c.l.b16 %v5280
    %v5447 = vunpack.c.h.b16 %v5280
    %v5448 = vunpack.c.l.b16 %v5281
    %v5449 = vunpack.c.h.b16 %v5281
    %v5450 = vunpack.c.l.b16 %v5282
    %v5451 = vunpack.c.h.b16 %v5282
    %v5452 = vunpack.c.l.b16 %v5283
    %v5453 = vunpack.c.h.b16 %v5283
    %v5454 = vunpack.c.l.b16 %v5284
    %v5455 = vunpack.c.h.b16 %v5284
    %v5456 = vunpack.c.l.b16 %v5285
    %v5457 = vunpack.c.h.b16 %v5285
    %v5458 = vunpack.c.l.b16 %v5286
    %v5459 = vunpack.c.h.b16 %v5286
    %v5460 = vunpack.c.l.b16 %v5287
    %v5461 = vunpack.c.h.b16 %v5287
    %v5462 = vunpack.c.l.b16 %v5288
    %v5463 = vunpack.c.h.b16 %v5288
    %v5464 = vunpack.c.l.b16 %v5289
    %v5465 = vunpack.c.h.b16 %v5289
    %v5466 = vunpack.c.l.b16 %v5290
    %v5467 = vunpack.c.h.b16 %v5290
    %v5468 = vunpack.c.l.b16 %v5291
    %v5469 = vunpack.c.h.b16 %v5291
    %v5470 = vunpack.c.l.b16 %v5292
    %v5471 = vunpack.c.h.b16 %v5292
    %v5472 = vunpack.c.l.b16 %v5293
    %v5473 = vunpack.c.h.b16 %v5293
    %v5474 = vunpack.c.l.b16 %v5294
    %v5475 = vunpack.c.h.b16 %v5294
    %v5476 = vunpack.c.l.b16 %v5295
    %v5477 = vunpack.c.h.b16 %v5295
    %v5478 = vunpack.c.l.b16 %v5296
    %v5479 = vunpack.c.h.b16 %v5296
    %v5480 = vunpack.c.l.b16 %v5297
    %v5481 = vunpack.c.h.b16 %v5297
    %v5482 = vunpack.c.l.b16 %v5298
    %v5483 = vunpack.c.h.b16 %v5298
    %v5484 = vunpack.c.l.b16 %v5299
    %v5485 = vunpack.c.h.b16 %v5299
    %v5486 = vunpack.c.l.b16 %v5300
    %v5487 = vunpack.c.h.b16 %v5300
    %v5488 = vunpack.c.l.b16 %v5301
    %v5489 = vunpack.c.h.b16 %v5301
    %v5490 = vunpack.c.l.b16 %v5302
    %v5491 = vunpack.c.h.b16 %v5302
    %v5492 = vunpack.c.l.b16 %v5303
    %v5493 = vunpack.c.h.b16 %v5303
    %v5494 = vunpack.c.l.b16 %v5304
    %v5495 = vunpack.c.h.b16 %v5304
    %v5496 = vunpack.c.l.b16 %v5305
    %v5497 = vunpack.c.h.b16 %v5305
    %v5498 = vunpack.c.l.b16 %v5306
    %v5499 = vunpack.c.h.b16 %v5306
    %v5500 = vunpack.c.l.b16 %v5307
    %v5501 = vunpack.c.h.b16 %v5307
    %v5502 = vunpack.c.l.b16 %v5308
    %v5503 = vunpack.c.h.b16 %v5308
    %v5504 = vunpack.c.l.b16 %v5309
    %v5505 = vunpack.c.h.b16 %v5309
    %v5506 = vunpack.c.l.b16 %v5310
    %v5507 = vunpack.c.h.b16 %v5310
    %v5508 = vunpack.c.l.b16 %v5311
    %v5509 = vunpack.c.h.b16 %v5311
    %v5510 = vunpack.c.l.b16 %v5312
    %v5511 = vunpack.c.h.b16 %v5312
    %v5512 = vunpack.c.l.b16 %v5313
    %v5513 = vunpack.c.h.b16 %v5313
    %v5514 = vunpack.c.l.b16 %v5314
    %v5515 = vunpack.c.h.b16 %v5314
    %v5516 = vunpack.c.l.b16 %v5315
    %v5517 = vunpack.c.h.b16 %v5315
    %v5518 = vunpack.c.l.b16 %v5316
    %v5519 = vunpack.c.h.b16 %v5316
    %v5520 = vunpack.c.l.b16 %v5317
    %v5521 = vunpack.c.h.b16 %v5317
    %v5522 = vunpack.c.l.b16 %v5318
    %v5523 = vunpack.c.h.b16 %v5318
    %v5524 = vunpack.c.l.b16 %v5319
    %v5525 = vunpack.c.h.b16 %v5319
    %v5526 = vunpack.c.l.b16 %v5320
    %v5527 = vunpack.c.h.b16 %v5320
    %v5528 = vunpack.c.l.b16 %v5321
    %v5529 = vunpack.c.h.b16 %v5321
    %v5530 = vpack.c.b16 %v5404, %v5402
    %v5531 = vpack.c.b16 %v5405, %v5403
    %v5532 = vpack.c.b16 %v5408, %v5406
    %v5533 = vpack.c.b16 %v5409, %v5407
    %v5534 = vpack.c.b16 %v5412, %v5410
    %v5535 = vpack.c.b16 %v5413, %v5411
    %v5536 = vpack.c.b16 %v5416, %v5414
    %v5537 = vpack.c.b16 %v5417, %v5415
    %v5538 = vpack.c.b16 %v5420, %v5418
    %v5539 = vpack.c.b16 %v5421, %v5419
    %v5540 = vpack.c.b16 %v5424, %v5422
    %v5541 = vpack.c.b16 %v5425, %v5423
    %v5542 = vpack.c.b16 %v5428, %v5426
    %v5543 = vpack.c.b16 %v5429, %v5427
    %v5544 = vpack.c.b16 %v5432, %v5430
    %v5545 = vpack.c.b16 %v5433, %v5431
    %v5546 = vpack.c.b16 %v5436, %v5434
    %v5547 = vpack.c.b16 %v5437, %v5435
    %v5548 = vpack.c.b16 %v5440, %v5438
    %v5549 = vpack.c.b16 %v5441, %v5439
    %v5550 = vpack.c.b16 %v5444, %v5442
    %v5551 = vpack.c.b16 %v5445, %v5443
    %v5552 = vpack.c.b16 %v5448, %v5446
    %v5553 = vpack.c.b16 %v5449, %v5447
    %v5554 = vpack.c.b16 %v5452, %v5450
    %v5555 = vpack.c.b16 %v5453, %v5451
    %v5556 = vpack.c.b16 %v5456, %v5454
    %v5557 = vpack.c.b16 %v5457, %v5455
    %v5558 = vpack.c.b16 %v5460, %v5458
    %v5559 = vpack.c.b16 %v5461, %v5459
    %v5560 = vpack.c.b16 %v5464, %v5462
    %v5561 = vpack.c.b16 %v5465, %v5463
    %v5562 = vpack.c.b16 %v5468, %v5466
    %v5563 = vpack.c.b16 %v5469, %v5467
    %v5564 = vpack.c.b16 %v5472, %v5470
    %v5565 = vpack.c.b16 %v5473, %v5471
    %v5566 = vpack.c.b16 %v5476, %v5474
    %v5567 = vpack.c.b16 %v5477, %v5475
    %v5568 = vpack.c.b16 %v5480, %v5478
    %v5569 = vpack.c.b16 %v5481, %v5479
    %v5570 = vpack.c.b16 %v5484, %v5482
    %v5571 = vpack.c.b16 %v5485, %v5483
    %v5572 = vpack.c.b16 %v5488, %v5486
    %v5573 = vpack.c.b16 %v5489, %v5487
    %v5574 = vpack.c.b16 %v5492, %v5490
    %v5575 = vpack.c.b16 %v5493, %v5491
    %v5576 = vpack.c.b16 %v5496, %v5494
    %v5577 = vpack.c.b16 %v5497, %v5495
    %v5578 = vpack.c.b16 %v5500, %v5498
    %v5579 = vpack.c.b16 %v5501, %v5499
    %v5580 = vpack.c.b16 %v5504, %v5502
    %v5581 = vpack.c.b16 %v5505, %v5503
    %v5582 = vpack.c.b16 %v5508, %v5506
    %v5583 = vpack.c.b16 %v5509, %v5507
    %v5584 = vpack.c.b16 %v5512, %v5510
    %v5585 = vpack.c.b16 %v5513, %v5511
    %v5586 = vpack.c.b16 %v5516, %v5514
    %v5587 = vpack.c.b16 %v5517, %v5515
    %v5588 = vpack.c.b16 %v5520, %v5518
    %v5589 = vpack.c.b16 %v5521, %v5519
    %v5590 = vpack.c.b16 %v5524, %v5522
    %v5591 = vpack.c.b16 %v5525, %v5523
    %v5592 = vpack.c.b16 %v5528, %v5526
    %v5593 = vpack.c.b16 %v5529, %v5527
    %5658 = vmatprep.subr.bf16.mxu0 %v5545
    %5659 = vmatpush1.bf16.msra.mxu0 %v5544
    %5660 = vmatprep.subr.bf16.mxu0 %v5543
    %5661 = vmatpush1.bf16.msra.mxu0 %v5542
    %5662 = vmatprep.subr.bf16.mxu0 %v5541
    %5663 = vmatpush1.bf16.msra.mxu0 %v5540
    %5664 = vmatprep.subr.bf16.mxu0 %v5539
    %5665 = vmatpush1.bf16.msra.mxu0 %v5538
    %5666 = vmatprep.subr.bf16.mxu0 %v5537
    %5667 = vmatpush1.bf16.msra.mxu0 %v5536
    %5668 = vmatprep.subr.bf16.mxu0 %v5535
    %5669 = vmatpush1.bf16.msra.mxu0 %v5534
    %5670 = vmatprep.subr.bf16.mxu0 %v5533
    %5671 = vmatpush1.bf16.msra.mxu0 %v5532
    %5672 = vmatprep.subr.bf16.mxu0 %v5531
    %5673 = vmatpush1.bf16.msra.mxu0 %v5530
    %5674 = vmatprep.subr.bf16.mxu0 %v5561
    %5675 = vmatpush2.bf16.msra.mxu0 %v5560
    %5676 = vmatprep.subr.bf16.mxu0 %v5559
    %5677 = vmatpush2.bf16.msra.mxu0 %v5558
    %5678 = vmatprep.subr.bf16.mxu0 %v5557
    %5679 = vmatpush2.bf16.msra.mxu0 %v5556
    %5680 = vmatprep.subr.bf16.mxu0 %v5555
    %5681 = vmatpush2.bf16.msra.mxu0 %v5554
    %5682 = vmatprep.subr.bf16.mxu0 %v5553
    %5683 = vmatpush2.bf16.msra.mxu0 %v5552
    %5684 = vmatprep.subr.bf16.mxu0 %v5551
    %5685 = vmatpush2.bf16.msra.mxu0 %v5550
    %5686 = vmatprep.subr.bf16.mxu0 %v5549
    %5687 = vmatpush2.bf16.msra.mxu0 %v5548
    %5688 = vmatprep.subr.bf16.mxu0 %v5547
    %5689 = vmatpush2.bf16.msra.mxu0 %v5546
    %5690 = vmatprep.mubr.bf16.mxu0 %v5324
    %5691 = vmatmul.mubr.bf16.gmra.mxu0 %v5323
    %v5692 = vpop.f32.mrf.mxu0
    %v5693 = vadd.f32 %v5331, %v5692
    %v5694 = vpop.f32.mrf.mxu0
    %v5695 = vadd.f32 %v5335, %v5694
    %v5696 = vpop.f32.mrf.mxu0
    %v5697 = vpop.f32.mrf.mxu0
    %5698 = vdwg.mxu0
    %5699 = vmatprep.subr.bf16.mxu0 %v5577
    %5700 = vmatpush1.bf16.msra.mxu0 %v5576
    %5701 = vmatprep.subr.bf16.mxu0 %v5575
    %5702 = vmatpush1.bf16.msra.mxu0 %v5574
    %5703 = vmatprep.subr.bf16.mxu0 %v5573
    %5704 = vmatpush1.bf16.msra.mxu0 %v5572
    %5705 = vmatprep.subr.bf16.mxu0 %v5571
    %5706 = vmatpush1.bf16.msra.mxu0 %v5570
    %5707 = vmatprep.subr.bf16.mxu0 %v5569
    %5708 = vmatpush1.bf16.msra.mxu0 %v5568
    %5709 = vmatprep.subr.bf16.mxu0 %v5567
    %5710 = vmatpush1.bf16.msra.mxu0 %v5566
    %5711 = vmatprep.subr.bf16.mxu0 %v5565
    %5712 = vmatpush1.bf16.msra.mxu0 %v5564
    %5713 = vmatprep.subr.bf16.mxu0 %v5563
    %5714 = vmatpush1.bf16.msra.mxu0 %v5562
    %5715 = vmatprep.subr.bf16.mxu0 %v5593
    %5716 = vmatpush2.bf16.msra.mxu0 %v5592
    %5717 = vmatprep.subr.bf16.mxu0 %v5591
    %5718 = vmatpush2.bf16.msra.mxu0 %v5590
    %5719 = vmatprep.subr.bf16.mxu0 %v5589
    %5720 = vmatpush2.bf16.msra.mxu0 %v5588
    %5721 = vmatprep.subr.bf16.mxu0 %v5587
    %5722 = vmatpush2.bf16.msra.mxu0 %v5586
    %5723 = vmatprep.subr.bf16.mxu0 %v5585
    %5724 = vmatpush2.bf16.msra.mxu0 %v5584
    %5725 = vmatprep.subr.bf16.mxu0 %v5583
    %5726 = vmatpush2.bf16.msra.mxu0 %v5582
    %5727 = vmatprep.subr.bf16.mxu0 %v5581
    %5728 = vmatpush2.bf16.msra.mxu0 %v5580
    %5729 = vmatprep.subr.bf16.mxu0 %v5579
    %5730 = vmatpush2.bf16.msra.mxu0 %v5578
    %5731 = vmatprep.mubr.bf16.mxu0 %v5326
    %5732 = vmatmul.mubr.bf16.gmra.mxu0 %v5325
    %v5733 = vpop.f32.mrf.mxu0
    %v5734 = vadd.f32 %v5693, %v5733
    %v5735 = vpop.f32.mrf.mxu0
    %v5736 = vadd.f32 %v5695, %v5735
    %v5737 = vpop.f32.mrf.mxu0
    %v5738 = vpop.f32.mrf.mxu0
    %5739 = vdwg.mxu0
    %vm5740 = vcmp.gt.f32.partialorder %v5734, 0.0
    %vm5741 = vcmp.gt.f32.partialorder %v5736, 0.0
    %v5742 = vmul.f32 %v5734, 0.01
    %v5743 = vmul.f32 %v5736, 0.01
    %v5744 = vsel %vm5740, %v5734, %v5742
    %v5745 = vsel %vm5741, %v5736, %v5743
    %v5746 = vld [vmem:[#allocation12] sm:$0xf]
    %v5747 = vld [vmem:[#allocation12 + $0x4] sm:$0xf]
    %v5748 = vld [vmem:[#allocation12 + $0x8] sm:$0xf]
    %v5749 = vld [vmem:[#allocation12 + $0xc] sm:$0xf]
    %v5750 = vld [vmem:[#allocation12 + $0x10] sm:$0xf]
    %v5751 = vld [vmem:[#allocation12 + $0x14] sm:$0xf]
    %v5752 = vld [vmem:[#allocation12 + $0x18] sm:$0xf]
    %v5753 = vld [vmem:[#allocation12 + $0x1c] sm:$0xf]
    %v5754 = vld [vmem:[#allocation12 + $0x20] sm:$0xf]
    %v5755 = vld [vmem:[#allocation12 + $0x24] sm:$0xf]
    %v5756 = vld [vmem:[#allocation12 + $0x28] sm:$0xf]
    %v5757 = vld [vmem:[#allocation12 + $0x2c] sm:$0xf]
    %v5758 = vld [vmem:[#allocation12 + $0x30] sm:$0xf]
    %v5759 = vld [vmem:[#allocation12 + $0x34] sm:$0xf]
    %v5760 = vld [vmem:[#allocation12 + $0x38] sm:$0xf]
    %v5761 = vld [vmem:[#allocation12 + $0x3c] sm:$0xf]
    %v5762 = vld [vmem:[#allocation12 + $0x40] sm:$0xf]
    %v5763 = vld [vmem:[#allocation12 + $0x44] sm:$0xf]
    %v5764 = vld [vmem:[#allocation12 + $0x48] sm:$0xf]
    %v5765 = vld [vmem:[#allocation12 + $0x4c] sm:$0xf]
    %v5766 = vld [vmem:[#allocation12 + $0x50] sm:$0xf]
    %v5767 = vld [vmem:[#allocation12 + $0x54] sm:$0xf]
    %v5768 = vld [vmem:[#allocation12 + $0x58] sm:$0xf]
    %v5769 = vld [vmem:[#allocation12 + $0x5c] sm:$0xf]
    %v5770 = vld [vmem:[#allocation12 + $0x60] sm:$0xf]
    %v5771 = vld [vmem:[#allocation12 + $0x64] sm:$0xf]
    %v5772 = vld [vmem:[#allocation12 + $0x68] sm:$0xf]
    %v5773 = vld [vmem:[#allocation12 + $0x6c] sm:$0xf]
    %v5774 = vld [vmem:[#allocation12 + $0x70] sm:$0xf]
    %v5775 = vld [vmem:[#allocation12 + $0x74] sm:$0xf]
    %v5776 = vld [vmem:[#allocation12 + $0x78] sm:$0xf]
    %v5777 = vld [vmem:[#allocation12 + $0x7c] sm:$0xf]
    %v5778 = vld [vmem:[#allocation13] sm:$0x1]
    %v5779 = vpack.c.bf16 %v5744, %v5744
    %v5780 = vpack.c.bf16 %v5745, %v5745
    %v5782 = vlaneseq
    %v5783 = vshrl.u32 %v5782, 7
    %v5784 = vsub.s32 0, %v5783
    %v5785 = vrot.slane %v5778, %v5784
    %v5819 = vunpack.c.l.b16 %v5746
    %v5820 = vunpack.c.l.b16 %v5747
    %v5821 = vunpack.c.l.b16 %v5748
    %v5822 = vunpack.c.l.b16 %v5749
    %v5823 = vunpack.c.l.b16 %v5750
    %v5824 = vunpack.c.l.b16 %v5751
    %v5825 = vunpack.c.l.b16 %v5752
    %v5826 = vunpack.c.l.b16 %v5753
    %v5827 = vunpack.c.l.b16 %v5754
    %v5828 = vunpack.c.l.b16 %v5755
    %v5829 = vunpack.c.l.b16 %v5756
    %v5830 = vunpack.c.l.b16 %v5757
    %v5831 = vunpack.c.l.b16 %v5758
    %v5832 = vunpack.c.l.b16 %v5759
    %v5833 = vunpack.c.l.b16 %v5760
    %v5834 = vunpack.c.l.b16 %v5761
    %v5835 = vunpack.c.l.b16 %v5762
    %v5836 = vunpack.c.l.b16 %v5763
    %v5837 = vunpack.c.l.b16 %v5764
    %v5838 = vunpack.c.l.b16 %v5765
    %v5839 = vunpack.c.l.b16 %v5766
    %v5840 = vunpack.c.l.b16 %v5767
    %v5841 = vunpack.c.l.b16 %v5768
    %v5842 = vunpack.c.l.b16 %v5769
    %v5843 = vunpack.c.l.b16 %v5770
    %v5844 = vunpack.c.l.b16 %v5771
    %v5845 = vunpack.c.l.b16 %v5772
    %v5846 = vunpack.c.l.b16 %v5773
    %v5847 = vunpack.c.l.b16 %v5774
    %v5848 = vunpack.c.l.b16 %v5775
    %v5849 = vunpack.c.l.b16 %v5776
    %v5850 = vunpack.c.l.b16 %v5777
    %v5851 = vpack.c.b16 %v5820, %v5819
    %v5852 = vpack.c.b16 %v5822, %v5821
    %v5853 = vpack.c.b16 %v5824, %v5823
    %v5854 = vpack.c.b16 %v5826, %v5825
    %v5855 = vpack.c.b16 %v5828, %v5827
    %v5856 = vpack.c.b16 %v5830, %v5829
    %v5857 = vpack.c.b16 %v5832, %v5831
    %v5858 = vpack.c.b16 %v5834, %v5833
    %v5859 = vpack.c.b16 %v5836, %v5835
    %v5860 = vpack.c.b16 %v5838, %v5837
    %v5861 = vpack.c.b16 %v5840, %v5839
    %v5862 = vpack.c.b16 %v5842, %v5841
    %v5863 = vpack.c.b16 %v5844, %v5843
    %v5864 = vpack.c.b16 %v5846, %v5845
    %v5865 = vpack.c.b16 %v5848, %v5847
    %v5866 = vpack.c.b16 %v5850, %v5849
    %5883 = vmatprep.subr.bf16.mxu0 0
    %5884 = vmatpush1.bf16.msra.mxu0 %v5858
    %5885 = vmatprep.subr.bf16.mxu0 0
    %5886 = vmatpush1.bf16.msra.mxu0 %v5857
    %5887 = vmatprep.subr.bf16.mxu0 0
    %5888 = vmatpush1.bf16.msra.mxu0 %v5856
    %5889 = vmatprep.subr.bf16.mxu0 0
    %5890 = vmatpush1.bf16.msra.mxu0 %v5855
    %5891 = vmatprep.subr.bf16.mxu0 0
    %5892 = vmatpush1.bf16.msra.mxu0 %v5854
    %5893 = vmatprep.subr.bf16.mxu0 0
    %5894 = vmatpush1.bf16.msra.mxu0 %v5853
    %5895 = vmatprep.subr.bf16.mxu0 0
    %5896 = vmatpush1.bf16.msra.mxu0 %v5852
    %5897 = vmatprep.subr.bf16.mxu0 0
    %5898 = vmatpush1.bf16.msra.mxu0 %v5851
    %5899 = vmatprep.subr.bf16.mxu0 0
    %5900 = vmatpush2.bf16.msra.mxu0 %v5866
    %5901 = vmatprep.subr.bf16.mxu0 0
    %5902 = vmatpush2.bf16.msra.mxu0 %v5865
    %5903 = vmatprep.subr.bf16.mxu0 0
    %5904 = vmatpush2.bf16.msra.mxu0 %v5864
    %5905 = vmatprep.subr.bf16.mxu0 0
    %5906 = vmatpush2.bf16.msra.mxu0 %v5863
    %5907 = vmatprep.subr.bf16.mxu0 0
    %5908 = vmatpush2.bf16.msra.mxu0 %v5862
    %5909 = vmatprep.subr.bf16.mxu0 0
    %5910 = vmatpush2.bf16.msra.mxu0 %v5861
    %5911 = vmatprep.subr.bf16.mxu0 0
    %5912 = vmatpush2.bf16.msra.mxu0 %v5860
    %5913 = vmatprep.subr.bf16.mxu0 0
    %5914 = vmatpush2.bf16.msra.mxu0 %v5859
    %5915 = vmatprep.mubr.bf16.mxu0 %v5780
    %5916 = vmatmul.mubr.bf16.gmra.mxu0 %v5779
    %v5917 = vpop.f32.mrf.mxu0
    %v5918 = vadd.f32 %v5785, %v5917
    %v5919 = vpop.f32.mrf.mxu0
    %v5920 = vpop.f32.mrf.mxu0
    %v5921 = vpop.f32.mrf.mxu0
    %5922 = vdwg.mxu0
    %5923 = vst [vmem:[%s17] sm:$0xff] %v5918
    %v5924 = vld [vmem:[#allocation15] sm:$0xff]
    %v5925 = vld [vmem:[#allocation15 + $0x8] sm:$0xff]
    %v5926 = vld [vmem:[#allocation15 + $0x10] sm:$0xff]
    %v5927 = vld [vmem:[#allocation15 + $0x18] sm:$0xff]
    %v5928 = vld [vmem:[#allocation15 + $0x20] sm:$0xff]
    %v5929 = vld [vmem:[#allocation15 + $0x28] sm:$0xff]
    %v5930 = vld [vmem:[#allocation15 + $0x30] sm:$0xff]
    %v5931 = vld [vmem:[#allocation15 + $0x38] sm:$0xff]
    %v5932 = vld [vmem:[#allocation15 + $0x40] sm:$0xff]
    %v5933 = vld [vmem:[#allocation15 + $0x48] sm:$0xff]
    %v5934 = vld [vmem:[#allocation15 + $0x50] sm:$0xff]
    %v5935 = vld [vmem:[#allocation15 + $0x58] sm:$0xff]
    %v5936 = vld [vmem:[#allocation15 + $0x60] sm:$0xff]
    %v5937 = vld [vmem:[#allocation15 + $0x68] sm:$0xff]
    %v5938 = vld [vmem:[#allocation15 + $0x70] sm:$0xff]
    %v5939 = vld [vmem:[#allocation15 + $0x78] sm:$0xff]
    %v5940 = vld [vmem:[#allocation16] sm:$0x3]
    %v5941 = vpack.c.bf16 %v5918, %v5918
    %v5943 = vlaneseq
    %v5944 = vshrl.u32 %v5943, 7
    %v5945 = vsub.s32 0, %v5944
    %v5946 = vrot.slane %v5940, %v5945
    %v5947 = vlaneseq
    %v5948 = vshrl.u32 %v5947, 7
    %v5949 = vsub.s32 1, %v5948
    %v5950 = vrot.slane %v5940, %v5949
    %v5969 = vunpack.c.l.b16 %v5924
    %v5970 = vunpack.c.h.b16 %v5924
    %v5971 = vunpack.c.l.b16 %v5925
    %v5972 = vunpack.c.h.b16 %v5925
    %v5973 = vunpack.c.l.b16 %v5926
    %v5974 = vunpack.c.h.b16 %v5926
    %v5975 = vunpack.c.l.b16 %v5927
    %v5976 = vunpack.c.h.b16 %v5927
    %v5977 = vunpack.c.l.b16 %v5928
    %v5978 = vunpack.c.h.b16 %v5928
    %v5979 = vunpack.c.l.b16 %v5929
    %v5980 = vunpack.c.h.b16 %v5929
    %v5981 = vunpack.c.l.b16 %v5930
    %v5982 = vunpack.c.h.b16 %v5930
    %v5983 = vunpack.c.l.b16 %v5931
    %v5984 = vunpack.c.h.b16 %v5931
    %v5985 = vunpack.c.l.b16 %v5932
    %v5986 = vunpack.c.h.b16 %v5932
    %v5987 = vunpack.c.l.b16 %v5933
    %v5988 = vunpack.c.h.b16 %v5933
    %v5989 = vunpack.c.l.b16 %v5934
    %v5990 = vunpack.c.h.b16 %v5934
    %v5991 = vunpack.c.l.b16 %v5935
    %v5992 = vunpack.c.h.b16 %v5935
    %v5993 = vunpack.c.l.b16 %v5936
    %v5994 = vunpack.c.h.b16 %v5936
    %v5995 = vunpack.c.l.b16 %v5937
    %v5996 = vunpack.c.h.b16 %v5937
    %v5997 = vunpack.c.l.b16 %v5938
    %v5998 = vunpack.c.h.b16 %v5938
    %v5999 = vunpack.c.l.b16 %v5939
    %v6000 = vunpack.c.h.b16 %v5939
    %v6001 = vpack.c.b16 %v5971, %v5969
    %v6002 = vpack.c.b16 %v5972, %v5970
    %v6003 = vpack.c.b16 %v5975, %v5973
    %v6004 = vpack.c.b16 %v5976, %v5974
    %v6005 = vpack.c.b16 %v5979, %v5977
    %v6006 = vpack.c.b16 %v5980, %v5978
    %v6007 = vpack.c.b16 %v5983, %v5981
    %v6008 = vpack.c.b16 %v5984, %v5982
    %v6009 = vpack.c.b16 %v5987, %v5985
    %v6010 = vpack.c.b16 %v5988, %v5986
    %v6011 = vpack.c.b16 %v5991, %v5989
    %v6012 = vpack.c.b16 %v5992, %v5990
    %v6013 = vpack.c.b16 %v5995, %v5993
    %v6014 = vpack.c.b16 %v5996, %v5994
    %v6015 = vpack.c.b16 %v5999, %v5997
    %v6016 = vpack.c.b16 %v6000, %v5998
    %6033 = vmatprep.subr.bf16.mxu0 %v6016
    %6034 = vmatpush1.bf16.msra.mxu0 %v6015
    %6035 = vmatprep.subr.bf16.mxu0 %v6014
    %6036 = vmatpush1.bf16.msra.mxu0 %v6013
    %6037 = vmatprep.subr.bf16.mxu0 %v6012
    %6038 = vmatpush1.bf16.msra.mxu0 %v6011
    %6039 = vmatprep.subr.bf16.mxu0 %v6010
    %6040 = vmatpush1.bf16.msra.mxu0 %v6009
    %6041 = vmatprep.subr.bf16.mxu0 %v6008
    %6042 = vmatpush1.bf16.msra.mxu0 %v6007
    %6043 = vmatprep.subr.bf16.mxu0 %v6006
    %6044 = vmatpush1.bf16.msra.mxu0 %v6005
    %6045 = vmatprep.subr.bf16.mxu0 %v6004
    %6046 = vmatpush1.bf16.msra.mxu0 %v6003
    %6047 = vmatprep.subr.bf16.mxu0 %v6002
    %6048 = vmatpush1.bf16.msra.mxu0 %v6001
    %6049 = vmatprep.subr.bf16.mxu0 0
    %6050 = vmatpush2.bf16.msra.mxu0 0
    %6051 = vmatprep.subr.bf16.mxu0 0
    %6052 = vmatpush2.bf16.msra.mxu0 0
    %6053 = vmatprep.subr.bf16.mxu0 0
    %6054 = vmatpush2.bf16.msra.mxu0 0
    %6055 = vmatprep.subr.bf16.mxu0 0
    %6056 = vmatpush2.bf16.msra.mxu0 0
    %6057 = vmatprep.subr.bf16.mxu0 0
    %6058 = vmatpush2.bf16.msra.mxu0 0
    %6059 = vmatprep.subr.bf16.mxu0 0
    %6060 = vmatpush2.bf16.msra.mxu0 0
    %6061 = vmatprep.subr.bf16.mxu0 0
    %6062 = vmatpush2.bf16.msra.mxu0 0
    %6063 = vmatprep.subr.bf16.mxu0 0
    %6064 = vmatpush2.bf16.msra.mxu0 0
    %6065 = vmatprep.mubr.bf16.mxu0 0
    %6066 = vmatmul.mubr.bf16.gmra.mxu0 %v5941
    %v6067 = vpop.f32.mrf.mxu0
    %v6068 = vadd.f32 %v5946, %v6067
    %v6069 = vpop.f32.mrf.mxu0
    %v6070 = vadd.f32 %v5950, %v6069
    %v6071 = vpop.f32.mrf.mxu0
    %v6072 = vpop.f32.mrf.mxu0
    %6073 = vdwg.mxu0
    %vm6074 = vcmp.gt.f32.partialorder %v6068, 0.0
    %vm6075 = vcmp.gt.f32.partialorder %v6070, 0.0
    %v6076 = vmul.f32 %v6068, 0.01
    %v6077 = vmul.f32 %v6070, 0.01
    %v6078 = vsel %vm6074, %v6068, %v6076
    %v6079 = vsel %vm6075, %v6070, %v6077
    %v6080 = vld [vmem:[#allocation18] sm:$0xff]
    %v6081 = vld [vmem:[#allocation18 + $0x8] sm:$0xff]
    %v6082 = vld [vmem:[#allocation18 + $0x10] sm:$0xff]
    %v6083 = vld [vmem:[#allocation18 + $0x18] sm:$0xff]
    %v6084 = vld [vmem:[#allocation18 + $0x20] sm:$0xff]
    %v6085 = vld [vmem:[#allocation18 + $0x28] sm:$0xff]
    %v6086 = vld [vmem:[#allocation18 + $0x30] sm:$0xff]
    %v6087 = vld [vmem:[#allocation18 + $0x38] sm:$0xff]
    %v6088 = vld [vmem:[#allocation18 + $0x40] sm:$0xff]
    %v6089 = vld [vmem:[#allocation18 + $0x48] sm:$0xff]
    %v6090 = vld [vmem:[#allocation18 + $0x50] sm:$0xff]
    %v6091 = vld [vmem:[#allocation18 + $0x58] sm:$0xff]
    %v6092 = vld [vmem:[#allocation18 + $0x60] sm:$0xff]
    %v6093 = vld [vmem:[#allocation18 + $0x68] sm:$0xff]
    %v6094 = vld [vmem:[#allocation18 + $0x70] sm:$0xff]
    %v6095 = vld [vmem:[#allocation18 + $0x78] sm:$0xff]
    %v6096 = vld [vmem:[#allocation18 + $0x80] sm:$0xff]
    %v6097 = vld [vmem:[#allocation18 + $0x88] sm:$0xff]
    %v6098 = vld [vmem:[#allocation18 + $0x90] sm:$0xff]
    %v6099 = vld [vmem:[#allocation18 + $0x98] sm:$0xff]
    %v6100 = vld [vmem:[#allocation18 + $0xa0] sm:$0xff]
    %v6101 = vld [vmem:[#allocation18 + $0xa8] sm:$0xff]
    %v6102 = vld [vmem:[#allocation18 + $0xb0] sm:$0xff]
    %v6103 = vld [vmem:[#allocation18 + $0xb8] sm:$0xff]
    %v6104 = vld [vmem:[#allocation18 + $0xc0] sm:$0xff]
    %v6105 = vld [vmem:[#allocation18 + $0xc8] sm:$0xff]
    %v6106 = vld [vmem:[#allocation18 + $0xd0] sm:$0xff]
    %v6107 = vld [vmem:[#allocation18 + $0xd8] sm:$0xff]
    %v6108 = vld [vmem:[#allocation18 + $0xe0] sm:$0xff]
    %v6109 = vld [vmem:[#allocation18 + $0xe8] sm:$0xff]
    %v6110 = vld [vmem:[#allocation18 + $0xf0] sm:$0xff]
    %v6111 = vld [vmem:[#allocation18 + $0xf8] sm:$0xff]
    %v6112 = vld [vmem:[#allocation18 + $0x100] sm:$0xff]
    %v6113 = vld [vmem:[#allocation18 + $0x108] sm:$0xff]
    %v6114 = vld [vmem:[#allocation18 + $0x110] sm:$0xff]
    %v6115 = vld [vmem:[#allocation18 + $0x118] sm:$0xff]
    %v6116 = vld [vmem:[#allocation18 + $0x120] sm:$0xff]
    %v6117 = vld [vmem:[#allocation18 + $0x128] sm:$0xff]
    %v6118 = vld [vmem:[#allocation18 + $0x130] sm:$0xff]
    %v6119 = vld [vmem:[#allocation18 + $0x138] sm:$0xff]
    %v6120 = vld [vmem:[#allocation18 + $0x140] sm:$0xff]
    %v6121 = vld [vmem:[#allocation18 + $0x148] sm:$0xff]
    %v6122 = vld [vmem:[#allocation18 + $0x150] sm:$0xff]
    %v6123 = vld [vmem:[#allocation18 + $0x158] sm:$0xff]
    %v6124 = vld [vmem:[#allocation18 + $0x160] sm:$0xff]
    %v6125 = vld [vmem:[#allocation18 + $0x168] sm:$0xff]
    %v6126 = vld [vmem:[#allocation18 + $0x170] sm:$0xff]
    %v6127 = vld [vmem:[#allocation18 + $0x178] sm:$0xff]
    %v6128 = vld [vmem:[#allocation18 + $0x180] sm:$0xff]
    %v6129 = vld [vmem:[#allocation18 + $0x188] sm:$0xff]
    %v6130 = vld [vmem:[#allocation18 + $0x190] sm:$0xff]
    %v6131 = vld [vmem:[#allocation18 + $0x198] sm:$0xff]
    %v6132 = vld [vmem:[#allocation18 + $0x1a0] sm:$0xff]
    %v6133 = vld [vmem:[#allocation18 + $0x1a8] sm:$0xff]
    %v6134 = vld [vmem:[#allocation18 + $0x1b0] sm:$0xff]
    %v6135 = vld [vmem:[#allocation18 + $0x1b8] sm:$0xff]
    %v6136 = vld [vmem:[#allocation18 + $0x1c0] sm:$0xff]
    %v6137 = vld [vmem:[#allocation18 + $0x1c8] sm:$0xff]
    %v6138 = vld [vmem:[#allocation18 + $0x1d0] sm:$0xff]
    %v6139 = vld [vmem:[#allocation18 + $0x1d8] sm:$0xff]
    %v6140 = vld [vmem:[#allocation18 + $0x1e0] sm:$0xff]
    %v6141 = vld [vmem:[#allocation18 + $0x1e8] sm:$0xff]
    %v6142 = vld [vmem:[#allocation18 + $0x1f0] sm:$0xff]
    %v6143 = vld [vmem:[#allocation18 + $0x1f8] sm:$0xff]
    %v6144 = vld [vmem:[#allocation19] sm:$0xf]
    %v6145 = vpack.c.bf16 %v6078, %v6078
    %v6146 = vpack.c.bf16 %v6079, %v6079
    %v6148 = vlaneseq
    %v6149 = vshrl.u32 %v6148, 7
    %v6150 = vsub.s32 0, %v6149
    %v6151 = vrot.slane %v6144, %v6150
    %v6152 = vlaneseq
    %v6153 = vshrl.u32 %v6152, 7
    %v6154 = vsub.s32 1, %v6153
    %v6155 = vrot.slane %v6144, %v6154
    %v6156 = vlaneseq
    %v6157 = vshrl.u32 %v6156, 7
    %v6158 = vsub.s32 2, %v6157
    %v6159 = vrot.slane %v6144, %v6158
    %v6160 = vlaneseq
    %v6161 = vshrl.u32 %v6160, 7
    %v6162 = vsub.s32 3, %v6161
    %v6163 = vrot.slane %v6144, %v6162
    %v6232 = vunpack.c.l.b16 %v6080
    %v6233 = vunpack.c.h.b16 %v6080
    %v6234 = vunpack.c.l.b16 %v6081
    %v6235 = vunpack.c.h.b16 %v6081
    %v6236 = vunpack.c.l.b16 %v6082
    %v6237 = vunpack.c.h.b16 %v6082
    %v6238 = vunpack.c.l.b16 %v6083
    %v6239 = vunpack.c.h.b16 %v6083
    %v6240 = vunpack.c.l.b16 %v6084
    %v6241 = vunpack.c.h.b16 %v6084
    %v6242 = vunpack.c.l.b16 %v6085
    %v6243 = vunpack.c.h.b16 %v6085
    %v6244 = vunpack.c.l.b16 %v6086
    %v6245 = vunpack.c.h.b16 %v6086
    %v6246 = vunpack.c.l.b16 %v6087
    %v6247 = vunpack.c.h.b16 %v6087
    %v6248 = vunpack.c.l.b16 %v6088
    %v6249 = vunpack.c.h.b16 %v6088
    %v6250 = vunpack.c.l.b16 %v6089
    %v6251 = vunpack.c.h.b16 %v6089
    %v6252 = vunpack.c.l.b16 %v6090
    %v6253 = vunpack.c.h.b16 %v6090
    %v6254 = vunpack.c.l.b16 %v6091
    %v6255 = vunpack.c.h.b16 %v6091
    %v6256 = vunpack.c.l.b16 %v6092
    %v6257 = vunpack.c.h.b16 %v6092
    %v6258 = vunpack.c.l.b16 %v6093
    %v6259 = vunpack.c.h.b16 %v6093
    %v6260 = vunpack.c.l.b16 %v6094
    %v6261 = vunpack.c.h.b16 %v6094
    %v6262 = vunpack.c.l.b16 %v6095
    %v6263 = vunpack.c.h.b16 %v6095
    %v6264 = vunpack.c.l.b16 %v6096
    %v6265 = vunpack.c.h.b16 %v6096
    %v6266 = vunpack.c.l.b16 %v6097
    %v6267 = vunpack.c.h.b16 %v6097
    %v6268 = vunpack.c.l.b16 %v6098
    %v6269 = vunpack.c.h.b16 %v6098
    %v6270 = vunpack.c.l.b16 %v6099
    %v6271 = vunpack.c.h.b16 %v6099
    %v6272 = vunpack.c.l.b16 %v6100
    %v6273 = vunpack.c.h.b16 %v6100
    %v6274 = vunpack.c.l.b16 %v6101
    %v6275 = vunpack.c.h.b16 %v6101
    %v6276 = vunpack.c.l.b16 %v6102
    %v6277 = vunpack.c.h.b16 %v6102
    %v6278 = vunpack.c.l.b16 %v6103
    %v6279 = vunpack.c.h.b16 %v6103
    %v6280 = vunpack.c.l.b16 %v6104
    %v6281 = vunpack.c.h.b16 %v6104
    %v6282 = vunpack.c.l.b16 %v6105
    %v6283 = vunpack.c.h.b16 %v6105
    %v6284 = vunpack.c.l.b16 %v6106
    %v6285 = vunpack.c.h.b16 %v6106
    %v6286 = vunpack.c.l.b16 %v6107
    %v6287 = vunpack.c.h.b16 %v6107
    %v6288 = vunpack.c.l.b16 %v6108
    %v6289 = vunpack.c.h.b16 %v6108
    %v6290 = vunpack.c.l.b16 %v6109
    %v6291 = vunpack.c.h.b16 %v6109
    %v6292 = vunpack.c.l.b16 %v6110
    %v6293 = vunpack.c.h.b16 %v6110
    %v6294 = vunpack.c.l.b16 %v6111
    %v6295 = vunpack.c.h.b16 %v6111
    %v6296 = vunpack.c.l.b16 %v6112
    %v6297 = vunpack.c.h.b16 %v6112
    %v6298 = vunpack.c.l.b16 %v6113
    %v6299 = vunpack.c.h.b16 %v6113
    %v6300 = vunpack.c.l.b16 %v6114
    %v6301 = vunpack.c.h.b16 %v6114
    %v6302 = vunpack.c.l.b16 %v6115
    %v6303 = vunpack.c.h.b16 %v6115
    %v6304 = vunpack.c.l.b16 %v6116
    %v6305 = vunpack.c.h.b16 %v6116
    %v6306 = vunpack.c.l.b16 %v6117
    %v6307 = vunpack.c.h.b16 %v6117
    %v6308 = vunpack.c.l.b16 %v6118
    %v6309 = vunpack.c.h.b16 %v6118
    %v6310 = vunpack.c.l.b16 %v6119
    %v6311 = vunpack.c.h.b16 %v6119
    %v6312 = vunpack.c.l.b16 %v6120
    %v6313 = vunpack.c.h.b16 %v6120
    %v6314 = vunpack.c.l.b16 %v6121
    %v6315 = vunpack.c.h.b16 %v6121
    %v6316 = vunpack.c.l.b16 %v6122
    %v6317 = vunpack.c.h.b16 %v6122
    %v6318 = vunpack.c.l.b16 %v6123
    %v6319 = vunpack.c.h.b16 %v6123
    %v6320 = vunpack.c.l.b16 %v6124
    %v6321 = vunpack.c.h.b16 %v6124
    %v6322 = vunpack.c.l.b16 %v6125
    %v6323 = vunpack.c.h.b16 %v6125
    %v6324 = vunpack.c.l.b16 %v6126
    %v6325 = vunpack.c.h.b16 %v6126
    %v6326 = vunpack.c.l.b16 %v6127
    %v6327 = vunpack.c.h.b16 %v6127
    %v6328 = vunpack.c.l.b16 %v6128
    %v6329 = vunpack.c.h.b16 %v6128
    %v6330 = vunpack.c.l.b16 %v6129
    %v6331 = vunpack.c.h.b16 %v6129
    %v6332 = vunpack.c.l.b16 %v6130
    %v6333 = vunpack.c.h.b16 %v6130
    %v6334 = vunpack.c.l.b16 %v6131
    %v6335 = vunpack.c.h.b16 %v6131
    %v6336 = vunpack.c.l.b16 %v6132
    %v6337 = vunpack.c.h.b16 %v6132
    %v6338 = vunpack.c.l.b16 %v6133
    %v6339 = vunpack.c.h.b16 %v6133
    %v6340 = vunpack.c.l.b16 %v6134
    %v6341 = vunpack.c.h.b16 %v6134
    %v6342 = vunpack.c.l.b16 %v6135
    %v6343 = vunpack.c.h.b16 %v6135
    %v6344 = vunpack.c.l.b16 %v6136
    %v6345 = vunpack.c.h.b16 %v6136
    %v6346 = vunpack.c.l.b16 %v6137
    %v6347 = vunpack.c.h.b16 %v6137
    %v6348 = vunpack.c.l.b16 %v6138
    %v6349 = vunpack.c.h.b16 %v6138
    %v6350 = vunpack.c.l.b16 %v6139
    %v6351 = vunpack.c.h.b16 %v6139
    %v6352 = vunpack.c.l.b16 %v6140
    %v6353 = vunpack.c.h.b16 %v6140
    %v6354 = vunpack.c.l.b16 %v6141
    %v6355 = vunpack.c.h.b16 %v6141
    %v6356 = vunpack.c.l.b16 %v6142
    %v6357 = vunpack.c.h.b16 %v6142
    %v6358 = vunpack.c.l.b16 %v6143
    %v6359 = vunpack.c.h.b16 %v6143
    %v6360 = vpack.c.b16 %v6236, %v6232
    %v6361 = vpack.c.b16 %v6237, %v6233
    %v6362 = vpack.c.b16 %v6238, %v6234
    %v6363 = vpack.c.b16 %v6239, %v6235
    %v6364 = vpack.c.b16 %v6244, %v6240
    %v6365 = vpack.c.b16 %v6245, %v6241
    %v6366 = vpack.c.b16 %v6246, %v6242
    %v6367 = vpack.c.b16 %v6247, %v6243
    %v6368 = vpack.c.b16 %v6252, %v6248
    %v6369 = vpack.c.b16 %v6253, %v6249
    %v6370 = vpack.c.b16 %v6254, %v6250
    %v6371 = vpack.c.b16 %v6255, %v6251
    %v6372 = vpack.c.b16 %v6260, %v6256
    %v6373 = vpack.c.b16 %v6261, %v6257
    %v6374 = vpack.c.b16 %v6262, %v6258
    %v6375 = vpack.c.b16 %v6263, %v6259
    %v6376 = vpack.c.b16 %v6268, %v6264
    %v6377 = vpack.c.b16 %v6269, %v6265
    %v6378 = vpack.c.b16 %v6270, %v6266
    %v6379 = vpack.c.b16 %v6271, %v6267
    %v6380 = vpack.c.b16 %v6276, %v6272
    %v6381 = vpack.c.b16 %v6277, %v6273
    %v6382 = vpack.c.b16 %v6278, %v6274
    %v6383 = vpack.c.b16 %v6279, %v6275
    %v6384 = vpack.c.b16 %v6284, %v6280
    %v6385 = vpack.c.b16 %v6285, %v6281
    %v6386 = vpack.c.b16 %v6286, %v6282
    %v6387 = vpack.c.b16 %v6287, %v6283
    %v6388 = vpack.c.b16 %v6292, %v6288
    %v6389 = vpack.c.b16 %v6293, %v6289
    %v6390 = vpack.c.b16 %v6294, %v6290
    %v6391 = vpack.c.b16 %v6295, %v6291
    %v6392 = vpack.c.b16 %v6300, %v6296
    %v6393 = vpack.c.b16 %v6301, %v6297
    %v6394 = vpack.c.b16 %v6302, %v6298
    %v6395 = vpack.c.b16 %v6303, %v6299
    %v6396 = vpack.c.b16 %v6308, %v6304
    %v6397 = vpack.c.b16 %v6309, %v6305
    %v6398 = vpack.c.b16 %v6310, %v6306
    %v6399 = vpack.c.b16 %v6311, %v6307
    %v6400 = vpack.c.b16 %v6316, %v6312
    %v6401 = vpack.c.b16 %v6317, %v6313
    %v6402 = vpack.c.b16 %v6318, %v6314
    %v6403 = vpack.c.b16 %v6319, %v6315
    %v6404 = vpack.c.b16 %v6324, %v6320
    %v6405 = vpack.c.b16 %v6325, %v6321
    %v6406 = vpack.c.b16 %v6326, %v6322
    %v6407 = vpack.c.b16 %v6327, %v6323
    %v6408 = vpack.c.b16 %v6332, %v6328
    %v6409 = vpack.c.b16 %v6333, %v6329
    %v6410 = vpack.c.b16 %v6334, %v6330
    %v6411 = vpack.c.b16 %v6335, %v6331
    %v6412 = vpack.c.b16 %v6340, %v6336
    %v6413 = vpack.c.b16 %v6341, %v6337
    %v6414 = vpack.c.b16 %v6342, %v6338
    %v6415 = vpack.c.b16 %v6343, %v6339
    %v6416 = vpack.c.b16 %v6348, %v6344
    %v6417 = vpack.c.b16 %v6349, %v6345
    %v6418 = vpack.c.b16 %v6350, %v6346
    %v6419 = vpack.c.b16 %v6351, %v6347
    %v6420 = vpack.c.b16 %v6356, %v6352
    %v6421 = vpack.c.b16 %v6357, %v6353
    %v6422 = vpack.c.b16 %v6358, %v6354
    %v6423 = vpack.c.b16 %v6359, %v6355
    %6488 = vmatprep.subr.bf16.mxu0 %v6389
    %6489 = vmatpush1.bf16.msra.mxu0 %v6388
    %6490 = vmatprep.subr.bf16.mxu0 %v6385
    %6491 = vmatpush1.bf16.msra.mxu0 %v6384
    %6492 = vmatprep.subr.bf16.mxu0 %v6381
    %6493 = vmatpush1.bf16.msra.mxu0 %v6380
    %6494 = vmatprep.subr.bf16.mxu0 %v6377
    %6495 = vmatpush1.bf16.msra.mxu0 %v6376
    %6496 = vmatprep.subr.bf16.mxu0 %v6373
    %6497 = vmatpush1.bf16.msra.mxu0 %v6372
    %6498 = vmatprep.subr.bf16.mxu0 %v6369
    %6499 = vmatpush1.bf16.msra.mxu0 %v6368
    %6500 = vmatprep.subr.bf16.mxu0 %v6365
    %6501 = vmatpush1.bf16.msra.mxu0 %v6364
    %6502 = vmatprep.subr.bf16.mxu0 %v6361
    %6503 = vmatpush1.bf16.msra.mxu0 %v6360
    %6504 = vmatprep.subr.bf16.mxu0 %v6421
    %6505 = vmatpush2.bf16.msra.mxu0 %v6420
    %6506 = vmatprep.subr.bf16.mxu0 %v6417
    %6507 = vmatpush2.bf16.msra.mxu0 %v6416
    %6508 = vmatprep.subr.bf16.mxu0 %v6413
    %6509 = vmatpush2.bf16.msra.mxu0 %v6412
    %6510 = vmatprep.subr.bf16.mxu0 %v6409
    %6511 = vmatpush2.bf16.msra.mxu0 %v6408
    %6512 = vmatprep.subr.bf16.mxu0 %v6405
    %6513 = vmatpush2.bf16.msra.mxu0 %v6404
    %6514 = vmatprep.subr.bf16.mxu0 %v6401
    %6515 = vmatpush2.bf16.msra.mxu0 %v6400
    %6516 = vmatprep.subr.bf16.mxu0 %v6397
    %6517 = vmatpush2.bf16.msra.mxu0 %v6396
    %6518 = vmatprep.subr.bf16.mxu0 %v6393
    %6519 = vmatpush2.bf16.msra.mxu0 %v6392
    %6520 = vmatprep.mubr.bf16.mxu0 %v6146
    %6521 = vmatmul.mubr.bf16.gmra.mxu0 %v6145
    %v6522 = vpop.f32.mrf.mxu0
    %v6523 = vadd.f32 %v6151, %v6522
    %v6524 = vpop.f32.mrf.mxu0
    %v6525 = vadd.f32 %v6155, %v6524
    %v6526 = vpop.f32.mrf.mxu0
    %v6527 = vpop.f32.mrf.mxu0
    %6528 = vdwg.mxu0
    %6529 = vmatprep.subr.bf16.mxu0 %v6391
    %6530 = vmatpush1.bf16.msra.mxu0 %v6390
    %6531 = vmatprep.subr.bf16.mxu0 %v6387
    %6532 = vmatpush1.bf16.msra.mxu0 %v6386
    %6533 = vmatprep.subr.bf16.mxu0 %v6383
    %6534 = vmatpush1.bf16.msra.mxu0 %v6382
    %6535 = vmatprep.subr.bf16.mxu0 %v6379
    %6536 = vmatpush1.bf16.msra.mxu0 %v6378
    %6537 = vmatprep.subr.bf16.mxu0 %v6375
    %6538 = vmatpush1.bf16.msra.mxu0 %v6374
    %6539 = vmatprep.subr.bf16.mxu0 %v6371
    %6540 = vmatpush1.bf16.msra.mxu0 %v6370
    %6541 = vmatprep.subr.bf16.mxu0 %v6367
    %6542 = vmatpush1.bf16.msra.mxu0 %v6366
    %6543 = vmatprep.subr.bf16.mxu0 %v6363
    %6544 = vmatpush1.bf16.msra.mxu0 %v6362
    %6545 = vmatprep.subr.bf16.mxu0 %v6423
    %6546 = vmatpush2.bf16.msra.mxu0 %v6422
    %6547 = vmatprep.subr.bf16.mxu0 %v6419
    %6548 = vmatpush2.bf16.msra.mxu0 %v6418
    %6549 = vmatprep.subr.bf16.mxu0 %v6415
    %6550 = vmatpush2.bf16.msra.mxu0 %v6414
    %6551 = vmatprep.subr.bf16.mxu0 %v6411
    %6552 = vmatpush2.bf16.msra.mxu0 %v6410
    %6553 = vmatprep.subr.bf16.mxu0 %v6407
    %6554 = vmatpush2.bf16.msra.mxu0 %v6406
    %6555 = vmatprep.subr.bf16.mxu0 %v6403
    %6556 = vmatpush2.bf16.msra.mxu0 %v6402
    %6557 = vmatprep.subr.bf16.mxu0 %v6399
    %6558 = vmatpush2.bf16.msra.mxu0 %v6398
    %6559 = vmatprep.subr.bf16.mxu0 %v6395
    %6560 = vmatpush2.bf16.msra.mxu0 %v6394
    %6561 = vmatprep.mubr.bf16.mxu0 %v6146
    %6562 = vmatmul.mubr.bf16.gmra.mxu0 %v6145
    %v6563 = vpop.f32.mrf.mxu0
    %v6564 = vadd.f32 %v6159, %v6563
    %v6565 = vpop.f32.mrf.mxu0
    %v6566 = vadd.f32 %v6163, %v6565
    %v6567 = vpop.f32.mrf.mxu0
    %v6568 = vpop.f32.mrf.mxu0
    %6569 = vdwg.mxu0
    %vm6570 = vcmp.gt.f32.partialorder %v6523, 0.0
    %vm6571 = vcmp.gt.f32.partialorder %v6525, 0.0
    %vm6572 = vcmp.gt.f32.partialorder %v6564, 0.0
    %vm6573 = vcmp.gt.f32.partialorder %v6566, 0.0
    %v6574 = vmul.f32 %v6523, 0.01
    %v6575 = vmul.f32 %v6525, 0.01
    %v6576 = vmul.f32 %v6564, 0.01
    %v6577 = vmul.f32 %v6566, 0.01
    %v6578 = vsel %vm6570, %v6523, %v6574
    %v6579 = vsel %vm6571, %v6525, %v6575
    %v6580 = vsel %vm6572, %v6564, %v6576
    %v6581 = vsel %vm6573, %v6566, %v6577
    %v6582 = vld [vmem:[#allocation21] sm:$0xff]
    %v6583 = vld [vmem:[#allocation21 + $0x8] sm:$0xff]
    %v6584 = vld [vmem:[#allocation21 + $0x10] sm:$0xff]
    %v6585 = vld [vmem:[#allocation21 + $0x18] sm:$0xff]
    %v6586 = vld [vmem:[#allocation21 + $0x20] sm:$0xff]
    %v6587 = vld [vmem:[#allocation21 + $0x28] sm:$0xff]
    %v6588 = vld [vmem:[#allocation21 + $0x30] sm:$0xff]
    %v6589 = vld [vmem:[#allocation21 + $0x38] sm:$0xff]
    %v6590 = vld [vmem:[#allocation21 + $0x40] sm:$0xff]
    %v6591 = vld [vmem:[#allocation21 + $0x48] sm:$0xff]
    %v6592 = vld [vmem:[#allocation21 + $0x50] sm:$0xff]
    %v6593 = vld [vmem:[#allocation21 + $0x58] sm:$0xff]
    %v6594 = vld [vmem:[#allocation21 + $0x60] sm:$0xff]
    %v6595 = vld [vmem:[#allocation21 + $0x68] sm:$0xff]
    %v6596 = vld [vmem:[#allocation21 + $0x70] sm:$0xff]
    %v6597 = vld [vmem:[#allocation21 + $0x78] sm:$0xff]
    %v6598 = vld [vmem:[#allocation21 + $0x80] sm:$0xff]
    %v6599 = vld [vmem:[#allocation21 + $0x88] sm:$0xff]
    %v6600 = vld [vmem:[#allocation21 + $0x90] sm:$0xff]
    %v6601 = vld [vmem:[#allocation21 + $0x98] sm:$0xff]
    %v6602 = vld [vmem:[#allocation21 + $0xa0] sm:$0xff]
    %v6603 = vld [vmem:[#allocation21 + $0xa8] sm:$0xff]
    %v6604 = vld [vmem:[#allocation21 + $0xb0] sm:$0xff]
    %v6605 = vld [vmem:[#allocation21 + $0xb8] sm:$0xff]
    %v6606 = vld [vmem:[#allocation21 + $0xc0] sm:$0xff]
    %v6607 = vld [vmem:[#allocation21 + $0xc8] sm:$0xff]
    %v6608 = vld [vmem:[#allocation21 + $0xd0] sm:$0xff]
    %v6609 = vld [vmem:[#allocation21 + $0xd8] sm:$0xff]
    %v6610 = vld [vmem:[#allocation21 + $0xe0] sm:$0xff]
    %v6611 = vld [vmem:[#allocation21 + $0xe8] sm:$0xff]
    %v6612 = vld [vmem:[#allocation21 + $0xf0] sm:$0xff]
    %v6613 = vld [vmem:[#allocation21 + $0xf8] sm:$0xff]
    %v6614 = vld [vmem:[#allocation21 + $0x100] sm:$0xff]
    %v6615 = vld [vmem:[#allocation21 + $0x108] sm:$0xff]
    %v6616 = vld [vmem:[#allocation21 + $0x110] sm:$0xff]
    %v6617 = vld [vmem:[#allocation21 + $0x118] sm:$0xff]
    %v6618 = vld [vmem:[#allocation21 + $0x120] sm:$0xff]
    %v6619 = vld [vmem:[#allocation21 + $0x128] sm:$0xff]
    %v6620 = vld [vmem:[#allocation21 + $0x130] sm:$0xff]
    %v6621 = vld [vmem:[#allocation21 + $0x138] sm:$0xff]
    %v6622 = vld [vmem:[#allocation21 + $0x140] sm:$0xff]
    %v6623 = vld [vmem:[#allocation21 + $0x148] sm:$0xff]
    %v6624 = vld [vmem:[#allocation21 + $0x150] sm:$0xff]
    %v6625 = vld [vmem:[#allocation21 + $0x158] sm:$0xff]
    %v6626 = vld [vmem:[#allocation21 + $0x160] sm:$0xff]
    %v6627 = vld [vmem:[#allocation21 + $0x168] sm:$0xff]
    %v6628 = vld [vmem:[#allocation21 + $0x170] sm:$0xff]
    %v6629 = vld [vmem:[#allocation21 + $0x178] sm:$0xff]
    %v6630 = vld [vmem:[#allocation21 + $0x180] sm:$0xff]
    %v6631 = vld [vmem:[#allocation21 + $0x188] sm:$0xff]
    %v6632 = vld [vmem:[#allocation21 + $0x190] sm:$0xff]
    %v6633 = vld [vmem:[#allocation21 + $0x198] sm:$0xff]
    %v6634 = vld [vmem:[#allocation21 + $0x1a0] sm:$0xff]
    %v6635 = vld [vmem:[#allocation21 + $0x1a8] sm:$0xff]
    %v6636 = vld [vmem:[#allocation21 + $0x1b0] sm:$0xff]
    %v6637 = vld [vmem:[#allocation21 + $0x1b8] sm:$0xff]
    %v6638 = vld [vmem:[#allocation21 + $0x1c0] sm:$0xff]
    %v6639 = vld [vmem:[#allocation21 + $0x1c8] sm:$0xff]
    %v6640 = vld [vmem:[#allocation21 + $0x1d0] sm:$0xff]
    %v6641 = vld [vmem:[#allocation21 + $0x1d8] sm:$0xff]
    %v6642 = vld [vmem:[#allocation21 + $0x1e0] sm:$0xff]
    %v6643 = vld [vmem:[#allocation21 + $0x1e8] sm:$0xff]
    %v6644 = vld [vmem:[#allocation21 + $0x1f0] sm:$0xff]
    %v6645 = vld [vmem:[#allocation21 + $0x1f8] sm:$0xff]
    %v6646 = vld [vmem:[#allocation21 + $0x200] sm:$0xff]
    %v6647 = vld [vmem:[#allocation21 + $0x208] sm:$0xff]
    %v6648 = vld [vmem:[#allocation21 + $0x210] sm:$0xff]
    %v6649 = vld [vmem:[#allocation21 + $0x218] sm:$0xff]
    %v6650 = vld [vmem:[#allocation21 + $0x220] sm:$0xff]
    %v6651 = vld [vmem:[#allocation21 + $0x228] sm:$0xff]
    %v6652 = vld [vmem:[#allocation21 + $0x230] sm:$0xff]
    %v6653 = vld [vmem:[#allocation21 + $0x238] sm:$0xff]
    %v6654 = vld [vmem:[#allocation21 + $0x240] sm:$0xff]
    %v6655 = vld [vmem:[#allocation21 + $0x248] sm:$0xff]
    %v6656 = vld [vmem:[#allocation21 + $0x250] sm:$0xff]
    %v6657 = vld [vmem:[#allocation21 + $0x258] sm:$0xff]
    %v6658 = vld [vmem:[#allocation21 + $0x260] sm:$0xff]
    %v6659 = vld [vmem:[#allocation21 + $0x268] sm:$0xff]
    %v6660 = vld [vmem:[#allocation21 + $0x270] sm:$0xff]
    %v6661 = vld [vmem:[#allocation21 + $0x278] sm:$0xff]
    %v6662 = vld [vmem:[#allocation21 + $0x280] sm:$0xff]
    %v6663 = vld [vmem:[#allocation21 + $0x288] sm:$0xff]
    %v6664 = vld [vmem:[#allocation21 + $0x290] sm:$0xff]
    %v6665 = vld [vmem:[#allocation21 + $0x298] sm:$0xff]
    %v6666 = vld [vmem:[#allocation21 + $0x2a0] sm:$0xff]
    %v6667 = vld [vmem:[#allocation21 + $0x2a8] sm:$0xff]
    %v6668 = vld [vmem:[#allocation21 + $0x2b0] sm:$0xff]
    %v6669 = vld [vmem:[#allocation21 + $0x2b8] sm:$0xff]
    %v6670 = vld [vmem:[#allocation21 + $0x2c0] sm:$0xff]
    %v6671 = vld [vmem:[#allocation21 + $0x2c8] sm:$0xff]
    %v6672 = vld [vmem:[#allocation21 + $0x2d0] sm:$0xff]
    %v6673 = vld [vmem:[#allocation21 + $0x2d8] sm:$0xff]
    %v6674 = vld [vmem:[#allocation21 + $0x2e0] sm:$0xff]
    %v6675 = vld [vmem:[#allocation21 + $0x2e8] sm:$0xff]
    %v6676 = vld [vmem:[#allocation21 + $0x2f0] sm:$0xff]
    %v6677 = vld [vmem:[#allocation21 + $0x2f8] sm:$0xff]
    %v6678 = vld [vmem:[#allocation21 + $0x300] sm:$0xff]
    %v6679 = vld [vmem:[#allocation21 + $0x308] sm:$0xff]
    %v6680 = vld [vmem:[#allocation21 + $0x310] sm:$0xff]
    %v6681 = vld [vmem:[#allocation21 + $0x318] sm:$0xff]
    %v6682 = vld [vmem:[#allocation21 + $0x320] sm:$0xff]
    %v6683 = vld [vmem:[#allocation21 + $0x328] sm:$0xff]
    %v6684 = vld [vmem:[#allocation21 + $0x330] sm:$0xff]
    %v6685 = vld [vmem:[#allocation21 + $0x338] sm:$0xff]
    %v6686 = vld [vmem:[#allocation21 + $0x340] sm:$0xff]
    %v6687 = vld [vmem:[#allocation21 + $0x348] sm:$0xff]
    %v6688 = vld [vmem:[#allocation21 + $0x350] sm:$0xff]
    %v6689 = vld [vmem:[#allocation21 + $0x358] sm:$0xff]
    %v6690 = vld [vmem:[#allocation21 + $0x360] sm:$0xff]
    %v6691 = vld [vmem:[#allocation21 + $0x368] sm:$0xff]
    %v6692 = vld [vmem:[#allocation21 + $0x370] sm:$0xff]
    %v6693 = vld [vmem:[#allocation21 + $0x378] sm:$0xff]
    %v6694 = vld [vmem:[#allocation21 + $0x380] sm:$0xff]
    %v6695 = vld [vmem:[#allocation21 + $0x388] sm:$0xff]
    %v6696 = vld [vmem:[#allocation21 + $0x390] sm:$0xff]
    %v6697 = vld [vmem:[#allocation21 + $0x398] sm:$0xff]
    %v6698 = vld [vmem:[#allocation21 + $0x3a0] sm:$0xff]
    %v6699 = vld [vmem:[#allocation21 + $0x3a8] sm:$0xff]
    %v6700 = vld [vmem:[#allocation21 + $0x3b0] sm:$0xff]
    %v6701 = vld [vmem:[#allocation21 + $0x3b8] sm:$0xff]
    %v6702 = vld [vmem:[#allocation21 + $0x3c0] sm:$0xff]
    %v6703 = vld [vmem:[#allocation21 + $0x3c8] sm:$0xff]
    %v6704 = vld [vmem:[#allocation21 + $0x3d0] sm:$0xff]
    %v6705 = vld [vmem:[#allocation21 + $0x3d8] sm:$0xff]
    %v6706 = vld [vmem:[#allocation21 + $0x3e0] sm:$0xff]
    %v6707 = vld [vmem:[#allocation21 + $0x3e8] sm:$0xff]
    %v6708 = vld [vmem:[#allocation21 + $0x3f0] sm:$0xff]
    %v6709 = vld [vmem:[#allocation21 + $0x3f8] sm:$0xff]
    %v6710 = vld [vmem:[#allocation21 + $0x400] sm:$0xff]
    %v6711 = vld [vmem:[#allocation21 + $0x408] sm:$0xff]
    %v6712 = vld [vmem:[#allocation21 + $0x410] sm:$0xff]
    %v6713 = vld [vmem:[#allocation21 + $0x418] sm:$0xff]
    %v6714 = vld [vmem:[#allocation21 + $0x420] sm:$0xff]
    %v6715 = vld [vmem:[#allocation21 + $0x428] sm:$0xff]
    %v6716 = vld [vmem:[#allocation21 + $0x430] sm:$0xff]
    %v6717 = vld [vmem:[#allocation21 + $0x438] sm:$0xff]
    %v6718 = vld [vmem:[#allocation21 + $0x440] sm:$0xff]
    %v6719 = vld [vmem:[#allocation21 + $0x448] sm:$0xff]
    %v6720 = vld [vmem:[#allocation21 + $0x450] sm:$0xff]
    %v6721 = vld [vmem:[#allocation21 + $0x458] sm:$0xff]
    %v6722 = vld [vmem:[#allocation21 + $0x460] sm:$0xff]
    %v6723 = vld [vmem:[#allocation21 + $0x468] sm:$0xff]
    %v6724 = vld [vmem:[#allocation21 + $0x470] sm:$0xff]
    %v6725 = vld [vmem:[#allocation21 + $0x478] sm:$0xff]
    %v6726 = vld [vmem:[#allocation21 + $0x480] sm:$0xff]
    %v6727 = vld [vmem:[#allocation21 + $0x488] sm:$0xff]
    %v6728 = vld [vmem:[#allocation21 + $0x490] sm:$0xff]
    %v6729 = vld [vmem:[#allocation21 + $0x498] sm:$0xff]
    %v6730 = vld [vmem:[#allocation21 + $0x4a0] sm:$0xff]
    %v6731 = vld [vmem:[#allocation21 + $0x4a8] sm:$0xff]
    %v6732 = vld [vmem:[#allocation21 + $0x4b0] sm:$0xff]
    %v6733 = vld [vmem:[#allocation21 + $0x4b8] sm:$0xff]
    %v6734 = vld [vmem:[#allocation21 + $0x4c0] sm:$0xff]
    %v6735 = vld [vmem:[#allocation21 + $0x4c8] sm:$0xff]
    %v6736 = vld [vmem:[#allocation21 + $0x4d0] sm:$0xff]
    %v6737 = vld [vmem:[#allocation21 + $0x4d8] sm:$0xff]
    %v6738 = vld [vmem:[#allocation21 + $0x4e0] sm:$0xff]
    %v6739 = vld [vmem:[#allocation21 + $0x4e8] sm:$0xff]
    %v6740 = vld [vmem:[#allocation21 + $0x4f0] sm:$0xff]
    %v6741 = vld [vmem:[#allocation21 + $0x4f8] sm:$0xff]
    %v6742 = vld [vmem:[#allocation21 + $0x500] sm:$0xff]
    %v6743 = vld [vmem:[#allocation21 + $0x508] sm:$0xff]
    %v6744 = vld [vmem:[#allocation21 + $0x510] sm:$0xff]
    %v6745 = vld [vmem:[#allocation21 + $0x518] sm:$0xff]
    %v6746 = vld [vmem:[#allocation21 + $0x520] sm:$0xff]
    %v6747 = vld [vmem:[#allocation21 + $0x528] sm:$0xff]
    %v6748 = vld [vmem:[#allocation21 + $0x530] sm:$0xff]
    %v6749 = vld [vmem:[#allocation21 + $0x538] sm:$0xff]
    %v6750 = vld [vmem:[#allocation21 + $0x540] sm:$0xff]
    %v6751 = vld [vmem:[#allocation21 + $0x548] sm:$0xff]
    %v6752 = vld [vmem:[#allocation21 + $0x550] sm:$0xff]
    %v6753 = vld [vmem:[#allocation21 + $0x558] sm:$0xff]
    %v6754 = vld [vmem:[#allocation21 + $0x560] sm:$0xff]
    %v6755 = vld [vmem:[#allocation21 + $0x568] sm:$0xff]
    %v6756 = vld [vmem:[#allocation21 + $0x570] sm:$0xff]
    %v6757 = vld [vmem:[#allocation21 + $0x578] sm:$0xff]
    %v6758 = vld [vmem:[#allocation21 + $0x580] sm:$0xff]
    %v6759 = vld [vmem:[#allocation21 + $0x588] sm:$0xff]
    %v6760 = vld [vmem:[#allocation21 + $0x590] sm:$0xff]
    %v6761 = vld [vmem:[#allocation21 + $0x598] sm:$0xff]
    %v6762 = vld [vmem:[#allocation21 + $0x5a0] sm:$0xff]
    %v6763 = vld [vmem:[#allocation21 + $0x5a8] sm:$0xff]
    %v6764 = vld [vmem:[#allocation21 + $0x5b0] sm:$0xff]
    %v6765 = vld [vmem:[#allocation21 + $0x5b8] sm:$0xff]
    %v6766 = vld [vmem:[#allocation21 + $0x5c0] sm:$0xff]
    %v6767 = vld [vmem:[#allocation21 + $0x5c8] sm:$0xff]
    %v6768 = vld [vmem:[#allocation21 + $0x5d0] sm:$0xff]
    %v6769 = vld [vmem:[#allocation21 + $0x5d8] sm:$0xff]
    %v6770 = vld [vmem:[#allocation21 + $0x5e0] sm:$0xff]
    %v6771 = vld [vmem:[#allocation21 + $0x5e8] sm:$0xff]
    %v6772 = vld [vmem:[#allocation21 + $0x5f0] sm:$0xff]
    %v6773 = vld [vmem:[#allocation21 + $0x5f8] sm:$0xff]
    %v6774 = vld [vmem:[#allocation21 + $0x600] sm:$0xff]
    %v6775 = vld [vmem:[#allocation21 + $0x608] sm:$0xff]
    %v6776 = vld [vmem:[#allocation21 + $0x610] sm:$0xff]
    %v6777 = vld [vmem:[#allocation21 + $0x618] sm:$0xff]
    %v6778 = vld [vmem:[#allocation21 + $0x620] sm:$0xff]
    %v6779 = vld [vmem:[#allocation21 + $0x628] sm:$0xff]
    %v6780 = vld [vmem:[#allocation21 + $0x630] sm:$0xff]
    %v6781 = vld [vmem:[#allocation21 + $0x638] sm:$0xff]
    %v6782 = vld [vmem:[#allocation21 + $0x640] sm:$0xff]
    %v6783 = vld [vmem:[#allocation21 + $0x648] sm:$0xff]
    %v6784 = vld [vmem:[#allocation21 + $0x650] sm:$0xff]
    %v6785 = vld [vmem:[#allocation21 + $0x658] sm:$0xff]
    %v6786 = vld [vmem:[#allocation21 + $0x660] sm:$0xff]
    %v6787 = vld [vmem:[#allocation21 + $0x668] sm:$0xff]
    %v6788 = vld [vmem:[#allocation21 + $0x670] sm:$0xff]
    %v6789 = vld [vmem:[#allocation21 + $0x678] sm:$0xff]
    %v6790 = vld [vmem:[#allocation21 + $0x680] sm:$0xff]
    %v6791 = vld [vmem:[#allocation21 + $0x688] sm:$0xff]
    %v6792 = vld [vmem:[#allocation21 + $0x690] sm:$0xff]
    %v6793 = vld [vmem:[#allocation21 + $0x698] sm:$0xff]
    %v6794 = vld [vmem:[#allocation21 + $0x6a0] sm:$0xff]
    %v6795 = vld [vmem:[#allocation21 + $0x6a8] sm:$0xff]
    %v6796 = vld [vmem:[#allocation21 + $0x6b0] sm:$0xff]
    %v6797 = vld [vmem:[#allocation21 + $0x6b8] sm:$0xff]
    %v6798 = vld [vmem:[#allocation21 + $0x6c0] sm:$0xff]
    %v6799 = vld [vmem:[#allocation21 + $0x6c8] sm:$0xff]
    %v6800 = vld [vmem:[#allocation21 + $0x6d0] sm:$0xff]
    %v6801 = vld [vmem:[#allocation21 + $0x6d8] sm:$0xff]
    %v6802 = vld [vmem:[#allocation21 + $0x6e0] sm:$0xff]
    %v6803 = vld [vmem:[#allocation21 + $0x6e8] sm:$0xff]
    %v6804 = vld [vmem:[#allocation21 + $0x6f0] sm:$0xff]
    %v6805 = vld [vmem:[#allocation21 + $0x6f8] sm:$0xff]
    %v6806 = vld [vmem:[#allocation21 + $0x700] sm:$0xff]
    %v6807 = vld [vmem:[#allocation21 + $0x708] sm:$0xff]
    %v6808 = vld [vmem:[#allocation21 + $0x710] sm:$0xff]
    %v6809 = vld [vmem:[#allocation21 + $0x718] sm:$0xff]
    %v6810 = vld [vmem:[#allocation21 + $0x720] sm:$0xff]
    %v6811 = vld [vmem:[#allocation21 + $0x728] sm:$0xff]
    %v6812 = vld [vmem:[#allocation21 + $0x730] sm:$0xff]
    %v6813 = vld [vmem:[#allocation21 + $0x738] sm:$0xff]
    %v6814 = vld [vmem:[#allocation21 + $0x740] sm:$0xff]
    %v6815 = vld [vmem:[#allocation21 + $0x748] sm:$0xff]
    %v6816 = vld [vmem:[#allocation21 + $0x750] sm:$0xff]
    %v6817 = vld [vmem:[#allocation21 + $0x758] sm:$0xff]
    %v6818 = vld [vmem:[#allocation21 + $0x760] sm:$0xff]
    %v6819 = vld [vmem:[#allocation21 + $0x768] sm:$0xff]
    %v6820 = vld [vmem:[#allocation21 + $0x770] sm:$0xff]
    %v6821 = vld [vmem:[#allocation21 + $0x778] sm:$0xff]
    %v6822 = vld [vmem:[#allocation21 + $0x780] sm:$0xff]
    %v6823 = vld [vmem:[#allocation21 + $0x788] sm:$0xff]
    %v6824 = vld [vmem:[#allocation21 + $0x790] sm:$0xff]
    %v6825 = vld [vmem:[#allocation21 + $0x798] sm:$0xff]
    %v6826 = vld [vmem:[#allocation21 + $0x7a0] sm:$0xff]
    %v6827 = vld [vmem:[#allocation21 + $0x7a8] sm:$0xff]
    %v6828 = vld [vmem:[#allocation21 + $0x7b0] sm:$0xff]
    %v6829 = vld [vmem:[#allocation21 + $0x7b8] sm:$0xff]
    %v6830 = vld [vmem:[#allocation21 + $0x7c0] sm:$0xff]
    %v6831 = vld [vmem:[#allocation21 + $0x7c8] sm:$0xff]
    %v6832 = vld [vmem:[#allocation21 + $0x7d0] sm:$0xff]
    %v6833 = vld [vmem:[#allocation21 + $0x7d8] sm:$0xff]
    %v6834 = vld [vmem:[#allocation21 + $0x7e0] sm:$0xff]
    %v6835 = vld [vmem:[#allocation21 + $0x7e8] sm:$0xff]
    %v6836 = vld [vmem:[#allocation21 + $0x7f0] sm:$0xff]
    %v6837 = vld [vmem:[#allocation21 + $0x7f8] sm:$0xff]
    %v6838 = vld [vmem:[#allocation22] sm:$0xff]
    %v6839 = vpack.c.bf16 %v6578, %v6578
    %v6840 = vpack.c.bf16 %v6579, %v6579
    %v6841 = vpack.c.bf16 %v6580, %v6580
    %v6842 = vpack.c.bf16 %v6581, %v6581
    %v6844 = vlaneseq
    %v6845 = vshrl.u32 %v6844, 7
    %v6846 = vsub.s32 0, %v6845
    %v6847 = vrot.slane %v6838, %v6846
    %v6848 = vlaneseq
    %v6849 = vshrl.u32 %v6848, 7
    %v6850 = vsub.s32 1, %v6849
    %v6851 = vrot.slane %v6838, %v6850
    %v6852 = vlaneseq
    %v6853 = vshrl.u32 %v6852, 7
    %v6854 = vsub.s32 2, %v6853
    %v6855 = vrot.slane %v6838, %v6854
    %v6856 = vlaneseq
    %v6857 = vshrl.u32 %v6856, 7
    %v6858 = vsub.s32 3, %v6857
    %v6859 = vrot.slane %v6838, %v6858
    %v6860 = vlaneseq
    %v6861 = vshrl.u32 %v6860, 7
    %v6862 = vsub.s32 4, %v6861
    %v6863 = vrot.slane %v6838, %v6862
    %v6864 = vlaneseq
    %v6865 = vshrl.u32 %v6864, 7
    %v6866 = vsub.s32 5, %v6865
    %v6867 = vrot.slane %v6838, %v6866
    %v6868 = vlaneseq
    %v6869 = vshrl.u32 %v6868, 7
    %v6870 = vsub.s32 6, %v6869
    %v6871 = vrot.slane %v6838, %v6870
    %v6872 = vlaneseq
    %v6873 = vshrl.u32 %v6872, 7
    %v6874 = vsub.s32 7, %v6873
    %v6875 = vrot.slane %v6838, %v6874
    %v7140 = vunpack.c.l.b16 %v6582
    %v7141 = vunpack.c.h.b16 %v6582
    %v7142 = vunpack.c.l.b16 %v6583
    %v7143 = vunpack.c.h.b16 %v6583
    %v7144 = vunpack.c.l.b16 %v6584
    %v7145 = vunpack.c.h.b16 %v6584
    %v7146 = vunpack.c.l.b16 %v6585
    %v7147 = vunpack.c.h.b16 %v6585
    %v7148 = vunpack.c.l.b16 %v6586
    %v7149 = vunpack.c.h.b16 %v6586
    %v7150 = vunpack.c.l.b16 %v6587
    %v7151 = vunpack.c.h.b16 %v6587
    %v7152 = vunpack.c.l.b16 %v6588
    %v7153 = vunpack.c.h.b16 %v6588
    %v7154 = vunpack.c.l.b16 %v6589
    %v7155 = vunpack.c.h.b16 %v6589
    %v7156 = vunpack.c.l.b16 %v6590
    %v7157 = vunpack.c.h.b16 %v6590
    %v7158 = vunpack.c.l.b16 %v6591
    %v7159 = vunpack.c.h.b16 %v6591
    %v7160 = vunpack.c.l.b16 %v6592
    %v7161 = vunpack.c.h.b16 %v6592
    %v7162 = vunpack.c.l.b16 %v6593
    %v7163 = vunpack.c.h.b16 %v6593
    %v7164 = vunpack.c.l.b16 %v6594
    %v7165 = vunpack.c.h.b16 %v6594
    %v7166 = vunpack.c.l.b16 %v6595
    %v7167 = vunpack.c.h.b16 %v6595
    %v7168 = vunpack.c.l.b16 %v6596
    %v7169 = vunpack.c.h.b16 %v6596
    %v7170 = vunpack.c.l.b16 %v6597
    %v7171 = vunpack.c.h.b16 %v6597
    %v7172 = vunpack.c.l.b16 %v6598
    %v7173 = vunpack.c.h.b16 %v6598
    %v7174 = vunpack.c.l.b16 %v6599
    %v7175 = vunpack.c.h.b16 %v6599
    %v7176 = vunpack.c.l.b16 %v6600
    %v7177 = vunpack.c.h.b16 %v6600
    %v7178 = vunpack.c.l.b16 %v6601
    %v7179 = vunpack.c.h.b16 %v6601
    %v7180 = vunpack.c.l.b16 %v6602
    %v7181 = vunpack.c.h.b16 %v6602
    %v7182 = vunpack.c.l.b16 %v6603
    %v7183 = vunpack.c.h.b16 %v6603
    %v7184 = vunpack.c.l.b16 %v6604
    %v7185 = vunpack.c.h.b16 %v6604
    %v7186 = vunpack.c.l.b16 %v6605
    %v7187 = vunpack.c.h.b16 %v6605
    %v7188 = vunpack.c.l.b16 %v6606
    %v7189 = vunpack.c.h.b16 %v6606
    %v7190 = vunpack.c.l.b16 %v6607
    %v7191 = vunpack.c.h.b16 %v6607
    %v7192 = vunpack.c.l.b16 %v6608
    %v7193 = vunpack.c.h.b16 %v6608
    %v7194 = vunpack.c.l.b16 %v6609
    %v7195 = vunpack.c.h.b16 %v6609
    %v7196 = vunpack.c.l.b16 %v6610
    %v7197 = vunpack.c.h.b16 %v6610
    %v7198 = vunpack.c.l.b16 %v6611
    %v7199 = vunpack.c.h.b16 %v6611
    %v7200 = vunpack.c.l.b16 %v6612
    %v7201 = vunpack.c.h.b16 %v6612
    %v7202 = vunpack.c.l.b16 %v6613
    %v7203 = vunpack.c.h.b16 %v6613
    %v7204 = vunpack.c.l.b16 %v6614
    %v7205 = vunpack.c.h.b16 %v6614
    %v7206 = vunpack.c.l.b16 %v6615
    %v7207 = vunpack.c.h.b16 %v6615
    %v7208 = vunpack.c.l.b16 %v6616
    %v7209 = vunpack.c.h.b16 %v6616
    %v7210 = vunpack.c.l.b16 %v6617
    %v7211 = vunpack.c.h.b16 %v6617
    %v7212 = vunpack.c.l.b16 %v6618
    %v7213 = vunpack.c.h.b16 %v6618
    %v7214 = vunpack.c.l.b16 %v6619
    %v7215 = vunpack.c.h.b16 %v6619
    %v7216 = vunpack.c.l.b16 %v6620
    %v7217 = vunpack.c.h.b16 %v6620
    %v7218 = vunpack.c.l.b16 %v6621
    %v7219 = vunpack.c.h.b16 %v6621
    %v7220 = vunpack.c.l.b16 %v6622
    %v7221 = vunpack.c.h.b16 %v6622
    %v7222 = vunpack.c.l.b16 %v6623
    %v7223 = vunpack.c.h.b16 %v6623
    %v7224 = vunpack.c.l.b16 %v6624
    %v7225 = vunpack.c.h.b16 %v6624
    %v7226 = vunpack.c.l.b16 %v6625
    %v7227 = vunpack.c.h.b16 %v6625
    %v7228 = vunpack.c.l.b16 %v6626
    %v7229 = vunpack.c.h.b16 %v6626
    %v7230 = vunpack.c.l.b16 %v6627
    %v7231 = vunpack.c.h.b16 %v6627
    %v7232 = vunpack.c.l.b16 %v6628
    %v7233 = vunpack.c.h.b16 %v6628
    %v7234 = vunpack.c.l.b16 %v6629
    %v7235 = vunpack.c.h.b16 %v6629
    %v7236 = vunpack.c.l.b16 %v6630
    %v7237 = vunpack.c.h.b16 %v6630
    %v7238 = vunpack.c.l.b16 %v6631
    %v7239 = vunpack.c.h.b16 %v6631
    %v7240 = vunpack.c.l.b16 %v6632
    %v7241 = vunpack.c.h.b16 %v6632
    %v7242 = vunpack.c.l.b16 %v6633
    %v7243 = vunpack.c.h.b16 %v6633
    %v7244 = vunpack.c.l.b16 %v6634
    %v7245 = vunpack.c.h.b16 %v6634
    %v7246 = vunpack.c.l.b16 %v6635
    %v7247 = vunpack.c.h.b16 %v6635
    %v7248 = vunpack.c.l.b16 %v6636
    %v7249 = vunpack.c.h.b16 %v6636
    %v7250 = vunpack.c.l.b16 %v6637
    %v7251 = vunpack.c.h.b16 %v6637
    %v7252 = vunpack.c.l.b16 %v6638
    %v7253 = vunpack.c.h.b16 %v6638
    %v7254 = vunpack.c.l.b16 %v6639
    %v7255 = vunpack.c.h.b16 %v6639
    %v7256 = vunpack.c.l.b16 %v6640
    %v7257 = vunpack.c.h.b16 %v6640
    %v7258 = vunpack.c.l.b16 %v6641
    %v7259 = vunpack.c.h.b16 %v6641
    %v7260 = vunpack.c.l.b16 %v6642
    %v7261 = vunpack.c.h.b16 %v6642
    %v7262 = vunpack.c.l.b16 %v6643
    %v7263 = vunpack.c.h.b16 %v6643
    %v7264 = vunpack.c.l.b16 %v6644
    %v7265 = vunpack.c.h.b16 %v6644
    %v7266 = vunpack.c.l.b16 %v6645
    %v7267 = vunpack.c.h.b16 %v6645
    %v7268 = vunpack.c.l.b16 %v6646
    %v7269 = vunpack.c.h.b16 %v6646
    %v7270 = vunpack.c.l.b16 %v6647
    %v7271 = vunpack.c.h.b16 %v6647
    %v7272 = vunpack.c.l.b16 %v6648
    %v7273 = vunpack.c.h.b16 %v6648
    %v7274 = vunpack.c.l.b16 %v6649
    %v7275 = vunpack.c.h.b16 %v6649
    %v7276 = vunpack.c.l.b16 %v6650
    %v7277 = vunpack.c.h.b16 %v6650
    %v7278 = vunpack.c.l.b16 %v6651
    %v7279 = vunpack.c.h.b16 %v6651
    %v7280 = vunpack.c.l.b16 %v6652
    %v7281 = vunpack.c.h.b16 %v6652
    %v7282 = vunpack.c.l.b16 %v6653
    %v7283 = vunpack.c.h.b16 %v6653
    %v7284 = vunpack.c.l.b16 %v6654
    %v7285 = vunpack.c.h.b16 %v6654
    %v7286 = vunpack.c.l.b16 %v6655
    %v7287 = vunpack.c.h.b16 %v6655
    %v7288 = vunpack.c.l.b16 %v6656
    %v7289 = vunpack.c.h.b16 %v6656
    %v7290 = vunpack.c.l.b16 %v6657
    %v7291 = vunpack.c.h.b16 %v6657
    %v7292 = vunpack.c.l.b16 %v6658
    %v7293 = vunpack.c.h.b16 %v6658
    %v7294 = vunpack.c.l.b16 %v6659
    %v7295 = vunpack.c.h.b16 %v6659
    %v7296 = vunpack.c.l.b16 %v6660
    %v7297 = vunpack.c.h.b16 %v6660
    %v7298 = vunpack.c.l.b16 %v6661
    %v7299 = vunpack.c.h.b16 %v6661
    %v7300 = vunpack.c.l.b16 %v6662
    %v7301 = vunpack.c.h.b16 %v6662
    %v7302 = vunpack.c.l.b16 %v6663
    %v7303 = vunpack.c.h.b16 %v6663
    %v7304 = vunpack.c.l.b16 %v6664
    %v7305 = vunpack.c.h.b16 %v6664
    %v7306 = vunpack.c.l.b16 %v6665
    %v7307 = vunpack.c.h.b16 %v6665
    %v7308 = vunpack.c.l.b16 %v6666
    %v7309 = vunpack.c.h.b16 %v6666
    %v7310 = vunpack.c.l.b16 %v6667
    %v7311 = vunpack.c.h.b16 %v6667
    %v7312 = vunpack.c.l.b16 %v6668
    %v7313 = vunpack.c.h.b16 %v6668
    %v7314 = vunpack.c.l.b16 %v6669
    %v7315 = vunpack.c.h.b16 %v6669
    %v7316 = vunpack.c.l.b16 %v6670
    %v7317 = vunpack.c.h.b16 %v6670
    %v7318 = vunpack.c.l.b16 %v6671
    %v7319 = vunpack.c.h.b16 %v6671
    %v7320 = vunpack.c.l.b16 %v6672
    %v7321 = vunpack.c.h.b16 %v6672
    %v7322 = vunpack.c.l.b16 %v6673
    %v7323 = vunpack.c.h.b16 %v6673
    %v7324 = vunpack.c.l.b16 %v6674
    %v7325 = vunpack.c.h.b16 %v6674
    %v7326 = vunpack.c.l.b16 %v6675
    %v7327 = vunpack.c.h.b16 %v6675
    %v7328 = vunpack.c.l.b16 %v6676
    %v7329 = vunpack.c.h.b16 %v6676
    %v7330 = vunpack.c.l.b16 %v6677
    %v7331 = vunpack.c.h.b16 %v6677
    %v7332 = vunpack.c.l.b16 %v6678
    %v7333 = vunpack.c.h.b16 %v6678
    %v7334 = vunpack.c.l.b16 %v6679
    %v7335 = vunpack.c.h.b16 %v6679
    %v7336 = vunpack.c.l.b16 %v6680
    %v7337 = vunpack.c.h.b16 %v6680
    %v7338 = vunpack.c.l.b16 %v6681
    %v7339 = vunpack.c.h.b16 %v6681
    %v7340 = vunpack.c.l.b16 %v6682
    %v7341 = vunpack.c.h.b16 %v6682
    %v7342 = vunpack.c.l.b16 %v6683
    %v7343 = vunpack.c.h.b16 %v6683
    %v7344 = vunpack.c.l.b16 %v6684
    %v7345 = vunpack.c.h.b16 %v6684
    %v7346 = vunpack.c.l.b16 %v6685
    %v7347 = vunpack.c.h.b16 %v6685
    %v7348 = vunpack.c.l.b16 %v6686
    %v7349 = vunpack.c.h.b16 %v6686
    %v7350 = vunpack.c.l.b16 %v6687
    %v7351 = vunpack.c.h.b16 %v6687
    %v7352 = vunpack.c.l.b16 %v6688
    %v7353 = vunpack.c.h.b16 %v6688
    %v7354 = vunpack.c.l.b16 %v6689
    %v7355 = vunpack.c.h.b16 %v6689
    %v7356 = vunpack.c.l.b16 %v6690
    %v7357 = vunpack.c.h.b16 %v6690
    %v7358 = vunpack.c.l.b16 %v6691
    %v7359 = vunpack.c.h.b16 %v6691
    %v7360 = vunpack.c.l.b16 %v6692
    %v7361 = vunpack.c.h.b16 %v6692
    %v7362 = vunpack.c.l.b16 %v6693
    %v7363 = vunpack.c.h.b16 %v6693
    %v7364 = vunpack.c.l.b16 %v6694
    %v7365 = vunpack.c.h.b16 %v6694
    %v7366 = vunpack.c.l.b16 %v6695
    %v7367 = vunpack.c.h.b16 %v6695
    %v7368 = vunpack.c.l.b16 %v6696
    %v7369 = vunpack.c.h.b16 %v6696
    %v7370 = vunpack.c.l.b16 %v6697
    %v7371 = vunpack.c.h.b16 %v6697
    %v7372 = vunpack.c.l.b16 %v6698
    %v7373 = vunpack.c.h.b16 %v6698
    %v7374 = vunpack.c.l.b16 %v6699
    %v7375 = vunpack.c.h.b16 %v6699
    %v7376 = vunpack.c.l.b16 %v6700
    %v7377 = vunpack.c.h.b16 %v6700
    %v7378 = vunpack.c.l.b16 %v6701
    %v7379 = vunpack.c.h.b16 %v6701
    %v7380 = vunpack.c.l.b16 %v6702
    %v7381 = vunpack.c.h.b16 %v6702
    %v7382 = vunpack.c.l.b16 %v6703
    %v7383 = vunpack.c.h.b16 %v6703
    %v7384 = vunpack.c.l.b16 %v6704
    %v7385 = vunpack.c.h.b16 %v6704
    %v7386 = vunpack.c.l.b16 %v6705
    %v7387 = vunpack.c.h.b16 %v6705
    %v7388 = vunpack.c.l.b16 %v6706
    %v7389 = vunpack.c.h.b16 %v6706
    %v7390 = vunpack.c.l.b16 %v6707
    %v7391 = vunpack.c.h.b16 %v6707
    %v7392 = vunpack.c.l.b16 %v6708
    %v7393 = vunpack.c.h.b16 %v6708
    %v7394 = vunpack.c.l.b16 %v6709
    %v7395 = vunpack.c.h.b16 %v6709
    %v7396 = vunpack.c.l.b16 %v6710
    %v7397 = vunpack.c.h.b16 %v6710
    %v7398 = vunpack.c.l.b16 %v6711
    %v7399 = vunpack.c.h.b16 %v6711
    %v7400 = vunpack.c.l.b16 %v6712
    %v7401 = vunpack.c.h.b16 %v6712
    %v7402 = vunpack.c.l.b16 %v6713
    %v7403 = vunpack.c.h.b16 %v6713
    %v7404 = vunpack.c.l.b16 %v6714
    %v7405 = vunpack.c.h.b16 %v6714
    %v7406 = vunpack.c.l.b16 %v6715
    %v7407 = vunpack.c.h.b16 %v6715
    %v7408 = vunpack.c.l.b16 %v6716
    %v7409 = vunpack.c.h.b16 %v6716
    %v7410 = vunpack.c.l.b16 %v6717
    %v7411 = vunpack.c.h.b16 %v6717
    %v7412 = vunpack.c.l.b16 %v6718
    %v7413 = vunpack.c.h.b16 %v6718
    %v7414 = vunpack.c.l.b16 %v6719
    %v7415 = vunpack.c.h.b16 %v6719
    %v7416 = vunpack.c.l.b16 %v6720
    %v7417 = vunpack.c.h.b16 %v6720
    %v7418 = vunpack.c.l.b16 %v6721
    %v7419 = vunpack.c.h.b16 %v6721
    %v7420 = vunpack.c.l.b16 %v6722
    %v7421 = vunpack.c.h.b16 %v6722
    %v7422 = vunpack.c.l.b16 %v6723
    %v7423 = vunpack.c.h.b16 %v6723
    %v7424 = vunpack.c.l.b16 %v6724
    %v7425 = vunpack.c.h.b16 %v6724
    %v7426 = vunpack.c.l.b16 %v6725
    %v7427 = vunpack.c.h.b16 %v6725
    %v7428 = vunpack.c.l.b16 %v6726
    %v7429 = vunpack.c.h.b16 %v6726
    %v7430 = vunpack.c.l.b16 %v6727
    %v7431 = vunpack.c.h.b16 %v6727
    %v7432 = vunpack.c.l.b16 %v6728
    %v7433 = vunpack.c.h.b16 %v6728
    %v7434 = vunpack.c.l.b16 %v6729
    %v7435 = vunpack.c.h.b16 %v6729
    %v7436 = vunpack.c.l.b16 %v6730
    %v7437 = vunpack.c.h.b16 %v6730
    %v7438 = vunpack.c.l.b16 %v6731
    %v7439 = vunpack.c.h.b16 %v6731
    %v7440 = vunpack.c.l.b16 %v6732
    %v7441 = vunpack.c.h.b16 %v6732
    %v7442 = vunpack.c.l.b16 %v6733
    %v7443 = vunpack.c.h.b16 %v6733
    %v7444 = vunpack.c.l.b16 %v6734
    %v7445 = vunpack.c.h.b16 %v6734
    %v7446 = vunpack.c.l.b16 %v6735
    %v7447 = vunpack.c.h.b16 %v6735
    %v7448 = vunpack.c.l.b16 %v6736
    %v7449 = vunpack.c.h.b16 %v6736
    %v7450 = vunpack.c.l.b16 %v6737
    %v7451 = vunpack.c.h.b16 %v6737
    %v7452 = vunpack.c.l.b16 %v6738
    %v7453 = vunpack.c.h.b16 %v6738
    %v7454 = vunpack.c.l.b16 %v6739
    %v7455 = vunpack.c.h.b16 %v6739
    %v7456 = vunpack.c.l.b16 %v6740
    %v7457 = vunpack.c.h.b16 %v6740
    %v7458 = vunpack.c.l.b16 %v6741
    %v7459 = vunpack.c.h.b16 %v6741
    %v7460 = vunpack.c.l.b16 %v6742
    %v7461 = vunpack.c.h.b16 %v6742
    %v7462 = vunpack.c.l.b16 %v6743
    %v7463 = vunpack.c.h.b16 %v6743
    %v7464 = vunpack.c.l.b16 %v6744
    %v7465 = vunpack.c.h.b16 %v6744
    %v7466 = vunpack.c.l.b16 %v6745
    %v7467 = vunpack.c.h.b16 %v6745
    %v7468 = vunpack.c.l.b16 %v6746
    %v7469 = vunpack.c.h.b16 %v6746
    %v7470 = vunpack.c.l.b16 %v6747
    %v7471 = vunpack.c.h.b16 %v6747
    %v7472 = vunpack.c.l.b16 %v6748
    %v7473 = vunpack.c.h.b16 %v6748
    %v7474 = vunpack.c.l.b16 %v6749
    %v7475 = vunpack.c.h.b16 %v6749
    %v7476 = vunpack.c.l.b16 %v6750
    %v7477 = vunpack.c.h.b16 %v6750
    %v7478 = vunpack.c.l.b16 %v6751
    %v7479 = vunpack.c.h.b16 %v6751
    %v7480 = vunpack.c.l.b16 %v6752
    %v7481 = vunpack.c.h.b16 %v6752
    %v7482 = vunpack.c.l.b16 %v6753
    %v7483 = vunpack.c.h.b16 %v6753
    %v7484 = vunpack.c.l.b16 %v6754
    %v7485 = vunpack.c.h.b16 %v6754
    %v7486 = vunpack.c.l.b16 %v6755
    %v7487 = vunpack.c.h.b16 %v6755
    %v7488 = vunpack.c.l.b16 %v6756
    %v7489 = vunpack.c.h.b16 %v6756
    %v7490 = vunpack.c.l.b16 %v6757
    %v7491 = vunpack.c.h.b16 %v6757
    %v7492 = vunpack.c.l.b16 %v6758
    %v7493 = vunpack.c.h.b16 %v6758
    %v7494 = vunpack.c.l.b16 %v6759
    %v7495 = vunpack.c.h.b16 %v6759
    %v7496 = vunpack.c.l.b16 %v6760
    %v7497 = vunpack.c.h.b16 %v6760
    %v7498 = vunpack.c.l.b16 %v6761
    %v7499 = vunpack.c.h.b16 %v6761
    %v7500 = vunpack.c.l.b16 %v6762
    %v7501 = vunpack.c.h.b16 %v6762
    %v7502 = vunpack.c.l.b16 %v6763
    %v7503 = vunpack.c.h.b16 %v6763
    %v7504 = vunpack.c.l.b16 %v6764
    %v7505 = vunpack.c.h.b16 %v6764
    %v7506 = vunpack.c.l.b16 %v6765
    %v7507 = vunpack.c.h.b16 %v6765
    %v7508 = vunpack.c.l.b16 %v6766
    %v7509 = vunpack.c.h.b16 %v6766
    %v7510 = vunpack.c.l.b16 %v6767
    %v7511 = vunpack.c.h.b16 %v6767
    %v7512 = vunpack.c.l.b16 %v6768
    %v7513 = vunpack.c.h.b16 %v6768
    %v7514 = vunpack.c.l.b16 %v6769
    %v7515 = vunpack.c.h.b16 %v6769
    %v7516 = vunpack.c.l.b16 %v6770
    %v7517 = vunpack.c.h.b16 %v6770
    %v7518 = vunpack.c.l.b16 %v6771
    %v7519 = vunpack.c.h.b16 %v6771
    %v7520 = vunpack.c.l.b16 %v6772
    %v7521 = vunpack.c.h.b16 %v6772
    %v7522 = vunpack.c.l.b16 %v6773
    %v7523 = vunpack.c.h.b16 %v6773
    %v7524 = vunpack.c.l.b16 %v6774
    %v7525 = vunpack.c.h.b16 %v6774
    %v7526 = vunpack.c.l.b16 %v6775
    %v7527 = vunpack.c.h.b16 %v6775
    %v7528 = vunpack.c.l.b16 %v6776
    %v7529 = vunpack.c.h.b16 %v6776
    %v7530 = vunpack.c.l.b16 %v6777
    %v7531 = vunpack.c.h.b16 %v6777
    %v7532 = vunpack.c.l.b16 %v6778
    %v7533 = vunpack.c.h.b16 %v6778
    %v7534 = vunpack.c.l.b16 %v6779
    %v7535 = vunpack.c.h.b16 %v6779
    %v7536 = vunpack.c.l.b16 %v6780
    %v7537 = vunpack.c.h.b16 %v6780
    %v7538 = vunpack.c.l.b16 %v6781
    %v7539 = vunpack.c.h.b16 %v6781
    %v7540 = vunpack.c.l.b16 %v6782
    %v7541 = vunpack.c.h.b16 %v6782
    %v7542 = vunpack.c.l.b16 %v6783
    %v7543 = vunpack.c.h.b16 %v6783
    %v7544 = vunpack.c.l.b16 %v6784
    %v7545 = vunpack.c.h.b16 %v6784
    %v7546 = vunpack.c.l.b16 %v6785
    %v7547 = vunpack.c.h.b16 %v6785
    %v7548 = vunpack.c.l.b16 %v6786
    %v7549 = vunpack.c.h.b16 %v6786
    %v7550 = vunpack.c.l.b16 %v6787
    %v7551 = vunpack.c.h.b16 %v6787
    %v7552 = vunpack.c.l.b16 %v6788
    %v7553 = vunpack.c.h.b16 %v6788
    %v7554 = vunpack.c.l.b16 %v6789
    %v7555 = vunpack.c.h.b16 %v6789
    %v7556 = vunpack.c.l.b16 %v6790
    %v7557 = vunpack.c.h.b16 %v6790
    %v7558 = vunpack.c.l.b16 %v6791
    %v7559 = vunpack.c.h.b16 %v6791
    %v7560 = vunpack.c.l.b16 %v6792
    %v7561 = vunpack.c.h.b16 %v6792
    %v7562 = vunpack.c.l.b16 %v6793
    %v7563 = vunpack.c.h.b16 %v6793
    %v7564 = vunpack.c.l.b16 %v6794
    %v7565 = vunpack.c.h.b16 %v6794
    %v7566 = vunpack.c.l.b16 %v6795
    %v7567 = vunpack.c.h.b16 %v6795
    %v7568 = vunpack.c.l.b16 %v6796
    %v7569 = vunpack.c.h.b16 %v6796
    %v7570 = vunpack.c.l.b16 %v6797
    %v7571 = vunpack.c.h.b16 %v6797
    %v7572 = vunpack.c.l.b16 %v6798
    %v7573 = vunpack.c.h.b16 %v6798
    %v7574 = vunpack.c.l.b16 %v6799
    %v7575 = vunpack.c.h.b16 %v6799
    %v7576 = vunpack.c.l.b16 %v6800
    %v7577 = vunpack.c.h.b16 %v6800
    %v7578 = vunpack.c.l.b16 %v6801
    %v7579 = vunpack.c.h.b16 %v6801
    %v7580 = vunpack.c.l.b16 %v6802
    %v7581 = vunpack.c.h.b16 %v6802
    %v7582 = vunpack.c.l.b16 %v6803
    %v7583 = vunpack.c.h.b16 %v6803
    %v7584 = vunpack.c.l.b16 %v6804
    %v7585 = vunpack.c.h.b16 %v6804
    %v7586 = vunpack.c.l.b16 %v6805
    %v7587 = vunpack.c.h.b16 %v6805
    %v7588 = vunpack.c.l.b16 %v6806
    %v7589 = vunpack.c.h.b16 %v6806
    %v7590 = vunpack.c.l.b16 %v6807
    %v7591 = vunpack.c.h.b16 %v6807
    %v7592 = vunpack.c.l.b16 %v6808
    %v7593 = vunpack.c.h.b16 %v6808
    %v7594 = vunpack.c.l.b16 %v6809
    %v7595 = vunpack.c.h.b16 %v6809
    %v7596 = vunpack.c.l.b16 %v6810
    %v7597 = vunpack.c.h.b16 %v6810
    %v7598 = vunpack.c.l.b16 %v6811
    %v7599 = vunpack.c.h.b16 %v6811
    %v7600 = vunpack.c.l.b16 %v6812
    %v7601 = vunpack.c.h.b16 %v6812
    %v7602 = vunpack.c.l.b16 %v6813
    %v7603 = vunpack.c.h.b16 %v6813
    %v7604 = vunpack.c.l.b16 %v6814
    %v7605 = vunpack.c.h.b16 %v6814
    %v7606 = vunpack.c.l.b16 %v6815
    %v7607 = vunpack.c.h.b16 %v6815
    %v7608 = vunpack.c.l.b16 %v6816
    %v7609 = vunpack.c.h.b16 %v6816
    %v7610 = vunpack.c.l.b16 %v6817
    %v7611 = vunpack.c.h.b16 %v6817
    %v7612 = vunpack.c.l.b16 %v6818
    %v7613 = vunpack.c.h.b16 %v6818
    %v7614 = vunpack.c.l.b16 %v6819
    %v7615 = vunpack.c.h.b16 %v6819
    %v7616 = vunpack.c.l.b16 %v6820
    %v7617 = vunpack.c.h.b16 %v6820
    %v7618 = vunpack.c.l.b16 %v6821
    %v7619 = vunpack.c.h.b16 %v6821
    %v7620 = vunpack.c.l.b16 %v6822
    %v7621 = vunpack.c.h.b16 %v6822
    %v7622 = vunpack.c.l.b16 %v6823
    %v7623 = vunpack.c.h.b16 %v6823
    %v7624 = vunpack.c.l.b16 %v6824
    %v7625 = vunpack.c.h.b16 %v6824
    %v7626 = vunpack.c.l.b16 %v6825
    %v7627 = vunpack.c.h.b16 %v6825
    %v7628 = vunpack.c.l.b16 %v6826
    %v7629 = vunpack.c.h.b16 %v6826
    %v7630 = vunpack.c.l.b16 %v6827
    %v7631 = vunpack.c.h.b16 %v6827
    %v7632 = vunpack.c.l.b16 %v6828
    %v7633 = vunpack.c.h.b16 %v6828
    %v7634 = vunpack.c.l.b16 %v6829
    %v7635 = vunpack.c.h.b16 %v6829
    %v7636 = vunpack.c.l.b16 %v6830
    %v7637 = vunpack.c.h.b16 %v6830
    %v7638 = vunpack.c.l.b16 %v6831
    %v7639 = vunpack.c.h.b16 %v6831
    %v7640 = vunpack.c.l.b16 %v6832
    %v7641 = vunpack.c.h.b16 %v6832
    %v7642 = vunpack.c.l.b16 %v6833
    %v7643 = vunpack.c.h.b16 %v6833
    %v7644 = vunpack.c.l.b16 %v6834
    %v7645 = vunpack.c.h.b16 %v6834
    %v7646 = vunpack.c.l.b16 %v6835
    %v7647 = vunpack.c.h.b16 %v6835
    %v7648 = vunpack.c.l.b16 %v6836
    %v7649 = vunpack.c.h.b16 %v6836
    %v7650 = vunpack.c.l.b16 %v6837
    %v7651 = vunpack.c.h.b16 %v6837
    %v7652 = vpack.c.b16 %v7148, %v7140
    %v7653 = vpack.c.b16 %v7149, %v7141
    %v7654 = vpack.c.b16 %v7150, %v7142
    %v7655 = vpack.c.b16 %v7151, %v7143
    %v7656 = vpack.c.b16 %v7152, %v7144
    %v7657 = vpack.c.b16 %v7153, %v7145
    %v7658 = vpack.c.b16 %v7154, %v7146
    %v7659 = vpack.c.b16 %v7155, %v7147
    %v7660 = vpack.c.b16 %v7164, %v7156
    %v7661 = vpack.c.b16 %v7165, %v7157
    %v7662 = vpack.c.b16 %v7166, %v7158
    %v7663 = vpack.c.b16 %v7167, %v7159
    %v7664 = vpack.c.b16 %v7168, %v7160
    %v7665 = vpack.c.b16 %v7169, %v7161
    %v7666 = vpack.c.b16 %v7170, %v7162
    %v7667 = vpack.c.b16 %v7171, %v7163
    %v7668 = vpack.c.b16 %v7180, %v7172
    %v7669 = vpack.c.b16 %v7181, %v7173
    %v7670 = vpack.c.b16 %v7182, %v7174
    %v7671 = vpack.c.b16 %v7183, %v7175
    %v7672 = vpack.c.b16 %v7184, %v7176
    %v7673 = vpack.c.b16 %v7185, %v7177
    %v7674 = vpack.c.b16 %v7186, %v7178
    %v7675 = vpack.c.b16 %v7187, %v7179
    %v7676 = vpack.c.b16 %v7196, %v7188
    %v7677 = vpack.c.b16 %v7197, %v7189
    %v7678 = vpack.c.b16 %v7198, %v7190
    %v7679 = vpack.c.b16 %v7199, %v7191
    %v7680 = vpack.c.b16 %v7200, %v7192
    %v7681 = vpack.c.b16 %v7201, %v7193
    %v7682 = vpack.c.b16 %v7202, %v7194
    %v7683 = vpack.c.b16 %v7203, %v7195
    %v7684 = vpack.c.b16 %v7212, %v7204
    %v7685 = vpack.c.b16 %v7213, %v7205
    %v7686 = vpack.c.b16 %v7214, %v7206
    %v7687 = vpack.c.b16 %v7215, %v7207
    %v7688 = vpack.c.b16 %v7216, %v7208
    %v7689 = vpack.c.b16 %v7217, %v7209
    %v7690 = vpack.c.b16 %v7218, %v7210
    %v7691 = vpack.c.b16 %v7219, %v7211
    %v7692 = vpack.c.b16 %v7228, %v7220
    %v7693 = vpack.c.b16 %v7229, %v7221
    %v7694 = vpack.c.b16 %v7230, %v7222
    %v7695 = vpack.c.b16 %v7231, %v7223
    %v7696 = vpack.c.b16 %v7232, %v7224
    %v7697 = vpack.c.b16 %v7233, %v7225
    %v7698 = vpack.c.b16 %v7234, %v7226
    %v7699 = vpack.c.b16 %v7235, %v7227
    %v7700 = vpack.c.b16 %v7244, %v7236
    %v7701 = vpack.c.b16 %v7245, %v7237
    %v7702 = vpack.c.b16 %v7246, %v7238
    %v7703 = vpack.c.b16 %v7247, %v7239
    %v7704 = vpack.c.b16 %v7248, %v7240
    %v7705 = vpack.c.b16 %v7249, %v7241
    %v7706 = vpack.c.b16 %v7250, %v7242
    %v7707 = vpack.c.b16 %v7251, %v7243
    %v7708 = vpack.c.b16 %v7260, %v7252
    %v7709 = vpack.c.b16 %v7261, %v7253
    %v7710 = vpack.c.b16 %v7262, %v7254
    %v7711 = vpack.c.b16 %v7263, %v7255
    %v7712 = vpack.c.b16 %v7264, %v7256
    %v7713 = vpack.c.b16 %v7265, %v7257
    %v7714 = vpack.c.b16 %v7266, %v7258
    %v7715 = vpack.c.b16 %v7267, %v7259
    %v7716 = vpack.c.b16 %v7276, %v7268
    %v7717 = vpack.c.b16 %v7277, %v7269
    %v7718 = vpack.c.b16 %v7278, %v7270
    %v7719 = vpack.c.b16 %v7279, %v7271
    %v7720 = vpack.c.b16 %v7280, %v7272
    %v7721 = vpack.c.b16 %v7281, %v7273
    %v7722 = vpack.c.b16 %v7282, %v7274
    %v7723 = vpack.c.b16 %v7283, %v7275
    %v7724 = vpack.c.b16 %v7292, %v7284
    %v7725 = vpack.c.b16 %v7293, %v7285
    %v7726 = vpack.c.b16 %v7294, %v7286
    %v7727 = vpack.c.b16 %v7295, %v7287
    %v7728 = vpack.c.b16 %v7296, %v7288
    %v7729 = vpack.c.b16 %v7297, %v7289
    %v7730 = vpack.c.b16 %v7298, %v7290
    %v7731 = vpack.c.b16 %v7299, %v7291
    %v7732 = vpack.c.b16 %v7308, %v7300
    %v7733 = vpack.c.b16 %v7309, %v7301
    %v7734 = vpack.c.b16 %v7310, %v7302
    %v7735 = vpack.c.b16 %v7311, %v7303
    %v7736 = vpack.c.b16 %v7312, %v7304
    %v7737 = vpack.c.b16 %v7313, %v7305
    %v7738 = vpack.c.b16 %v7314, %v7306
    %v7739 = vpack.c.b16 %v7315, %v7307
    %v7740 = vpack.c.b16 %v7324, %v7316
    %v7741 = vpack.c.b16 %v7325, %v7317
    %v7742 = vpack.c.b16 %v7326, %v7318
    %v7743 = vpack.c.b16 %v7327, %v7319
    %v7744 = vpack.c.b16 %v7328, %v7320
    %v7745 = vpack.c.b16 %v7329, %v7321
    %v7746 = vpack.c.b16 %v7330, %v7322
    %v7747 = vpack.c.b16 %v7331, %v7323
    %v7748 = vpack.c.b16 %v7340, %v7332
    %v7749 = vpack.c.b16 %v7341, %v7333
    %v7750 = vpack.c.b16 %v7342, %v7334
    %v7751 = vpack.c.b16 %v7343, %v7335
    %v7752 = vpack.c.b16 %v7344, %v7336
    %v7753 = vpack.c.b16 %v7345, %v7337
    %v7754 = vpack.c.b16 %v7346, %v7338
    %v7755 = vpack.c.b16 %v7347, %v7339
    %v7756 = vpack.c.b16 %v7356, %v7348
    %v7757 = vpack.c.b16 %v7357, %v7349
    %v7758 = vpack.c.b16 %v7358, %v7350
    %v7759 = vpack.c.b16 %v7359, %v7351
    %v7760 = vpack.c.b16 %v7360, %v7352
    %v7761 = vpack.c.b16 %v7361, %v7353
    %v7762 = vpack.c.b16 %v7362, %v7354
    %v7763 = vpack.c.b16 %v7363, %v7355
    %v7764 = vpack.c.b16 %v7372, %v7364
    %v7765 = vpack.c.b16 %v7373, %v7365
    %v7766 = vpack.c.b16 %v7374, %v7366
    %v7767 = vpack.c.b16 %v7375, %v7367
    %v7768 = vpack.c.b16 %v7376, %v7368
    %v7769 = vpack.c.b16 %v7377, %v7369
    %v7770 = vpack.c.b16 %v7378, %v7370
    %v7771 = vpack.c.b16 %v7379, %v7371
    %v7772 = vpack.c.b16 %v7388, %v7380
    %v7773 = vpack.c.b16 %v7389, %v7381
    %v7774 = vpack.c.b16 %v7390, %v7382
    %v7775 = vpack.c.b16 %v7391, %v7383
    %v7776 = vpack.c.b16 %v7392, %v7384
    %v7777 = vpack.c.b16 %v7393, %v7385
    %v7778 = vpack.c.b16 %v7394, %v7386
    %v7779 = vpack.c.b16 %v7395, %v7387
    %v7780 = vpack.c.b16 %v7404, %v7396
    %v7781 = vpack.c.b16 %v7405, %v7397
    %v7782 = vpack.c.b16 %v7406, %v7398
    %v7783 = vpack.c.b16 %v7407, %v7399
    %v7784 = vpack.c.b16 %v7408, %v7400
    %v7785 = vpack.c.b16 %v7409, %v7401
    %v7786 = vpack.c.b16 %v7410, %v7402
    %v7787 = vpack.c.b16 %v7411, %v7403
    %v7788 = vpack.c.b16 %v7420, %v7412
    %v7789 = vpack.c.b16 %v7421, %v7413
    %v7790 = vpack.c.b16 %v7422, %v7414
    %v7791 = vpack.c.b16 %v7423, %v7415
    %v7792 = vpack.c.b16 %v7424, %v7416
    %v7793 = vpack.c.b16 %v7425, %v7417
    %v7794 = vpack.c.b16 %v7426, %v7418
    %v7795 = vpack.c.b16 %v7427, %v7419
    %v7796 = vpack.c.b16 %v7436, %v7428
    %v7797 = vpack.c.b16 %v7437, %v7429
    %v7798 = vpack.c.b16 %v7438, %v7430
    %v7799 = vpack.c.b16 %v7439, %v7431
    %v7800 = vpack.c.b16 %v7440, %v7432
    %v7801 = vpack.c.b16 %v7441, %v7433
    %v7802 = vpack.c.b16 %v7442, %v7434
    %v7803 = vpack.c.b16 %v7443, %v7435
    %v7804 = vpack.c.b16 %v7452, %v7444
    %v7805 = vpack.c.b16 %v7453, %v7445
    %v7806 = vpack.c.b16 %v7454, %v7446
    %v7807 = vpack.c.b16 %v7455, %v7447
    %v7808 = vpack.c.b16 %v7456, %v7448
    %v7809 = vpack.c.b16 %v7457, %v7449
    %v7810 = vpack.c.b16 %v7458, %v7450
    %v7811 = vpack.c.b16 %v7459, %v7451
    %v7812 = vpack.c.b16 %v7468, %v7460
    %v7813 = vpack.c.b16 %v7469, %v7461
    %v7814 = vpack.c.b16 %v7470, %v7462
    %v7815 = vpack.c.b16 %v7471, %v7463
    %v7816 = vpack.c.b16 %v7472, %v7464
    %v7817 = vpack.c.b16 %v7473, %v7465
    %v7818 = vpack.c.b16 %v7474, %v7466
    %v7819 = vpack.c.b16 %v7475, %v7467
    %v7820 = vpack.c.b16 %v7484, %v7476
    %v7821 = vpack.c.b16 %v7485, %v7477
    %v7822 = vpack.c.b16 %v7486, %v7478
    %v7823 = vpack.c.b16 %v7487, %v7479
    %v7824 = vpack.c.b16 %v7488, %v7480
    %v7825 = vpack.c.b16 %v7489, %v7481
    %v7826 = vpack.c.b16 %v7490, %v7482
    %v7827 = vpack.c.b16 %v7491, %v7483
    %v7828 = vpack.c.b16 %v7500, %v7492
    %v7829 = vpack.c.b16 %v7501, %v7493
    %v7830 = vpack.c.b16 %v7502, %v7494
    %v7831 = vpack.c.b16 %v7503, %v7495
    %v7832 = vpack.c.b16 %v7504, %v7496
    %v7833 = vpack.c.b16 %v7505, %v7497
    %v7834 = vpack.c.b16 %v7506, %v7498
    %v7835 = vpack.c.b16 %v7507, %v7499
    %v7836 = vpack.c.b16 %v7516, %v7508
    %v7837 = vpack.c.b16 %v7517, %v7509
    %v7838 = vpack.c.b16 %v7518, %v7510
    %v7839 = vpack.c.b16 %v7519, %v7511
    %v7840 = vpack.c.b16 %v7520, %v7512
    %v7841 = vpack.c.b16 %v7521, %v7513
    %v7842 = vpack.c.b16 %v7522, %v7514
    %v7843 = vpack.c.b16 %v7523, %v7515
    %v7844 = vpack.c.b16 %v7532, %v7524
    %v7845 = vpack.c.b16 %v7533, %v7525
    %v7846 = vpack.c.b16 %v7534, %v7526
    %v7847 = vpack.c.b16 %v7535, %v7527
    %v7848 = vpack.c.b16 %v7536, %v7528
    %v7849 = vpack.c.b16 %v7537, %v7529
    %v7850 = vpack.c.b16 %v7538, %v7530
    %v7851 = vpack.c.b16 %v7539, %v7531
    %v7852 = vpack.c.b16 %v7548, %v7540
    %v7853 = vpack.c.b16 %v7549, %v7541
    %v7854 = vpack.c.b16 %v7550, %v7542
    %v7855 = vpack.c.b16 %v7551, %v7543
    %v7856 = vpack.c.b16 %v7552, %v7544
    %v7857 = vpack.c.b16 %v7553, %v7545
    %v7858 = vpack.c.b16 %v7554, %v7546
    %v7859 = vpack.c.b16 %v7555, %v7547
    %v7860 = vpack.c.b16 %v7564, %v7556
    %v7861 = vpack.c.b16 %v7565, %v7557
    %v7862 = vpack.c.b16 %v7566, %v7558
    %v7863 = vpack.c.b16 %v7567, %v7559
    %v7864 = vpack.c.b16 %v7568, %v7560
    %v7865 = vpack.c.b16 %v7569, %v7561
    %v7866 = vpack.c.b16 %v7570, %v7562
    %v7867 = vpack.c.b16 %v7571, %v7563
    %v7868 = vpack.c.b16 %v7580, %v7572
    %v7869 = vpack.c.b16 %v7581, %v7573
    %v7870 = vpack.c.b16 %v7582, %v7574
    %v7871 = vpack.c.b16 %v7583, %v7575
    %v7872 = vpack.c.b16 %v7584, %v7576
    %v7873 = vpack.c.b16 %v7585, %v7577
    %v7874 = vpack.c.b16 %v7586, %v7578
    %v7875 = vpack.c.b16 %v7587, %v7579
    %v7876 = vpack.c.b16 %v7596, %v7588
    %v7877 = vpack.c.b16 %v7597, %v7589
    %v7878 = vpack.c.b16 %v7598, %v7590
    %v7879 = vpack.c.b16 %v7599, %v7591
    %v7880 = vpack.c.b16 %v7600, %v7592
    %v7881 = vpack.c.b16 %v7601, %v7593
    %v7882 = vpack.c.b16 %v7602, %v7594
    %v7883 = vpack.c.b16 %v7603, %v7595
    %v7884 = vpack.c.b16 %v7612, %v7604
    %v7885 = vpack.c.b16 %v7613, %v7605
    %v7886 = vpack.c.b16 %v7614, %v7606
    %v7887 = vpack.c.b16 %v7615, %v7607
    %v7888 = vpack.c.b16 %v7616, %v7608
    %v7889 = vpack.c.b16 %v7617, %v7609
    %v7890 = vpack.c.b16 %v7618, %v7610
    %v7891 = vpack.c.b16 %v7619, %v7611
    %v7892 = vpack.c.b16 %v7628, %v7620
    %v7893 = vpack.c.b16 %v7629, %v7621
    %v7894 = vpack.c.b16 %v7630, %v7622
    %v7895 = vpack.c.b16 %v7631, %v7623
    %v7896 = vpack.c.b16 %v7632, %v7624
    %v7897 = vpack.c.b16 %v7633, %v7625
    %v7898 = vpack.c.b16 %v7634, %v7626
    %v7899 = vpack.c.b16 %v7635, %v7627
    %v7900 = vpack.c.b16 %v7644, %v7636
    %v7901 = vpack.c.b16 %v7645, %v7637
    %v7902 = vpack.c.b16 %v7646, %v7638
    %v7903 = vpack.c.b16 %v7647, %v7639
    %v7904 = vpack.c.b16 %v7648, %v7640
    %v7905 = vpack.c.b16 %v7649, %v7641
    %v7906 = vpack.c.b16 %v7650, %v7642
    %v7907 = vpack.c.b16 %v7651, %v7643
    %8164 = vmatprep.subr.bf16.mxu0 %v7709
    %8165 = vmatpush1.bf16.msra.mxu0 %v7708
    %8166 = vmatprep.subr.bf16.mxu0 %v7701
    %8167 = vmatpush1.bf16.msra.mxu0 %v7700
    %8168 = vmatprep.subr.bf16.mxu0 %v7693
    %8169 = vmatpush1.bf16.msra.mxu0 %v7692
    %8170 = vmatprep.subr.bf16.mxu0 %v7685
    %8171 = vmatpush1.bf16.msra.mxu0 %v7684
    %8172 = vmatprep.subr.bf16.mxu0 %v7677
    %8173 = vmatpush1.bf16.msra.mxu0 %v7676
    %8174 = vmatprep.subr.bf16.mxu0 %v7669
    %8175 = vmatpush1.bf16.msra.mxu0 %v7668
    %8176 = vmatprep.subr.bf16.mxu0 %v7661
    %8177 = vmatpush1.bf16.msra.mxu0 %v7660
    %8178 = vmatprep.subr.bf16.mxu0 %v7653
    %8179 = vmatpush1.bf16.msra.mxu0 %v7652
    %8180 = vmatprep.subr.bf16.mxu0 %v7773
    %8181 = vmatpush2.bf16.msra.mxu0 %v7772
    %8182 = vmatprep.subr.bf16.mxu0 %v7765
    %8183 = vmatpush2.bf16.msra.mxu0 %v7764
    %8184 = vmatprep.subr.bf16.mxu0 %v7757
    %8185 = vmatpush2.bf16.msra.mxu0 %v7756
    %8186 = vmatprep.subr.bf16.mxu0 %v7749
    %8187 = vmatpush2.bf16.msra.mxu0 %v7748
    %8188 = vmatprep.subr.bf16.mxu0 %v7741
    %8189 = vmatpush2.bf16.msra.mxu0 %v7740
    %8190 = vmatprep.subr.bf16.mxu0 %v7733
    %8191 = vmatpush2.bf16.msra.mxu0 %v7732
    %8192 = vmatprep.subr.bf16.mxu0 %v7725
    %8193 = vmatpush2.bf16.msra.mxu0 %v7724
    %8194 = vmatprep.subr.bf16.mxu0 %v7717
    %8195 = vmatpush2.bf16.msra.mxu0 %v7716
    %8196 = vmatprep.mubr.bf16.mxu0 %v6840
    %8197 = vmatmul.mubr.bf16.gmra.mxu0 %v6839
    %v8198 = vpop.f32.mrf.mxu0
    %v8199 = vadd.f32 %v6847, %v8198
    %v8200 = vpop.f32.mrf.mxu0
    %v8201 = vadd.f32 %v6851, %v8200
    %v8202 = vpop.f32.mrf.mxu0
    %v8203 = vpop.f32.mrf.mxu0
    %8204 = vdwg.mxu0
    %8205 = vmatprep.subr.bf16.mxu0 %v7837
    %8206 = vmatpush1.bf16.msra.mxu0 %v7836
    %8207 = vmatprep.subr.bf16.mxu0 %v7829
    %8208 = vmatpush1.bf16.msra.mxu0 %v7828
    %8209 = vmatprep.subr.bf16.mxu0 %v7821
    %8210 = vmatpush1.bf16.msra.mxu0 %v7820
    %8211 = vmatprep.subr.bf16.mxu0 %v7813
    %8212 = vmatpush1.bf16.msra.mxu0 %v7812
    %8213 = vmatprep.subr.bf16.mxu0 %v7805
    %8214 = vmatpush1.bf16.msra.mxu0 %v7804
    %8215 = vmatprep.subr.bf16.mxu0 %v7797
    %8216 = vmatpush1.bf16.msra.mxu0 %v7796
    %8217 = vmatprep.subr.bf16.mxu0 %v7789
    %8218 = vmatpush1.bf16.msra.mxu0 %v7788
    %8219 = vmatprep.subr.bf16.mxu0 %v7781
    %8220 = vmatpush1.bf16.msra.mxu0 %v7780
    %8221 = vmatprep.subr.bf16.mxu0 %v7901
    %8222 = vmatpush2.bf16.msra.mxu0 %v7900
    %8223 = vmatprep.subr.bf16.mxu0 %v7893
    %8224 = vmatpush2.bf16.msra.mxu0 %v7892
    %8225 = vmatprep.subr.bf16.mxu0 %v7885
    %8226 = vmatpush2.bf16.msra.mxu0 %v7884
    %8227 = vmatprep.subr.bf16.mxu0 %v7877
    %8228 = vmatpush2.bf16.msra.mxu0 %v7876
    %8229 = vmatprep.subr.bf16.mxu0 %v7869
    %8230 = vmatpush2.bf16.msra.mxu0 %v7868
    %8231 = vmatprep.subr.bf16.mxu0 %v7861
    %8232 = vmatpush2.bf16.msra.mxu0 %v7860
    %8233 = vmatprep.subr.bf16.mxu0 %v7853
    %8234 = vmatpush2.bf16.msra.mxu0 %v7852
    %8235 = vmatprep.subr.bf16.mxu0 %v7845
    %8236 = vmatpush2.bf16.msra.mxu0 %v7844
    %8237 = vmatprep.mubr.bf16.mxu0 %v6842
    %8238 = vmatmul.mubr.bf16.gmra.mxu0 %v6841
    %v8239 = vpop.f32.mrf.mxu0
    %v8240 = vadd.f32 %v8199, %v8239
    %v8241 = vpop.f32.mrf.mxu0
    %v8242 = vadd.f32 %v8201, %v8241
    %v8243 = vpop.f32.mrf.mxu0
    %v8244 = vpop.f32.mrf.mxu0
    %8245 = vdwg.mxu0
    %8246 = vmatprep.subr.bf16.mxu0 %v7711
    %8247 = vmatpush1.bf16.msra.mxu0 %v7710
    %8248 = vmatprep.subr.bf16.mxu0 %v7703
    %8249 = vmatpush1.bf16.msra.mxu0 %v7702
    %8250 = vmatprep.subr.bf16.mxu0 %v7695
    %8251 = vmatpush1.bf16.msra.mxu0 %v7694
    %8252 = vmatprep.subr.bf16.mxu0 %v7687
    %8253 = vmatpush1.bf16.msra.mxu0 %v7686
    %8254 = vmatprep.subr.bf16.mxu0 %v7679
    %8255 = vmatpush1.bf16.msra.mxu0 %v7678
    %8256 = vmatprep.subr.bf16.mxu0 %v7671
    %8257 = vmatpush1.bf16.msra.mxu0 %v7670
    %8258 = vmatprep.subr.bf16.mxu0 %v7663
    %8259 = vmatpush1.bf16.msra.mxu0 %v7662
    %8260 = vmatprep.subr.bf16.mxu0 %v7655
    %8261 = vmatpush1.bf16.msra.mxu0 %v7654
    %8262 = vmatprep.subr.bf16.mxu0 %v7775
    %8263 = vmatpush2.bf16.msra.mxu0 %v7774
    %8264 = vmatprep.subr.bf16.mxu0 %v7767
    %8265 = vmatpush2.bf16.msra.mxu0 %v7766
    %8266 = vmatprep.subr.bf16.mxu0 %v7759
    %8267 = vmatpush2.bf16.msra.mxu0 %v7758
    %8268 = vmatprep.subr.bf16.mxu0 %v7751
    %8269 = vmatpush2.bf16.msra.mxu0 %v7750
    %8270 = vmatprep.subr.bf16.mxu0 %v7743
    %8271 = vmatpush2.bf16.msra.mxu0 %v7742
    %8272 = vmatprep.subr.bf16.mxu0 %v7735
    %8273 = vmatpush2.bf16.msra.mxu0 %v7734
    %8274 = vmatprep.subr.bf16.mxu0 %v7727
    %8275 = vmatpush2.bf16.msra.mxu0 %v7726
    %8276 = vmatprep.subr.bf16.mxu0 %v7719
    %8277 = vmatpush2.bf16.msra.mxu0 %v7718
    %8278 = vmatprep.mubr.bf16.mxu0 %v6840
    %8279 = vmatmul.mubr.bf16.gmra.mxu0 %v6839
    %v8280 = vpop.f32.mrf.mxu0
    %v8281 = vadd.f32 %v6855, %v8280
    %v8282 = vpop.f32.mrf.mxu0
    %v8283 = vadd.f32 %v6859, %v8282
    %v8284 = vpop.f32.mrf.mxu0
    %v8285 = vpop.f32.mrf.mxu0
    %8286 = vdwg.mxu0
    %8287 = vmatprep.subr.bf16.mxu0 %v7839
    %8288 = vmatpush1.bf16.msra.mxu0 %v7838
    %8289 = vmatprep.subr.bf16.mxu0 %v7831
    %8290 = vmatpush1.bf16.msra.mxu0 %v7830
    %8291 = vmatprep.subr.bf16.mxu0 %v7823
    %8292 = vmatpush1.bf16.msra.mxu0 %v7822
    %8293 = vmatprep.subr.bf16.mxu0 %v7815
    %8294 = vmatpush1.bf16.msra.mxu0 %v7814
    %8295 = vmatprep.subr.bf16.mxu0 %v7807
    %8296 = vmatpush1.bf16.msra.mxu0 %v7806
    %8297 = vmatprep.subr.bf16.mxu0 %v7799
    %8298 = vmatpush1.bf16.msra.mxu0 %v7798
    %8299 = vmatprep.subr.bf16.mxu0 %v7791
    %8300 = vmatpush1.bf16.msra.mxu0 %v7790
    %8301 = vmatprep.subr.bf16.mxu0 %v7783
    %8302 = vmatpush1.bf16.msra.mxu0 %v7782
    %8303 = vmatprep.subr.bf16.mxu0 %v7903
    %8304 = vmatpush2.bf16.msra.mxu0 %v7902
    %8305 = vmatprep.subr.bf16.mxu0 %v7895
    %8306 = vmatpush2.bf16.msra.mxu0 %v7894
    %8307 = vmatprep.subr.bf16.mxu0 %v7887
    %8308 = vmatpush2.bf16.msra.mxu0 %v7886
    %8309 = vmatprep.subr.bf16.mxu0 %v7879
    %8310 = vmatpush2.bf16.msra.mxu0 %v7878
    %8311 = vmatprep.subr.bf16.mxu0 %v7871
    %8312 = vmatpush2.bf16.msra.mxu0 %v7870
    %8313 = vmatprep.subr.bf16.mxu0 %v7863
    %8314 = vmatpush2.bf16.msra.mxu0 %v7862
    %8315 = vmatprep.subr.bf16.mxu0 %v7855
    %8316 = vmatpush2.bf16.msra.mxu0 %v7854
    %8317 = vmatprep.subr.bf16.mxu0 %v7847
    %8318 = vmatpush2.bf16.msra.mxu0 %v7846
    %8319 = vmatprep.mubr.bf16.mxu0 %v6842
    %8320 = vmatmul.mubr.bf16.gmra.mxu0 %v6841
    %v8321 = vpop.f32.mrf.mxu0
    %v8322 = vadd.f32 %v8281, %v8321
    %v8323 = vpop.f32.mrf.mxu0
    %v8324 = vadd.f32 %v8283, %v8323
    %v8325 = vpop.f32.mrf.mxu0
    %v8326 = vpop.f32.mrf.mxu0
    %8327 = vdwg.mxu0
    %8328 = vmatprep.subr.bf16.mxu0 %v7713
    %8329 = vmatpush1.bf16.msra.mxu0 %v7712
    %8330 = vmatprep.subr.bf16.mxu0 %v7705
    %8331 = vmatpush1.bf16.msra.mxu0 %v7704
    %8332 = vmatprep.subr.bf16.mxu0 %v7697
    %8333 = vmatpush1.bf16.msra.mxu0 %v7696
    %8334 = vmatprep.subr.bf16.mxu0 %v7689
    %8335 = vmatpush1.bf16.msra.mxu0 %v7688
    %8336 = vmatprep.subr.bf16.mxu0 %v7681
    %8337 = vmatpush1.bf16.msra.mxu0 %v7680
    %8338 = vmatprep.subr.bf16.mxu0 %v7673
    %8339 = vmatpush1.bf16.msra.mxu0 %v7672
    %8340 = vmatprep.subr.bf16.mxu0 %v7665
    %8341 = vmatpush1.bf16.msra.mxu0 %v7664
    %8342 = vmatprep.subr.bf16.mxu0 %v7657
    %8343 = vmatpush1.bf16.msra.mxu0 %v7656
    %8344 = vmatprep.subr.bf16.mxu0 %v7777
    %8345 = vmatpush2.bf16.msra.mxu0 %v7776
    %8346 = vmatprep.subr.bf16.mxu0 %v7769
    %8347 = vmatpush2.bf16.msra.mxu0 %v7768
    %8348 = vmatprep.subr.bf16.mxu0 %v7761
    %8349 = vmatpush2.bf16.msra.mxu0 %v7760
    %8350 = vmatprep.subr.bf16.mxu0 %v7753
    %8351 = vmatpush2.bf16.msra.mxu0 %v7752
    %8352 = vmatprep.subr.bf16.mxu0 %v7745
    %8353 = vmatpush2.bf16.msra.mxu0 %v7744
    %8354 = vmatprep.subr.bf16.mxu0 %v7737
    %8355 = vmatpush2.bf16.msra.mxu0 %v7736
    %8356 = vmatprep.subr.bf16.mxu0 %v7729
    %8357 = vmatpush2.bf16.msra.mxu0 %v7728
    %8358 = vmatprep.subr.bf16.mxu0 %v7721
    %8359 = vmatpush2.bf16.msra.mxu0 %v7720
    %8360 = vmatprep.mubr.bf16.mxu0 %v6840
    %8361 = vmatmul.mubr.bf16.gmra.mxu0 %v6839
    %v8362 = vpop.f32.mrf.mxu0
    %v8363 = vadd.f32 %v6863, %v8362
    %v8364 = vpop.f32.mrf.mxu0
    %v8365 = vadd.f32 %v6867, %v8364
    %v8366 = vpop.f32.mrf.mxu0
    %v8367 = vpop.f32.mrf.mxu0
    %8368 = vdwg.mxu0
    %8369 = vmatprep.subr.bf16.mxu0 %v7841
    %8370 = vmatpush1.bf16.msra.mxu0 %v7840
    %8371 = vmatprep.subr.bf16.mxu0 %v7833
    %8372 = vmatpush1.bf16.msra.mxu0 %v7832
    %8373 = vmatprep.subr.bf16.mxu0 %v7825
    %8374 = vmatpush1.bf16.msra.mxu0 %v7824
    %8375 = vmatprep.subr.bf16.mxu0 %v7817
    %8376 = vmatpush1.bf16.msra.mxu0 %v7816
    %8377 = vmatprep.subr.bf16.mxu0 %v7809
    %8378 = vmatpush1.bf16.msra.mxu0 %v7808
    %8379 = vmatprep.subr.bf16.mxu0 %v7801
    %8380 = vmatpush1.bf16.msra.mxu0 %v7800
    %8381 = vmatprep.subr.bf16.mxu0 %v7793
    %8382 = vmatpush1.bf16.msra.mxu0 %v7792
    %8383 = vmatprep.subr.bf16.mxu0 %v7785
    %8384 = vmatpush1.bf16.msra.mxu0 %v7784
    %8385 = vmatprep.subr.bf16.mxu0 %v7905
    %8386 = vmatpush2.bf16.msra.mxu0 %v7904
    %8387 = vmatprep.subr.bf16.mxu0 %v7897
    %8388 = vmatpush2.bf16.msra.mxu0 %v7896
    %8389 = vmatprep.subr.bf16.mxu0 %v7889
    %8390 = vmatpush2.bf16.msra.mxu0 %v7888
    %8391 = vmatprep.subr.bf16.mxu0 %v7881
    %8392 = vmatpush2.bf16.msra.mxu0 %v7880
    %8393 = vmatprep.subr.bf16.mxu0 %v7873
    %8394 = vmatpush2.bf16.msra.mxu0 %v7872
    %8395 = vmatprep.subr.bf16.mxu0 %v7865
    %8396 = vmatpush2.bf16.msra.mxu0 %v7864
    %8397 = vmatprep.subr.bf16.mxu0 %v7857
    %8398 = vmatpush2.bf16.msra.mxu0 %v7856
    %8399 = vmatprep.subr.bf16.mxu0 %v7849
    %8400 = vmatpush2.bf16.msra.mxu0 %v7848
    %8401 = vmatprep.mubr.bf16.mxu0 %v6842
    %8402 = vmatmul.mubr.bf16.gmra.mxu0 %v6841
    %v8403 = vpop.f32.mrf.mxu0
    %v8404 = vadd.f32 %v8363, %v8403
    %v8405 = vpop.f32.mrf.mxu0
    %v8406 = vadd.f32 %v8365, %v8405
    %v8407 = vpop.f32.mrf.mxu0
    %v8408 = vpop.f32.mrf.mxu0
    %8409 = vdwg.mxu0
    %8410 = vmatprep.subr.bf16.mxu0 %v7715
    %8411 = vmatpush1.bf16.msra.mxu0 %v7714
    %8412 = vmatprep.subr.bf16.mxu0 %v7707
    %8413 = vmatpush1.bf16.msra.mxu0 %v7706
    %8414 = vmatprep.subr.bf16.mxu0 %v7699
    %8415 = vmatpush1.bf16.msra.mxu0 %v7698
    %8416 = vmatprep.subr.bf16.mxu0 %v7691
    %8417 = vmatpush1.bf16.msra.mxu0 %v7690
    %8418 = vmatprep.subr.bf16.mxu0 %v7683
    %8419 = vmatpush1.bf16.msra.mxu0 %v7682
    %8420 = vmatprep.subr.bf16.mxu0 %v7675
    %8421 = vmatpush1.bf16.msra.mxu0 %v7674
    %8422 = vmatprep.subr.bf16.mxu0 %v7667
    %8423 = vmatpush1.bf16.msra.mxu0 %v7666
    %8424 = vmatprep.subr.bf16.mxu0 %v7659
    %8425 = vmatpush1.bf16.msra.mxu0 %v7658
    %8426 = vmatprep.subr.bf16.mxu0 %v7779
    %8427 = vmatpush2.bf16.msra.mxu0 %v7778
    %8428 = vmatprep.subr.bf16.mxu0 %v7771
    %8429 = vmatpush2.bf16.msra.mxu0 %v7770
    %8430 = vmatprep.subr.bf16.mxu0 %v7763
    %8431 = vmatpush2.bf16.msra.mxu0 %v7762
    %8432 = vmatprep.subr.bf16.mxu0 %v7755
    %8433 = vmatpush2.bf16.msra.mxu0 %v7754
    %8434 = vmatprep.subr.bf16.mxu0 %v7747
    %8435 = vmatpush2.bf16.msra.mxu0 %v7746
    %8436 = vmatprep.subr.bf16.mxu0 %v7739
    %8437 = vmatpush2.bf16.msra.mxu0 %v7738
    %8438 = vmatprep.subr.bf16.mxu0 %v7731
    %8439 = vmatpush2.bf16.msra.mxu0 %v7730
    %8440 = vmatprep.subr.bf16.mxu0 %v7723
    %8441 = vmatpush2.bf16.msra.mxu0 %v7722
    %8442 = vmatprep.mubr.bf16.mxu0 %v6840
    %8443 = vmatmul.mubr.bf16.gmra.mxu0 %v6839
    %v8444 = vpop.f32.mrf.mxu0
    %v8445 = vadd.f32 %v6871, %v8444
    %v8446 = vpop.f32.mrf.mxu0
    %v8447 = vadd.f32 %v6875, %v8446
    %v8448 = vpop.f32.mrf.mxu0
    %v8449 = vpop.f32.mrf.mxu0
    %8450 = vdwg.mxu0
    %8451 = vmatprep.subr.bf16.mxu0 %v7843
    %8452 = vmatpush1.bf16.msra.mxu0 %v7842
    %8453 = vmatprep.subr.bf16.mxu0 %v7835
    %8454 = vmatpush1.bf16.msra.mxu0 %v7834
    %8455 = vmatprep.subr.bf16.mxu0 %v7827
    %8456 = vmatpush1.bf16.msra.mxu0 %v7826
    %8457 = vmatprep.subr.bf16.mxu0 %v7819
    %8458 = vmatpush1.bf16.msra.mxu0 %v7818
    %8459 = vmatprep.subr.bf16.mxu0 %v7811
    %8460 = vmatpush1.bf16.msra.mxu0 %v7810
    %8461 = vmatprep.subr.bf16.mxu0 %v7803
    %8462 = vmatpush1.bf16.msra.mxu0 %v7802
    %8463 = vmatprep.subr.bf16.mxu0 %v7795
    %8464 = vmatpush1.bf16.msra.mxu0 %v7794
    %8465 = vmatprep.subr.bf16.mxu0 %v7787
    %8466 = vmatpush1.bf16.msra.mxu0 %v7786
    %8467 = vmatprep.subr.bf16.mxu0 %v7907
    %8468 = vmatpush2.bf16.msra.mxu0 %v7906
    %8469 = vmatprep.subr.bf16.mxu0 %v7899
    %8470 = vmatpush2.bf16.msra.mxu0 %v7898
    %8471 = vmatprep.subr.bf16.mxu0 %v7891
    %8472 = vmatpush2.bf16.msra.mxu0 %v7890
    %8473 = vmatprep.subr.bf16.mxu0 %v7883
    %8474 = vmatpush2.bf16.msra.mxu0 %v7882
    %8475 = vmatprep.subr.bf16.mxu0 %v7875
    %8476 = vmatpush2.bf16.msra.mxu0 %v7874
    %8477 = vmatprep.subr.bf16.mxu0 %v7867
    %8478 = vmatpush2.bf16.msra.mxu0 %v7866
    %8479 = vmatprep.subr.bf16.mxu0 %v7859
    %8480 = vmatpush2.bf16.msra.mxu0 %v7858
    %8481 = vmatprep.subr.bf16.mxu0 %v7851
    %8482 = vmatpush2.bf16.msra.mxu0 %v7850
    %8483 = vmatprep.mubr.bf16.mxu0 %v6842
    %8484 = vmatmul.mubr.bf16.gmra.mxu0 %v6841
    %v8485 = vpop.f32.mrf.mxu0
    %v8486 = vadd.f32 %v8445, %v8485
    %v8487 = vpop.f32.mrf.mxu0
    %v8488 = vadd.f32 %v8447, %v8487
    %v8489 = vpop.f32.mrf.mxu0
    %v8490 = vpop.f32.mrf.mxu0
    %8491 = vdwg.mxu0
    %vm8492 = vcmp.gt.f32.partialorder %v8240, 0.0
    %vm8493 = vcmp.gt.f32.partialorder %v8242, 0.0
    %vm8494 = vcmp.gt.f32.partialorder %v8322, 0.0
    %vm8495 = vcmp.gt.f32.partialorder %v8324, 0.0
    %vm8496 = vcmp.gt.f32.partialorder %v8404, 0.0
    %vm8497 = vcmp.gt.f32.partialorder %v8406, 0.0
    %vm8498 = vcmp.gt.f32.partialorder %v8486, 0.0
    %vm8499 = vcmp.gt.f32.partialorder %v8488, 0.0
    %v8500 = vmul.f32 %v8240, 0.01
    %v8501 = vmul.f32 %v8242, 0.01
    %v8502 = vmul.f32 %v8322, 0.01
    %v8503 = vmul.f32 %v8324, 0.01
    %v8504 = vmul.f32 %v8404, 0.01
    %v8505 = vmul.f32 %v8406, 0.01
    %v8506 = vmul.f32 %v8486, 0.01
    %v8507 = vmul.f32 %v8488, 0.01
    %v8508 = vsel %vm8492, %v8240, %v8500
    %v8509 = vsel %vm8493, %v8242, %v8501
    %v8510 = vsel %vm8494, %v8322, %v8502
    %v8511 = vsel %vm8495, %v8324, %v8503
    %v8512 = vsel %vm8496, %v8404, %v8504
    %v8513 = vsel %vm8497, %v8406, %v8505
    %v8514 = vsel %vm8498, %v8486, %v8506
    %v8515 = vsel %vm8499, %v8488, %v8507
    %v8516 = vld [vmem:[#allocation24] sm:$0xff]
    %v8517 = vld [vmem:[#allocation24 + $0x8] sm:$0xff]
    %v8518 = vld [vmem:[#allocation24 + $0x10] sm:$0xff]
    %v8519 = vld [vmem:[#allocation24 + $0x18] sm:$0xf]
    %v8520 = vld [vmem:[#allocation24 + $0x1c] sm:$0xff]
    %v8521 = vld [vmem:[#allocation24 + $0x24] sm:$0xff]
    %v8522 = vld [vmem:[#allocation24 + $0x2c] sm:$0xff]
    %v8523 = vld [vmem:[#allocation24 + $0x34] sm:$0xf]
    %v8524 = vld [vmem:[#allocation24 + $0x38] sm:$0xff]
    %v8525 = vld [vmem:[#allocation24 + $0x40] sm:$0xff]
    %v8526 = vld [vmem:[#allocation24 + $0x48] sm:$0xff]
    %v8527 = vld [vmem:[#allocation24 + $0x50] sm:$0xf]
    %v8528 = vld [vmem:[#allocation24 + $0x54] sm:$0xff]
    %v8529 = vld [vmem:[#allocation24 + $0x5c] sm:$0xff]
    %v8530 = vld [vmem:[#allocation24 + $0x64] sm:$0xff]
    %v8531 = vld [vmem:[#allocation24 + $0x6c] sm:$0xf]
    %v8532 = vld [vmem:[#allocation24 + $0x70] sm:$0xff]
    %v8533 = vld [vmem:[#allocation24 + $0x78] sm:$0xff]
    %v8534 = vld [vmem:[#allocation24 + $0x80] sm:$0xff]
    %v8535 = vld [vmem:[#allocation24 + $0x88] sm:$0xf]
    %v8536 = vld [vmem:[#allocation24 + $0x8c] sm:$0xff]
    %v8537 = vld [vmem:[#allocation24 + $0x94] sm:$0xff]
    %v8538 = vld [vmem:[#allocation24 + $0x9c] sm:$0xff]
    %v8539 = vld [vmem:[#allocation24 + $0xa4] sm:$0xf]
    %v8540 = vld [vmem:[#allocation24 + $0xa8] sm:$0xff]
    %v8541 = vld [vmem:[#allocation24 + $0xb0] sm:$0xff]
    %v8542 = vld [vmem:[#allocation24 + $0xb8] sm:$0xff]
    %v8543 = vld [vmem:[#allocation24 + $0xc0] sm:$0xf]
    %v8544 = vld [vmem:[#allocation24 + $0xc4] sm:$0xff]
    %v8545 = vld [vmem:[#allocation24 + $0xcc] sm:$0xff]
    %v8546 = vld [vmem:[#allocation24 + $0xd4] sm:$0xff]
    %v8547 = vld [vmem:[#allocation24 + $0xdc] sm:$0xf]
    %v8548 = vld [vmem:[#allocation24 + $0xe0] sm:$0xff]
    %v8549 = vld [vmem:[#allocation24 + $0xe8] sm:$0xff]
    %v8550 = vld [vmem:[#allocation24 + $0xf0] sm:$0xff]
    %v8551 = vld [vmem:[#allocation24 + $0xf8] sm:$0xf]
    %v8552 = vld [vmem:[#allocation24 + $0xfc] sm:$0xff]
    %v8553 = vld [vmem:[#allocation24 + $0x104] sm:$0xff]
    %v8554 = vld [vmem:[#allocation24 + $0x10c] sm:$0xff]
    %v8555 = vld [vmem:[#allocation24 + $0x114] sm:$0xf]
    %v8556 = vld [vmem:[#allocation24 + $0x118] sm:$0xff]
    %v8557 = vld [vmem:[#allocation24 + $0x120] sm:$0xff]
    %v8558 = vld [vmem:[#allocation24 + $0x128] sm:$0xff]
    %v8559 = vld [vmem:[#allocation24 + $0x130] sm:$0xf]
    %v8560 = vld [vmem:[#allocation24 + $0x134] sm:$0xff]
    %v8561 = vld [vmem:[#allocation24 + $0x13c] sm:$0xff]
    %v8562 = vld [vmem:[#allocation24 + $0x144] sm:$0xff]
    %v8563 = vld [vmem:[#allocation24 + $0x14c] sm:$0xf]
    %v8564 = vld [vmem:[#allocation24 + $0x150] sm:$0xff]
    %v8565 = vld [vmem:[#allocation24 + $0x158] sm:$0xff]
    %v8566 = vld [vmem:[#allocation24 + $0x160] sm:$0xff]
    %v8567 = vld [vmem:[#allocation24 + $0x168] sm:$0xf]
    %v8568 = vld [vmem:[#allocation24 + $0x16c] sm:$0xff]
    %v8569 = vld [vmem:[#allocation24 + $0x174] sm:$0xff]
    %v8570 = vld [vmem:[#allocation24 + $0x17c] sm:$0xff]
    %v8571 = vld [vmem:[#allocation24 + $0x184] sm:$0xf]
    %v8572 = vld [vmem:[#allocation24 + $0x188] sm:$0xff]
    %v8573 = vld [vmem:[#allocation24 + $0x190] sm:$0xff]
    %v8574 = vld [vmem:[#allocation24 + $0x198] sm:$0xff]
    %v8575 = vld [vmem:[#allocation24 + $0x1a0] sm:$0xf]
    %v8576 = vld [vmem:[#allocation24 + $0x1a4] sm:$0xff]
    %v8577 = vld [vmem:[#allocation24 + $0x1ac] sm:$0xff]
    %v8578 = vld [vmem:[#allocation24 + $0x1b4] sm:$0xff]
    %v8579 = vld [vmem:[#allocation24 + $0x1bc] sm:$0xf]
    %v8580 = vld [vmem:[#allocation24 + $0x1c0] sm:$0xff]
    %v8581 = vld [vmem:[#allocation24 + $0x1c8] sm:$0xff]
    %v8582 = vld [vmem:[#allocation24 + $0x1d0] sm:$0xff]
    %v8583 = vld [vmem:[#allocation24 + $0x1d8] sm:$0xf]
    %v8584 = vld [vmem:[#allocation24 + $0x1dc] sm:$0xff]
    %v8585 = vld [vmem:[#allocation24 + $0x1e4] sm:$0xff]
    %v8586 = vld [vmem:[#allocation24 + $0x1ec] sm:$0xff]
    %v8587 = vld [vmem:[#allocation24 + $0x1f4] sm:$0xf]
    %v8588 = vld [vmem:[#allocation24 + $0x1f8] sm:$0xff]
    %v8589 = vld [vmem:[#allocation24 + $0x200] sm:$0xff]
    %v8590 = vld [vmem:[#allocation24 + $0x208] sm:$0xff]
    %v8591 = vld [vmem:[#allocation24 + $0x210] sm:$0xf]
    %v8592 = vld [vmem:[#allocation24 + $0x214] sm:$0xff]
    %v8593 = vld [vmem:[#allocation24 + $0x21c] sm:$0xff]
    %v8594 = vld [vmem:[#allocation24 + $0x224] sm:$0xff]
    %v8595 = vld [vmem:[#allocation24 + $0x22c] sm:$0xf]
    %v8596 = vld [vmem:[#allocation24 + $0x230] sm:$0xff]
    %v8597 = vld [vmem:[#allocation24 + $0x238] sm:$0xff]
    %v8598 = vld [vmem:[#allocation24 + $0x240] sm:$0xff]
    %v8599 = vld [vmem:[#allocation24 + $0x248] sm:$0xf]
    %v8600 = vld [vmem:[#allocation24 + $0x24c] sm:$0xff]
    %v8601 = vld [vmem:[#allocation24 + $0x254] sm:$0xff]
    %v8602 = vld [vmem:[#allocation24 + $0x25c] sm:$0xff]
    %v8603 = vld [vmem:[#allocation24 + $0x264] sm:$0xf]
    %v8604 = vld [vmem:[#allocation24 + $0x268] sm:$0xff]
    %v8605 = vld [vmem:[#allocation24 + $0x270] sm:$0xff]
    %v8606 = vld [vmem:[#allocation24 + $0x278] sm:$0xff]
    %v8607 = vld [vmem:[#allocation24 + $0x280] sm:$0xf]
    %v8608 = vld [vmem:[#allocation24 + $0x284] sm:$0xff]
    %v8609 = vld [vmem:[#allocation24 + $0x28c] sm:$0xff]
    %v8610 = vld [vmem:[#allocation24 + $0x294] sm:$0xff]
    %v8611 = vld [vmem:[#allocation24 + $0x29c] sm:$0xf]
    %v8612 = vld [vmem:[#allocation24 + $0x2a0] sm:$0xff]
    %v8613 = vld [vmem:[#allocation24 + $0x2a8] sm:$0xff]
    %v8614 = vld [vmem:[#allocation24 + $0x2b0] sm:$0xff]
    %v8615 = vld [vmem:[#allocation24 + $0x2b8] sm:$0xf]
    %v8616 = vld [vmem:[#allocation24 + $0x2bc] sm:$0xff]
    %v8617 = vld [vmem:[#allocation24 + $0x2c4] sm:$0xff]
    %v8618 = vld [vmem:[#allocation24 + $0x2cc] sm:$0xff]
    %v8619 = vld [vmem:[#allocation24 + $0x2d4] sm:$0xf]
    %v8620 = vld [vmem:[#allocation24 + $0x2d8] sm:$0xff]
    %v8621 = vld [vmem:[#allocation24 + $0x2e0] sm:$0xff]
    %v8622 = vld [vmem:[#allocation24 + $0x2e8] sm:$0xff]
    %v8623 = vld [vmem:[#allocation24 + $0x2f0] sm:$0xf]
    %v8624 = vld [vmem:[#allocation24 + $0x2f4] sm:$0xff]
    %v8625 = vld [vmem:[#allocation24 + $0x2fc] sm:$0xff]
    %v8626 = vld [vmem:[#allocation24 + $0x304] sm:$0xff]
    %v8627 = vld [vmem:[#allocation24 + $0x30c] sm:$0xf]
    %v8628 = vld [vmem:[#allocation24 + $0x310] sm:$0xff]
    %v8629 = vld [vmem:[#allocation24 + $0x318] sm:$0xff]
    %v8630 = vld [vmem:[#allocation24 + $0x320] sm:$0xff]
    %v8631 = vld [vmem:[#allocation24 + $0x328] sm:$0xf]
    %v8632 = vld [vmem:[#allocation24 + $0x32c] sm:$0xff]
    %v8633 = vld [vmem:[#allocation24 + $0x334] sm:$0xff]
    %v8634 = vld [vmem:[#allocation24 + $0x33c] sm:$0xff]
    %v8635 = vld [vmem:[#allocation24 + $0x344] sm:$0xf]
    %v8636 = vld [vmem:[#allocation24 + $0x348] sm:$0xff]
    %v8637 = vld [vmem:[#allocation24 + $0x350] sm:$0xff]
    %v8638 = vld [vmem:[#allocation24 + $0x358] sm:$0xff]
    %v8639 = vld [vmem:[#allocation24 + $0x360] sm:$0xf]
    %v8640 = vld [vmem:[#allocation24 + $0x364] sm:$0xff]
    %v8641 = vld [vmem:[#allocation24 + $0x36c] sm:$0xff]
    %v8642 = vld [vmem:[#allocation24 + $0x374] sm:$0xff]
    %v8643 = vld [vmem:[#allocation24 + $0x37c] sm:$0xf]
    %v8644 = vld [vmem:[#allocation24 + $0x380] sm:$0xff]
    %v8645 = vld [vmem:[#allocation24 + $0x388] sm:$0xff]
    %v8646 = vld [vmem:[#allocation24 + $0x390] sm:$0xff]
    %v8647 = vld [vmem:[#allocation24 + $0x398] sm:$0xf]
    %v8648 = vld [vmem:[#allocation24 + $0x39c] sm:$0xff]
    %v8649 = vld [vmem:[#allocation24 + $0x3a4] sm:$0xff]
    %v8650 = vld [vmem:[#allocation24 + $0x3ac] sm:$0xff]
    %v8651 = vld [vmem:[#allocation24 + $0x3b4] sm:$0xf]
    %v8652 = vld [vmem:[#allocation24 + $0x3b8] sm:$0xff]
    %v8653 = vld [vmem:[#allocation24 + $0x3c0] sm:$0xff]
    %v8654 = vld [vmem:[#allocation24 + $0x3c8] sm:$0xff]
    %v8655 = vld [vmem:[#allocation24 + $0x3d0] sm:$0xf]
    %v8656 = vld [vmem:[#allocation24 + $0x3d4] sm:$0xff]
    %v8657 = vld [vmem:[#allocation24 + $0x3dc] sm:$0xff]
    %v8658 = vld [vmem:[#allocation24 + $0x3e4] sm:$0xff]
    %v8659 = vld [vmem:[#allocation24 + $0x3ec] sm:$0xf]
    %v8660 = vld [vmem:[#allocation24 + $0x3f0] sm:$0xff]
    %v8661 = vld [vmem:[#allocation24 + $0x3f8] sm:$0xff]
    %v8662 = vld [vmem:[#allocation24 + $0x400] sm:$0xff]
    %v8663 = vld [vmem:[#allocation24 + $0x408] sm:$0xf]
    %v8664 = vld [vmem:[#allocation24 + $0x40c] sm:$0xff]
    %v8665 = vld [vmem:[#allocation24 + $0x414] sm:$0xff]
    %v8666 = vld [vmem:[#allocation24 + $0x41c] sm:$0xff]
    %v8667 = vld [vmem:[#allocation24 + $0x424] sm:$0xf]
    %v8668 = vld [vmem:[#allocation24 + $0x428] sm:$0xff]
    %v8669 = vld [vmem:[#allocation24 + $0x430] sm:$0xff]
    %v8670 = vld [vmem:[#allocation24 + $0x438] sm:$0xff]
    %v8671 = vld [vmem:[#allocation24 + $0x440] sm:$0xf]
    %v8672 = vld [vmem:[#allocation24 + $0x444] sm:$0xff]
    %v8673 = vld [vmem:[#allocation24 + $0x44c] sm:$0xff]
    %v8674 = vld [vmem:[#allocation24 + $0x454] sm:$0xff]
    %v8675 = vld [vmem:[#allocation24 + $0x45c] sm:$0xf]
    %v8676 = vld [vmem:[#allocation24 + $0x460] sm:$0xff]
    %v8677 = vld [vmem:[#allocation24 + $0x468] sm:$0xff]
    %v8678 = vld [vmem:[#allocation24 + $0x470] sm:$0xff]
    %v8679 = vld [vmem:[#allocation24 + $0x478] sm:$0xf]
    %v8680 = vld [vmem:[#allocation24 + $0x47c] sm:$0xff]
    %v8681 = vld [vmem:[#allocation24 + $0x484] sm:$0xff]
    %v8682 = vld [vmem:[#allocation24 + $0x48c] sm:$0xff]
    %v8683 = vld [vmem:[#allocation24 + $0x494] sm:$0xf]
    %v8684 = vld [vmem:[#allocation24 + $0x498] sm:$0xff]
    %v8685 = vld [vmem:[#allocation24 + $0x4a0] sm:$0xff]
    %v8686 = vld [vmem:[#allocation24 + $0x4a8] sm:$0xff]
    %v8687 = vld [vmem:[#allocation24 + $0x4b0] sm:$0xf]
    %v8688 = vld [vmem:[#allocation24 + $0x4b4] sm:$0xff]
    %v8689 = vld [vmem:[#allocation24 + $0x4bc] sm:$0xff]
    %v8690 = vld [vmem:[#allocation24 + $0x4c4] sm:$0xff]
    %v8691 = vld [vmem:[#allocation24 + $0x4cc] sm:$0xf]
    %v8692 = vld [vmem:[#allocation24 + $0x4d0] sm:$0xff]
    %v8693 = vld [vmem:[#allocation24 + $0x4d8] sm:$0xff]
    %v8694 = vld [vmem:[#allocation24 + $0x4e0] sm:$0xff]
    %v8695 = vld [vmem:[#allocation24 + $0x4e8] sm:$0xf]
    %v8696 = vld [vmem:[#allocation24 + $0x4ec] sm:$0xff]
    %v8697 = vld [vmem:[#allocation24 + $0x4f4] sm:$0xff]
    %v8698 = vld [vmem:[#allocation24 + $0x4fc] sm:$0xff]
    %v8699 = vld [vmem:[#allocation24 + $0x504] sm:$0xf]
    %v8700 = vld [vmem:[#allocation24 + $0x508] sm:$0xff]
    %v8701 = vld [vmem:[#allocation24 + $0x510] sm:$0xff]
    %v8702 = vld [vmem:[#allocation24 + $0x518] sm:$0xff]
    %v8703 = vld [vmem:[#allocation24 + $0x520] sm:$0xf]
    %v8704 = vld [vmem:[#allocation24 + $0x524] sm:$0xff]
    %v8705 = vld [vmem:[#allocation24 + $0x52c] sm:$0xff]
    %v8706 = vld [vmem:[#allocation24 + $0x534] sm:$0xff]
    %v8707 = vld [vmem:[#allocation24 + $0x53c] sm:$0xf]
    %v8708 = vld [vmem:[#allocation24 + $0x540] sm:$0xff]
    %v8709 = vld [vmem:[#allocation24 + $0x548] sm:$0xff]
    %v8710 = vld [vmem:[#allocation24 + $0x550] sm:$0xff]
    %v8711 = vld [vmem:[#allocation24 + $0x558] sm:$0xf]
    %v8712 = vld [vmem:[#allocation24 + $0x55c] sm:$0xff]
    %v8713 = vld [vmem:[#allocation24 + $0x564] sm:$0xff]
    %v8714 = vld [vmem:[#allocation24 + $0x56c] sm:$0xff]
    %v8715 = vld [vmem:[#allocation24 + $0x574] sm:$0xf]
    %v8716 = vld [vmem:[#allocation24 + $0x578] sm:$0xff]
    %v8717 = vld [vmem:[#allocation24 + $0x580] sm:$0xff]
    %v8718 = vld [vmem:[#allocation24 + $0x588] sm:$0xff]
    %v8719 = vld [vmem:[#allocation24 + $0x590] sm:$0xf]
    %v8720 = vld [vmem:[#allocation24 + $0x594] sm:$0xff]
    %v8721 = vld [vmem:[#allocation24 + $0x59c] sm:$0xff]
    %v8722 = vld [vmem:[#allocation24 + $0x5a4] sm:$0xff]
    %v8723 = vld [vmem:[#allocation24 + $0x5ac] sm:$0xf]
    %v8724 = vld [vmem:[#allocation24 + $0x5b0] sm:$0xff]
    %v8725 = vld [vmem:[#allocation24 + $0x5b8] sm:$0xff]
    %v8726 = vld [vmem:[#allocation24 + $0x5c0] sm:$0xff]
    %v8727 = vld [vmem:[#allocation24 + $0x5c8] sm:$0xf]
    %v8728 = vld [vmem:[#allocation24 + $0x5cc] sm:$0xff]
    %v8729 = vld [vmem:[#allocation24 + $0x5d4] sm:$0xff]
    %v8730 = vld [vmem:[#allocation24 + $0x5dc] sm:$0xff]
    %v8731 = vld [vmem:[#allocation24 + $0x5e4] sm:$0xf]
    %v8732 = vld [vmem:[#allocation24 + $0x5e8] sm:$0xff]
    %v8733 = vld [vmem:[#allocation24 + $0x5f0] sm:$0xff]
    %v8734 = vld [vmem:[#allocation24 + $0x5f8] sm:$0xff]
    %v8735 = vld [vmem:[#allocation24 + $0x600] sm:$0xf]
    %v8736 = vld [vmem:[#allocation24 + $0x604] sm:$0xff]
    %v8737 = vld [vmem:[#allocation24 + $0x60c] sm:$0xff]
    %v8738 = vld [vmem:[#allocation24 + $0x614] sm:$0xff]
    %v8739 = vld [vmem:[#allocation24 + $0x61c] sm:$0xf]
    %v8740 = vld [vmem:[#allocation24 + $0x620] sm:$0xff]
    %v8741 = vld [vmem:[#allocation24 + $0x628] sm:$0xff]
    %v8742 = vld [vmem:[#allocation24 + $0x630] sm:$0xff]
    %v8743 = vld [vmem:[#allocation24 + $0x638] sm:$0xf]
    %v8744 = vld [vmem:[#allocation24 + $0x63c] sm:$0xff]
    %v8745 = vld [vmem:[#allocation24 + $0x644] sm:$0xff]
    %v8746 = vld [vmem:[#allocation24 + $0x64c] sm:$0xff]
    %v8747 = vld [vmem:[#allocation24 + $0x654] sm:$0xf]
    %v8748 = vld [vmem:[#allocation24 + $0x658] sm:$0xff]
    %v8749 = vld [vmem:[#allocation24 + $0x660] sm:$0xff]
    %v8750 = vld [vmem:[#allocation24 + $0x668] sm:$0xff]
    %v8751 = vld [vmem:[#allocation24 + $0x670] sm:$0xf]
    %v8752 = vld [vmem:[#allocation24 + $0x674] sm:$0xff]
    %v8753 = vld [vmem:[#allocation24 + $0x67c] sm:$0xff]
    %v8754 = vld [vmem:[#allocation24 + $0x684] sm:$0xff]
    %v8755 = vld [vmem:[#allocation24 + $0x68c] sm:$0xf]
    %v8756 = vld [vmem:[#allocation24 + $0x690] sm:$0xff]
    %v8757 = vld [vmem:[#allocation24 + $0x698] sm:$0xff]
    %v8758 = vld [vmem:[#allocation24 + $0x6a0] sm:$0xff]
    %v8759 = vld [vmem:[#allocation24 + $0x6a8] sm:$0xf]
    %v8760 = vld [vmem:[#allocation24 + $0x6ac] sm:$0xff]
    %v8761 = vld [vmem:[#allocation24 + $0x6b4] sm:$0xff]
    %v8762 = vld [vmem:[#allocation24 + $0x6bc] sm:$0xff]
    %v8763 = vld [vmem:[#allocation24 + $0x6c4] sm:$0xf]
    %v8764 = vld [vmem:[#allocation24 + $0x6c8] sm:$0xff]
    %v8765 = vld [vmem:[#allocation24 + $0x6d0] sm:$0xff]
    %v8766 = vld [vmem:[#allocation24 + $0x6d8] sm:$0xff]
    %v8767 = vld [vmem:[#allocation24 + $0x6e0] sm:$0xf]
    %v8768 = vld [vmem:[#allocation24 + $0x6e4] sm:$0xff]
    %v8769 = vld [vmem:[#allocation24 + $0x6ec] sm:$0xff]
    %v8770 = vld [vmem:[#allocation24 + $0x6f4] sm:$0xff]
    %v8771 = vld [vmem:[#allocation24 + $0x6fc] sm:$0xf]
    %v8772 = vld [vmem:[#allocation24 + $0x700] sm:$0xff]
    %v8773 = vld [vmem:[#allocation24 + $0x708] sm:$0xff]
    %v8774 = vld [vmem:[#allocation24 + $0x710] sm:$0xff]
    %v8775 = vld [vmem:[#allocation24 + $0x718] sm:$0xf]
    %v8776 = vld [vmem:[#allocation24 + $0x71c] sm:$0xff]
    %v8777 = vld [vmem:[#allocation24 + $0x724] sm:$0xff]
    %v8778 = vld [vmem:[#allocation24 + $0x72c] sm:$0xff]
    %v8779 = vld [vmem:[#allocation24 + $0x734] sm:$0xf]
    %v8780 = vld [vmem:[#allocation24 + $0x738] sm:$0xff]
    %v8781 = vld [vmem:[#allocation24 + $0x740] sm:$0xff]
    %v8782 = vld [vmem:[#allocation24 + $0x748] sm:$0xff]
    %v8783 = vld [vmem:[#allocation24 + $0x750] sm:$0xf]
    %v8784 = vld [vmem:[#allocation24 + $0x754] sm:$0xff]
    %v8785 = vld [vmem:[#allocation24 + $0x75c] sm:$0xff]
    %v8786 = vld [vmem:[#allocation24 + $0x764] sm:$0xff]
    %v8787 = vld [vmem:[#allocation24 + $0x76c] sm:$0xf]
    %v8788 = vld [vmem:[#allocation24 + $0x770] sm:$0xff]
    %v8789 = vld [vmem:[#allocation24 + $0x778] sm:$0xff]
    %v8790 = vld [vmem:[#allocation24 + $0x780] sm:$0xff]
    %v8791 = vld [vmem:[#allocation24 + $0x788] sm:$0xf]
    %v8792 = vld [vmem:[#allocation24 + $0x78c] sm:$0xff]
    %v8793 = vld [vmem:[#allocation24 + $0x794] sm:$0xff]
    %v8794 = vld [vmem:[#allocation24 + $0x79c] sm:$0xff]
    %v8795 = vld [vmem:[#allocation24 + $0x7a4] sm:$0xf]
    %v8796 = vld [vmem:[#allocation24 + $0x7a8] sm:$0xff]
    %v8797 = vld [vmem:[#allocation24 + $0x7b0] sm:$0xff]
    %v8798 = vld [vmem:[#allocation24 + $0x7b8] sm:$0xff]
    %v8799 = vld [vmem:[#allocation24 + $0x7c0] sm:$0xf]
    %v8800 = vld [vmem:[#allocation24 + $0x7c4] sm:$0xff]
    %v8801 = vld [vmem:[#allocation24 + $0x7cc] sm:$0xff]
    %v8802 = vld [vmem:[#allocation24 + $0x7d4] sm:$0xff]
    %v8803 = vld [vmem:[#allocation24 + $0x7dc] sm:$0xf]
    %v8804 = vld [vmem:[#allocation24 + $0x7e0] sm:$0xff]
    %v8805 = vld [vmem:[#allocation24 + $0x7e8] sm:$0xff]
    %v8806 = vld [vmem:[#allocation24 + $0x7f0] sm:$0xff]
    %v8807 = vld [vmem:[#allocation24 + $0x7f8] sm:$0xf]
    %v8808 = vld [vmem:[#allocation24 + $0x7fc] sm:$0xff]
    %v8809 = vld [vmem:[#allocation24 + $0x804] sm:$0xff]
    %v8810 = vld [vmem:[#allocation24 + $0x80c] sm:$0xff]
    %v8811 = vld [vmem:[#allocation24 + $0x814] sm:$0xf]
    %v8812 = vld [vmem:[#allocation24 + $0x818] sm:$0xff]
    %v8813 = vld [vmem:[#allocation24 + $0x820] sm:$0xff]
    %v8814 = vld [vmem:[#allocation24 + $0x828] sm:$0xff]
    %v8815 = vld [vmem:[#allocation24 + $0x830] sm:$0xf]
    %v8816 = vld [vmem:[#allocation24 + $0x834] sm:$0xff]
    %v8817 = vld [vmem:[#allocation24 + $0x83c] sm:$0xff]
    %v8818 = vld [vmem:[#allocation24 + $0x844] sm:$0xff]
    %v8819 = vld [vmem:[#allocation24 + $0x84c] sm:$0xf]
    %v8820 = vld [vmem:[#allocation24 + $0x850] sm:$0xff]
    %v8821 = vld [vmem:[#allocation24 + $0x858] sm:$0xff]
    %v8822 = vld [vmem:[#allocation24 + $0x860] sm:$0xff]
    %v8823 = vld [vmem:[#allocation24 + $0x868] sm:$0xf]
    %v8824 = vld [vmem:[#allocation24 + $0x86c] sm:$0xff]
    %v8825 = vld [vmem:[#allocation24 + $0x874] sm:$0xff]
    %v8826 = vld [vmem:[#allocation24 + $0x87c] sm:$0xff]
    %v8827 = vld [vmem:[#allocation24 + $0x884] sm:$0xf]
    %v8828 = vld [vmem:[#allocation24 + $0x888] sm:$0xff]
    %v8829 = vld [vmem:[#allocation24 + $0x890] sm:$0xff]
    %v8830 = vld [vmem:[#allocation24 + $0x898] sm:$0xff]
    %v8831 = vld [vmem:[#allocation24 + $0x8a0] sm:$0xf]
    %v8832 = vld [vmem:[#allocation24 + $0x8a4] sm:$0xff]
    %v8833 = vld [vmem:[#allocation24 + $0x8ac] sm:$0xff]
    %v8834 = vld [vmem:[#allocation24 + $0x8b4] sm:$0xff]
    %v8835 = vld [vmem:[#allocation24 + $0x8bc] sm:$0xf]
    %v8836 = vld [vmem:[#allocation24 + $0x8c0] sm:$0xff]
    %v8837 = vld [vmem:[#allocation24 + $0x8c8] sm:$0xff]
    %v8838 = vld [vmem:[#allocation24 + $0x8d0] sm:$0xff]
    %v8839 = vld [vmem:[#allocation24 + $0x8d8] sm:$0xf]
    %v8840 = vld [vmem:[#allocation24 + $0x8dc] sm:$0xff]
    %v8841 = vld [vmem:[#allocation24 + $0x8e4] sm:$0xff]
    %v8842 = vld [vmem:[#allocation24 + $0x8ec] sm:$0xff]
    %v8843 = vld [vmem:[#allocation24 + $0x8f4] sm:$0xf]
    %v8844 = vld [vmem:[#allocation24 + $0x8f8] sm:$0xff]
    %v8845 = vld [vmem:[#allocation24 + $0x900] sm:$0xff]
    %v8846 = vld [vmem:[#allocation24 + $0x908] sm:$0xff]
    %v8847 = vld [vmem:[#allocation24 + $0x910] sm:$0xf]
    %v8848 = vld [vmem:[#allocation24 + $0x914] sm:$0xff]
    %v8849 = vld [vmem:[#allocation24 + $0x91c] sm:$0xff]
    %v8850 = vld [vmem:[#allocation24 + $0x924] sm:$0xff]
    %v8851 = vld [vmem:[#allocation24 + $0x92c] sm:$0xf]
    %v8852 = vld [vmem:[#allocation24 + $0x930] sm:$0xff]
    %v8853 = vld [vmem:[#allocation24 + $0x938] sm:$0xff]
    %v8854 = vld [vmem:[#allocation24 + $0x940] sm:$0xff]
    %v8855 = vld [vmem:[#allocation24 + $0x948] sm:$0xf]
    %v8856 = vld [vmem:[#allocation24 + $0x94c] sm:$0xff]
    %v8857 = vld [vmem:[#allocation24 + $0x954] sm:$0xff]
    %v8858 = vld [vmem:[#allocation24 + $0x95c] sm:$0xff]
    %v8859 = vld [vmem:[#allocation24 + $0x964] sm:$0xf]
    %v8860 = vld [vmem:[#allocation24 + $0x968] sm:$0xff]
    %v8861 = vld [vmem:[#allocation24 + $0x970] sm:$0xff]
    %v8862 = vld [vmem:[#allocation24 + $0x978] sm:$0xff]
    %v8863 = vld [vmem:[#allocation24 + $0x980] sm:$0xf]
    %v8864 = vld [vmem:[#allocation24 + $0x984] sm:$0xff]
    %v8865 = vld [vmem:[#allocation24 + $0x98c] sm:$0xff]
    %v8866 = vld [vmem:[#allocation24 + $0x994] sm:$0xff]
    %v8867 = vld [vmem:[#allocation24 + $0x99c] sm:$0xf]
    %v8868 = vld [vmem:[#allocation24 + $0x9a0] sm:$0xff]
    %v8869 = vld [vmem:[#allocation24 + $0x9a8] sm:$0xff]
    %v8870 = vld [vmem:[#allocation24 + $0x9b0] sm:$0xff]
    %v8871 = vld [vmem:[#allocation24 + $0x9b8] sm:$0xf]
    %v8872 = vld [vmem:[#allocation24 + $0x9bc] sm:$0xff]
    %v8873 = vld [vmem:[#allocation24 + $0x9c4] sm:$0xff]
    %v8874 = vld [vmem:[#allocation24 + $0x9cc] sm:$0xff]
    %v8875 = vld [vmem:[#allocation24 + $0x9d4] sm:$0xf]
    %v8876 = vld [vmem:[#allocation24 + $0x9d8] sm:$0xff]
    %v8877 = vld [vmem:[#allocation24 + $0x9e0] sm:$0xff]
    %v8878 = vld [vmem:[#allocation24 + $0x9e8] sm:$0xff]
    %v8879 = vld [vmem:[#allocation24 + $0x9f0] sm:$0xf]
    %v8880 = vld [vmem:[#allocation24 + $0x9f4] sm:$0xff]
    %v8881 = vld [vmem:[#allocation24 + $0x9fc] sm:$0xff]
    %v8882 = vld [vmem:[#allocation24 + $0xa04] sm:$0xff]
    %v8883 = vld [vmem:[#allocation24 + $0xa0c] sm:$0xf]
    %v8884 = vld [vmem:[#allocation24 + $0xa10] sm:$0xff]
    %v8885 = vld [vmem:[#allocation24 + $0xa18] sm:$0xff]
    %v8886 = vld [vmem:[#allocation24 + $0xa20] sm:$0xff]
    %v8887 = vld [vmem:[#allocation24 + $0xa28] sm:$0xf]
    %v8888 = vld [vmem:[#allocation24 + $0xa2c] sm:$0xff]
    %v8889 = vld [vmem:[#allocation24 + $0xa34] sm:$0xff]
    %v8890 = vld [vmem:[#allocation24 + $0xa3c] sm:$0xff]
    %v8891 = vld [vmem:[#allocation24 + $0xa44] sm:$0xf]
    %v8892 = vld [vmem:[#allocation24 + $0xa48] sm:$0xff]
    %v8893 = vld [vmem:[#allocation24 + $0xa50] sm:$0xff]
    %v8894 = vld [vmem:[#allocation24 + $0xa58] sm:$0xff]
    %v8895 = vld [vmem:[#allocation24 + $0xa60] sm:$0xf]
    %v8896 = vld [vmem:[#allocation24 + $0xa64] sm:$0xff]
    %v8897 = vld [vmem:[#allocation24 + $0xa6c] sm:$0xff]
    %v8898 = vld [vmem:[#allocation24 + $0xa74] sm:$0xff]
    %v8899 = vld [vmem:[#allocation24 + $0xa7c] sm:$0xf]
    %v8900 = vld [vmem:[#allocation24 + $0xa80] sm:$0xff]
    %v8901 = vld [vmem:[#allocation24 + $0xa88] sm:$0xff]
    %v8902 = vld [vmem:[#allocation24 + $0xa90] sm:$0xff]
    %v8903 = vld [vmem:[#allocation24 + $0xa98] sm:$0xf]
    %v8904 = vld [vmem:[#allocation24 + $0xa9c] sm:$0xff]
    %v8905 = vld [vmem:[#allocation24 + $0xaa4] sm:$0xff]
    %v8906 = vld [vmem:[#allocation24 + $0xaac] sm:$0xff]
    %v8907 = vld [vmem:[#allocation24 + $0xab4] sm:$0xf]
    %v8908 = vld [vmem:[#allocation24 + $0xab8] sm:$0xff]
    %v8909 = vld [vmem:[#allocation24 + $0xac0] sm:$0xff]
    %v8910 = vld [vmem:[#allocation24 + $0xac8] sm:$0xff]
    %v8911 = vld [vmem:[#allocation24 + $0xad0] sm:$0xf]
    %v8912 = vld [vmem:[#allocation24 + $0xad4] sm:$0xff]
    %v8913 = vld [vmem:[#allocation24 + $0xadc] sm:$0xff]
    %v8914 = vld [vmem:[#allocation24 + $0xae4] sm:$0xff]
    %v8915 = vld [vmem:[#allocation24 + $0xaec] sm:$0xf]
    %v8916 = vld [vmem:[#allocation24 + $0xaf0] sm:$0xff]
    %v8917 = vld [vmem:[#allocation24 + $0xaf8] sm:$0xff]
    %v8918 = vld [vmem:[#allocation24 + $0xb00] sm:$0xff]
    %v8919 = vld [vmem:[#allocation24 + $0xb08] sm:$0xf]
    %v8920 = vld [vmem:[#allocation24 + $0xb0c] sm:$0xff]
    %v8921 = vld [vmem:[#allocation24 + $0xb14] sm:$0xff]
    %v8922 = vld [vmem:[#allocation24 + $0xb1c] sm:$0xff]
    %v8923 = vld [vmem:[#allocation24 + $0xb24] sm:$0xf]
    %v8924 = vld [vmem:[#allocation24 + $0xb28] sm:$0xff]
    %v8925 = vld [vmem:[#allocation24 + $0xb30] sm:$0xff]
    %v8926 = vld [vmem:[#allocation24 + $0xb38] sm:$0xff]
    %v8927 = vld [vmem:[#allocation24 + $0xb40] sm:$0xf]
    %v8928 = vld [vmem:[#allocation24 + $0xb44] sm:$0xff]
    %v8929 = vld [vmem:[#allocation24 + $0xb4c] sm:$0xff]
    %v8930 = vld [vmem:[#allocation24 + $0xb54] sm:$0xff]
    %v8931 = vld [vmem:[#allocation24 + $0xb5c] sm:$0xf]
    %v8932 = vld [vmem:[#allocation24 + $0xb60] sm:$0xff]
    %v8933 = vld [vmem:[#allocation24 + $0xb68] sm:$0xff]
    %v8934 = vld [vmem:[#allocation24 + $0xb70] sm:$0xff]
    %v8935 = vld [vmem:[#allocation24 + $0xb78] sm:$0xf]
    %v8936 = vld [vmem:[#allocation24 + $0xb7c] sm:$0xff]
    %v8937 = vld [vmem:[#allocation24 + $0xb84] sm:$0xff]
    %v8938 = vld [vmem:[#allocation24 + $0xb8c] sm:$0xff]
    %v8939 = vld [vmem:[#allocation24 + $0xb94] sm:$0xf]
    %v8940 = vld [vmem:[#allocation24 + $0xb98] sm:$0xff]
    %v8941 = vld [vmem:[#allocation24 + $0xba0] sm:$0xff]
    %v8942 = vld [vmem:[#allocation24 + $0xba8] sm:$0xff]
    %v8943 = vld [vmem:[#allocation24 + $0xbb0] sm:$0xf]
    %v8944 = vld [vmem:[#allocation24 + $0xbb4] sm:$0xff]
    %v8945 = vld [vmem:[#allocation24 + $0xbbc] sm:$0xff]
    %v8946 = vld [vmem:[#allocation24 + $0xbc4] sm:$0xff]
    %v8947 = vld [vmem:[#allocation24 + $0xbcc] sm:$0xf]
    %v8948 = vld [vmem:[#allocation24 + $0xbd0] sm:$0xff]
    %v8949 = vld [vmem:[#allocation24 + $0xbd8] sm:$0xff]
    %v8950 = vld [vmem:[#allocation24 + $0xbe0] sm:$0xff]
    %v8951 = vld [vmem:[#allocation24 + $0xbe8] sm:$0xf]
    %v8952 = vld [vmem:[#allocation24 + $0xbec] sm:$0xff]
    %v8953 = vld [vmem:[#allocation24 + $0xbf4] sm:$0xff]
    %v8954 = vld [vmem:[#allocation24 + $0xbfc] sm:$0xff]
    %v8955 = vld [vmem:[#allocation24 + $0xc04] sm:$0xf]
    %v8956 = vld [vmem:[#allocation24 + $0xc08] sm:$0xff]
    %v8957 = vld [vmem:[#allocation24 + $0xc10] sm:$0xff]
    %v8958 = vld [vmem:[#allocation24 + $0xc18] sm:$0xff]
    %v8959 = vld [vmem:[#allocation24 + $0xc20] sm:$0xf]
    %v8960 = vld [vmem:[#allocation24 + $0xc24] sm:$0xff]
    %v8961 = vld [vmem:[#allocation24 + $0xc2c] sm:$0xff]
    %v8962 = vld [vmem:[#allocation24 + $0xc34] sm:$0xff]
    %v8963 = vld [vmem:[#allocation24 + $0xc3c] sm:$0xf]
    %v8964 = vld [vmem:[#allocation24 + $0xc40] sm:$0xff]
    %v8965 = vld [vmem:[#allocation24 + $0xc48] sm:$0xff]
    %v8966 = vld [vmem:[#allocation24 + $0xc50] sm:$0xff]
    %v8967 = vld [vmem:[#allocation24 + $0xc58] sm:$0xf]
    %v8968 = vld [vmem:[#allocation24 + $0xc5c] sm:$0xff]
    %v8969 = vld [vmem:[#allocation24 + $0xc64] sm:$0xff]
    %v8970 = vld [vmem:[#allocation24 + $0xc6c] sm:$0xff]
    %v8971 = vld [vmem:[#allocation24 + $0xc74] sm:$0xf]
    %v8972 = vld [vmem:[#allocation24 + $0xc78] sm:$0xff]
    %v8973 = vld [vmem:[#allocation24 + $0xc80] sm:$0xff]
    %v8974 = vld [vmem:[#allocation24 + $0xc88] sm:$0xff]
    %v8975 = vld [vmem:[#allocation24 + $0xc90] sm:$0xf]
    %v8976 = vld [vmem:[#allocation24 + $0xc94] sm:$0xff]
    %v8977 = vld [vmem:[#allocation24 + $0xc9c] sm:$0xff]
    %v8978 = vld [vmem:[#allocation24 + $0xca4] sm:$0xff]
    %v8979 = vld [vmem:[#allocation24 + $0xcac] sm:$0xf]
    %v8980 = vld [vmem:[#allocation24 + $0xcb0] sm:$0xff]
    %v8981 = vld [vmem:[#allocation24 + $0xcb8] sm:$0xff]
    %v8982 = vld [vmem:[#allocation24 + $0xcc0] sm:$0xff]
    %v8983 = vld [vmem:[#allocation24 + $0xcc8] sm:$0xf]
    %v8984 = vld [vmem:[#allocation24 + $0xccc] sm:$0xff]
    %v8985 = vld [vmem:[#allocation24 + $0xcd4] sm:$0xff]
    %v8986 = vld [vmem:[#allocation24 + $0xcdc] sm:$0xff]
    %v8987 = vld [vmem:[#allocation24 + $0xce4] sm:$0xf]
    %v8988 = vld [vmem:[#allocation24 + $0xce8] sm:$0xff]
    %v8989 = vld [vmem:[#allocation24 + $0xcf0] sm:$0xff]
    %v8990 = vld [vmem:[#allocation24 + $0xcf8] sm:$0xff]
    %v8991 = vld [vmem:[#allocation24 + $0xd00] sm:$0xf]
    %v8992 = vld [vmem:[#allocation24 + $0xd04] sm:$0xff]
    %v8993 = vld [vmem:[#allocation24 + $0xd0c] sm:$0xff]
    %v8994 = vld [vmem:[#allocation24 + $0xd14] sm:$0xff]
    %v8995 = vld [vmem:[#allocation24 + $0xd1c] sm:$0xf]
    %v8996 = vld [vmem:[#allocation24 + $0xd20] sm:$0xff]
    %v8997 = vld [vmem:[#allocation24 + $0xd28] sm:$0xff]
    %v8998 = vld [vmem:[#allocation24 + $0xd30] sm:$0xff]
    %v8999 = vld [vmem:[#allocation24 + $0xd38] sm:$0xf]
    %v9000 = vld [vmem:[#allocation24 + $0xd3c] sm:$0xff]
    %v9001 = vld [vmem:[#allocation24 + $0xd44] sm:$0xff]
    %v9002 = vld [vmem:[#allocation24 + $0xd4c] sm:$0xff]
    %v9003 = vld [vmem:[#allocation24 + $0xd54] sm:$0xf]
    %v9004 = vld [vmem:[#allocation24 + $0xd58] sm:$0xff]
    %v9005 = vld [vmem:[#allocation24 + $0xd60] sm:$0xff]
    %v9006 = vld [vmem:[#allocation24 + $0xd68] sm:$0xff]
    %v9007 = vld [vmem:[#allocation24 + $0xd70] sm:$0xf]
    %v9008 = vld [vmem:[#allocation24 + $0xd74] sm:$0xff]
    %v9009 = vld [vmem:[#allocation24 + $0xd7c] sm:$0xff]
    %v9010 = vld [vmem:[#allocation24 + $0xd84] sm:$0xff]
    %v9011 = vld [vmem:[#allocation24 + $0xd8c] sm:$0xf]
    %v9012 = vld [vmem:[#allocation24 + $0xd90] sm:$0xff]
    %v9013 = vld [vmem:[#allocation24 + $0xd98] sm:$0xff]
    %v9014 = vld [vmem:[#allocation24 + $0xda0] sm:$0xff]
    %v9015 = vld [vmem:[#allocation24 + $0xda8] sm:$0xf]
    %v9016 = vld [vmem:[#allocation24 + $0xdac] sm:$0xff]
    %v9017 = vld [vmem:[#allocation24 + $0xdb4] sm:$0xff]
    %v9018 = vld [vmem:[#allocation24 + $0xdbc] sm:$0xff]
    %v9019 = vld [vmem:[#allocation24 + $0xdc4] sm:$0xf]
    %v9020 = vld [vmem:[#allocation24 + $0xdc8] sm:$0xff]
    %v9021 = vld [vmem:[#allocation24 + $0xdd0] sm:$0xff]
    %v9022 = vld [vmem:[#allocation24 + $0xdd8] sm:$0xff]
    %v9023 = vld [vmem:[#allocation24 + $0xde0] sm:$0xf]
    %v9024 = vld [vmem:[#allocation24 + $0xde4] sm:$0xff]
    %v9025 = vld [vmem:[#allocation24 + $0xdec] sm:$0xff]
    %v9026 = vld [vmem:[#allocation24 + $0xdf4] sm:$0xff]
    %v9027 = vld [vmem:[#allocation24 + $0xdfc] sm:$0xf]
    %v9028 = vld [vmem:[#allocation25] sm:$0xff]
    %v9029 = vpack.c.bf16 %v8508, %v8508
    %v9030 = vpack.c.bf16 %v8509, %v8509
    %v9031 = vpack.c.bf16 %v8510, %v8510
    %v9032 = vpack.c.bf16 %v8511, %v8511
    %v9033 = vpack.c.bf16 %v8512, %v8512
    %v9034 = vpack.c.bf16 %v8513, %v8513
    %v9035 = vpack.c.bf16 %v8514, %v8514
    %v9036 = vpack.c.bf16 %v8515, %v8515
    %v9038 = vlaneseq
    %v9039 = vshrl.u32 %v9038, 7
    %v9040 = vsub.s32 0, %v9039
    %v9041 = vrot.slane %v9028, %v9040
    %v9042 = vlaneseq
    %v9043 = vshrl.u32 %v9042, 7
    %v9044 = vsub.s32 1, %v9043
    %v9045 = vrot.slane %v9028, %v9044
    %v9046 = vlaneseq
    %v9047 = vshrl.u32 %v9046, 7
    %v9048 = vsub.s32 2, %v9047
    %v9049 = vrot.slane %v9028, %v9048
    %v9050 = vlaneseq
    %v9051 = vshrl.u32 %v9050, 7
    %v9052 = vsub.s32 3, %v9051
    %v9053 = vrot.slane %v9028, %v9052
    %v9054 = vlaneseq
    %v9055 = vshrl.u32 %v9054, 7
    %v9056 = vsub.s32 4, %v9055
    %v9057 = vrot.slane %v9028, %v9056
    %v9058 = vlaneseq
    %v9059 = vshrl.u32 %v9058, 7
    %v9060 = vsub.s32 5, %v9059
    %v9061 = vrot.slane %v9028, %v9060
    %v9062 = vlaneseq
    %v9063 = vshrl.u32 %v9062, 7
    %v9064 = vsub.s32 6, %v9063
    %v9065 = vrot.slane %v9028, %v9064
    %v9585 = vunpack.c.l.b16 %v8516
    %v9586 = vunpack.c.h.b16 %v8516
    %v9587 = vunpack.c.l.b16 %v8517
    %v9588 = vunpack.c.h.b16 %v8517
    %v9589 = vunpack.c.l.b16 %v8518
    %v9590 = vunpack.c.h.b16 %v8518
    %v9591 = vunpack.c.l.b16 %v8519
    %v9592 = vunpack.c.l.b16 %v8520
    %v9593 = vunpack.c.h.b16 %v8520
    %v9594 = vunpack.c.l.b16 %v8521
    %v9595 = vunpack.c.h.b16 %v8521
    %v9596 = vunpack.c.l.b16 %v8522
    %v9597 = vunpack.c.h.b16 %v8522
    %v9598 = vunpack.c.l.b16 %v8523
    %v9599 = vunpack.c.l.b16 %v8524
    %v9600 = vunpack.c.h.b16 %v8524
    %v9601 = vunpack.c.l.b16 %v8525
    %v9602 = vunpack.c.h.b16 %v8525
    %v9603 = vunpack.c.l.b16 %v8526
    %v9604 = vunpack.c.h.b16 %v8526
    %v9605 = vunpack.c.l.b16 %v8527
    %v9606 = vunpack.c.l.b16 %v8528
    %v9607 = vunpack.c.h.b16 %v8528
    %v9608 = vunpack.c.l.b16 %v8529
    %v9609 = vunpack.c.h.b16 %v8529
    %v9610 = vunpack.c.l.b16 %v8530
    %v9611 = vunpack.c.h.b16 %v8530
    %v9612 = vunpack.c.l.b16 %v8531
    %v9613 = vunpack.c.l.b16 %v8532
    %v9614 = vunpack.c.h.b16 %v8532
    %v9615 = vunpack.c.l.b16 %v8533
    %v9616 = vunpack.c.h.b16 %v8533
    %v9617 = vunpack.c.l.b16 %v8534
    %v9618 = vunpack.c.h.b16 %v8534
    %v9619 = vunpack.c.l.b16 %v8535
    %v9620 = vunpack.c.l.b16 %v8536
    %v9621 = vunpack.c.h.b16 %v8536
    %v9622 = vunpack.c.l.b16 %v8537
    %v9623 = vunpack.c.h.b16 %v8537
    %v9624 = vunpack.c.l.b16 %v8538
    %v9625 = vunpack.c.h.b16 %v8538
    %v9626 = vunpack.c.l.b16 %v8539
    %v9627 = vunpack.c.l.b16 %v8540
    %v9628 = vunpack.c.h.b16 %v8540
    %v9629 = vunpack.c.l.b16 %v8541
    %v9630 = vunpack.c.h.b16 %v8541
    %v9631 = vunpack.c.l.b16 %v8542
    %v9632 = vunpack.c.h.b16 %v8542
    %v9633 = vunpack.c.l.b16 %v8543
    %v9634 = vunpack.c.l.b16 %v8544
    %v9635 = vunpack.c.h.b16 %v8544
    %v9636 = vunpack.c.l.b16 %v8545
    %v9637 = vunpack.c.h.b16 %v8545
    %v9638 = vunpack.c.l.b16 %v8546
    %v9639 = vunpack.c.h.b16 %v8546
    %v9640 = vunpack.c.l.b16 %v8547
    %v9641 = vunpack.c.l.b16 %v8548
    %v9642 = vunpack.c.h.b16 %v8548
    %v9643 = vunpack.c.l.b16 %v8549
    %v9644 = vunpack.c.h.b16 %v8549
    %v9645 = vunpack.c.l.b16 %v8550
    %v9646 = vunpack.c.h.b16 %v8550
    %v9647 = vunpack.c.l.b16 %v8551
    %v9648 = vunpack.c.l.b16 %v8552
    %v9649 = vunpack.c.h.b16 %v8552
    %v9650 = vunpack.c.l.b16 %v8553
    %v9651 = vunpack.c.h.b16 %v8553
    %v9652 = vunpack.c.l.b16 %v8554
    %v9653 = vunpack.c.h.b16 %v8554
    %v9654 = vunpack.c.l.b16 %v8555
    %v9655 = vunpack.c.l.b16 %v8556
    %v9656 = vunpack.c.h.b16 %v8556
    %v9657 = vunpack.c.l.b16 %v8557
    %v9658 = vunpack.c.h.b16 %v8557
    %v9659 = vunpack.c.l.b16 %v8558
    %v9660 = vunpack.c.h.b16 %v8558
    %v9661 = vunpack.c.l.b16 %v8559
    %v9662 = vunpack.c.l.b16 %v8560
    %v9663 = vunpack.c.h.b16 %v8560
    %v9664 = vunpack.c.l.b16 %v8561
    %v9665 = vunpack.c.h.b16 %v8561
    %v9666 = vunpack.c.l.b16 %v8562
    %v9667 = vunpack.c.h.b16 %v8562
    %v9668 = vunpack.c.l.b16 %v8563
    %v9669 = vunpack.c.l.b16 %v8564
    %v9670 = vunpack.c.h.b16 %v8564
    %v9671 = vunpack.c.l.b16 %v8565
    %v9672 = vunpack.c.h.b16 %v8565
    %v9673 = vunpack.c.l.b16 %v8566
    %v9674 = vunpack.c.h.b16 %v8566
    %v9675 = vunpack.c.l.b16 %v8567
    %v9676 = vunpack.c.l.b16 %v8568
    %v9677 = vunpack.c.h.b16 %v8568
    %v9678 = vunpack.c.l.b16 %v8569
    %v9679 = vunpack.c.h.b16 %v8569
    %v9680 = vunpack.c.l.b16 %v8570
    %v9681 = vunpack.c.h.b16 %v8570
    %v9682 = vunpack.c.l.b16 %v8571
    %v9683 = vunpack.c.l.b16 %v8572
    %v9684 = vunpack.c.h.b16 %v8572
    %v9685 = vunpack.c.l.b16 %v8573
    %v9686 = vunpack.c.h.b16 %v8573
    %v9687 = vunpack.c.l.b16 %v8574
    %v9688 = vunpack.c.h.b16 %v8574
    %v9689 = vunpack.c.l.b16 %v8575
    %v9690 = vunpack.c.l.b16 %v8576
    %v9691 = vunpack.c.h.b16 %v8576
    %v9692 = vunpack.c.l.b16 %v8577
    %v9693 = vunpack.c.h.b16 %v8577
    %v9694 = vunpack.c.l.b16 %v8578
    %v9695 = vunpack.c.h.b16 %v8578
    %v9696 = vunpack.c.l.b16 %v8579
    %v9697 = vunpack.c.l.b16 %v8580
    %v9698 = vunpack.c.h.b16 %v8580
    %v9699 = vunpack.c.l.b16 %v8581
    %v9700 = vunpack.c.h.b16 %v8581
    %v9701 = vunpack.c.l.b16 %v8582
    %v9702 = vunpack.c.h.b16 %v8582
    %v9703 = vunpack.c.l.b16 %v8583
    %v9704 = vunpack.c.l.b16 %v8584
    %v9705 = vunpack.c.h.b16 %v8584
    %v9706 = vunpack.c.l.b16 %v8585
    %v9707 = vunpack.c.h.b16 %v8585
    %v9708 = vunpack.c.l.b16 %v8586
    %v9709 = vunpack.c.h.b16 %v8586
    %v9710 = vunpack.c.l.b16 %v8587
    %v9711 = vunpack.c.l.b16 %v8588
    %v9712 = vunpack.c.h.b16 %v8588
    %v9713 = vunpack.c.l.b16 %v8589
    %v9714 = vunpack.c.h.b16 %v8589
    %v9715 = vunpack.c.l.b16 %v8590
    %v9716 = vunpack.c.h.b16 %v8590
    %v9717 = vunpack.c.l.b16 %v8591
    %v9718 = vunpack.c.l.b16 %v8592
    %v9719 = vunpack.c.h.b16 %v8592
    %v9720 = vunpack.c.l.b16 %v8593
    %v9721 = vunpack.c.h.b16 %v8593
    %v9722 = vunpack.c.l.b16 %v8594
    %v9723 = vunpack.c.h.b16 %v8594
    %v9724 = vunpack.c.l.b16 %v8595
    %v9725 = vunpack.c.l.b16 %v8596
    %v9726 = vunpack.c.h.b16 %v8596
    %v9727 = vunpack.c.l.b16 %v8597
    %v9728 = vunpack.c.h.b16 %v8597
    %v9729 = vunpack.c.l.b16 %v8598
    %v9730 = vunpack.c.h.b16 %v8598
    %v9731 = vunpack.c.l.b16 %v8599
    %v9732 = vunpack.c.l.b16 %v8600
    %v9733 = vunpack.c.h.b16 %v8600
    %v9734 = vunpack.c.l.b16 %v8601
    %v9735 = vunpack.c.h.b16 %v8601
    %v9736 = vunpack.c.l.b16 %v8602
    %v9737 = vunpack.c.h.b16 %v8602
    %v9738 = vunpack.c.l.b16 %v8603
    %v9739 = vunpack.c.l.b16 %v8604
    %v9740 = vunpack.c.h.b16 %v8604
    %v9741 = vunpack.c.l.b16 %v8605
    %v9742 = vunpack.c.h.b16 %v8605
    %v9743 = vunpack.c.l.b16 %v8606
    %v9744 = vunpack.c.h.b16 %v8606
    %v9745 = vunpack.c.l.b16 %v8607
    %v9746 = vunpack.c.l.b16 %v8608
    %v9747 = vunpack.c.h.b16 %v8608
    %v9748 = vunpack.c.l.b16 %v8609
    %v9749 = vunpack.c.h.b16 %v8609
    %v9750 = vunpack.c.l.b16 %v8610
    %v9751 = vunpack.c.h.b16 %v8610
    %v9752 = vunpack.c.l.b16 %v8611
    %v9753 = vunpack.c.l.b16 %v8612
    %v9754 = vunpack.c.h.b16 %v8612
    %v9755 = vunpack.c.l.b16 %v8613
    %v9756 = vunpack.c.h.b16 %v8613
    %v9757 = vunpack.c.l.b16 %v8614
    %v9758 = vunpack.c.h.b16 %v8614
    %v9759 = vunpack.c.l.b16 %v8615
    %v9760 = vunpack.c.l.b16 %v8616
    %v9761 = vunpack.c.h.b16 %v8616
    %v9762 = vunpack.c.l.b16 %v8617
    %v9763 = vunpack.c.h.b16 %v8617
    %v9764 = vunpack.c.l.b16 %v8618
    %v9765 = vunpack.c.h.b16 %v8618
    %v9766 = vunpack.c.l.b16 %v8619
    %v9767 = vunpack.c.l.b16 %v8620
    %v9768 = vunpack.c.h.b16 %v8620
    %v9769 = vunpack.c.l.b16 %v8621
    %v9770 = vunpack.c.h.b16 %v8621
    %v9771 = vunpack.c.l.b16 %v8622
    %v9772 = vunpack.c.h.b16 %v8622
    %v9773 = vunpack.c.l.b16 %v8623
    %v9774 = vunpack.c.l.b16 %v8624
    %v9775 = vunpack.c.h.b16 %v8624
    %v9776 = vunpack.c.l.b16 %v8625
    %v9777 = vunpack.c.h.b16 %v8625
    %v9778 = vunpack.c.l.b16 %v8626
    %v9779 = vunpack.c.h.b16 %v8626
    %v9780 = vunpack.c.l.b16 %v8627
    %v9781 = vunpack.c.l.b16 %v8628
    %v9782 = vunpack.c.h.b16 %v8628
    %v9783 = vunpack.c.l.b16 %v8629
    %v9784 = vunpack.c.h.b16 %v8629
    %v9785 = vunpack.c.l.b16 %v8630
    %v9786 = vunpack.c.h.b16 %v8630
    %v9787 = vunpack.c.l.b16 %v8631
    %v9788 = vunpack.c.l.b16 %v8632
    %v9789 = vunpack.c.h.b16 %v8632
    %v9790 = vunpack.c.l.b16 %v8633
    %v9791 = vunpack.c.h.b16 %v8633
    %v9792 = vunpack.c.l.b16 %v8634
    %v9793 = vunpack.c.h.b16 %v8634
    %v9794 = vunpack.c.l.b16 %v8635
    %v9795 = vunpack.c.l.b16 %v8636
    %v9796 = vunpack.c.h.b16 %v8636
    %v9797 = vunpack.c.l.b16 %v8637
    %v9798 = vunpack.c.h.b16 %v8637
    %v9799 = vunpack.c.l.b16 %v8638
    %v9800 = vunpack.c.h.b16 %v8638
    %v9801 = vunpack.c.l.b16 %v8639
    %v9802 = vunpack.c.l.b16 %v8640
    %v9803 = vunpack.c.h.b16 %v8640
    %v9804 = vunpack.c.l.b16 %v8641
    %v9805 = vunpack.c.h.b16 %v8641
    %v9806 = vunpack.c.l.b16 %v8642
    %v9807 = vunpack.c.h.b16 %v8642
    %v9808 = vunpack.c.l.b16 %v8643
    %v9809 = vunpack.c.l.b16 %v8644
    %v9810 = vunpack.c.h.b16 %v8644
    %v9811 = vunpack.c.l.b16 %v8645
    %v9812 = vunpack.c.h.b16 %v8645
    %v9813 = vunpack.c.l.b16 %v8646
    %v9814 = vunpack.c.h.b16 %v8646
    %v9815 = vunpack.c.l.b16 %v8647
    %v9816 = vunpack.c.l.b16 %v8648
    %v9817 = vunpack.c.h.b16 %v8648
    %v9818 = vunpack.c.l.b16 %v8649
    %v9819 = vunpack.c.h.b16 %v8649
    %v9820 = vunpack.c.l.b16 %v8650
    %v9821 = vunpack.c.h.b16 %v8650
    %v9822 = vunpack.c.l.b16 %v8651
    %v9823 = vunpack.c.l.b16 %v8652
    %v9824 = vunpack.c.h.b16 %v8652
    %v9825 = vunpack.c.l.b16 %v8653
    %v9826 = vunpack.c.h.b16 %v8653
    %v9827 = vunpack.c.l.b16 %v8654
    %v9828 = vunpack.c.h.b16 %v8654
    %v9829 = vunpack.c.l.b16 %v8655
    %v9830 = vunpack.c.l.b16 %v8656
    %v9831 = vunpack.c.h.b16 %v8656
    %v9832 = vunpack.c.l.b16 %v8657
    %v9833 = vunpack.c.h.b16 %v8657
    %v9834 = vunpack.c.l.b16 %v8658
    %v9835 = vunpack.c.h.b16 %v8658
    %v9836 = vunpack.c.l.b16 %v8659
    %v9837 = vunpack.c.l.b16 %v8660
    %v9838 = vunpack.c.h.b16 %v8660
    %v9839 = vunpack.c.l.b16 %v8661
    %v9840 = vunpack.c.h.b16 %v8661
    %v9841 = vunpack.c.l.b16 %v8662
    %v9842 = vunpack.c.h.b16 %v8662
    %v9843 = vunpack.c.l.b16 %v8663
    %v9844 = vunpack.c.l.b16 %v8664
    %v9845 = vunpack.c.h.b16 %v8664
    %v9846 = vunpack.c.l.b16 %v8665
    %v9847 = vunpack.c.h.b16 %v8665
    %v9848 = vunpack.c.l.b16 %v8666
    %v9849 = vunpack.c.h.b16 %v8666
    %v9850 = vunpack.c.l.b16 %v8667
    %v9851 = vunpack.c.l.b16 %v8668
    %v9852 = vunpack.c.h.b16 %v8668
    %v9853 = vunpack.c.l.b16 %v8669
    %v9854 = vunpack.c.h.b16 %v8669
    %v9855 = vunpack.c.l.b16 %v8670
    %v9856 = vunpack.c.h.b16 %v8670
    %v9857 = vunpack.c.l.b16 %v8671
    %v9858 = vunpack.c.l.b16 %v8672
    %v9859 = vunpack.c.h.b16 %v8672
    %v9860 = vunpack.c.l.b16 %v8673
    %v9861 = vunpack.c.h.b16 %v8673
    %v9862 = vunpack.c.l.b16 %v8674
    %v9863 = vunpack.c.h.b16 %v8674
    %v9864 = vunpack.c.l.b16 %v8675
    %v9865 = vunpack.c.l.b16 %v8676
    %v9866 = vunpack.c.h.b16 %v8676
    %v9867 = vunpack.c.l.b16 %v8677
    %v9868 = vunpack.c.h.b16 %v8677
    %v9869 = vunpack.c.l.b16 %v8678
    %v9870 = vunpack.c.h.b16 %v8678
    %v9871 = vunpack.c.l.b16 %v8679
    %v9872 = vunpack.c.l.b16 %v8680
    %v9873 = vunpack.c.h.b16 %v8680
    %v9874 = vunpack.c.l.b16 %v8681
    %v9875 = vunpack.c.h.b16 %v8681
    %v9876 = vunpack.c.l.b16 %v8682
    %v9877 = vunpack.c.h.b16 %v8682
    %v9878 = vunpack.c.l.b16 %v8683
    %v9879 = vunpack.c.l.b16 %v8684
    %v9880 = vunpack.c.h.b16 %v8684
    %v9881 = vunpack.c.l.b16 %v8685
    %v9882 = vunpack.c.h.b16 %v8685
    %v9883 = vunpack.c.l.b16 %v8686
    %v9884 = vunpack.c.h.b16 %v8686
    %v9885 = vunpack.c.l.b16 %v8687
    %v9886 = vunpack.c.l.b16 %v8688
    %v9887 = vunpack.c.h.b16 %v8688
    %v9888 = vunpack.c.l.b16 %v8689
    %v9889 = vunpack.c.h.b16 %v8689
    %v9890 = vunpack.c.l.b16 %v8690
    %v9891 = vunpack.c.h.b16 %v8690
    %v9892 = vunpack.c.l.b16 %v8691
    %v9893 = vunpack.c.l.b16 %v8692
    %v9894 = vunpack.c.h.b16 %v8692
    %v9895 = vunpack.c.l.b16 %v8693
    %v9896 = vunpack.c.h.b16 %v8693
    %v9897 = vunpack.c.l.b16 %v8694
    %v9898 = vunpack.c.h.b16 %v8694
    %v9899 = vunpack.c.l.b16 %v8695
    %v9900 = vunpack.c.l.b16 %v8696
    %v9901 = vunpack.c.h.b16 %v8696
    %v9902 = vunpack.c.l.b16 %v8697
    %v9903 = vunpack.c.h.b16 %v8697
    %v9904 = vunpack.c.l.b16 %v8698
    %v9905 = vunpack.c.h.b16 %v8698
    %v9906 = vunpack.c.l.b16 %v8699
    %v9907 = vunpack.c.l.b16 %v8700
    %v9908 = vunpack.c.h.b16 %v8700
    %v9909 = vunpack.c.l.b16 %v8701
    %v9910 = vunpack.c.h.b16 %v8701
    %v9911 = vunpack.c.l.b16 %v8702
    %v9912 = vunpack.c.h.b16 %v8702
    %v9913 = vunpack.c.l.b16 %v8703
    %v9914 = vunpack.c.l.b16 %v8704
    %v9915 = vunpack.c.h.b16 %v8704
    %v9916 = vunpack.c.l.b16 %v8705
    %v9917 = vunpack.c.h.b16 %v8705
    %v9918 = vunpack.c.l.b16 %v8706
    %v9919 = vunpack.c.h.b16 %v8706
    %v9920 = vunpack.c.l.b16 %v8707
    %v9921 = vunpack.c.l.b16 %v8708
    %v9922 = vunpack.c.h.b16 %v8708
    %v9923 = vunpack.c.l.b16 %v8709
    %v9924 = vunpack.c.h.b16 %v8709
    %v9925 = vunpack.c.l.b16 %v8710
    %v9926 = vunpack.c.h.b16 %v8710
    %v9927 = vunpack.c.l.b16 %v8711
    %v9928 = vunpack.c.l.b16 %v8712
    %v9929 = vunpack.c.h.b16 %v8712
    %v9930 = vunpack.c.l.b16 %v8713
    %v9931 = vunpack.c.h.b16 %v8713
    %v9932 = vunpack.c.l.b16 %v8714
    %v9933 = vunpack.c.h.b16 %v8714
    %v9934 = vunpack.c.l.b16 %v8715
    %v9935 = vunpack.c.l.b16 %v8716
    %v9936 = vunpack.c.h.b16 %v8716
    %v9937 = vunpack.c.l.b16 %v8717
    %v9938 = vunpack.c.h.b16 %v8717
    %v9939 = vunpack.c.l.b16 %v8718
    %v9940 = vunpack.c.h.b16 %v8718
    %v9941 = vunpack.c.l.b16 %v8719
    %v9942 = vunpack.c.l.b16 %v8720
    %v9943 = vunpack.c.h.b16 %v8720
    %v9944 = vunpack.c.l.b16 %v8721
    %v9945 = vunpack.c.h.b16 %v8721
    %v9946 = vunpack.c.l.b16 %v8722
    %v9947 = vunpack.c.h.b16 %v8722
    %v9948 = vunpack.c.l.b16 %v8723
    %v9949 = vunpack.c.l.b16 %v8724
    %v9950 = vunpack.c.h.b16 %v8724
    %v9951 = vunpack.c.l.b16 %v8725
    %v9952 = vunpack.c.h.b16 %v8725
    %v9953 = vunpack.c.l.b16 %v8726
    %v9954 = vunpack.c.h.b16 %v8726
    %v9955 = vunpack.c.l.b16 %v8727
    %v9956 = vunpack.c.l.b16 %v8728
    %v9957 = vunpack.c.h.b16 %v8728
    %v9958 = vunpack.c.l.b16 %v8729
    %v9959 = vunpack.c.h.b16 %v8729
    %v9960 = vunpack.c.l.b16 %v8730
    %v9961 = vunpack.c.h.b16 %v8730
    %v9962 = vunpack.c.l.b16 %v8731
    %v9963 = vunpack.c.l.b16 %v8732
    %v9964 = vunpack.c.h.b16 %v8732
    %v9965 = vunpack.c.l.b16 %v8733
    %v9966 = vunpack.c.h.b16 %v8733
    %v9967 = vunpack.c.l.b16 %v8734
    %v9968 = vunpack.c.h.b16 %v8734
    %v9969 = vunpack.c.l.b16 %v8735
    %v9970 = vunpack.c.l.b16 %v8736
    %v9971 = vunpack.c.h.b16 %v8736
    %v9972 = vunpack.c.l.b16 %v8737
    %v9973 = vunpack.c.h.b16 %v8737
    %v9974 = vunpack.c.l.b16 %v8738
    %v9975 = vunpack.c.h.b16 %v8738
    %v9976 = vunpack.c.l.b16 %v8739
    %v9977 = vunpack.c.l.b16 %v8740
    %v9978 = vunpack.c.h.b16 %v8740
    %v9979 = vunpack.c.l.b16 %v8741
    %v9980 = vunpack.c.h.b16 %v8741
    %v9981 = vunpack.c.l.b16 %v8742
    %v9982 = vunpack.c.h.b16 %v8742
    %v9983 = vunpack.c.l.b16 %v8743
    %v9984 = vunpack.c.l.b16 %v8744
    %v9985 = vunpack.c.h.b16 %v8744
    %v9986 = vunpack.c.l.b16 %v8745
    %v9987 = vunpack.c.h.b16 %v8745
    %v9988 = vunpack.c.l.b16 %v8746
    %v9989 = vunpack.c.h.b16 %v8746
    %v9990 = vunpack.c.l.b16 %v8747
    %v9991 = vunpack.c.l.b16 %v8748
    %v9992 = vunpack.c.h.b16 %v8748
    %v9993 = vunpack.c.l.b16 %v8749
    %v9994 = vunpack.c.h.b16 %v8749
    %v9995 = vunpack.c.l.b16 %v8750
    %v9996 = vunpack.c.h.b16 %v8750
    %v9997 = vunpack.c.l.b16 %v8751
    %v9998 = vunpack.c.l.b16 %v8752
    %v9999 = vunpack.c.h.b16 %v8752
    %v10000 = vunpack.c.l.b16 %v8753
    %v10001 = vunpack.c.h.b16 %v8753
    %v10002 = vunpack.c.l.b16 %v8754
    %v10003 = vunpack.c.h.b16 %v8754
    %v10004 = vunpack.c.l.b16 %v8755
    %v10005 = vunpack.c.l.b16 %v8756
    %v10006 = vunpack.c.h.b16 %v8756
    %v10007 = vunpack.c.l.b16 %v8757
    %v10008 = vunpack.c.h.b16 %v8757
    %v10009 = vunpack.c.l.b16 %v8758
    %v10010 = vunpack.c.h.b16 %v8758
    %v10011 = vunpack.c.l.b16 %v8759
    %v10012 = vunpack.c.l.b16 %v8760
    %v10013 = vunpack.c.h.b16 %v8760
    %v10014 = vunpack.c.l.b16 %v8761
    %v10015 = vunpack.c.h.b16 %v8761
    %v10016 = vunpack.c.l.b16 %v8762
    %v10017 = vunpack.c.h.b16 %v8762
    %v10018 = vunpack.c.l.b16 %v8763
    %v10019 = vunpack.c.l.b16 %v8764
    %v10020 = vunpack.c.h.b16 %v8764
    %v10021 = vunpack.c.l.b16 %v8765
    %v10022 = vunpack.c.h.b16 %v8765
    %v10023 = vunpack.c.l.b16 %v8766
    %v10024 = vunpack.c.h.b16 %v8766
    %v10025 = vunpack.c.l.b16 %v8767
    %v10026 = vunpack.c.l.b16 %v8768
    %v10027 = vunpack.c.h.b16 %v8768
    %v10028 = vunpack.c.l.b16 %v8769
    %v10029 = vunpack.c.h.b16 %v8769
    %v10030 = vunpack.c.l.b16 %v8770
    %v10031 = vunpack.c.h.b16 %v8770
    %v10032 = vunpack.c.l.b16 %v8771
    %v10033 = vunpack.c.l.b16 %v8772
    %v10034 = vunpack.c.h.b16 %v8772
    %v10035 = vunpack.c.l.b16 %v8773
    %v10036 = vunpack.c.h.b16 %v8773
    %v10037 = vunpack.c.l.b16 %v8774
    %v10038 = vunpack.c.h.b16 %v8774
    %v10039 = vunpack.c.l.b16 %v8775
    %v10040 = vunpack.c.l.b16 %v8776
    %v10041 = vunpack.c.h.b16 %v8776
    %v10042 = vunpack.c.l.b16 %v8777
    %v10043 = vunpack.c.h.b16 %v8777
    %v10044 = vunpack.c.l.b16 %v8778
    %v10045 = vunpack.c.h.b16 %v8778
    %v10046 = vunpack.c.l.b16 %v8779
    %v10047 = vunpack.c.l.b16 %v8780
    %v10048 = vunpack.c.h.b16 %v8780
    %v10049 = vunpack.c.l.b16 %v8781
    %v10050 = vunpack.c.h.b16 %v8781
    %v10051 = vunpack.c.l.b16 %v8782
    %v10052 = vunpack.c.h.b16 %v8782
    %v10053 = vunpack.c.l.b16 %v8783
    %v10054 = vunpack.c.l.b16 %v8784
    %v10055 = vunpack.c.h.b16 %v8784
    %v10056 = vunpack.c.l.b16 %v8785
    %v10057 = vunpack.c.h.b16 %v8785
    %v10058 = vunpack.c.l.b16 %v8786
    %v10059 = vunpack.c.h.b16 %v8786
    %v10060 = vunpack.c.l.b16 %v8787
    %v10061 = vunpack.c.l.b16 %v8788
    %v10062 = vunpack.c.h.b16 %v8788
    %v10063 = vunpack.c.l.b16 %v8789
    %v10064 = vunpack.c.h.b16 %v8789
    %v10065 = vunpack.c.l.b16 %v8790
    %v10066 = vunpack.c.h.b16 %v8790
    %v10067 = vunpack.c.l.b16 %v8791
    %v10068 = vunpack.c.l.b16 %v8792
    %v10069 = vunpack.c.h.b16 %v8792
    %v10070 = vunpack.c.l.b16 %v8793
    %v10071 = vunpack.c.h.b16 %v8793
    %v10072 = vunpack.c.l.b16 %v8794
    %v10073 = vunpack.c.h.b16 %v8794
    %v10074 = vunpack.c.l.b16 %v8795
    %v10075 = vunpack.c.l.b16 %v8796
    %v10076 = vunpack.c.h.b16 %v8796
    %v10077 = vunpack.c.l.b16 %v8797
    %v10078 = vunpack.c.h.b16 %v8797
    %v10079 = vunpack.c.l.b16 %v8798
    %v10080 = vunpack.c.h.b16 %v8798
    %v10081 = vunpack.c.l.b16 %v8799
    %v10082 = vunpack.c.l.b16 %v8800
    %v10083 = vunpack.c.h.b16 %v8800
    %v10084 = vunpack.c.l.b16 %v8801
    %v10085 = vunpack.c.h.b16 %v8801
    %v10086 = vunpack.c.l.b16 %v8802
    %v10087 = vunpack.c.h.b16 %v8802
    %v10088 = vunpack.c.l.b16 %v8803
    %v10089 = vunpack.c.l.b16 %v8804
    %v10090 = vunpack.c.h.b16 %v8804
    %v10091 = vunpack.c.l.b16 %v8805
    %v10092 = vunpack.c.h.b16 %v8805
    %v10093 = vunpack.c.l.b16 %v8806
    %v10094 = vunpack.c.h.b16 %v8806
    %v10095 = vunpack.c.l.b16 %v8807
    %v10096 = vunpack.c.l.b16 %v8808
    %v10097 = vunpack.c.h.b16 %v8808
    %v10098 = vunpack.c.l.b16 %v8809
    %v10099 = vunpack.c.h.b16 %v8809
    %v10100 = vunpack.c.l.b16 %v8810
    %v10101 = vunpack.c.h.b16 %v8810
    %v10102 = vunpack.c.l.b16 %v8811
    %v10103 = vunpack.c.l.b16 %v8812
    %v10104 = vunpack.c.h.b16 %v8812
    %v10105 = vunpack.c.l.b16 %v8813
    %v10106 = vunpack.c.h.b16 %v8813
    %v10107 = vunpack.c.l.b16 %v8814
    %v10108 = vunpack.c.h.b16 %v8814
    %v10109 = vunpack.c.l.b16 %v8815
    %v10110 = vunpack.c.l.b16 %v8816
    %v10111 = vunpack.c.h.b16 %v8816
    %v10112 = vunpack.c.l.b16 %v8817
    %v10113 = vunpack.c.h.b16 %v8817
    %v10114 = vunpack.c.l.b16 %v8818
    %v10115 = vunpack.c.h.b16 %v8818
    %v10116 = vunpack.c.l.b16 %v8819
    %v10117 = vunpack.c.l.b16 %v8820
    %v10118 = vunpack.c.h.b16 %v8820
    %v10119 = vunpack.c.l.b16 %v8821
    %v10120 = vunpack.c.h.b16 %v8821
    %v10121 = vunpack.c.l.b16 %v8822
    %v10122 = vunpack.c.h.b16 %v8822
    %v10123 = vunpack.c.l.b16 %v8823
    %v10124 = vunpack.c.l.b16 %v8824
    %v10125 = vunpack.c.h.b16 %v8824
    %v10126 = vunpack.c.l.b16 %v8825
    %v10127 = vunpack.c.h.b16 %v8825
    %v10128 = vunpack.c.l.b16 %v8826
    %v10129 = vunpack.c.h.b16 %v8826
    %v10130 = vunpack.c.l.b16 %v8827
    %v10131 = vunpack.c.l.b16 %v8828
    %v10132 = vunpack.c.h.b16 %v8828
    %v10133 = vunpack.c.l.b16 %v8829
    %v10134 = vunpack.c.h.b16 %v8829
    %v10135 = vunpack.c.l.b16 %v8830
    %v10136 = vunpack.c.h.b16 %v8830
    %v10137 = vunpack.c.l.b16 %v8831
    %v10138 = vunpack.c.l.b16 %v8832
    %v10139 = vunpack.c.h.b16 %v8832
    %v10140 = vunpack.c.l.b16 %v8833
    %v10141 = vunpack.c.h.b16 %v8833
    %v10142 = vunpack.c.l.b16 %v8834
    %v10143 = vunpack.c.h.b16 %v8834
    %v10144 = vunpack.c.l.b16 %v8835
    %v10145 = vunpack.c.l.b16 %v8836
    %v10146 = vunpack.c.h.b16 %v8836
    %v10147 = vunpack.c.l.b16 %v8837
    %v10148 = vunpack.c.h.b16 %v8837
    %v10149 = vunpack.c.l.b16 %v8838
    %v10150 = vunpack.c.h.b16 %v8838
    %v10151 = vunpack.c.l.b16 %v8839
    %v10152 = vunpack.c.l.b16 %v8840
    %v10153 = vunpack.c.h.b16 %v8840
    %v10154 = vunpack.c.l.b16 %v8841
    %v10155 = vunpack.c.h.b16 %v8841
    %v10156 = vunpack.c.l.b16 %v8842
    %v10157 = vunpack.c.h.b16 %v8842
    %v10158 = vunpack.c.l.b16 %v8843
    %v10159 = vunpack.c.l.b16 %v8844
    %v10160 = vunpack.c.h.b16 %v8844
    %v10161 = vunpack.c.l.b16 %v8845
    %v10162 = vunpack.c.h.b16 %v8845
    %v10163 = vunpack.c.l.b16 %v8846
    %v10164 = vunpack.c.h.b16 %v8846
    %v10165 = vunpack.c.l.b16 %v8847
    %v10166 = vunpack.c.l.b16 %v8848
    %v10167 = vunpack.c.h.b16 %v8848
    %v10168 = vunpack.c.l.b16 %v8849
    %v10169 = vunpack.c.h.b16 %v8849
    %v10170 = vunpack.c.l.b16 %v8850
    %v10171 = vunpack.c.h.b16 %v8850
    %v10172 = vunpack.c.l.b16 %v8851
    %v10173 = vunpack.c.l.b16 %v8852
    %v10174 = vunpack.c.h.b16 %v8852
    %v10175 = vunpack.c.l.b16 %v8853
    %v10176 = vunpack.c.h.b16 %v8853
    %v10177 = vunpack.c.l.b16 %v8854
    %v10178 = vunpack.c.h.b16 %v8854
    %v10179 = vunpack.c.l.b16 %v8855
    %v10180 = vunpack.c.l.b16 %v8856
    %v10181 = vunpack.c.h.b16 %v8856
    %v10182 = vunpack.c.l.b16 %v8857
    %v10183 = vunpack.c.h.b16 %v8857
    %v10184 = vunpack.c.l.b16 %v8858
    %v10185 = vunpack.c.h.b16 %v8858
    %v10186 = vunpack.c.l.b16 %v8859
    %v10187 = vunpack.c.l.b16 %v8860
    %v10188 = vunpack.c.h.b16 %v8860
    %v10189 = vunpack.c.l.b16 %v8861
    %v10190 = vunpack.c.h.b16 %v8861
    %v10191 = vunpack.c.l.b16 %v8862
    %v10192 = vunpack.c.h.b16 %v8862
    %v10193 = vunpack.c.l.b16 %v8863
    %v10194 = vunpack.c.l.b16 %v8864
    %v10195 = vunpack.c.h.b16 %v8864
    %v10196 = vunpack.c.l.b16 %v8865
    %v10197 = vunpack.c.h.b16 %v8865
    %v10198 = vunpack.c.l.b16 %v8866
    %v10199 = vunpack.c.h.b16 %v8866
    %v10200 = vunpack.c.l.b16 %v8867
    %v10201 = vunpack.c.l.b16 %v8868
    %v10202 = vunpack.c.h.b16 %v8868
    %v10203 = vunpack.c.l.b16 %v8869
    %v10204 = vunpack.c.h.b16 %v8869
    %v10205 = vunpack.c.l.b16 %v8870
    %v10206 = vunpack.c.h.b16 %v8870
    %v10207 = vunpack.c.l.b16 %v8871
    %v10208 = vunpack.c.l.b16 %v8872
    %v10209 = vunpack.c.h.b16 %v8872
    %v10210 = vunpack.c.l.b16 %v8873
    %v10211 = vunpack.c.h.b16 %v8873
    %v10212 = vunpack.c.l.b16 %v8874
    %v10213 = vunpack.c.h.b16 %v8874
    %v10214 = vunpack.c.l.b16 %v8875
    %v10215 = vunpack.c.l.b16 %v8876
    %v10216 = vunpack.c.h.b16 %v8876
    %v10217 = vunpack.c.l.b16 %v8877
    %v10218 = vunpack.c.h.b16 %v8877
    %v10219 = vunpack.c.l.b16 %v8878
    %v10220 = vunpack.c.h.b16 %v8878
    %v10221 = vunpack.c.l.b16 %v8879
    %v10222 = vunpack.c.l.b16 %v8880
    %v10223 = vunpack.c.h.b16 %v8880
    %v10224 = vunpack.c.l.b16 %v8881
    %v10225 = vunpack.c.h.b16 %v8881
    %v10226 = vunpack.c.l.b16 %v8882
    %v10227 = vunpack.c.h.b16 %v8882
    %v10228 = vunpack.c.l.b16 %v8883
    %v10229 = vunpack.c.l.b16 %v8884
    %v10230 = vunpack.c.h.b16 %v8884
    %v10231 = vunpack.c.l.b16 %v8885
    %v10232 = vunpack.c.h.b16 %v8885
    %v10233 = vunpack.c.l.b16 %v8886
    %v10234 = vunpack.c.h.b16 %v8886
    %v10235 = vunpack.c.l.b16 %v8887
    %v10236 = vunpack.c.l.b16 %v8888
    %v10237 = vunpack.c.h.b16 %v8888
    %v10238 = vunpack.c.l.b16 %v8889
    %v10239 = vunpack.c.h.b16 %v8889
    %v10240 = vunpack.c.l.b16 %v8890
    %v10241 = vunpack.c.h.b16 %v8890
    %v10242 = vunpack.c.l.b16 %v8891
    %v10243 = vunpack.c.l.b16 %v8892
    %v10244 = vunpack.c.h.b16 %v8892
    %v10245 = vunpack.c.l.b16 %v8893
    %v10246 = vunpack.c.h.b16 %v8893
    %v10247 = vunpack.c.l.b16 %v8894
    %v10248 = vunpack.c.h.b16 %v8894
    %v10249 = vunpack.c.l.b16 %v8895
    %v10250 = vunpack.c.l.b16 %v8896
    %v10251 = vunpack.c.h.b16 %v8896
    %v10252 = vunpack.c.l.b16 %v8897
    %v10253 = vunpack.c.h.b16 %v8897
    %v10254 = vunpack.c.l.b16 %v8898
    %v10255 = vunpack.c.h.b16 %v8898
    %v10256 = vunpack.c.l.b16 %v8899
    %v10257 = vunpack.c.l.b16 %v8900
    %v10258 = vunpack.c.h.b16 %v8900
    %v10259 = vunpack.c.l.b16 %v8901
    %v10260 = vunpack.c.h.b16 %v8901
    %v10261 = vunpack.c.l.b16 %v8902
    %v10262 = vunpack.c.h.b16 %v8902
    %v10263 = vunpack.c.l.b16 %v8903
    %v10264 = vunpack.c.l.b16 %v8904
    %v10265 = vunpack.c.h.b16 %v8904
    %v10266 = vunpack.c.l.b16 %v8905
    %v10267 = vunpack.c.h.b16 %v8905
    %v10268 = vunpack.c.l.b16 %v8906
    %v10269 = vunpack.c.h.b16 %v8906
    %v10270 = vunpack.c.l.b16 %v8907
    %v10271 = vunpack.c.l.b16 %v8908
    %v10272 = vunpack.c.h.b16 %v8908
    %v10273 = vunpack.c.l.b16 %v8909
    %v10274 = vunpack.c.h.b16 %v8909
    %v10275 = vunpack.c.l.b16 %v8910
    %v10276 = vunpack.c.h.b16 %v8910
    %v10277 = vunpack.c.l.b16 %v8911
    %v10278 = vunpack.c.l.b16 %v8912
    %v10279 = vunpack.c.h.b16 %v8912
    %v10280 = vunpack.c.l.b16 %v8913
    %v10281 = vunpack.c.h.b16 %v8913
    %v10282 = vunpack.c.l.b16 %v8914
    %v10283 = vunpack.c.h.b16 %v8914
    %v10284 = vunpack.c.l.b16 %v8915
    %v10285 = vunpack.c.l.b16 %v8916
    %v10286 = vunpack.c.h.b16 %v8916
    %v10287 = vunpack.c.l.b16 %v8917
    %v10288 = vunpack.c.h.b16 %v8917
    %v10289 = vunpack.c.l.b16 %v8918
    %v10290 = vunpack.c.h.b16 %v8918
    %v10291 = vunpack.c.l.b16 %v8919
    %v10292 = vunpack.c.l.b16 %v8920
    %v10293 = vunpack.c.h.b16 %v8920
    %v10294 = vunpack.c.l.b16 %v8921
    %v10295 = vunpack.c.h.b16 %v8921
    %v10296 = vunpack.c.l.b16 %v8922
    %v10297 = vunpack.c.h.b16 %v8922
    %v10298 = vunpack.c.l.b16 %v8923
    %v10299 = vunpack.c.l.b16 %v8924
    %v10300 = vunpack.c.h.b16 %v8924
    %v10301 = vunpack.c.l.b16 %v8925
    %v10302 = vunpack.c.h.b16 %v8925
    %v10303 = vunpack.c.l.b16 %v8926
    %v10304 = vunpack.c.h.b16 %v8926
    %v10305 = vunpack.c.l.b16 %v8927
    %v10306 = vunpack.c.l.b16 %v8928
    %v10307 = vunpack.c.h.b16 %v8928
    %v10308 = vunpack.c.l.b16 %v8929
    %v10309 = vunpack.c.h.b16 %v8929
    %v10310 = vunpack.c.l.b16 %v8930
    %v10311 = vunpack.c.h.b16 %v8930
    %v10312 = vunpack.c.l.b16 %v8931
    %v10313 = vunpack.c.l.b16 %v8932
    %v10314 = vunpack.c.h.b16 %v8932
    %v10315 = vunpack.c.l.b16 %v8933
    %v10316 = vunpack.c.h.b16 %v8933
    %v10317 = vunpack.c.l.b16 %v8934
    %v10318 = vunpack.c.h.b16 %v8934
    %v10319 = vunpack.c.l.b16 %v8935
    %v10320 = vunpack.c.l.b16 %v8936
    %v10321 = vunpack.c.h.b16 %v8936
    %v10322 = vunpack.c.l.b16 %v8937
    %v10323 = vunpack.c.h.b16 %v8937
    %v10324 = vunpack.c.l.b16 %v8938
    %v10325 = vunpack.c.h.b16 %v8938
    %v10326 = vunpack.c.l.b16 %v8939
    %v10327 = vunpack.c.l.b16 %v8940
    %v10328 = vunpack.c.h.b16 %v8940
    %v10329 = vunpack.c.l.b16 %v8941
    %v10330 = vunpack.c.h.b16 %v8941
    %v10331 = vunpack.c.l.b16 %v8942
    %v10332 = vunpack.c.h.b16 %v8942
    %v10333 = vunpack.c.l.b16 %v8943
    %v10334 = vunpack.c.l.b16 %v8944
    %v10335 = vunpack.c.h.b16 %v8944
    %v10336 = vunpack.c.l.b16 %v8945
    %v10337 = vunpack.c.h.b16 %v8945
    %v10338 = vunpack.c.l.b16 %v8946
    %v10339 = vunpack.c.h.b16 %v8946
    %v10340 = vunpack.c.l.b16 %v8947
    %v10341 = vunpack.c.l.b16 %v8948
    %v10342 = vunpack.c.h.b16 %v8948
    %v10343 = vunpack.c.l.b16 %v8949
    %v10344 = vunpack.c.h.b16 %v8949
    %v10345 = vunpack.c.l.b16 %v8950
    %v10346 = vunpack.c.h.b16 %v8950
    %v10347 = vunpack.c.l.b16 %v8951
    %v10348 = vunpack.c.l.b16 %v8952
    %v10349 = vunpack.c.h.b16 %v8952
    %v10350 = vunpack.c.l.b16 %v8953
    %v10351 = vunpack.c.h.b16 %v8953
    %v10352 = vunpack.c.l.b16 %v8954
    %v10353 = vunpack.c.h.b16 %v8954
    %v10354 = vunpack.c.l.b16 %v8955
    %v10355 = vunpack.c.l.b16 %v8956
    %v10356 = vunpack.c.h.b16 %v8956
    %v10357 = vunpack.c.l.b16 %v8957
    %v10358 = vunpack.c.h.b16 %v8957
    %v10359 = vunpack.c.l.b16 %v8958
    %v10360 = vunpack.c.h.b16 %v8958
    %v10361 = vunpack.c.l.b16 %v8959
    %v10362 = vunpack.c.l.b16 %v8960
    %v10363 = vunpack.c.h.b16 %v8960
    %v10364 = vunpack.c.l.b16 %v8961
    %v10365 = vunpack.c.h.b16 %v8961
    %v10366 = vunpack.c.l.b16 %v8962
    %v10367 = vunpack.c.h.b16 %v8962
    %v10368 = vunpack.c.l.b16 %v8963
    %v10369 = vunpack.c.l.b16 %v8964
    %v10370 = vunpack.c.h.b16 %v8964
    %v10371 = vunpack.c.l.b16 %v8965
    %v10372 = vunpack.c.h.b16 %v8965
    %v10373 = vunpack.c.l.b16 %v8966
    %v10374 = vunpack.c.h.b16 %v8966
    %v10375 = vunpack.c.l.b16 %v8967
    %v10376 = vunpack.c.l.b16 %v8968
    %v10377 = vunpack.c.h.b16 %v8968
    %v10378 = vunpack.c.l.b16 %v8969
    %v10379 = vunpack.c.h.b16 %v8969
    %v10380 = vunpack.c.l.b16 %v8970
    %v10381 = vunpack.c.h.b16 %v8970
    %v10382 = vunpack.c.l.b16 %v8971
    %v10383 = vunpack.c.l.b16 %v8972
    %v10384 = vunpack.c.h.b16 %v8972
    %v10385 = vunpack.c.l.b16 %v8973
    %v10386 = vunpack.c.h.b16 %v8973
    %v10387 = vunpack.c.l.b16 %v8974
    %v10388 = vunpack.c.h.b16 %v8974
    %v10389 = vunpack.c.l.b16 %v8975
    %v10390 = vunpack.c.l.b16 %v8976
    %v10391 = vunpack.c.h.b16 %v8976
    %v10392 = vunpack.c.l.b16 %v8977
    %v10393 = vunpack.c.h.b16 %v8977
    %v10394 = vunpack.c.l.b16 %v8978
    %v10395 = vunpack.c.h.b16 %v8978
    %v10396 = vunpack.c.l.b16 %v8979
    %v10397 = vunpack.c.l.b16 %v8980
    %v10398 = vunpack.c.h.b16 %v8980
    %v10399 = vunpack.c.l.b16 %v8981
    %v10400 = vunpack.c.h.b16 %v8981
    %v10401 = vunpack.c.l.b16 %v8982
    %v10402 = vunpack.c.h.b16 %v8982
    %v10403 = vunpack.c.l.b16 %v8983
    %v10404 = vunpack.c.l.b16 %v8984
    %v10405 = vunpack.c.h.b16 %v8984
    %v10406 = vunpack.c.l.b16 %v8985
    %v10407 = vunpack.c.h.b16 %v8985
    %v10408 = vunpack.c.l.b16 %v8986
    %v10409 = vunpack.c.h.b16 %v8986
    %v10410 = vunpack.c.l.b16 %v8987
    %v10411 = vunpack.c.l.b16 %v8988
    %v10412 = vunpack.c.h.b16 %v8988
    %v10413 = vunpack.c.l.b16 %v8989
    %v10414 = vunpack.c.h.b16 %v8989
    %v10415 = vunpack.c.l.b16 %v8990
    %v10416 = vunpack.c.h.b16 %v8990
    %v10417 = vunpack.c.l.b16 %v8991
    %v10418 = vunpack.c.l.b16 %v8992
    %v10419 = vunpack.c.h.b16 %v8992
    %v10420 = vunpack.c.l.b16 %v8993
    %v10421 = vunpack.c.h.b16 %v8993
    %v10422 = vunpack.c.l.b16 %v8994
    %v10423 = vunpack.c.h.b16 %v8994
    %v10424 = vunpack.c.l.b16 %v8995
    %v10425 = vunpack.c.l.b16 %v8996
    %v10426 = vunpack.c.h.b16 %v8996
    %v10427 = vunpack.c.l.b16 %v8997
    %v10428 = vunpack.c.h.b16 %v8997
    %v10429 = vunpack.c.l.b16 %v8998
    %v10430 = vunpack.c.h.b16 %v8998
    %v10431 = vunpack.c.l.b16 %v8999
    %v10432 = vunpack.c.l.b16 %v9000
    %v10433 = vunpack.c.h.b16 %v9000
    %v10434 = vunpack.c.l.b16 %v9001
    %v10435 = vunpack.c.h.b16 %v9001
    %v10436 = vunpack.c.l.b16 %v9002
    %v10437 = vunpack.c.h.b16 %v9002
    %v10438 = vunpack.c.l.b16 %v9003
    %v10439 = vunpack.c.l.b16 %v9004
    %v10440 = vunpack.c.h.b16 %v9004
    %v10441 = vunpack.c.l.b16 %v9005
    %v10442 = vunpack.c.h.b16 %v9005
    %v10443 = vunpack.c.l.b16 %v9006
    %v10444 = vunpack.c.h.b16 %v9006
    %v10445 = vunpack.c.l.b16 %v9007
    %v10446 = vunpack.c.l.b16 %v9008
    %v10447 = vunpack.c.h.b16 %v9008
    %v10448 = vunpack.c.l.b16 %v9009
    %v10449 = vunpack.c.h.b16 %v9009
    %v10450 = vunpack.c.l.b16 %v9010
    %v10451 = vunpack.c.h.b16 %v9010
    %v10452 = vunpack.c.l.b16 %v9011
    %v10453 = vunpack.c.l.b16 %v9012
    %v10454 = vunpack.c.h.b16 %v9012
    %v10455 = vunpack.c.l.b16 %v9013
    %v10456 = vunpack.c.h.b16 %v9013
    %v10457 = vunpack.c.l.b16 %v9014
    %v10458 = vunpack.c.h.b16 %v9014
    %v10459 = vunpack.c.l.b16 %v9015
    %v10460 = vunpack.c.l.b16 %v9016
    %v10461 = vunpack.c.h.b16 %v9016
    %v10462 = vunpack.c.l.b16 %v9017
    %v10463 = vunpack.c.h.b16 %v9017
    %v10464 = vunpack.c.l.b16 %v9018
    %v10465 = vunpack.c.h.b16 %v9018
    %v10466 = vunpack.c.l.b16 %v9019
    %v10467 = vunpack.c.l.b16 %v9020
    %v10468 = vunpack.c.h.b16 %v9020
    %v10469 = vunpack.c.l.b16 %v9021
    %v10470 = vunpack.c.h.b16 %v9021
    %v10471 = vunpack.c.l.b16 %v9022
    %v10472 = vunpack.c.h.b16 %v9022
    %v10473 = vunpack.c.l.b16 %v9023
    %v10474 = vunpack.c.l.b16 %v9024
    %v10475 = vunpack.c.h.b16 %v9024
    %v10476 = vunpack.c.l.b16 %v9025
    %v10477 = vunpack.c.h.b16 %v9025
    %v10478 = vunpack.c.l.b16 %v9026
    %v10479 = vunpack.c.h.b16 %v9026
    %v10480 = vunpack.c.l.b16 %v9027
    %v10481 = vpack.c.b16 %v9592, %v9585
    %v10482 = vpack.c.b16 %v9593, %v9586
    %v10483 = vpack.c.b16 %v9594, %v9587
    %v10484 = vpack.c.b16 %v9595, %v9588
    %v10485 = vpack.c.b16 %v9596, %v9589
    %v10486 = vpack.c.b16 %v9597, %v9590
    %v10487 = vpack.c.b16 %v9598, %v9591
    %v10488 = vpack.c.b16 %v9606, %v9599
    %v10489 = vpack.c.b16 %v9607, %v9600
    %v10490 = vpack.c.b16 %v9608, %v9601
    %v10491 = vpack.c.b16 %v9609, %v9602
    %v10492 = vpack.c.b16 %v9610, %v9603
    %v10493 = vpack.c.b16 %v9611, %v9604
    %v10494 = vpack.c.b16 %v9612, %v9605
    %v10495 = vpack.c.b16 %v9620, %v9613
    %v10496 = vpack.c.b16 %v9621, %v9614
    %v10497 = vpack.c.b16 %v9622, %v9615
    %v10498 = vpack.c.b16 %v9623, %v9616
    %v10499 = vpack.c.b16 %v9624, %v9617
    %v10500 = vpack.c.b16 %v9625, %v9618
    %v10501 = vpack.c.b16 %v9626, %v9619
    %v10502 = vpack.c.b16 %v9634, %v9627
    %v10503 = vpack.c.b16 %v9635, %v9628
    %v10504 = vpack.c.b16 %v9636, %v9629
    %v10505 = vpack.c.b16 %v9637, %v9630
    %v10506 = vpack.c.b16 %v9638, %v9631
    %v10507 = vpack.c.b16 %v9639, %v9632
    %v10508 = vpack.c.b16 %v9640, %v9633
    %v10509 = vpack.c.b16 %v9648, %v9641
    %v10510 = vpack.c.b16 %v9649, %v9642
    %v10511 = vpack.c.b16 %v9650, %v9643
    %v10512 = vpack.c.b16 %v9651, %v9644
    %v10513 = vpack.c.b16 %v9652, %v9645
    %v10514 = vpack.c.b16 %v9653, %v9646
    %v10515 = vpack.c.b16 %v9654, %v9647
    %v10516 = vpack.c.b16 %v9662, %v9655
    %v10517 = vpack.c.b16 %v9663, %v9656
    %v10518 = vpack.c.b16 %v9664, %v9657
    %v10519 = vpack.c.b16 %v9665, %v9658
    %v10520 = vpack.c.b16 %v9666, %v9659
    %v10521 = vpack.c.b16 %v9667, %v9660
    %v10522 = vpack.c.b16 %v9668, %v9661
    %v10523 = vpack.c.b16 %v9676, %v9669
    %v10524 = vpack.c.b16 %v9677, %v9670
    %v10525 = vpack.c.b16 %v9678, %v9671
    %v10526 = vpack.c.b16 %v9679, %v9672
    %v10527 = vpack.c.b16 %v9680, %v9673
    %v10528 = vpack.c.b16 %v9681, %v9674
    %v10529 = vpack.c.b16 %v9682, %v9675
    %v10530 = vpack.c.b16 %v9690, %v9683
    %v10531 = vpack.c.b16 %v9691, %v9684
    %v10532 = vpack.c.b16 %v9692, %v9685
    %v10533 = vpack.c.b16 %v9693, %v9686
    %v10534 = vpack.c.b16 %v9694, %v9687
    %v10535 = vpack.c.b16 %v9695, %v9688
    %v10536 = vpack.c.b16 %v9696, %v9689
    %v10537 = vpack.c.b16 %v9704, %v9697
    %v10538 = vpack.c.b16 %v9705, %v9698
    %v10539 = vpack.c.b16 %v9706, %v9699
    %v10540 = vpack.c.b16 %v9707, %v9700
    %v10541 = vpack.c.b16 %v9708, %v9701
    %v10542 = vpack.c.b16 %v9709, %v9702
    %v10543 = vpack.c.b16 %v9710, %v9703
    %v10544 = vpack.c.b16 %v9718, %v9711
    %v10545 = vpack.c.b16 %v9719, %v9712
    %v10546 = vpack.c.b16 %v9720, %v9713
    %v10547 = vpack.c.b16 %v9721, %v9714
    %v10548 = vpack.c.b16 %v9722, %v9715
    %v10549 = vpack.c.b16 %v9723, %v9716
    %v10550 = vpack.c.b16 %v9724, %v9717
    %v10551 = vpack.c.b16 %v9732, %v9725
    %v10552 = vpack.c.b16 %v9733, %v9726
    %v10553 = vpack.c.b16 %v9734, %v9727
    %v10554 = vpack.c.b16 %v9735, %v9728
    %v10555 = vpack.c.b16 %v9736, %v9729
    %v10556 = vpack.c.b16 %v9737, %v9730
    %v10557 = vpack.c.b16 %v9738, %v9731
    %v10558 = vpack.c.b16 %v9746, %v9739
    %v10559 = vpack.c.b16 %v9747, %v9740
    %v10560 = vpack.c.b16 %v9748, %v9741
    %v10561 = vpack.c.b16 %v9749, %v9742
    %v10562 = vpack.c.b16 %v9750, %v9743
    %v10563 = vpack.c.b16 %v9751, %v9744
    %v10564 = vpack.c.b16 %v9752, %v9745
    %v10565 = vpack.c.b16 %v9760, %v9753
    %v10566 = vpack.c.b16 %v9761, %v9754
    %v10567 = vpack.c.b16 %v9762, %v9755
    %v10568 = vpack.c.b16 %v9763, %v9756
    %v10569 = vpack.c.b16 %v9764, %v9757
    %v10570 = vpack.c.b16 %v9765, %v9758
    %v10571 = vpack.c.b16 %v9766, %v9759
    %v10572 = vpack.c.b16 %v9774, %v9767
    %v10573 = vpack.c.b16 %v9775, %v9768
    %v10574 = vpack.c.b16 %v9776, %v9769
    %v10575 = vpack.c.b16 %v9777, %v9770
    %v10576 = vpack.c.b16 %v9778, %v9771
    %v10577 = vpack.c.b16 %v9779, %v9772
    %v10578 = vpack.c.b16 %v9780, %v9773
    %v10579 = vpack.c.b16 %v9788, %v9781
    %v10580 = vpack.c.b16 %v9789, %v9782
    %v10581 = vpack.c.b16 %v9790, %v9783
    %v10582 = vpack.c.b16 %v9791, %v9784
    %v10583 = vpack.c.b16 %v9792, %v9785
    %v10584 = vpack.c.b16 %v9793, %v9786
    %v10585 = vpack.c.b16 %v9794, %v9787
    %v10586 = vpack.c.b16 %v9802, %v9795
    %v10587 = vpack.c.b16 %v9803, %v9796
    %v10588 = vpack.c.b16 %v9804, %v9797
    %v10589 = vpack.c.b16 %v9805, %v9798
    %v10590 = vpack.c.b16 %v9806, %v9799
    %v10591 = vpack.c.b16 %v9807, %v9800
    %v10592 = vpack.c.b16 %v9808, %v9801
    %v10593 = vpack.c.b16 %v9816, %v9809
    %v10594 = vpack.c.b16 %v9817, %v9810
    %v10595 = vpack.c.b16 %v9818, %v9811
    %v10596 = vpack.c.b16 %v9819, %v9812
    %v10597 = vpack.c.b16 %v9820, %v9813
    %v10598 = vpack.c.b16 %v9821, %v9814
    %v10599 = vpack.c.b16 %v9822, %v9815
    %v10600 = vpack.c.b16 %v9830, %v9823
    %v10601 = vpack.c.b16 %v9831, %v9824
    %v10602 = vpack.c.b16 %v9832, %v9825
    %v10603 = vpack.c.b16 %v9833, %v9826
    %v10604 = vpack.c.b16 %v9834, %v9827
    %v10605 = vpack.c.b16 %v9835, %v9828
    %v10606 = vpack.c.b16 %v9836, %v9829
    %v10607 = vpack.c.b16 %v9844, %v9837
    %v10608 = vpack.c.b16 %v9845, %v9838
    %v10609 = vpack.c.b16 %v9846, %v9839
    %v10610 = vpack.c.b16 %v9847, %v9840
    %v10611 = vpack.c.b16 %v9848, %v9841
    %v10612 = vpack.c.b16 %v9849, %v9842
    %v10613 = vpack.c.b16 %v9850, %v9843
    %v10614 = vpack.c.b16 %v9858, %v9851
    %v10615 = vpack.c.b16 %v9859, %v9852
    %v10616 = vpack.c.b16 %v9860, %v9853
    %v10617 = vpack.c.b16 %v9861, %v9854
    %v10618 = vpack.c.b16 %v9862, %v9855
    %v10619 = vpack.c.b16 %v9863, %v9856
    %v10620 = vpack.c.b16 %v9864, %v9857
    %v10621 = vpack.c.b16 %v9872, %v9865
    %v10622 = vpack.c.b16 %v9873, %v9866
    %v10623 = vpack.c.b16 %v9874, %v9867
    %v10624 = vpack.c.b16 %v9875, %v9868
    %v10625 = vpack.c.b16 %v9876, %v9869
    %v10626 = vpack.c.b16 %v9877, %v9870
    %v10627 = vpack.c.b16 %v9878, %v9871
    %v10628 = vpack.c.b16 %v9886, %v9879
    %v10629 = vpack.c.b16 %v9887, %v9880
    %v10630 = vpack.c.b16 %v9888, %v9881
    %v10631 = vpack.c.b16 %v9889, %v9882
    %v10632 = vpack.c.b16 %v9890, %v9883
    %v10633 = vpack.c.b16 %v9891, %v9884
    %v10634 = vpack.c.b16 %v9892, %v9885
    %v10635 = vpack.c.b16 %v9900, %v9893
    %v10636 = vpack.c.b16 %v9901, %v9894
    %v10637 = vpack.c.b16 %v9902, %v9895
    %v10638 = vpack.c.b16 %v9903, %v9896
    %v10639 = vpack.c.b16 %v9904, %v9897
    %v10640 = vpack.c.b16 %v9905, %v9898
    %v10641 = vpack.c.b16 %v9906, %v9899
    %v10642 = vpack.c.b16 %v9914, %v9907
    %v10643 = vpack.c.b16 %v9915, %v9908
    %v10644 = vpack.c.b16 %v9916, %v9909
    %v10645 = vpack.c.b16 %v9917, %v9910
    %v10646 = vpack.c.b16 %v9918, %v9911
    %v10647 = vpack.c.b16 %v9919, %v9912
    %v10648 = vpack.c.b16 %v9920, %v9913
    %v10649 = vpack.c.b16 %v9928, %v9921
    %v10650 = vpack.c.b16 %v9929, %v9922
    %v10651 = vpack.c.b16 %v9930, %v9923
    %v10652 = vpack.c.b16 %v9931, %v9924
    %v10653 = vpack.c.b16 %v9932, %v9925
    %v10654 = vpack.c.b16 %v9933, %v9926
    %v10655 = vpack.c.b16 %v9934, %v9927
    %v10656 = vpack.c.b16 %v9942, %v9935
    %v10657 = vpack.c.b16 %v9943, %v9936
    %v10658 = vpack.c.b16 %v9944, %v9937
    %v10659 = vpack.c.b16 %v9945, %v9938
    %v10660 = vpack.c.b16 %v9946, %v9939
    %v10661 = vpack.c.b16 %v9947, %v9940
    %v10662 = vpack.c.b16 %v9948, %v9941
    %v10663 = vpack.c.b16 %v9956, %v9949
    %v10664 = vpack.c.b16 %v9957, %v9950
    %v10665 = vpack.c.b16 %v9958, %v9951
    %v10666 = vpack.c.b16 %v9959, %v9952
    %v10667 = vpack.c.b16 %v9960, %v9953
    %v10668 = vpack.c.b16 %v9961, %v9954
    %v10669 = vpack.c.b16 %v9962, %v9955
    %v10670 = vpack.c.b16 %v9970, %v9963
    %v10671 = vpack.c.b16 %v9971, %v9964
    %v10672 = vpack.c.b16 %v9972, %v9965
    %v10673 = vpack.c.b16 %v9973, %v9966
    %v10674 = vpack.c.b16 %v9974, %v9967
    %v10675 = vpack.c.b16 %v9975, %v9968
    %v10676 = vpack.c.b16 %v9976, %v9969
    %v10677 = vpack.c.b16 %v9984, %v9977
    %v10678 = vpack.c.b16 %v9985, %v9978
    %v10679 = vpack.c.b16 %v9986, %v9979
    %v10680 = vpack.c.b16 %v9987, %v9980
    %v10681 = vpack.c.b16 %v9988, %v9981
    %v10682 = vpack.c.b16 %v9989, %v9982
    %v10683 = vpack.c.b16 %v9990, %v9983
    %v10684 = vpack.c.b16 %v9998, %v9991
    %v10685 = vpack.c.b16 %v9999, %v9992
    %v10686 = vpack.c.b16 %v10000, %v9993
    %v10687 = vpack.c.b16 %v10001, %v9994
    %v10688 = vpack.c.b16 %v10002, %v9995
    %v10689 = vpack.c.b16 %v10003, %v9996
    %v10690 = vpack.c.b16 %v10004, %v9997
    %v10691 = vpack.c.b16 %v10012, %v10005
    %v10692 = vpack.c.b16 %v10013, %v10006
    %v10693 = vpack.c.b16 %v10014, %v10007
    %v10694 = vpack.c.b16 %v10015, %v10008
    %v10695 = vpack.c.b16 %v10016, %v10009
    %v10696 = vpack.c.b16 %v10017, %v10010
    %v10697 = vpack.c.b16 %v10018, %v10011
    %v10698 = vpack.c.b16 %v10026, %v10019
    %v10699 = vpack.c.b16 %v10027, %v10020
    %v10700 = vpack.c.b16 %v10028, %v10021
    %v10701 = vpack.c.b16 %v10029, %v10022
    %v10702 = vpack.c.b16 %v10030, %v10023
    %v10703 = vpack.c.b16 %v10031, %v10024
    %v10704 = vpack.c.b16 %v10032, %v10025
    %v10705 = vpack.c.b16 %v10040, %v10033
    %v10706 = vpack.c.b16 %v10041, %v10034
    %v10707 = vpack.c.b16 %v10042, %v10035
    %v10708 = vpack.c.b16 %v10043, %v10036
    %v10709 = vpack.c.b16 %v10044, %v10037
    %v10710 = vpack.c.b16 %v10045, %v10038
    %v10711 = vpack.c.b16 %v10046, %v10039
    %v10712 = vpack.c.b16 %v10054, %v10047
    %v10713 = vpack.c.b16 %v10055, %v10048
    %v10714 = vpack.c.b16 %v10056, %v10049
    %v10715 = vpack.c.b16 %v10057, %v10050
    %v10716 = vpack.c.b16 %v10058, %v10051
    %v10717 = vpack.c.b16 %v10059, %v10052
    %v10718 = vpack.c.b16 %v10060, %v10053
    %v10719 = vpack.c.b16 %v10068, %v10061
    %v10720 = vpack.c.b16 %v10069, %v10062
    %v10721 = vpack.c.b16 %v10070, %v10063
    %v10722 = vpack.c.b16 %v10071, %v10064
    %v10723 = vpack.c.b16 %v10072, %v10065
    %v10724 = vpack.c.b16 %v10073, %v10066
    %v10725 = vpack.c.b16 %v10074, %v10067
    %v10726 = vpack.c.b16 %v10082, %v10075
    %v10727 = vpack.c.b16 %v10083, %v10076
    %v10728 = vpack.c.b16 %v10084, %v10077
    %v10729 = vpack.c.b16 %v10085, %v10078
    %v10730 = vpack.c.b16 %v10086, %v10079
    %v10731 = vpack.c.b16 %v10087, %v10080
    %v10732 = vpack.c.b16 %v10088, %v10081
    %v10733 = vpack.c.b16 %v10096, %v10089
    %v10734 = vpack.c.b16 %v10097, %v10090
    %v10735 = vpack.c.b16 %v10098, %v10091
    %v10736 = vpack.c.b16 %v10099, %v10092
    %v10737 = vpack.c.b16 %v10100, %v10093
    %v10738 = vpack.c.b16 %v10101, %v10094
    %v10739 = vpack.c.b16 %v10102, %v10095
    %v10740 = vpack.c.b16 %v10110, %v10103
    %v10741 = vpack.c.b16 %v10111, %v10104
    %v10742 = vpack.c.b16 %v10112, %v10105
    %v10743 = vpack.c.b16 %v10113, %v10106
    %v10744 = vpack.c.b16 %v10114, %v10107
    %v10745 = vpack.c.b16 %v10115, %v10108
    %v10746 = vpack.c.b16 %v10116, %v10109
    %v10747 = vpack.c.b16 %v10124, %v10117
    %v10748 = vpack.c.b16 %v10125, %v10118
    %v10749 = vpack.c.b16 %v10126, %v10119
    %v10750 = vpack.c.b16 %v10127, %v10120
    %v10751 = vpack.c.b16 %v10128, %v10121
    %v10752 = vpack.c.b16 %v10129, %v10122
    %v10753 = vpack.c.b16 %v10130, %v10123
    %v10754 = vpack.c.b16 %v10138, %v10131
    %v10755 = vpack.c.b16 %v10139, %v10132
    %v10756 = vpack.c.b16 %v10140, %v10133
    %v10757 = vpack.c.b16 %v10141, %v10134
    %v10758 = vpack.c.b16 %v10142, %v10135
    %v10759 = vpack.c.b16 %v10143, %v10136
    %v10760 = vpack.c.b16 %v10144, %v10137
    %v10761 = vpack.c.b16 %v10152, %v10145
    %v10762 = vpack.c.b16 %v10153, %v10146
    %v10763 = vpack.c.b16 %v10154, %v10147
    %v10764 = vpack.c.b16 %v10155, %v10148
    %v10765 = vpack.c.b16 %v10156, %v10149
    %v10766 = vpack.c.b16 %v10157, %v10150
    %v10767 = vpack.c.b16 %v10158, %v10151
    %v10768 = vpack.c.b16 %v10166, %v10159
    %v10769 = vpack.c.b16 %v10167, %v10160
    %v10770 = vpack.c.b16 %v10168, %v10161
    %v10771 = vpack.c.b16 %v10169, %v10162
    %v10772 = vpack.c.b16 %v10170, %v10163
    %v10773 = vpack.c.b16 %v10171, %v10164
    %v10774 = vpack.c.b16 %v10172, %v10165
    %v10775 = vpack.c.b16 %v10180, %v10173
    %v10776 = vpack.c.b16 %v10181, %v10174
    %v10777 = vpack.c.b16 %v10182, %v10175
    %v10778 = vpack.c.b16 %v10183, %v10176
    %v10779 = vpack.c.b16 %v10184, %v10177
    %v10780 = vpack.c.b16 %v10185, %v10178
    %v10781 = vpack.c.b16 %v10186, %v10179
    %v10782 = vpack.c.b16 %v10194, %v10187
    %v10783 = vpack.c.b16 %v10195, %v10188
    %v10784 = vpack.c.b16 %v10196, %v10189
    %v10785 = vpack.c.b16 %v10197, %v10190
    %v10786 = vpack.c.b16 %v10198, %v10191
    %v10787 = vpack.c.b16 %v10199, %v10192
    %v10788 = vpack.c.b16 %v10200, %v10193
    %v10789 = vpack.c.b16 %v10208, %v10201
    %v10790 = vpack.c.b16 %v10209, %v10202
    %v10791 = vpack.c.b16 %v10210, %v10203
    %v10792 = vpack.c.b16 %v10211, %v10204
    %v10793 = vpack.c.b16 %v10212, %v10205
    %v10794 = vpack.c.b16 %v10213, %v10206
    %v10795 = vpack.c.b16 %v10214, %v10207
    %v10796 = vpack.c.b16 %v10222, %v10215
    %v10797 = vpack.c.b16 %v10223, %v10216
    %v10798 = vpack.c.b16 %v10224, %v10217
    %v10799 = vpack.c.b16 %v10225, %v10218
    %v10800 = vpack.c.b16 %v10226, %v10219
    %v10801 = vpack.c.b16 %v10227, %v10220
    %v10802 = vpack.c.b16 %v10228, %v10221
    %v10803 = vpack.c.b16 %v10236, %v10229
    %v10804 = vpack.c.b16 %v10237, %v10230
    %v10805 = vpack.c.b16 %v10238, %v10231
    %v10806 = vpack.c.b16 %v10239, %v10232
    %v10807 = vpack.c.b16 %v10240, %v10233
    %v10808 = vpack.c.b16 %v10241, %v10234
    %v10809 = vpack.c.b16 %v10242, %v10235
    %v10810 = vpack.c.b16 %v10250, %v10243
    %v10811 = vpack.c.b16 %v10251, %v10244
    %v10812 = vpack.c.b16 %v10252, %v10245
    %v10813 = vpack.c.b16 %v10253, %v10246
    %v10814 = vpack.c.b16 %v10254, %v10247
    %v10815 = vpack.c.b16 %v10255, %v10248
    %v10816 = vpack.c.b16 %v10256, %v10249
    %v10817 = vpack.c.b16 %v10264, %v10257
    %v10818 = vpack.c.b16 %v10265, %v10258
    %v10819 = vpack.c.b16 %v10266, %v10259
    %v10820 = vpack.c.b16 %v10267, %v10260
    %v10821 = vpack.c.b16 %v10268, %v10261
    %v10822 = vpack.c.b16 %v10269, %v10262
    %v10823 = vpack.c.b16 %v10270, %v10263
    %v10824 = vpack.c.b16 %v10278, %v10271
    %v10825 = vpack.c.b16 %v10279, %v10272
    %v10826 = vpack.c.b16 %v10280, %v10273
    %v10827 = vpack.c.b16 %v10281, %v10274
    %v10828 = vpack.c.b16 %v10282, %v10275
    %v10829 = vpack.c.b16 %v10283, %v10276
    %v10830 = vpack.c.b16 %v10284, %v10277
    %v10831 = vpack.c.b16 %v10292, %v10285
    %v10832 = vpack.c.b16 %v10293, %v10286
    %v10833 = vpack.c.b16 %v10294, %v10287
    %v10834 = vpack.c.b16 %v10295, %v10288
    %v10835 = vpack.c.b16 %v10296, %v10289
    %v10836 = vpack.c.b16 %v10297, %v10290
    %v10837 = vpack.c.b16 %v10298, %v10291
    %v10838 = vpack.c.b16 %v10306, %v10299
    %v10839 = vpack.c.b16 %v10307, %v10300
    %v10840 = vpack.c.b16 %v10308, %v10301
    %v10841 = vpack.c.b16 %v10309, %v10302
    %v10842 = vpack.c.b16 %v10310, %v10303
    %v10843 = vpack.c.b16 %v10311, %v10304
    %v10844 = vpack.c.b16 %v10312, %v10305
    %v10845 = vpack.c.b16 %v10320, %v10313
    %v10846 = vpack.c.b16 %v10321, %v10314
    %v10847 = vpack.c.b16 %v10322, %v10315
    %v10848 = vpack.c.b16 %v10323, %v10316
    %v10849 = vpack.c.b16 %v10324, %v10317
    %v10850 = vpack.c.b16 %v10325, %v10318
    %v10851 = vpack.c.b16 %v10326, %v10319
    %v10852 = vpack.c.b16 %v10334, %v10327
    %v10853 = vpack.c.b16 %v10335, %v10328
    %v10854 = vpack.c.b16 %v10336, %v10329
    %v10855 = vpack.c.b16 %v10337, %v10330
    %v10856 = vpack.c.b16 %v10338, %v10331
    %v10857 = vpack.c.b16 %v10339, %v10332
    %v10858 = vpack.c.b16 %v10340, %v10333
    %v10859 = vpack.c.b16 %v10348, %v10341
    %v10860 = vpack.c.b16 %v10349, %v10342
    %v10861 = vpack.c.b16 %v10350, %v10343
    %v10862 = vpack.c.b16 %v10351, %v10344
    %v10863 = vpack.c.b16 %v10352, %v10345
    %v10864 = vpack.c.b16 %v10353, %v10346
    %v10865 = vpack.c.b16 %v10354, %v10347
    %v10866 = vpack.c.b16 %v10362, %v10355
    %v10867 = vpack.c.b16 %v10363, %v10356
    %v10868 = vpack.c.b16 %v10364, %v10357
    %v10869 = vpack.c.b16 %v10365, %v10358
    %v10870 = vpack.c.b16 %v10366, %v10359
    %v10871 = vpack.c.b16 %v10367, %v10360
    %v10872 = vpack.c.b16 %v10368, %v10361
    %v10873 = vpack.c.b16 %v10376, %v10369
    %v10874 = vpack.c.b16 %v10377, %v10370
    %v10875 = vpack.c.b16 %v10378, %v10371
    %v10876 = vpack.c.b16 %v10379, %v10372
    %v10877 = vpack.c.b16 %v10380, %v10373
    %v10878 = vpack.c.b16 %v10381, %v10374
    %v10879 = vpack.c.b16 %v10382, %v10375
    %v10880 = vpack.c.b16 %v10390, %v10383
    %v10881 = vpack.c.b16 %v10391, %v10384
    %v10882 = vpack.c.b16 %v10392, %v10385
    %v10883 = vpack.c.b16 %v10393, %v10386
    %v10884 = vpack.c.b16 %v10394, %v10387
    %v10885 = vpack.c.b16 %v10395, %v10388
    %v10886 = vpack.c.b16 %v10396, %v10389
    %v10887 = vpack.c.b16 %v10404, %v10397
    %v10888 = vpack.c.b16 %v10405, %v10398
    %v10889 = vpack.c.b16 %v10406, %v10399
    %v10890 = vpack.c.b16 %v10407, %v10400
    %v10891 = vpack.c.b16 %v10408, %v10401
    %v10892 = vpack.c.b16 %v10409, %v10402
    %v10893 = vpack.c.b16 %v10410, %v10403
    %v10894 = vpack.c.b16 %v10418, %v10411
    %v10895 = vpack.c.b16 %v10419, %v10412
    %v10896 = vpack.c.b16 %v10420, %v10413
    %v10897 = vpack.c.b16 %v10421, %v10414
    %v10898 = vpack.c.b16 %v10422, %v10415
    %v10899 = vpack.c.b16 %v10423, %v10416
    %v10900 = vpack.c.b16 %v10424, %v10417
    %v10901 = vpack.c.b16 %v10432, %v10425
    %v10902 = vpack.c.b16 %v10433, %v10426
    %v10903 = vpack.c.b16 %v10434, %v10427
    %v10904 = vpack.c.b16 %v10435, %v10428
    %v10905 = vpack.c.b16 %v10436, %v10429
    %v10906 = vpack.c.b16 %v10437, %v10430
    %v10907 = vpack.c.b16 %v10438, %v10431
    %v10908 = vpack.c.b16 %v10446, %v10439
    %v10909 = vpack.c.b16 %v10447, %v10440
    %v10910 = vpack.c.b16 %v10448, %v10441
    %v10911 = vpack.c.b16 %v10449, %v10442
    %v10912 = vpack.c.b16 %v10450, %v10443
    %v10913 = vpack.c.b16 %v10451, %v10444
    %v10914 = vpack.c.b16 %v10452, %v10445
    %v10915 = vpack.c.b16 %v10460, %v10453
    %v10916 = vpack.c.b16 %v10461, %v10454
    %v10917 = vpack.c.b16 %v10462, %v10455
    %v10918 = vpack.c.b16 %v10463, %v10456
    %v10919 = vpack.c.b16 %v10464, %v10457
    %v10920 = vpack.c.b16 %v10465, %v10458
    %v10921 = vpack.c.b16 %v10466, %v10459
    %v10922 = vpack.c.b16 %v10474, %v10467
    %v10923 = vpack.c.b16 %v10475, %v10468
    %v10924 = vpack.c.b16 %v10476, %v10469
    %v10925 = vpack.c.b16 %v10477, %v10470
    %v10926 = vpack.c.b16 %v10478, %v10471
    %v10927 = vpack.c.b16 %v10479, %v10472
    %v10928 = vpack.c.b16 %v10480, %v10473
    %11377 = vmatprep.subr.bf16.mxu0 %v10531
    %11378 = vmatpush1.bf16.msra.mxu0 %v10530
    %11379 = vmatprep.subr.bf16.mxu0 %v10524
    %11380 = vmatpush1.bf16.msra.mxu0 %v10523
    %11381 = vmatprep.subr.bf16.mxu0 %v10517
    %11382 = vmatpush1.bf16.msra.mxu0 %v10516
    %11383 = vmatprep.subr.bf16.mxu0 %v10510
    %11384 = vmatpush1.bf16.msra.mxu0 %v10509
    %11385 = vmatprep.subr.bf16.mxu0 %v10503
    %11386 = vmatpush1.bf16.msra.mxu0 %v10502
    %11387 = vmatprep.subr.bf16.mxu0 %v10496
    %11388 = vmatpush1.bf16.msra.mxu0 %v10495
    %11389 = vmatprep.subr.bf16.mxu0 %v10489
    %11390 = vmatpush1.bf16.msra.mxu0 %v10488
    %11391 = vmatprep.subr.bf16.mxu0 %v10482
    %11392 = vmatpush1.bf16.msra.mxu0 %v10481
    %11393 = vmatprep.subr.bf16.mxu0 %v10587
    %11394 = vmatpush2.bf16.msra.mxu0 %v10586
    %11395 = vmatprep.subr.bf16.mxu0 %v10580
    %11396 = vmatpush2.bf16.msra.mxu0 %v10579
    %11397 = vmatprep.subr.bf16.mxu0 %v10573
    %11398 = vmatpush2.bf16.msra.mxu0 %v10572
    %11399 = vmatprep.subr.bf16.mxu0 %v10566
    %11400 = vmatpush2.bf16.msra.mxu0 %v10565
    %11401 = vmatprep.subr.bf16.mxu0 %v10559
    %11402 = vmatpush2.bf16.msra.mxu0 %v10558
    %11403 = vmatprep.subr.bf16.mxu0 %v10552
    %11404 = vmatpush2.bf16.msra.mxu0 %v10551
    %11405 = vmatprep.subr.bf16.mxu0 %v10545
    %11406 = vmatpush2.bf16.msra.mxu0 %v10544
    %11407 = vmatprep.subr.bf16.mxu0 %v10538
    %11408 = vmatpush2.bf16.msra.mxu0 %v10537
    %11409 = vmatprep.mubr.bf16.mxu0 %v9030
    %11410 = vmatmul.mubr.bf16.gmra.mxu0 %v9029
    %v11411 = vpop.f32.mrf.mxu0
    %v11412 = vadd.f32 %v9041, %v11411
    %v11413 = vpop.f32.mrf.mxu0
    %v11414 = vadd.f32 %v9045, %v11413
    %v11415 = vpop.f32.mrf.mxu0
    %v11416 = vpop.f32.mrf.mxu0
    %11417 = vdwg.mxu0
    %11418 = vmatprep.subr.bf16.mxu0 %v10643
    %11419 = vmatpush1.bf16.msra.mxu0 %v10642
    %11420 = vmatprep.subr.bf16.mxu0 %v10636
    %11421 = vmatpush1.bf16.msra.mxu0 %v10635
    %11422 = vmatprep.subr.bf16.mxu0 %v10629
    %11423 = vmatpush1.bf16.msra.mxu0 %v10628
    %11424 = vmatprep.subr.bf16.mxu0 %v10622
    %11425 = vmatpush1.bf16.msra.mxu0 %v10621
    %11426 = vmatprep.subr.bf16.mxu0 %v10615
    %11427 = vmatpush1.bf16.msra.mxu0 %v10614
    %11428 = vmatprep.subr.bf16.mxu0 %v10608
    %11429 = vmatpush1.bf16.msra.mxu0 %v10607
    %11430 = vmatprep.subr.bf16.mxu0 %v10601
    %11431 = vmatpush1.bf16.msra.mxu0 %v10600
    %11432 = vmatprep.subr.bf16.mxu0 %v10594
    %11433 = vmatpush1.bf16.msra.mxu0 %v10593
    %11434 = vmatprep.subr.bf16.mxu0 %v10699
    %11435 = vmatpush2.bf16.msra.mxu0 %v10698
    %11436 = vmatprep.subr.bf16.mxu0 %v10692
    %11437 = vmatpush2.bf16.msra.mxu0 %v10691
    %11438 = vmatprep.subr.bf16.mxu0 %v10685
    %11439 = vmatpush2.bf16.msra.mxu0 %v10684
    %11440 = vmatprep.subr.bf16.mxu0 %v10678
    %11441 = vmatpush2.bf16.msra.mxu0 %v10677
    %11442 = vmatprep.subr.bf16.mxu0 %v10671
    %11443 = vmatpush2.bf16.msra.mxu0 %v10670
    %11444 = vmatprep.subr.bf16.mxu0 %v10664
    %11445 = vmatpush2.bf16.msra.mxu0 %v10663
    %11446 = vmatprep.subr.bf16.mxu0 %v10657
    %11447 = vmatpush2.bf16.msra.mxu0 %v10656
    %11448 = vmatprep.subr.bf16.mxu0 %v10650
    %11449 = vmatpush2.bf16.msra.mxu0 %v10649
    %11450 = vmatprep.mubr.bf16.mxu0 %v9032
    %11451 = vmatmul.mubr.bf16.gmra.mxu0 %v9031
    %v11452 = vpop.f32.mrf.mxu0
    %v11453 = vadd.f32 %v11412, %v11452
    %v11454 = vpop.f32.mrf.mxu0
    %v11455 = vadd.f32 %v11414, %v11454
    %v11456 = vpop.f32.mrf.mxu0
    %v11457 = vpop.f32.mrf.mxu0
    %11458 = vdwg.mxu0
    %11459 = vmatprep.subr.bf16.mxu0 %v10755
    %11460 = vmatpush1.bf16.msra.mxu0 %v10754
    %11461 = vmatprep.subr.bf16.mxu0 %v10748
    %11462 = vmatpush1.bf16.msra.mxu0 %v10747
    %11463 = vmatprep.subr.bf16.mxu0 %v10741
    %11464 = vmatpush1.bf16.msra.mxu0 %v10740
    %11465 = vmatprep.subr.bf16.mxu0 %v10734
    %11466 = vmatpush1.bf16.msra.mxu0 %v10733
    %11467 = vmatprep.subr.bf16.mxu0 %v10727
    %11468 = vmatpush1.bf16.msra.mxu0 %v10726
    %11469 = vmatprep.subr.bf16.mxu0 %v10720
    %11470 = vmatpush1.bf16.msra.mxu0 %v10719
    %11471 = vmatprep.subr.bf16.mxu0 %v10713
    %11472 = vmatpush1.bf16.msra.mxu0 %v10712
    %11473 = vmatprep.subr.bf16.mxu0 %v10706
    %11474 = vmatpush1.bf16.msra.mxu0 %v10705
    %11475 = vmatprep.subr.bf16.mxu0 %v10811
    %11476 = vmatpush2.bf16.msra.mxu0 %v10810
    %11477 = vmatprep.subr.bf16.mxu0 %v10804
    %11478 = vmatpush2.bf16.msra.mxu0 %v10803
    %11479 = vmatprep.subr.bf16.mxu0 %v10797
    %11480 = vmatpush2.bf16.msra.mxu0 %v10796
    %11481 = vmatprep.subr.bf16.mxu0 %v10790
    %11482 = vmatpush2.bf16.msra.mxu0 %v10789
    %11483 = vmatprep.subr.bf16.mxu0 %v10783
    %11484 = vmatpush2.bf16.msra.mxu0 %v10782
    %11485 = vmatprep.subr.bf16.mxu0 %v10776
    %11486 = vmatpush2.bf16.msra.mxu0 %v10775
    %11487 = vmatprep.subr.bf16.mxu0 %v10769
    %11488 = vmatpush2.bf16.msra.mxu0 %v10768
    %11489 = vmatprep.subr.bf16.mxu0 %v10762
    %11490 = vmatpush2.bf16.msra.mxu0 %v10761
    %11491 = vmatprep.mubr.bf16.mxu0 %v9034
    %11492 = vmatmul.mubr.bf16.gmra.mxu0 %v9033
    %v11493 = vpop.f32.mrf.mxu0
    %v11494 = vadd.f32 %v11453, %v11493
    %v11495 = vpop.f32.mrf.mxu0
    %v11496 = vadd.f32 %v11455, %v11495
    %v11497 = vpop.f32.mrf.mxu0
    %v11498 = vpop.f32.mrf.mxu0
    %11499 = vdwg.mxu0
    %11500 = vmatprep.subr.bf16.mxu0 %v10867
    %11501 = vmatpush1.bf16.msra.mxu0 %v10866
    %11502 = vmatprep.subr.bf16.mxu0 %v10860
    %11503 = vmatpush1.bf16.msra.mxu0 %v10859
    %11504 = vmatprep.subr.bf16.mxu0 %v10853
    %11505 = vmatpush1.bf16.msra.mxu0 %v10852
    %11506 = vmatprep.subr.bf16.mxu0 %v10846
    %11507 = vmatpush1.bf16.msra.mxu0 %v10845
    %11508 = vmatprep.subr.bf16.mxu0 %v10839
    %11509 = vmatpush1.bf16.msra.mxu0 %v10838
    %11510 = vmatprep.subr.bf16.mxu0 %v10832
    %11511 = vmatpush1.bf16.msra.mxu0 %v10831
    %11512 = vmatprep.subr.bf16.mxu0 %v10825
    %11513 = vmatpush1.bf16.msra.mxu0 %v10824
    %11514 = vmatprep.subr.bf16.mxu0 %v10818
    %11515 = vmatpush1.bf16.msra.mxu0 %v10817
    %11516 = vmatprep.subr.bf16.mxu0 %v10923
    %11517 = vmatpush2.bf16.msra.mxu0 %v10922
    %11518 = vmatprep.subr.bf16.mxu0 %v10916
    %11519 = vmatpush2.bf16.msra.mxu0 %v10915
    %11520 = vmatprep.subr.bf16.mxu0 %v10909
    %11521 = vmatpush2.bf16.msra.mxu0 %v10908
    %11522 = vmatprep.subr.bf16.mxu0 %v10902
    %11523 = vmatpush2.bf16.msra.mxu0 %v10901
    %11524 = vmatprep.subr.bf16.mxu0 %v10895
    %11525 = vmatpush2.bf16.msra.mxu0 %v10894
    %11526 = vmatprep.subr.bf16.mxu0 %v10888
    %11527 = vmatpush2.bf16.msra.mxu0 %v10887
    %11528 = vmatprep.subr.bf16.mxu0 %v10881
    %11529 = vmatpush2.bf16.msra.mxu0 %v10880
    %11530 = vmatprep.subr.bf16.mxu0 %v10874
    %11531 = vmatpush2.bf16.msra.mxu0 %v10873
    %11532 = vmatprep.mubr.bf16.mxu0 %v9036
    %11533 = vmatmul.mubr.bf16.gmra.mxu0 %v9035
    %v11534 = vpop.f32.mrf.mxu0
    %v11535 = vadd.f32 %v11494, %v11534
    %v11536 = vpop.f32.mrf.mxu0
    %v11537 = vadd.f32 %v11496, %v11536
    %v11538 = vpop.f32.mrf.mxu0
    %v11539 = vpop.f32.mrf.mxu0
    %11540 = vdwg.mxu0
    %11541 = vmatprep.subr.bf16.mxu0 %v10533
    %11542 = vmatpush1.bf16.msra.mxu0 %v10532
    %11543 = vmatprep.subr.bf16.mxu0 %v10526
    %11544 = vmatpush1.bf16.msra.mxu0 %v10525
    %11545 = vmatprep.subr.bf16.mxu0 %v10519
    %11546 = vmatpush1.bf16.msra.mxu0 %v10518
    %11547 = vmatprep.subr.bf16.mxu0 %v10512
    %11548 = vmatpush1.bf16.msra.mxu0 %v10511
    %11549 = vmatprep.subr.bf16.mxu0 %v10505
    %11550 = vmatpush1.bf16.msra.mxu0 %v10504
    %11551 = vmatprep.subr.bf16.mxu0 %v10498
    %11552 = vmatpush1.bf16.msra.mxu0 %v10497
    %11553 = vmatprep.subr.bf16.mxu0 %v10491
    %11554 = vmatpush1.bf16.msra.mxu0 %v10490
    %11555 = vmatprep.subr.bf16.mxu0 %v10484
    %11556 = vmatpush1.bf16.msra.mxu0 %v10483
    %11557 = vmatprep.subr.bf16.mxu0 %v10589
    %11558 = vmatpush2.bf16.msra.mxu0 %v10588
    %11559 = vmatprep.subr.bf16.mxu0 %v10582
    %11560 = vmatpush2.bf16.msra.mxu0 %v10581
    %11561 = vmatprep.subr.bf16.mxu0 %v10575
    %11562 = vmatpush2.bf16.msra.mxu0 %v10574
    %11563 = vmatprep.subr.bf16.mxu0 %v10568
    %11564 = vmatpush2.bf16.msra.mxu0 %v10567
    %11565 = vmatprep.subr.bf16.mxu0 %v10561
    %11566 = vmatpush2.bf16.msra.mxu0 %v10560
    %11567 = vmatprep.subr.bf16.mxu0 %v10554
    %11568 = vmatpush2.bf16.msra.mxu0 %v10553
    %11569 = vmatprep.subr.bf16.mxu0 %v10547
    %11570 = vmatpush2.bf16.msra.mxu0 %v10546
    %11571 = vmatprep.subr.bf16.mxu0 %v10540
    %11572 = vmatpush2.bf16.msra.mxu0 %v10539
    %11573 = vmatprep.mubr.bf16.mxu0 %v9030
    %11574 = vmatmul.mubr.bf16.gmra.mxu0 %v9029
    %v11575 = vpop.f32.mrf.mxu0
    %v11576 = vadd.f32 %v9049, %v11575
    %v11577 = vpop.f32.mrf.mxu0
    %v11578 = vadd.f32 %v9053, %v11577
    %v11579 = vpop.f32.mrf.mxu0
    %v11580 = vpop.f32.mrf.mxu0
    %11581 = vdwg.mxu0
    %11582 = vmatprep.subr.bf16.mxu0 %v10645
    %11583 = vmatpush1.bf16.msra.mxu0 %v10644
    %11584 = vmatprep.subr.bf16.mxu0 %v10638
    %11585 = vmatpush1.bf16.msra.mxu0 %v10637
    %11586 = vmatprep.subr.bf16.mxu0 %v10631
    %11587 = vmatpush1.bf16.msra.mxu0 %v10630
    %11588 = vmatprep.subr.bf16.mxu0 %v10624
    %11589 = vmatpush1.bf16.msra.mxu0 %v10623
    %11590 = vmatprep.subr.bf16.mxu0 %v10617
    %11591 = vmatpush1.bf16.msra.mxu0 %v10616
    %11592 = vmatprep.subr.bf16.mxu0 %v10610
    %11593 = vmatpush1.bf16.msra.mxu0 %v10609
    %11594 = vmatprep.subr.bf16.mxu0 %v10603
    %11595 = vmatpush1.bf16.msra.mxu0 %v10602
    %11596 = vmatprep.subr.bf16.mxu0 %v10596
    %11597 = vmatpush1.bf16.msra.mxu0 %v10595
    %11598 = vmatprep.subr.bf16.mxu0 %v10701
    %11599 = vmatpush2.bf16.msra.mxu0 %v10700
    %11600 = vmatprep.subr.bf16.mxu0 %v10694
    %11601 = vmatpush2.bf16.msra.mxu0 %v10693
    %11602 = vmatprep.subr.bf16.mxu0 %v10687
    %11603 = vmatpush2.bf16.msra.mxu0 %v10686
    %11604 = vmatprep.subr.bf16.mxu0 %v10680
    %11605 = vmatpush2.bf16.msra.mxu0 %v10679
    %11606 = vmatprep.subr.bf16.mxu0 %v10673
    %11607 = vmatpush2.bf16.msra.mxu0 %v10672
    %11608 = vmatprep.subr.bf16.mxu0 %v10666
    %11609 = vmatpush2.bf16.msra.mxu0 %v10665
    %11610 = vmatprep.subr.bf16.mxu0 %v10659
    %11611 = vmatpush2.bf16.msra.mxu0 %v10658
    %11612 = vmatprep.subr.bf16.mxu0 %v10652
    %11613 = vmatpush2.bf16.msra.mxu0 %v10651
    %11614 = vmatprep.mubr.bf16.mxu0 %v9032
    %11615 = vmatmul.mubr.bf16.gmra.mxu0 %v9031
    %v11616 = vpop.f32.mrf.mxu0
    %v11617 = vadd.f32 %v11576, %v11616
    %v11618 = vpop.f32.mrf.mxu0
    %v11619 = vadd.f32 %v11578, %v11618
    %v11620 = vpop.f32.mrf.mxu0
    %v11621 = vpop.f32.mrf.mxu0
    %11622 = vdwg.mxu0
    %11623 = vmatprep.subr.bf16.mxu0 %v10757
    %11624 = vmatpush1.bf16.msra.mxu0 %v10756
    %11625 = vmatprep.subr.bf16.mxu0 %v10750
    %11626 = vmatpush1.bf16.msra.mxu0 %v10749
    %11627 = vmatprep.subr.bf16.mxu0 %v10743
    %11628 = vmatpush1.bf16.msra.mxu0 %v10742
    %11629 = vmatprep.subr.bf16.mxu0 %v10736
    %11630 = vmatpush1.bf16.msra.mxu0 %v10735
    %11631 = vmatprep.subr.bf16.mxu0 %v10729
    %11632 = vmatpush1.bf16.msra.mxu0 %v10728
    %11633 = vmatprep.subr.bf16.mxu0 %v10722
    %11634 = vmatpush1.bf16.msra.mxu0 %v10721
    %11635 = vmatprep.subr.bf16.mxu0 %v10715
    %11636 = vmatpush1.bf16.msra.mxu0 %v10714
    %11637 = vmatprep.subr.bf16.mxu0 %v10708
    %11638 = vmatpush1.bf16.msra.mxu0 %v10707
    %11639 = vmatprep.subr.bf16.mxu0 %v10813
    %11640 = vmatpush2.bf16.msra.mxu0 %v10812
    %11641 = vmatprep.subr.bf16.mxu0 %v10806
    %11642 = vmatpush2.bf16.msra.mxu0 %v10805
    %11643 = vmatprep.subr.bf16.mxu0 %v10799
    %11644 = vmatpush2.bf16.msra.mxu0 %v10798
    %11645 = vmatprep.subr.bf16.mxu0 %v10792
    %11646 = vmatpush2.bf16.msra.mxu0 %v10791
    %11647 = vmatprep.subr.bf16.mxu0 %v10785
    %11648 = vmatpush2.bf16.msra.mxu0 %v10784
    %11649 = vmatprep.subr.bf16.mxu0 %v10778
    %11650 = vmatpush2.bf16.msra.mxu0 %v10777
    %11651 = vmatprep.subr.bf16.mxu0 %v10771
    %11652 = vmatpush2.bf16.msra.mxu0 %v10770
    %11653 = vmatprep.subr.bf16.mxu0 %v10764
    %11654 = vmatpush2.bf16.msra.mxu0 %v10763
    %11655 = vmatprep.mubr.bf16.mxu0 %v9034
    %11656 = vmatmul.mubr.bf16.gmra.mxu0 %v9033
    %v11657 = vpop.f32.mrf.mxu0
    %v11658 = vadd.f32 %v11617, %v11657
    %v11659 = vpop.f32.mrf.mxu0
    %v11660 = vadd.f32 %v11619, %v11659
    %v11661 = vpop.f32.mrf.mxu0
    %v11662 = vpop.f32.mrf.mxu0
    %11663 = vdwg.mxu0
    %11664 = vmatprep.subr.bf16.mxu0 %v10869
    %11665 = vmatpush1.bf16.msra.mxu0 %v10868
    %11666 = vmatprep.subr.bf16.mxu0 %v10862
    %11667 = vmatpush1.bf16.msra.mxu0 %v10861
    %11668 = vmatprep.subr.bf16.mxu0 %v10855
    %11669 = vmatpush1.bf16.msra.mxu0 %v10854
    %11670 = vmatprep.subr.bf16.mxu0 %v10848
    %11671 = vmatpush1.bf16.msra.mxu0 %v10847
    %11672 = vmatprep.subr.bf16.mxu0 %v10841
    %11673 = vmatpush1.bf16.msra.mxu0 %v10840
    %11674 = vmatprep.subr.bf16.mxu0 %v10834
    %11675 = vmatpush1.bf16.msra.mxu0 %v10833
    %11676 = vmatprep.subr.bf16.mxu0 %v10827
    %11677 = vmatpush1.bf16.msra.mxu0 %v10826
    %11678 = vmatprep.subr.bf16.mxu0 %v10820
    %11679 = vmatpush1.bf16.msra.mxu0 %v10819
    %11680 = vmatprep.subr.bf16.mxu0 %v10925
    %11681 = vmatpush2.bf16.msra.mxu0 %v10924
    %11682 = vmatprep.subr.bf16.mxu0 %v10918
    %11683 = vmatpush2.bf16.msra.mxu0 %v10917
    %11684 = vmatprep.subr.bf16.mxu0 %v10911
    %11685 = vmatpush2.bf16.msra.mxu0 %v10910
    %11686 = vmatprep.subr.bf16.mxu0 %v10904
    %11687 = vmatpush2.bf16.msra.mxu0 %v10903
    %11688 = vmatprep.subr.bf16.mxu0 %v10897
    %11689 = vmatpush2.bf16.msra.mxu0 %v10896
    %11690 = vmatprep.subr.bf16.mxu0 %v10890
    %11691 = vmatpush2.bf16.msra.mxu0 %v10889
    %11692 = vmatprep.subr.bf16.mxu0 %v10883
    %11693 = vmatpush2.bf16.msra.mxu0 %v10882
    %11694 = vmatprep.subr.bf16.mxu0 %v10876
    %11695 = vmatpush2.bf16.msra.mxu0 %v10875
    %11696 = vmatprep.mubr.bf16.mxu0 %v9036
    %11697 = vmatmul.mubr.bf16.gmra.mxu0 %v9035
    %v11698 = vpop.f32.mrf.mxu0
    %v11699 = vadd.f32 %v11658, %v11698
    %v11700 = vpop.f32.mrf.mxu0
    %v11701 = vadd.f32 %v11660, %v11700
    %v11702 = vpop.f32.mrf.mxu0
    %v11703 = vpop.f32.mrf.mxu0
    %11704 = vdwg.mxu0
    %11705 = vmatprep.subr.bf16.mxu0 %v10535
    %11706 = vmatpush1.bf16.msra.mxu0 %v10534
    %11707 = vmatprep.subr.bf16.mxu0 %v10528
    %11708 = vmatpush1.bf16.msra.mxu0 %v10527
    %11709 = vmatprep.subr.bf16.mxu0 %v10521
    %11710 = vmatpush1.bf16.msra.mxu0 %v10520
    %11711 = vmatprep.subr.bf16.mxu0 %v10514
    %11712 = vmatpush1.bf16.msra.mxu0 %v10513
    %11713 = vmatprep.subr.bf16.mxu0 %v10507
    %11714 = vmatpush1.bf16.msra.mxu0 %v10506
    %11715 = vmatprep.subr.bf16.mxu0 %v10500
    %11716 = vmatpush1.bf16.msra.mxu0 %v10499
    %11717 = vmatprep.subr.bf16.mxu0 %v10493
    %11718 = vmatpush1.bf16.msra.mxu0 %v10492
    %11719 = vmatprep.subr.bf16.mxu0 %v10486
    %11720 = vmatpush1.bf16.msra.mxu0 %v10485
    %11721 = vmatprep.subr.bf16.mxu0 %v10591
    %11722 = vmatpush2.bf16.msra.mxu0 %v10590
    %11723 = vmatprep.subr.bf16.mxu0 %v10584
    %11724 = vmatpush2.bf16.msra.mxu0 %v10583
    %11725 = vmatprep.subr.bf16.mxu0 %v10577
    %11726 = vmatpush2.bf16.msra.mxu0 %v10576
    %11727 = vmatprep.subr.bf16.mxu0 %v10570
    %11728 = vmatpush2.bf16.msra.mxu0 %v10569
    %11729 = vmatprep.subr.bf16.mxu0 %v10563
    %11730 = vmatpush2.bf16.msra.mxu0 %v10562
    %11731 = vmatprep.subr.bf16.mxu0 %v10556
    %11732 = vmatpush2.bf16.msra.mxu0 %v10555
    %11733 = vmatprep.subr.bf16.mxu0 %v10549
    %11734 = vmatpush2.bf16.msra.mxu0 %v10548
    %11735 = vmatprep.subr.bf16.mxu0 %v10542
    %11736 = vmatpush2.bf16.msra.mxu0 %v10541
    %11737 = vmatprep.mubr.bf16.mxu0 %v9030
    %11738 = vmatmul.mubr.bf16.gmra.mxu0 %v9029
    %v11739 = vpop.f32.mrf.mxu0
    %v11740 = vadd.f32 %v9057, %v11739
    %v11741 = vpop.f32.mrf.mxu0
    %v11742 = vadd.f32 %v9061, %v11741
    %v11743 = vpop.f32.mrf.mxu0
    %v11744 = vpop.f32.mrf.mxu0
    %11745 = vdwg.mxu0
    %11746 = vmatprep.subr.bf16.mxu0 %v10647
    %11747 = vmatpush1.bf16.msra.mxu0 %v10646
    %11748 = vmatprep.subr.bf16.mxu0 %v10640
    %11749 = vmatpush1.bf16.msra.mxu0 %v10639
    %11750 = vmatprep.subr.bf16.mxu0 %v10633
    %11751 = vmatpush1.bf16.msra.mxu0 %v10632
    %11752 = vmatprep.subr.bf16.mxu0 %v10626
    %11753 = vmatpush1.bf16.msra.mxu0 %v10625
    %11754 = vmatprep.subr.bf16.mxu0 %v10619
    %11755 = vmatpush1.bf16.msra.mxu0 %v10618
    %11756 = vmatprep.subr.bf16.mxu0 %v10612
    %11757 = vmatpush1.bf16.msra.mxu0 %v10611
    %11758 = vmatprep.subr.bf16.mxu0 %v10605
    %11759 = vmatpush1.bf16.msra.mxu0 %v10604
    %11760 = vmatprep.subr.bf16.mxu0 %v10598
    %11761 = vmatpush1.bf16.msra.mxu0 %v10597
    %11762 = vmatprep.subr.bf16.mxu0 %v10703
    %11763 = vmatpush2.bf16.msra.mxu0 %v10702
    %11764 = vmatprep.subr.bf16.mxu0 %v10696
    %11765 = vmatpush2.bf16.msra.mxu0 %v10695
    %11766 = vmatprep.subr.bf16.mxu0 %v10689
    %11767 = vmatpush2.bf16.msra.mxu0 %v10688
    %11768 = vmatprep.subr.bf16.mxu0 %v10682
    %11769 = vmatpush2.bf16.msra.mxu0 %v10681
    %11770 = vmatprep.subr.bf16.mxu0 %v10675
    %11771 = vmatpush2.bf16.msra.mxu0 %v10674
    %11772 = vmatprep.subr.bf16.mxu0 %v10668
    %11773 = vmatpush2.bf16.msra.mxu0 %v10667
    %11774 = vmatprep.subr.bf16.mxu0 %v10661
    %11775 = vmatpush2.bf16.msra.mxu0 %v10660
    %11776 = vmatprep.subr.bf16.mxu0 %v10654
    %11777 = vmatpush2.bf16.msra.mxu0 %v10653
    %11778 = vmatprep.mubr.bf16.mxu0 %v9032
    %11779 = vmatmul.mubr.bf16.gmra.mxu0 %v9031
    %v11780 = vpop.f32.mrf.mxu0
    %v11781 = vadd.f32 %v11740, %v11780
    %v11782 = vpop.f32.mrf.mxu0
    %v11783 = vadd.f32 %v11742, %v11782
    %v11784 = vpop.f32.mrf.mxu0
    %v11785 = vpop.f32.mrf.mxu0
    %11786 = vdwg.mxu0
    %11787 = vmatprep.subr.bf16.mxu0 %v10759
    %11788 = vmatpush1.bf16.msra.mxu0 %v10758
    %11789 = vmatprep.subr.bf16.mxu0 %v10752
    %11790 = vmatpush1.bf16.msra.mxu0 %v10751
    %11791 = vmatprep.subr.bf16.mxu0 %v10745
    %11792 = vmatpush1.bf16.msra.mxu0 %v10744
    %11793 = vmatprep.subr.bf16.mxu0 %v10738
    %11794 = vmatpush1.bf16.msra.mxu0 %v10737
    %11795 = vmatprep.subr.bf16.mxu0 %v10731
    %11796 = vmatpush1.bf16.msra.mxu0 %v10730
    %11797 = vmatprep.subr.bf16.mxu0 %v10724
    %11798 = vmatpush1.bf16.msra.mxu0 %v10723
    %11799 = vmatprep.subr.bf16.mxu0 %v10717
    %11800 = vmatpush1.bf16.msra.mxu0 %v10716
    %11801 = vmatprep.subr.bf16.mxu0 %v10710
    %11802 = vmatpush1.bf16.msra.mxu0 %v10709
    %11803 = vmatprep.subr.bf16.mxu0 %v10815
    %11804 = vmatpush2.bf16.msra.mxu0 %v10814
    %11805 = vmatprep.subr.bf16.mxu0 %v10808
    %11806 = vmatpush2.bf16.msra.mxu0 %v10807
    %11807 = vmatprep.subr.bf16.mxu0 %v10801
    %11808 = vmatpush2.bf16.msra.mxu0 %v10800
    %11809 = vmatprep.subr.bf16.mxu0 %v10794
    %11810 = vmatpush2.bf16.msra.mxu0 %v10793
    %11811 = vmatprep.subr.bf16.mxu0 %v10787
    %11812 = vmatpush2.bf16.msra.mxu0 %v10786
    %11813 = vmatprep.subr.bf16.mxu0 %v10780
    %11814 = vmatpush2.bf16.msra.mxu0 %v10779
    %11815 = vmatprep.subr.bf16.mxu0 %v10773
    %11816 = vmatpush2.bf16.msra.mxu0 %v10772
    %11817 = vmatprep.subr.bf16.mxu0 %v10766
    %11818 = vmatpush2.bf16.msra.mxu0 %v10765
    %11819 = vmatprep.mubr.bf16.mxu0 %v9034
    %11820 = vmatmul.mubr.bf16.gmra.mxu0 %v9033
    %v11821 = vpop.f32.mrf.mxu0
    %v11822 = vadd.f32 %v11781, %v11821
    %v11823 = vpop.f32.mrf.mxu0
    %v11824 = vadd.f32 %v11783, %v11823
    %v11825 = vpop.f32.mrf.mxu0
    %v11826 = vpop.f32.mrf.mxu0
    %11827 = vdwg.mxu0
    %11828 = vmatprep.subr.bf16.mxu0 %v10871
    %11829 = vmatpush1.bf16.msra.mxu0 %v10870
    %11830 = vmatprep.subr.bf16.mxu0 %v10864
    %11831 = vmatpush1.bf16.msra.mxu0 %v10863
    %11832 = vmatprep.subr.bf16.mxu0 %v10857
    %11833 = vmatpush1.bf16.msra.mxu0 %v10856
    %11834 = vmatprep.subr.bf16.mxu0 %v10850
    %11835 = vmatpush1.bf16.msra.mxu0 %v10849
    %11836 = vmatprep.subr.bf16.mxu0 %v10843
    %11837 = vmatpush1.bf16.msra.mxu0 %v10842
    %11838 = vmatprep.subr.bf16.mxu0 %v10836
    %11839 = vmatpush1.bf16.msra.mxu0 %v10835
    %11840 = vmatprep.subr.bf16.mxu0 %v10829
    %11841 = vmatpush1.bf16.msra.mxu0 %v10828
    %11842 = vmatprep.subr.bf16.mxu0 %v10822
    %11843 = vmatpush1.bf16.msra.mxu0 %v10821
    %11844 = vmatprep.subr.bf16.mxu0 %v10927
    %11845 = vmatpush2.bf16.msra.mxu0 %v10926
    %11846 = vmatprep.subr.bf16.mxu0 %v10920
    %11847 = vmatpush2.bf16.msra.mxu0 %v10919
    %11848 = vmatprep.subr.bf16.mxu0 %v10913
    %11849 = vmatpush2.bf16.msra.mxu0 %v10912
    %11850 = vmatprep.subr.bf16.mxu0 %v10906
    %11851 = vmatpush2.bf16.msra.mxu0 %v10905
    %11852 = vmatprep.subr.bf16.mxu0 %v10899
    %11853 = vmatpush2.bf16.msra.mxu0 %v10898
    %11854 = vmatprep.subr.bf16.mxu0 %v10892
    %11855 = vmatpush2.bf16.msra.mxu0 %v10891
    %11856 = vmatprep.subr.bf16.mxu0 %v10885
    %11857 = vmatpush2.bf16.msra.mxu0 %v10884
    %11858 = vmatprep.subr.bf16.mxu0 %v10878
    %11859 = vmatpush2.bf16.msra.mxu0 %v10877
    %11860 = vmatprep.mubr.bf16.mxu0 %v9036
    %11861 = vmatmul.mubr.bf16.gmra.mxu0 %v9035
    %v11862 = vpop.f32.mrf.mxu0
    %v11863 = vadd.f32 %v11822, %v11862
    %v11864 = vpop.f32.mrf.mxu0
    %v11865 = vadd.f32 %v11824, %v11864
    %v11866 = vpop.f32.mrf.mxu0
    %v11867 = vpop.f32.mrf.mxu0
    %11868 = vdwg.mxu0
    %11869 = vmatprep.subr.bf16.mxu0 0
    %11870 = vmatpush1.bf16.msra.mxu0 %v10536
    %11871 = vmatprep.subr.bf16.mxu0 0
    %11872 = vmatpush1.bf16.msra.mxu0 %v10529
    %11873 = vmatprep.subr.bf16.mxu0 0
    %11874 = vmatpush1.bf16.msra.mxu0 %v10522
    %11875 = vmatprep.subr.bf16.mxu0 0
    %11876 = vmatpush1.bf16.msra.mxu0 %v10515
    %11877 = vmatprep.subr.bf16.mxu0 0
    %11878 = vmatpush1.bf16.msra.mxu0 %v10508
    %11879 = vmatprep.subr.bf16.mxu0 0
    %11880 = vmatpush1.bf16.msra.mxu0 %v10501
    %11881 = vmatprep.subr.bf16.mxu0 0
    %11882 = vmatpush1.bf16.msra.mxu0 %v10494
    %11883 = vmatprep.subr.bf16.mxu0 0
    %11884 = vmatpush1.bf16.msra.mxu0 %v10487
    %11885 = vmatprep.subr.bf16.mxu0 0
    %11886 = vmatpush2.bf16.msra.mxu0 %v10592
    %11887 = vmatprep.subr.bf16.mxu0 0
    %11888 = vmatpush2.bf16.msra.mxu0 %v10585
    %11889 = vmatprep.subr.bf16.mxu0 0
    %11890 = vmatpush2.bf16.msra.mxu0 %v10578
    %11891 = vmatprep.subr.bf16.mxu0 0
    %11892 = vmatpush2.bf16.msra.mxu0 %v10571
    %11893 = vmatprep.subr.bf16.mxu0 0
    %11894 = vmatpush2.bf16.msra.mxu0 %v10564
    %11895 = vmatprep.subr.bf16.mxu0 0
    %11896 = vmatpush2.bf16.msra.mxu0 %v10557
    %11897 = vmatprep.subr.bf16.mxu0 0
    %11898 = vmatpush2.bf16.msra.mxu0 %v10550
    %11899 = vmatprep.subr.bf16.mxu0 0
    %11900 = vmatpush2.bf16.msra.mxu0 %v10543
    %11901 = vmatprep.mubr.bf16.mxu0 %v9030
    %11902 = vmatmul.mubr.bf16.gmra.mxu0 %v9029
    %v11903 = vpop.f32.mrf.mxu0
    %v11904 = vadd.f32 %v9065, %v11903
    %v11905 = vpop.f32.mrf.mxu0
    %v11906 = vpop.f32.mrf.mxu0
    %v11907 = vpop.f32.mrf.mxu0
    %11908 = vdwg.mxu0
    %11909 = vmatprep.subr.bf16.mxu0 0
    %11910 = vmatpush1.bf16.msra.mxu0 %v10648
    %11911 = vmatprep.subr.bf16.mxu0 0
    %11912 = vmatpush1.bf16.msra.mxu0 %v10641
    %11913 = vmatprep.subr.bf16.mxu0 0
    %11914 = vmatpush1.bf16.msra.mxu0 %v10634
    %11915 = vmatprep.subr.bf16.mxu0 0
    %11916 = vmatpush1.bf16.msra.mxu0 %v10627
    %11917 = vmatprep.subr.bf16.mxu0 0
    %11918 = vmatpush1.bf16.msra.mxu0 %v10620
    %11919 = vmatprep.subr.bf16.mxu0 0
    %11920 = vmatpush1.bf16.msra.mxu0 %v10613
    %11921 = vmatprep.subr.bf16.mxu0 0
    %11922 = vmatpush1.bf16.msra.mxu0 %v10606
    %11923 = vmatprep.subr.bf16.mxu0 0
    %11924 = vmatpush1.bf16.msra.mxu0 %v10599
    %11925 = vmatprep.subr.bf16.mxu0 0
    %11926 = vmatpush2.bf16.msra.mxu0 %v10704
    %11927 = vmatprep.subr.bf16.mxu0 0
    %11928 = vmatpush2.bf16.msra.mxu0 %v10697
    %11929 = vmatprep.subr.bf16.mxu0 0
    %11930 = vmatpush2.bf16.msra.mxu0 %v10690
    %11931 = vmatprep.subr.bf16.mxu0 0
    %11932 = vmatpush2.bf16.msra.mxu0 %v10683
    %11933 = vmatprep.subr.bf16.mxu0 0
    %11934 = vmatpush2.bf16.msra.mxu0 %v10676
    %11935 = vmatprep.subr.bf16.mxu0 0
    %11936 = vmatpush2.bf16.msra.mxu0 %v10669
    %11937 = vmatprep.subr.bf16.mxu0 0
    %11938 = vmatpush2.bf16.msra.mxu0 %v10662
    %11939 = vmatprep.subr.bf16.mxu0 0
    %11940 = vmatpush2.bf16.msra.mxu0 %v10655
    %11941 = vmatprep.mubr.bf16.mxu0 %v9032
    %11942 = vmatmul.mubr.bf16.gmra.mxu0 %v9031
    %v11943 = vpop.f32.mrf.mxu0
    %v11944 = vadd.f32 %v11904, %v11943
    %v11945 = vpop.f32.mrf.mxu0
    %v11946 = vpop.f32.mrf.mxu0
    %v11947 = vpop.f32.mrf.mxu0
    %11948 = vdwg.mxu0
    %11949 = vmatprep.subr.bf16.mxu0 0
    %11950 = vmatpush1.bf16.msra.mxu0 %v10760
    %11951 = vmatprep.subr.bf16.mxu0 0
    %11952 = vmatpush1.bf16.msra.mxu0 %v10753
    %11953 = vmatprep.subr.bf16.mxu0 0
    %11954 = vmatpush1.bf16.msra.mxu0 %v10746
    %11955 = vmatprep.subr.bf16.mxu0 0
    %11956 = vmatpush1.bf16.msra.mxu0 %v10739
    %11957 = vmatprep.subr.bf16.mxu0 0
    %11958 = vmatpush1.bf16.msra.mxu0 %v10732
    %11959 = vmatprep.subr.bf16.mxu0 0
    %11960 = vmatpush1.bf16.msra.mxu0 %v10725
    %11961 = vmatprep.subr.bf16.mxu0 0
    %11962 = vmatpush1.bf16.msra.mxu0 %v10718
    %11963 = vmatprep.subr.bf16.mxu0 0
    %11964 = vmatpush1.bf16.msra.mxu0 %v10711
    %11965 = vmatprep.subr.bf16.mxu0 0
    %11966 = vmatpush2.bf16.msra.mxu0 %v10816
    %11967 = vmatprep.subr.bf16.mxu0 0
    %11968 = vmatpush2.bf16.msra.mxu0 %v10809
    %11969 = vmatprep.subr.bf16.mxu0 0
    %11970 = vmatpush2.bf16.msra.mxu0 %v10802
    %11971 = vmatprep.subr.bf16.mxu0 0
    %11972 = vmatpush2.bf16.msra.mxu0 %v10795
    %11973 = vmatprep.subr.bf16.mxu0 0
    %11974 = vmatpush2.bf16.msra.mxu0 %v10788
    %11975 = vmatprep.subr.bf16.mxu0 0
    %11976 = vmatpush2.bf16.msra.mxu0 %v10781
    %11977 = vmatprep.subr.bf16.mxu0 0
    %11978 = vmatpush2.bf16.msra.mxu0 %v10774
    %11979 = vmatprep.subr.bf16.mxu0 0
    %11980 = vmatpush2.bf16.msra.mxu0 %v10767
    %11981 = vmatprep.mubr.bf16.mxu0 %v9034
    %11982 = vmatmul.mubr.bf16.gmra.mxu0 %v9033
    %v11983 = vpop.f32.mrf.mxu0
    %v11984 = vadd.f32 %v11944, %v11983
    %v11985 = vpop.f32.mrf.mxu0
    %v11986 = vpop.f32.mrf.mxu0
    %v11987 = vpop.f32.mrf.mxu0
    %11988 = vdwg.mxu0
    %11989 = vmatprep.subr.bf16.mxu0 0
    %11990 = vmatpush1.bf16.msra.mxu0 %v10872
    %11991 = vmatprep.subr.bf16.mxu0 0
    %11992 = vmatpush1.bf16.msra.mxu0 %v10865
    %11993 = vmatprep.subr.bf16.mxu0 0
    %11994 = vmatpush1.bf16.msra.mxu0 %v10858
    %11995 = vmatprep.subr.bf16.mxu0 0
    %11996 = vmatpush1.bf16.msra.mxu0 %v10851
    %11997 = vmatprep.subr.bf16.mxu0 0
    %11998 = vmatpush1.bf16.msra.mxu0 %v10844
    %11999 = vmatprep.subr.bf16.mxu0 0
    %12000 = vmatpush1.bf16.msra.mxu0 %v10837
    %12001 = vmatprep.subr.bf16.mxu0 0
    %12002 = vmatpush1.bf16.msra.mxu0 %v10830
    %12003 = vmatprep.subr.bf16.mxu0 0
    %12004 = vmatpush1.bf16.msra.mxu0 %v10823
    %12005 = vmatprep.subr.bf16.mxu0 0
    %12006 = vmatpush2.bf16.msra.mxu0 %v10928
    %12007 = vmatprep.subr.bf16.mxu0 0
    %12008 = vmatpush2.bf16.msra.mxu0 %v10921
    %12009 = vmatprep.subr.bf16.mxu0 0
    %12010 = vmatpush2.bf16.msra.mxu0 %v10914
    %12011 = vmatprep.subr.bf16.mxu0 0
    %12012 = vmatpush2.bf16.msra.mxu0 %v10907
    %12013 = vmatprep.subr.bf16.mxu0 0
    %12014 = vmatpush2.bf16.msra.mxu0 %v10900
    %12015 = vmatprep.subr.bf16.mxu0 0
    %12016 = vmatpush2.bf16.msra.mxu0 %v10893
    %12017 = vmatprep.subr.bf16.mxu0 0
    %12018 = vmatpush2.bf16.msra.mxu0 %v10886
    %12019 = vmatprep.subr.bf16.mxu0 0
    %12020 = vmatpush2.bf16.msra.mxu0 %v10879
    %12021 = vmatprep.mubr.bf16.mxu0 %v9036
    %12022 = vmatmul.mubr.bf16.gmra.mxu0 %v9035
    %v12023 = vpop.f32.mrf.mxu0
    %v12024 = vadd.f32 %v11984, %v12023
    %v12025 = vpop.f32.mrf.mxu0
    %v12026 = vpop.f32.mrf.mxu0
    %v12027 = vpop.f32.mrf.mxu0
    %12028 = vdwg.mxu0
    %12029 = vst [vmem:[%s18] sm:$0xff] %v11535
    %12030 = vst [vmem:[%s18 + $0x8] sm:$0xff] %v11537
    %12031 = vst [vmem:[%s18 + $0x10] sm:$0xff] %v11699
    %12032 = vst [vmem:[%s18 + $0x18] sm:$0xff] %v11701
    %12033 = vst [vmem:[%s18 + $0x20] sm:$0xff] %v11863
    %12034 = vst [vmem:[%s18 + $0x28] sm:$0xff] %v11865
    %12035 = vst [vmem:[%s18 + $0x30] sm:$0xff] %v12024
    // Predicated region
    $region134: #{deep_auto_encoder_forward.1} parent=1 // pred_check
      _
    $region135: #{deep_auto_encoder_forward.1} parent=1 // pred_check_branch
      %12037 = sbr.rel (0) target = $region137
    $region136: #{deep_auto_encoder_forward.1} parent=1 // pred_region
      _
    $region137: #{deep_auto_encoder_forward.1} parent=1 // pred_fallthru
      _
    // Predicated region
    $region138: #{deep_auto_encoder_forward.1} parent=1 // pred_check
      _
    $region139: #{deep_auto_encoder_forward.1} parent=1 // pred_check_branch
      %12039 = sbr.rel (0) target = $region141
    $region140: #{deep_auto_encoder_forward.1} parent=1 // pred_region
      _
    $region141: #{deep_auto_encoder_forward.1} parent=1 // pred_fallthru
      _
    // Predicated region
    $region142: #{deep_auto_encoder_forward.1} parent=1 // pred_check
      _
    $region143: #{deep_auto_encoder_forward.1} parent=1 // pred_check_branch
      %12041 = sbr.rel (0) target = $region145
    $region144: #{deep_auto_encoder_forward.1} parent=1 // pred_region
      _
    $region145: #{deep_auto_encoder_forward.1} parent=1 // pred_fallthru
      _
    // Predicated region
    $region146: #{deep_auto_encoder_forward.1} parent=1 // pred_check
      _
    $region147: #{deep_auto_encoder_forward.1} parent=1 // pred_check_branch
      %12043 = sbr.rel (0) target = $region149
    $region148: #{deep_auto_encoder_forward.1} parent=1 // pred_region
      _
    $region149: #{deep_auto_encoder_forward.1} parent=1 // pred_fallthru
      _
    %12044 = vsyncpa [#allocation3], 1
    %12045 = vsyncpa [#allocation5], 1
    %12046 = vsyncpa [#allocation8], 1
    %12047 = vsyncpa [#allocation11], 1
    %12048 = vsyncpa [#allocation14], 1
    %12049 = vsyncpa [#allocation17], 1
    %12050 = vsyncpa [#allocation20], 1
    %12051 = vsyncpa [#allocation23], 1
    %12052 = vsyncpa [#allocation26], 1

</llo_original>
